<compile_context>
chip_gen: v6e
topology: v6e:2x2x1
jax: 0.10.0
libtpu: 0.0.40
codegen_flags: <defaults>
</compile_context>

<pallas_src>
import functools

import numpy as np
import jax
import jax.numpy as jnp
from jax import lax
from jax.experimental import pallas as pl
from jax.experimental.pallas import tpu as pltpu


def _round_up(v, m):
    return (v + m - 1) // m * m


def _encoder_kernel(H, W, WP, LO, LD2, SOFF1, SOFF2, d,
                    xpad_ref, w1f_ref, b1_ref, s1_ref, t1_ref,
                    fc1_ref, fc2_ref,
                    w2f_ref, b2_ref, s2_ref, t2_ref,
                    wsc_ref, sel_ref, wmp_ref,
                    out_ref, p2_ref):
    f32 = jnp.float32
    COUT = out_ref.shape[1]

    def sigmoid(v):
        return 1.0 / (1.0 + jnp.exp(-v))

    # ---- Conv2d #1 (3x3, dilation d, 'same') as ONE K-fused MXU matmul ----
    taps1 = [kh * d * WP + kw * d for kh in range(3) for kw in range(3)]
    patch1 = jnp.concatenate([xpad_ref[0, t:t + LO, :] for t in taps1], axis=1)
    h = jnp.dot(patch1, w1f_ref[...], preferred_element_type=f32) + b1_ref[...]
    h = h * s1_ref[...] + t1_ref[...]            # BatchNorm2d #1 (inference affine)
    h = h * sigmoid(h)                           # SiLU

    # Valid-column mask (kills the junk columns of each padded row), built
    # in-kernel via iota + compare (no mask DMA).
    col = lax.broadcasted_iota(jnp.int32, (H, WP, 1), 1)
    valid = (col < W).astype(f32).reshape(LO, 1)
    h = h * valid

    # ---- SEBlock: global average pool -> fc1 -> ReLU -> fc2 -> sigmoid ----
    ones_row = jnp.ones((1, LO), f32)
    sq = jnp.dot(ones_row, h, preferred_element_type=f32) * (1.0 / (H * W))
    e = jnp.maximum(jnp.dot(sq, fc1_ref[...], preferred_element_type=f32), 0.0)
    se = sigmoid(jnp.dot(e, fc2_ref[...], preferred_element_type=f32))
    h = h * se                                   # channel-wise excitation

    # ---- stage conv2 input: zero only the halo, overwrite the interior ----
    p2_ref[0:SOFF2, :] = jnp.zeros((SOFF2, COUT), f32)
    p2_ref[SOFF2 + LO:LD2, :] = jnp.zeros((LD2 - SOFF2 - LO, COUT), f32)
    p2_ref[SOFF2:SOFF2 + LO, :] = h

    # ---- Conv2d #2 (3x3, 'same') as ONE K-fused MXU matmul ----
    taps2 = [kh * WP + kw for kh in range(3) for kw in range(3)]
    patch2 = jnp.concatenate([p2_ref[t:t + LO, :] for t in taps2], axis=1)
    h2 = jnp.dot(patch2, w2f_ref[...], preferred_element_type=f32) + b2_ref[...]
    h2 = h2 * s2_ref[...] + t2_ref[...]          # BatchNorm2d #2 (inference affine)
    h2 = h2 * sigmoid(h2)                        # SiLU

    # ---- residual: 1x1 shortcut conv (no bias) ----
    xin = xpad_ref[0, SOFF1:SOFF1 + LO, :]
    res = h2 + jnp.dot(xin, wsc_ref[...], preferred_element_type=f32)

    # ---- downsample: Conv2d(Cout, Cout, 2, stride 2, no bias) on the MXU ----
    # 0/1 selection matmuls gather the 4 strided taps, then one folded matmul.
    gathered = [jnp.dot(sel_ref[t], res, preferred_element_type=f32)
                for t in range(4)]
    patch_mp = jnp.concatenate(gathered, axis=1)                  # (QO, 4*COUT)
    out_ds = jnp.dot(patch_mp, wmp_ref[...], preferred_element_type=f32)
    # Dropout2d -> identity (inference).
    out_ref[0, :, :] = out_ds.T.astype(out_ref.dtype)             # NCHW-flat


def encoder_block_forward(x_nchw, params, dilation=1):
    N, CIN, H, W = x_nchw.shape
    COUT = params["b1"].shape[0]
    d = int(dilation)
    assert H % 2 == 0 and W % 2 == 0, "downsample path needs even H, W"

    WP = _round_up(W + 2 * d, 8)      # padded flat row width (multiple of 8)
    LO = H * WP                       # flattened conv-output length (junk cols kept)
    ROWS1 = H + 2 * d + 1             # +1 row so the largest tap slice stays in bounds
    LD1 = ROWS1 * WP
    LD2 = (H + 3) * WP                # conv2 staging buffer length
    SOFF1 = d * WP + d                # flat position of real pixel (0, 0) in xpad
    SOFF2 = WP + 1                    # staging offset inside the conv2 buffer
    HO, WO = H // 2, W // 2
    QO = HO * WO

    f32 = jnp.float32
    x = jnp.transpose(x_nchw, (0, 2, 3, 1)).astype(f32)           # NCHW -> NHWC
    buf = jnp.zeros((N, ROWS1, WP, CIN), f32)
    buf = buf.at[:, d:d + H, d:d + W, :].set(x)
    xpad = buf.reshape(N, LD1, CIN)                               # layout glue only

    # 0/1 selection matrices for the 4 taps of the 2x2 / stride-2 conv.
    sel = np.zeros((4, QO, LO), np.float32)
    rr = np.arange(HO)[:, None]
    cc = np.arange(WO)[None, :]
    q = (rr * WO + cc).reshape(-1)
    for kh in range(2):
        for kw in range(2):
            p = ((2 * rr + kh) * WP + 2 * cc + kw).reshape(-1)
            sel[kh * 2 + kw, q, p] = 1.0
    sel = jnp.asarray(sel)

    # Host-side weight packing for the K-fused matmuls (layout glue only).
    w1f = params["w1_hwio"].reshape(9 * CIN, COUT)
    w2f = params["w2_hwio"].reshape(9 * COUT, COUT)
    wsc = params["wsc_hwio"].reshape(CIN, COUT)
    wmpf = params["wmp_hwio"].reshape(4 * COUT, COUT)
    CR = params["se_fc1"].shape[1]
    b1 = params["b1"].reshape(1, COUT)
    b2 = params["b2"].reshape(1, COUT)
    s1 = params["scale1"].reshape(1, COUT)
    t1 = params["shift1"].reshape(1, COUT)
    s2 = params["scale2"].reshape(1, COUT)
    t2 = params["shift2"].reshape(1, COUT)

    kernel = functools.partial(_encoder_kernel, H, W, WP, LO, LD2, SOFF1, SOFF2, d)

    out_flat = pl.pallas_call(
        kernel,
        out_shape=jax.ShapeDtypeStruct((N, COUT, QO), f32),
        grid=(N,),
        in_specs=[
            pl.BlockSpec((1, LD1, CIN), lambda n: (n, 0, 0)),     # padded input image
            pl.BlockSpec((9 * CIN, COUT), lambda n: (0, 0)),      # conv1 weight (K-fused)
            pl.BlockSpec((1, COUT), lambda n: (0, 0)),            # conv1 bias
            pl.BlockSpec((1, COUT), lambda n: (0, 0)),            # bn1 scale
            pl.BlockSpec((1, COUT), lambda n: (0, 0)),            # bn1 shift
            pl.BlockSpec((COUT, CR), lambda n: (0, 0)),           # SE fc1 weight
            pl.BlockSpec((CR, COUT), lambda n: (0, 0)),           # SE fc2 weight
            pl.BlockSpec((9 * COUT, COUT), lambda n: (0, 0)),     # conv2 weight (K-fused)
            pl.BlockSpec((1, COUT), lambda n: (0, 0)),            # conv2 bias
            pl.BlockSpec((1, COUT), lambda n: (0, 0)),            # bn2 scale
            pl.BlockSpec((1, COUT), lambda n: (0, 0)),            # bn2 shift
            pl.BlockSpec((CIN, COUT), lambda n: (0, 0)),          # shortcut 1x1 weight
            pl.BlockSpec((4, QO, LO), lambda n: (0, 0, 0)),       # downsample tap selectors
            pl.BlockSpec((4 * COUT, COUT), lambda n: (0, 0)),     # downsample conv weight
        ],
        out_specs=pl.BlockSpec((1, COUT, QO), lambda n: (n, 0, 0)),
        scratch_shapes=[pltpu.VMEM((LD2, COUT), f32)],            # conv2 staging buffer
        compiler_params=pltpu.CompilerParams(
            dimension_semantics=("parallel",)),                   # batch axis -> megacore
    )(xpad, w1f, b1, s1, t1, params["se_fc1"], params["se_fc2"],
      w2f, b2, s2, t2, wsc, sel, wmpf)

    return out_flat.reshape(N, COUT, HO, WO)                      # pure reshape, no transpose


def init_params(key, in_channels, out_channels, reduction=16):
    assert out_channels >= reduction, "SEBlock needs out_channels >= reduction"
    cr = out_channels // reduction
    f32 = jnp.float32
    ks = jax.random.split(key, 12)

    # PyTorch-layout weights.
    w1_pt = 0.1 * jax.random.normal(ks[0], (out_channels, in_channels, 3, 3), f32)
    b1 = 0.1 * jax.random.normal(ks[1], (out_channels,), f32)
    w2_pt = 0.1 * jax.random.normal(ks[2], (out_channels, out_channels, 3, 3), f32)
    b2 = 0.1 * jax.random.normal(ks[3], (out_channels,), f32)
    fc1_pt = 0.3 * jax.random.normal(ks[4], (cr, out_channels), f32)   # Linear: (out, in)
    fc2_pt = 0.3 * jax.random.normal(ks[5], (out_channels, cr), f32)
    wsc_pt = 0.1 * jax.random.normal(ks[6], (out_channels, in_channels, 1, 1), f32)
    wmp_pt = 0.1 * jax.random.normal(ks[7], (out_channels, out_channels, 2, 2), f32)

    # BatchNorm2d eval-mode affine (gamma, beta, running mean/var folded).
    eps = 1e-5

    def bn_affine(kg, kb, km, kv):
        gamma = 1.0 + 0.1 * jax.random.normal(kg, (out_channels,), f32)
        beta = 0.1 * jax.random.normal(kb, (out_channels,), f32)
        rmean = 0.1 * jax.random.normal(km, (out_channels,), f32)
        rvar = 1.0 + 0.1 * jax.random.uniform(kv, (out_channels,), f32)
        scale = gamma / jnp.sqrt(rvar + eps)
        return scale, beta - rmean * scale

    scale1, shift1 = bn_affine(ks[8], ks[9], ks[10], ks[11])
    scale2, shift2 = bn_affine(*jax.random.split(jax.random.fold_in(key, 99), 4))

    return dict(
        w1_hwio=jnp.transpose(w1_pt, (2, 3, 1, 0)), b1=b1,
        scale1=scale1, shift1=shift1,
        se_fc1=jnp.transpose(fc1_pt), se_fc2=jnp.transpose(fc2_pt),
        w2_hwio=jnp.transpose(w2_pt, (2, 3, 1, 0)), b2=b2,
        scale2=scale2, shift2=shift2,
        wsc_hwio=jnp.transpose(wsc_pt, (2, 3, 1, 0)),
        wmp_hwio=jnp.transpose(wmp_pt, (2, 3, 1, 0)),
    )


def reference_forward(x_nchw, params, dilation=1):
    """Plain-JAX reference (same inference semantics) for validation."""
    dn = ("NHWC", "HWIO", "NHWC")
    hp = lax.Precision.HIGHEST
    d = int(dilation)
    x = jnp.transpose(x_nchw, (0, 2, 3, 1)).astype(jnp.float32)
    h = lax.conv_general_dilated(x, params["w1_hwio"], (1, 1), [(d, d), (d, d)],
                                 rhs_dilation=(d, d), dimension_numbers=dn,
                                 precision=hp) + params["b1"]
    h = h * params["scale1"] + params["shift1"]
    h = h * jax.nn.sigmoid(h)
    sq = jnp.mean(h, axis=(1, 2))                                 # (N, Cout)
    e = jax.nn.relu(sq @ params["se_fc1"])
    e = jax.nn.sigmoid(e @ params["se_fc2"])
    h = h * e[:, None, None, :]
    h2 = lax.conv_general_dilated(h, params["w2_hwio"], (1, 1), [(1, 1), (1, 1)],
                                  dimension_numbers=dn, precision=hp) + params["b2"]
    h2 = h2 * params["scale2"] + params["shift2"]
    h2 = h2 * jax.nn.sigmoid(h2)
    res = h2 + lax.conv_general_dilated(x, params["wsc_hwio"], (1, 1), [(0, 0), (0, 0)],
                                        dimension_numbers=dn, precision=hp)
    out = lax.conv_general_dilated(res, params["wmp_hwio"], (2, 2), [(0, 0), (0, 0)],
                                   dimension_numbers=dn, precision=hp)
    return jnp.transpose(out, (0, 3, 1, 2))


if __name__ == "__main__":
    key = jax.random.PRNGKey(0)
    kx, kp = jax.random.split(key)
    N, CIN, COUT, H, W = 2, 4, 32, 16, 16
    x = jax.random.normal(kx, (N, CIN, H, W), jnp.float32)
    params = init_params(kp, CIN, COUT)

    out = jax.block_until_ready(encoder_block_forward(x, params, dilation=1))
    assert out.shape == (N, COUT, H // 2, W // 2), out.shape

    ref = jax.block_until_ready(reference_forward(x, params, dilation=1))
    np.testing.assert_allclose(np.asarray(out), np.asarray(ref), rtol=3e-2, atol=3e-2)
    print("KERNEL_OK")
</pallas_src>

<mosaic_0001>
module attributes {stable_mosaic.version = 11 : i64} {
  func.func @_encoder_kernel(%arg0: i32, %arg1: memref<1x456x4xf32, #tpu.memory_space<vmem>>, %arg2: memref<36x32xf32, #tpu.memory_space<vmem>>, %arg3: memref<1x32xf32, #tpu.memory_space<vmem>>, %arg4: memref<1x32xf32, #tpu.memory_space<vmem>>, %arg5: memref<1x32xf32, #tpu.memory_space<vmem>>, %arg6: memref<32x2xf32, #tpu.memory_space<vmem>>, %arg7: memref<2x32xf32, #tpu.memory_space<vmem>>, %arg8: memref<288x32xf32, #tpu.memory_space<vmem>>, %arg9: memref<1x32xf32, #tpu.memory_space<vmem>>, %arg10: memref<1x32xf32, #tpu.memory_space<vmem>>, %arg11: memref<1x32xf32, #tpu.memory_space<vmem>>, %arg12: memref<4x32xf32, #tpu.memory_space<vmem>>, %arg13: memref<4x64x384xf32, #tpu.memory_space<vmem>>, %arg14: memref<128x32xf32, #tpu.memory_space<vmem>>, %arg15: memref<1x32x64xf32, #tpu.memory_space<vmem>>, %arg16: memref<456x32xf32, #tpu.memory_space<vmem>>) attributes {dimension_semantics = [#tpu.dimension_semantics<parallel>], iteration_bounds = array<i64: 2>, scalar_prefetch = 0 : i64, scratch_operands = 1 : i64, tpu.core_type = #tpu.core_type<tc>, window_params = [{transform_indices = @transform_0, window_bounds = array<i64: 1, 456, 4>}, {pipeline_mode = #tpu.pipeline_mode<synchronous>, transform_indices = @transform_1, window_bounds = array<i64: 36, 32>}, {pipeline_mode = #tpu.pipeline_mode<synchronous>, transform_indices = @transform_2, window_bounds = array<i64: 1, 32>}, {pipeline_mode = #tpu.pipeline_mode<synchronous>, transform_indices = @transform_3, window_bounds = array<i64: 1, 32>}, {pipeline_mode = #tpu.pipeline_mode<synchronous>, transform_indices = @transform_4, window_bounds = array<i64: 1, 32>}, {pipeline_mode = #tpu.pipeline_mode<synchronous>, transform_indices = @transform_5, window_bounds = array<i64: 32, 2>}, {pipeline_mode = #tpu.pipeline_mode<synchronous>, transform_indices = @transform_6, window_bounds = array<i64: 2, 32>}, {pipeline_mode = #tpu.pipeline_mode<synchronous>, transform_indices = @transform_7, window_bounds = array<i64: 288, 32>}, {pipeline_mode = #tpu.pipeline_mode<synchronous>, transform_indices = @transform_8, window_bounds = array<i64: 1, 32>}, {pipeline_mode = #tpu.pipeline_mode<synchronous>, transform_indices = @transform_9, window_bounds = array<i64: 1, 32>}, {pipeline_mode = #tpu.pipeline_mode<synchronous>, transform_indices = @transform_10, window_bounds = array<i64: 1, 32>}, {pipeline_mode = #tpu.pipeline_mode<synchronous>, transform_indices = @transform_11, window_bounds = array<i64: 4, 32>}, {pipeline_mode = #tpu.pipeline_mode<synchronous>, transform_indices = @transform_12, window_bounds = array<i64: 4, 64, 384>}, {pipeline_mode = #tpu.pipeline_mode<synchronous>, transform_indices = @transform_13, window_bounds = array<i64: 128, 32>}, {transform_indices = @transform_14, window_bounds = array<i64: 1, 32, 64>}]} {
    %c0 = arith.constant 0 : index
    %c0_0 = arith.constant 0 : index
    %c0_1 = arith.constant 0 : index
    %0 = vector.load %arg1[%c0, %c0_0, %c0_1] : memref<1x456x4xf32, #tpu.memory_space<vmem>>, vector<1x384x4xf32>
    %1 = vector.shape_cast %0 : vector<1x384x4xf32> to vector<384x4xf32>
    %c0_2 = arith.constant 0 : index
    %c1 = arith.constant 1 : index
    %c0_3 = arith.constant 0 : index
    %2 = vector.load %arg1[%c0_2, %c1, %c0_3] : memref<1x456x4xf32, #tpu.memory_space<vmem>>, vector<1x384x4xf32>
    %3 = vector.shape_cast %2 : vector<1x384x4xf32> to vector<384x4xf32>
    %c0_4 = arith.constant 0 : index
    %c2 = arith.constant 2 : index
    %c0_5 = arith.constant 0 : index
    %4 = vector.load %arg1[%c0_4, %c2, %c0_5] : memref<1x456x4xf32, #tpu.memory_space<vmem>>, vector<1x384x4xf32>
    %5 = vector.shape_cast %4 : vector<1x384x4xf32> to vector<384x4xf32>
    %c0_6 = arith.constant 0 : index
    %c24 = arith.constant 24 : index
    %c0_7 = arith.constant 0 : index
    %6 = vector.load %arg1[%c0_6, %c24, %c0_7] : memref<1x456x4xf32, #tpu.memory_space<vmem>>, vector<1x384x4xf32>
    %7 = vector.shape_cast %6 : vector<1x384x4xf32> to vector<384x4xf32>
    %c0_8 = arith.constant 0 : index
    %c25 = arith.constant 25 : index
    %c0_9 = arith.constant 0 : index
    %8 = vector.load %arg1[%c0_8, %c25, %c0_9] : memref<1x456x4xf32, #tpu.memory_space<vmem>>, vector<1x384x4xf32>
    %9 = vector.shape_cast %8 : vector<1x384x4xf32> to vector<384x4xf32>
    %c0_10 = arith.constant 0 : index
    %c26 = arith.constant 26 : index
    %c0_11 = arith.constant 0 : index
    %10 = vector.load %arg1[%c0_10, %c26, %c0_11] : memref<1x456x4xf32, #tpu.memory_space<vmem>>, vector<1x384x4xf32>
    %11 = vector.shape_cast %10 : vector<1x384x4xf32> to vector<384x4xf32>
    %c0_12 = arith.constant 0 : index
    %c48 = arith.constant 48 : index
    %c0_13 = arith.constant 0 : index
    %12 = vector.load %arg1[%c0_12, %c48, %c0_13] : memref<1x456x4xf32, #tpu.memory_space<vmem>>, vector<1x384x4xf32>
    %13 = vector.shape_cast %12 : vector<1x384x4xf32> to vector<384x4xf32>
    %c0_14 = arith.constant 0 : index
    %c49 = arith.constant 49 : index
    %c0_15 = arith.constant 0 : index
    %14 = vector.load %arg1[%c0_14, %c49, %c0_15] : memref<1x456x4xf32, #tpu.memory_space<vmem>>, vector<1x384x4xf32>
    %15 = vector.shape_cast %14 : vector<1x384x4xf32> to vector<384x4xf32>
    %c0_16 = arith.constant 0 : index
    %c50 = arith.constant 50 : index
    %c0_17 = arith.constant 0 : index
    %16 = vector.load %arg1[%c0_16, %c50, %c0_17] : memref<1x456x4xf32, #tpu.memory_space<vmem>>, vector<1x384x4xf32>
    %17 = vector.shape_cast %16 : vector<1x384x4xf32> to vector<384x4xf32>
    %18 = tpu.concatenate %1, %3, %5, %7, %9, %11, %13, %15, %17 in 1 : vector<384x4xf32>, vector<384x4xf32>, vector<384x4xf32>, vector<384x4xf32>, vector<384x4xf32>, vector<384x4xf32>, vector<384x4xf32>, vector<384x4xf32>, vector<384x4xf32> -> vector<384x36xf32>
    %c0_18 = arith.constant 0 : index
    %c0_19 = arith.constant 0 : index
    %19 = vector.load %arg2[%c0_18, %c0_19] : memref<36x32xf32, #tpu.memory_space<vmem>>, vector<36x32xf32>
    %cst = arith.constant dense<0.000000e+00> : vector<384x32xf32>
    %20 = tpu.matmul %18, %19, %cst {dimension_numbers = #tpu.dot_dimension_numbers<[1], [0], [0], [1], [0, 0, 1, 1], [], []>} : vector<384x36xf32>, vector<36x32xf32>, vector<384x32xf32> -> vector<384x32xf32>
    %c0_20 = arith.constant 0 : index
    %c0_21 = arith.constant 0 : index
    %21 = vector.load %arg3[%c0_20, %c0_21] : memref<1x32xf32, #tpu.memory_space<vmem>>, vector<1x32xf32>
    %22 = vector.broadcast %21 : vector<1x32xf32> to vector<384x32xf32>
    %23 = arith.addf %20, %22 : vector<384x32xf32>
    %c0_22 = arith.constant 0 : index
    %c0_23 = arith.constant 0 : index
    %24 = vector.load %arg4[%c0_22, %c0_23] : memref<1x32xf32, #tpu.memory_space<vmem>>, vector<1x32xf32>
    %25 = vector.broadcast %24 : vector<1x32xf32> to vector<384x32xf32>
    %26 = arith.mulf %23, %25 : vector<384x32xf32>
    %c0_24 = arith.constant 0 : index
    %c0_25 = arith.constant 0 : index
    %27 = vector.load %arg5[%c0_24, %c0_25] : memref<1x32xf32, #tpu.memory_space<vmem>>, vector<1x32xf32>
    %28 = vector.broadcast %27 : vector<1x32xf32> to vector<384x32xf32>
    %29 = arith.addf %26, %28 : vector<384x32xf32>
    %cst_26 = arith.constant 0.000000e+00 : f32
    %30 = vector.broadcast %cst_26 : f32 to vector<384x32xf32>
    %31 = arith.subf %30, %29 : vector<384x32xf32>
    %32 = math.exp %31 : vector<384x32xf32>
    %cst_27 = arith.constant 1.000000e+00 : f32
    %33 = vector.broadcast %cst_27 : f32 to vector<384x32xf32>
    %34 = arith.addf %33, %32 : vector<384x32xf32>
    %cst_28 = arith.constant 1.000000e+00 : f32
    %35 = vector.broadcast %cst_28 : f32 to vector<384x32xf32>
    %36 = arith.divf %35, %34 : vector<384x32xf32>
    %37 = arith.mulf %29, %36 : vector<384x32xf32>
    %38 = tpu.iota {dimensions = array<i32: 1>} : vector<16x24x1xi32>
    %c16_i32 = arith.constant 16 : i32
    %39 = vector.broadcast %c16_i32 : i32 to vector<16x24x1xi32>
    %40 = arith.cmpi slt, %38, %39 : vector<16x24x1xi32>
    %41 = arith.extui %40 : vector<16x24x1xi1> to vector<16x24x1xi32>
    %42 = arith.sitofp %41 : vector<16x24x1xi32> to vector<16x24x1xf32>
    %43 = vector.shape_cast %42 : vector<16x24x1xf32> to vector<384x1xf32>
    %44 = vector.broadcast %43 : vector<384x1xf32> to vector<384x32xf32>
    %45 = arith.mulf %37, %44 : vector<384x32xf32>
    %cst_29 = arith.constant 1.000000e+00 : f32
    %46 = vector.broadcast %cst_29 : f32 to vector<1x384xf32>
    %cst_30 = arith.constant dense<0.000000e+00> : vector<1x32xf32>
    %47 = tpu.matmul %46, %45, %cst_30 {dimension_numbers = #tpu.dot_dimension_numbers<[1], [0], [0], [1], [0, 0, 1, 1], [], []>} : vector<1x384xf32>, vector<384x32xf32>, vector<1x32xf32> -> vector<1x32xf32>
    %cst_31 = arith.constant 3.906250e-03 : f32
    %48 = vector.broadcast %cst_31 : f32 to vector<1x32xf32>
    %49 = arith.mulf %47, %48 : vector<1x32xf32>
    %c0_32 = arith.constant 0 : index
    %c0_33 = arith.constant 0 : index
    %50 = vector.load %arg6[%c0_32, %c0_33] : memref<32x2xf32, #tpu.memory_space<vmem>>, vector<32x2xf32>
    %cst_34 = arith.constant dense<0.000000e+00> : vector<1x2xf32>
    %51 = tpu.matmul %49, %50, %cst_34 {dimension_numbers = #tpu.dot_dimension_numbers<[1], [0], [0], [1], [0, 0, 1, 1], [], []>} : vector<1x32xf32>, vector<32x2xf32>, vector<1x2xf32> -> vector<1x2xf32>
    %cst_35 = arith.constant 0.000000e+00 : f32
    %52 = vector.broadcast %cst_35 : f32 to vector<1x2xf32>
    %53 = arith.maximumf %51, %52 : vector<1x2xf32>
    %c0_36 = arith.constant 0 : index
    %c0_37 = arith.constant 0 : index
    %54 = vector.load %arg7[%c0_36, %c0_37] : memref<2x32xf32, #tpu.memory_space<vmem>>, vector<2x32xf32>
    %cst_38 = arith.constant dense<0.000000e+00> : vector<1x32xf32>
    %55 = tpu.matmul %53, %54, %cst_38 {dimension_numbers = #tpu.dot_dimension_numbers<[1], [0], [0], [1], [0, 0, 1, 1], [], []>} : vector<1x2xf32>, vector<2x32xf32>, vector<1x32xf32> -> vector<1x32xf32>
    %cst_39 = arith.constant 0.000000e+00 : f32
    %56 = vector.broadcast %cst_39 : f32 to vector<1x32xf32>
    %57 = arith.subf %56, %55 : vector<1x32xf32>
    %58 = math.exp %57 : vector<1x32xf32>
    %cst_40 = arith.constant 1.000000e+00 : f32
    %59 = vector.broadcast %cst_40 : f32 to vector<1x32xf32>
    %60 = arith.addf %59, %58 : vector<1x32xf32>
    %cst_41 = arith.constant 1.000000e+00 : f32
    %61 = vector.broadcast %cst_41 : f32 to vector<1x32xf32>
    %62 = arith.divf %61, %60 : vector<1x32xf32>
    %63 = vector.broadcast %62 : vector<1x32xf32> to vector<384x32xf32>
    %64 = arith.mulf %45, %63 : vector<384x32xf32>
    %cst_42 = arith.constant 0.000000e+00 : f32
    %65 = vector.broadcast %cst_42 : f32 to vector<25x32xf32>
    %c0_43 = arith.constant 0 : index
    %c0_44 = arith.constant 0 : index
    %66 = vector.load %arg16[%c0_43, %c0_44] : memref<456x32xf32, #tpu.memory_space<vmem>>, vector<25x32xf32>
    tpu.vector_store %arg16[%c0_43, %c0_44], %65 {strides = array<i32>} : memref<456x32xf32, #tpu.memory_space<vmem>>, vector<25x32xf32>,
    %cst_45 = arith.constant 0.000000e+00 : f32
    %67 = vector.broadcast %cst_45 : f32 to vector<47x32xf32>
    %c409 = arith.constant 409 : index
    %c0_46 = arith.constant 0 : index
    %68 = vector.load %arg16[%c409, %c0_46] : memref<456x32xf32, #tpu.memory_space<vmem>>, vector<47x32xf32>
    tpu.vector_store %arg16[%c409, %c0_46], %67 {strides = array<i32>} : memref<456x32xf32, #tpu.memory_space<vmem>>, vector<47x32xf32>,
    %c25_47 = arith.constant 25 : index
    %c0_48 = arith.constant 0 : index
    %69 = vector.load %arg16[%c25_47, %c0_48] : memref<456x32xf32, #tpu.memory_space<vmem>>, vector<384x32xf32>
    tpu.vector_store %arg16[%c25_47, %c0_48], %64 {strides = array<i32>} : memref<456x32xf32, #tpu.memory_space<vmem>>, vector<384x32xf32>,
    %c0_49 = arith.constant 0 : index
    %c0_50 = arith.constant 0 : index
    %70 = vector.load %arg16[%c0_49, %c0_50] : memref<456x32xf32, #tpu.memory_space<vmem>>, vector<384x32xf32>
    %c1_51 = arith.constant 1 : index
    %c0_52 = arith.constant 0 : index
    %71 = vector.load %arg16[%c1_51, %c0_52] : memref<456x32xf32, #tpu.memory_space<vmem>>, vector<384x32xf32>
    %c2_53 = arith.constant 2 : index
    %c0_54 = arith.constant 0 : index
    %72 = vector.load %arg16[%c2_53, %c0_54] : memref<456x32xf32, #tpu.memory_space<vmem>>, vector<384x32xf32>
    %c24_55 = arith.constant 24 : index
    %c0_56 = arith.constant 0 : index
    %73 = vector.load %arg16[%c24_55, %c0_56] : memref<456x32xf32, #tpu.memory_space<vmem>>, vector<384x32xf32>
    %c25_57 = arith.constant 25 : index
    %c0_58 = arith.constant 0 : index
    %74 = vector.load %arg16[%c25_57, %c0_58] : memref<456x32xf32, #tpu.memory_space<vmem>>, vector<384x32xf32>
    %c26_59 = arith.constant 26 : index
    %c0_60 = arith.constant 0 : index
    %75 = vector.load %arg16[%c26_59, %c0_60] : memref<456x32xf32, #tpu.memory_space<vmem>>, vector<384x32xf32>
    %c48_61 = arith.constant 48 : index
    %c0_62 = arith.constant 0 : index
    %76 = vector.load %arg16[%c48_61, %c0_62] : memref<456x32xf32, #tpu.memory_space<vmem>>, vector<384x32xf32>
    %c49_63 = arith.constant 49 : index
    %c0_64 = arith.constant 0 : index
    %77 = vector.load %arg16[%c49_63, %c0_64] : memref<456x32xf32, #tpu.memory_space<vmem>>, vector<384x32xf32>
    %c50_65 = arith.constant 50 : index
    %c0_66 = arith.constant 0 : index
    %78 = vector.load %arg16[%c50_65, %c0_66] : memref<456x32xf32, #tpu.memory_space<vmem>>, vector<384x32xf32>
    %79 = tpu.concatenate %70, %71, %72, %73, %74, %75, %76, %77, %78 in 1 : vector<384x32xf32>, vector<384x32xf32>, vector<384x32xf32>, vector<384x32xf32>, vector<384x32xf32>, vector<384x32xf32>, vector<384x32xf32>, vector<384x32xf32>, vector<384x32xf32> -> vector<384x288xf32>
    %c0_67 = arith.constant 0 : index
    %c0_68 = arith.constant 0 : index
    %80 = vector.load %arg8[%c0_67, %c0_68] : memref<288x32xf32, #tpu.memory_space<vmem>>, vector<288x32xf32>
    %cst_69 = arith.constant dense<0.000000e+00> : vector<384x32xf32>
    %81 = tpu.matmul %79, %80, %cst_69 {dimension_numbers = #tpu.dot_dimension_numbers<[1], [0], [0], [1], [0, 0, 1, 1], [], []>} : vector<384x288xf32>, vector<288x32xf32>, vector<384x32xf32> -> vector<384x32xf32>
    %c0_70 = arith.constant 0 : index
    %c0_71 = arith.constant 0 : index
    %82 = vector.load %arg9[%c0_70, %c0_71] : memref<1x32xf32, #tpu.memory_space<vmem>>, vector<1x32xf32>
    %83 = vector.broadcast %82 : vector<1x32xf32> to vector<384x32xf32>
    %84 = arith.addf %81, %83 : vector<384x32xf32>
    %c0_72 = arith.constant 0 : index
    %c0_73 = arith.constant 0 : index
    %85 = vector.load %arg10[%c0_72, %c0_73] : memref<1x32xf32, #tpu.memory_space<vmem>>, vector<1x32xf32>
    %86 = vector.broadcast %85 : vector<1x32xf32> to vector<384x32xf32>
    %87 = arith.mulf %84, %86 : vector<384x32xf32>
    %c0_74 = arith.constant 0 : index
    %c0_75 = arith.constant 0 : index
    %88 = vector.load %arg11[%c0_74, %c0_75] : memref<1x32xf32, #tpu.memory_space<vmem>>, vector<1x32xf32>
    %89 = vector.broadcast %88 : vector<1x32xf32> to vector<384x32xf32>
    %90 = arith.addf %87, %89 : vector<384x32xf32>
    %cst_76 = arith.constant 0.000000e+00 : f32
    %91 = vector.broadcast %cst_76 : f32 to vector<384x32xf32>
    %92 = arith.subf %91, %90 : vector<384x32xf32>
    %93 = math.exp %92 : vector<384x32xf32>
    %cst_77 = arith.constant 1.000000e+00 : f32
    %94 = vector.broadcast %cst_77 : f32 to vector<384x32xf32>
    %95 = arith.addf %94, %93 : vector<384x32xf32>
    %cst_78 = arith.constant 1.000000e+00 : f32
    %96 = vector.broadcast %cst_78 : f32 to vector<384x32xf32>
    %97 = arith.divf %96, %95 : vector<384x32xf32>
    %98 = arith.mulf %90, %97 : vector<384x32xf32>
    %c0_79 = arith.constant 0 : index
    %c25_80 = arith.constant 25 : index
    %c0_81 = arith.constant 0 : index
    %99 = vector.load %arg1[%c0_79, %c25_80, %c0_81] : memref<1x456x4xf32, #tpu.memory_space<vmem>>, vector<1x384x4xf32>
    %100 = vector.shape_cast %99 : vector<1x384x4xf32> to vector<384x4xf32>
    %c0_82 = arith.constant 0 : index
    %c0_83 = arith.constant 0 : index
    %101 = vector.load %arg12[%c0_82, %c0_83] : memref<4x32xf32, #tpu.memory_space<vmem>>, vector<4x32xf32>
    %cst_84 = arith.constant dense<0.000000e+00> : vector<384x32xf32>
    %102 = tpu.matmul %100, %101, %cst_84 {dimension_numbers = #tpu.dot_dimension_numbers<[1], [0], [0], [1], [0, 0, 1, 1], [], []>} : vector<384x4xf32>, vector<4x32xf32>, vector<384x32xf32> -> vector<384x32xf32>
    %103 = arith.addf %98, %102 : vector<384x32xf32>
    %c0_85 = arith.constant 0 : index
    %c0_86 = arith.constant 0 : index
    %c0_87 = arith.constant 0 : index
    %104 = vector.load %arg13[%c0_85, %c0_86, %c0_87] : memref<4x64x384xf32, #tpu.memory_space<vmem>>, vector<1x64x384xf32>
    %105 = vector.shape_cast %104 : vector<1x64x384xf32> to vector<64x384xf32>
    %cst_88 = arith.constant dense<0.000000e+00> : vector<64x32xf32>
    %106 = tpu.matmul %105, %103, %cst_88 {dimension_numbers = #tpu.dot_dimension_numbers<[1], [0], [0], [1], [0, 0, 1, 1], [], []>} : vector<64x384xf32>, vector<384x32xf32>, vector<64x32xf32> -> vector<64x32xf32>
    %c1_89 = arith.constant 1 : index
    %c0_90 = arith.constant 0 : index
    %c0_91 = arith.constant 0 : index
    %107 = vector.load %arg13[%c1_89, %c0_90, %c0_91] : memref<4x64x384xf32, #tpu.memory_space<vmem>>, vector<1x64x384xf32>
    %108 = vector.shape_cast %107 : vector<1x64x384xf32> to vector<64x384xf32>
    %cst_92 = arith.constant dense<0.000000e+00> : vector<64x32xf32>
    %109 = tpu.matmul %108, %103, %cst_92 {dimension_numbers = #tpu.dot_dimension_numbers<[1], [0], [0], [1], [0, 0, 1, 1], [], []>} : vector<64x384xf32>, vector<384x32xf32>, vector<64x32xf32> -> vector<64x32xf32>
    %c2_93 = arith.constant 2 : index
    %c0_94 = arith.constant 0 : index
    %c0_95 = arith.constant 0 : index
    %110 = vector.load %arg13[%c2_93, %c0_94, %c0_95] : memref<4x64x384xf32, #tpu.memory_space<vmem>>, vector<1x64x384xf32>
    %111 = vector.shape_cast %110 : vector<1x64x384xf32> to vector<64x384xf32>
    %cst_96 = arith.constant dense<0.000000e+00> : vector<64x32xf32>
    %112 = tpu.matmul %111, %103, %cst_96 {dimension_numbers = #tpu.dot_dimension_numbers<[1], [0], [0], [1], [0, 0, 1, 1], [], []>} : vector<64x384xf32>, vector<384x32xf32>, vector<64x32xf32> -> vector<64x32xf32>
    %c3 = arith.constant 3 : index
    %c0_97 = arith.constant 0 : index
    %c0_98 = arith.constant 0 : index
    %113 = vector.load %arg13[%c3, %c0_97, %c0_98] : memref<4x64x384xf32, #tpu.memory_space<vmem>>, vector<1x64x384xf32>
    %114 = vector.shape_cast %113 : vector<1x64x384xf32> to vector<64x384xf32>
    %cst_99 = arith.constant dense<0.000000e+00> : vector<64x32xf32>
    %115 = tpu.matmul %114, %103, %cst_99 {dimension_numbers = #tpu.dot_dimension_numbers<[1], [0], [0], [1], [0, 0, 1, 1], [], []>} : vector<64x384xf32>, vector<384x32xf32>, vector<64x32xf32> -> vector<64x32xf32>
    %116 = tpu.concatenate %106, %109, %112, %115 in 1 : vector<64x32xf32>, vector<64x32xf32>, vector<64x32xf32>, vector<64x32xf32> -> vector<64x128xf32>
    %c0_100 = arith.constant 0 : index
    %c0_101 = arith.constant 0 : index
    %117 = vector.load %arg14[%c0_100, %c0_101] : memref<128x32xf32, #tpu.memory_space<vmem>>, vector<128x32xf32>
    %cst_102 = arith.constant dense<0.000000e+00> : vector<64x32xf32>
    %118 = tpu.matmul %116, %117, %cst_102 {dimension_numbers = #tpu.dot_dimension_numbers<[1], [0], [0], [1], [0, 0, 1, 1], [], []>} : vector<64x128xf32>, vector<128x32xf32>, vector<64x32xf32> -> vector<64x32xf32>
    %119 = tpu.transpose %118, [1, 0] : vector<64x32xf32> -> vector<32x64xf32>
    %c0_103 = arith.constant 0 : index
    %c0_104 = arith.constant 0 : index
    %c0_105 = arith.constant 0 : index
    %120 = vector.load %arg15[%c0_103, %c0_104, %c0_105] : memref<1x32x64xf32, #tpu.memory_space<vmem>>, vector<1x32x64xf32>
    %121 = vector.shape_cast %120 : vector<1x32x64xf32> to vector<32x64xf32>
    %122 = vector.shape_cast %119 : vector<32x64xf32> to vector<1x32x64xf32>
    tpu.vector_store %arg15[%c0_103, %c0_104, %c0_105], %122 {strides = array<i32>} : memref<1x32x64xf32, #tpu.memory_space<vmem>>, vector<1x32x64xf32>,
    return
  }
  func.func @transform_0(%arg0: i32) -> (i32, i32, i32) {
    %c0_i32 = arith.constant 0 : i32
    %c0_i32_0 = arith.constant 0 : i32
    %c0_i32_1 = arith.constant 0 : i32
    return %arg0, %c0_i32, %c0_i32_0 : i32, i32, i32
  }
  func.func @transform_1(%arg0: i32) -> (i32, i32) {
    %c0_i32 = arith.constant 0 : i32
    %c0_i32_0 = arith.constant 0 : i32
    %c0_i32_1 = arith.constant 0 : i32
    return %c0_i32, %c0_i32_0 : i32, i32
  }
  func.func @transform_2(%arg0: i32) -> (i32, i32) {
    %c0_i32 = arith.constant 0 : i32
    %c0_i32_0 = arith.constant 0 : i32
    %c0_i32_1 = arith.constant 0 : i32
    return %c0_i32, %c0_i32_0 : i32, i32
  }
  func.func @transform_3(%arg0: i32) -> (i32, i32) {
    %c0_i32 = arith.constant 0 : i32
    %c0_i32_0 = arith.constant 0 : i32
    %c0_i32_1 = arith.constant 0 : i32
    return %c0_i32, %c0_i32_0 : i32, i32
  }
  func.func @transform_4(%arg0: i32) -> (i32, i32) {
    %c0_i32 = arith.constant 0 : i32
    %c0_i32_0 = arith.constant 0 : i32
    %c0_i32_1 = arith.constant 0 : i32
    return %c0_i32, %c0_i32_0 : i32, i32
  }
  func.func @transform_5(%arg0: i32) -> (i32, i32) {
    %c0_i32 = arith.constant 0 : i32
    %c0_i32_0 = arith.constant 0 : i32
    %c0_i32_1 = arith.constant 0 : i32
    return %c0_i32, %c0_i32_0 : i32, i32
  }
  func.func @transform_6(%arg0: i32) -> (i32, i32) {
    %c0_i32 = arith.constant 0 : i32
    %c0_i32_0 = arith.constant 0 : i32
    %c0_i32_1 = arith.constant 0 : i32
    return %c0_i32, %c0_i32_0 : i32, i32
  }
  func.func @transform_7(%arg0: i32) -> (i32, i32) {
    %c0_i32 = arith.constant 0 : i32
    %c0_i32_0 = arith.constant 0 : i32
    %c0_i32_1 = arith.constant 0 : i32
    return %c0_i32, %c0_i32_0 : i32, i32
  }
  func.func @transform_8(%arg0: i32) -> (i32, i32) {
    %c0_i32 = arith.constant 0 : i32
    %c0_i32_0 = arith.constant 0 : i32
    %c0_i32_1 = arith.constant 0 : i32
    return %c0_i32, %c0_i32_0 : i32, i32
  }
  func.func @transform_9(%arg0: i32) -> (i32, i32) {
    %c0_i32 = arith.constant 0 : i32
    %c0_i32_0 = arith.constant 0 : i32
    %c0_i32_1 = arith.constant 0 : i32
    return %c0_i32, %c0_i32_0 : i32, i32
  }
  func.func @transform_10(%arg0: i32) -> (i32, i32) {
    %c0_i32 = arith.constant 0 : i32
    %c0_i32_0 = arith.constant 0 : i32
    %c0_i32_1 = arith.constant 0 : i32
    return %c0_i32, %c0_i32_0 : i32, i32
  }
  func.func @transform_11(%arg0: i32) -> (i32, i32) {
    %c0_i32 = arith.constant 0 : i32
    %c0_i32_0 = arith.constant 0 : i32
    %c0_i32_1 = arith.constant 0 : i32
    return %c0_i32, %c0_i32_0 : i32, i32
  }
  func.func @transform_12(%arg0: i32) -> (i32, i32, i32) {
    %c0_i32 = arith.constant 0 : i32
    %c0_i32_0 = arith.constant 0 : i32
    %c0_i32_1 = arith.constant 0 : i32
    %c0_i32_2 = arith.constant 0 : i32
    return %c0_i32, %c0_i32_0, %c0_i32_1 : i32, i32, i32
  }
  func.func @transform_13(%arg0: i32) -> (i32, i32) {
    %c0_i32 = arith.constant 0 : i32
    %c0_i32_0 = arith.constant 0 : i32
    %c0_i32_1 = arith.constant 0 : i32
    return %c0_i32, %c0_i32_0 : i32, i32
  }
  func.func @transform_14(%arg0: i32) -> (i32, i32, i32) {
    %c0_i32 = arith.constant 0 : i32
    %c0_i32_0 = arith.constant 0 : i32
    %c0_i32_1 = arith.constant 0 : i32
    return %arg0, %c0_i32, %c0_i32_0 : i32, i32, i32
  }
}

</mosaic_0001>

<llo_original>
// kernel: tpu_custom_call.1
$region0: #{tpu_custom_call.1}
  #allocation0 [shape = 'u32[]', space=smem, size = 0x4, offset = 0x4, fixed_abs, tag = 'smem constant byte address 0x4 - core index']
  #allocation1 [shape = 'u32[144,128]{1,0:T(1,128)}', space=vmem, size = 0x12000, scoped, tag = 'internal scratch']
  #allocation2 [shape = 'f32[456,32]{1,0:T(8,128)}', space=vmem, size = 0x39000, scoped, tag = 'scratch operand']
  %s0 = inlined_call_operand.vmem [shape: f32[2,456,4], index: 0, kind: input, shape index: {}]
  %s1 = inlined_call_operand.vmem [shape: f32[36,32], index: 1, kind: input, shape index: {}]
  %s2 = inlined_call_operand.vmem [shape: f32[1,32], index: 2, kind: input, shape index: {}]
  %s3 = inlined_call_operand.vmem [shape: f32[1,32], index: 3, kind: input, shape index: {}]
  %s4 = inlined_call_operand.vmem [shape: f32[1,32], index: 4, kind: input, shape index: {}]
  %s5 = inlined_call_operand.vmem [shape: f32[32,2], index: 5, kind: input, shape index: {}]
  %s6 = inlined_call_operand.vmem [shape: f32[2,32], index: 6, kind: input, shape index: {}]
  %s7 = inlined_call_operand.vmem [shape: f32[288,32], index: 7, kind: input, shape index: {}]
  %s8 = inlined_call_operand.vmem [shape: f32[1,32], index: 8, kind: input, shape index: {}]
  %s9 = inlined_call_operand.vmem [shape: f32[1,32], index: 9, kind: input, shape index: {}]
  %s10 = inlined_call_operand.vmem [shape: f32[1,32], index: 10, kind: input, shape index: {}]
  %s11 = inlined_call_operand.vmem [shape: f32[4,32], index: 11, kind: input, shape index: {}]
  %s12 = inlined_call_operand.vmem [shape: f32[4,64,384], index: 12, kind: input, shape index: {}]
  %s13 = inlined_call_operand.vmem [shape: f32[128,32], index: 13, kind: input, shape index: {}]
  %s14 = inlined_call_operand.hbm [shape: f32[2,32,64], index: 14, kind: output, shape index: {}]
  %s15 = sld [smem:[#allocation0]]
  $region89: #{tpu_custom_call.1} parent=0
    _
  %s17 = ssub.s32 1, %s15
  %s18 = scalar_select 0, %s17, %s15
  $region1: #{tpu_custom_call.1} parent=0
    #allocation3 [shape = 'u8[32768]{0}', space=vmem, size = 0x8000, scoped, tag = 'output window, operand 0']
    #allocation4 [shape = 's32[2]{0}', space=sflag, size = 0x8, scoped, tag = 'scoped memory for tpu_custom_call.1']
    %19 = vsyncpa [#allocation4], 0
    %s20 = scalar_lea.sflag [#allocation4], 1
    %21 = vsyncpa %s20, 0
    loop: start=0, step=1, limit=4
    $region2: #{tpu_custom_call.1} parent=1 // loop_pre_header
      _
    $region3: #{tpu_custom_call.1} parent=1 // loop_header
      %s23 = sphi 0, %s27
      %p24 = scmp.ge.s32.totalorder %s23, 4
      %s33 = sphi 0, %s35
      %s36 = sphi 0, %s33
      %s37 = sphi 0, %s36
      %s53 = sphi 0, %s37
      %s57 = sphi 0, %s57
      %s59 = sphi 0, %s57
      %s60 = sphi 0, %s59
      %s74 = sphi 0, %s60
      %s78 = sphi 0, %s78
      %s80 = sphi 0, %s78
      %s81 = sphi 0, %s80
      %s95 = sphi 0, %s81
      %s99 = sphi 0, %s99
      %s101 = sphi 0, %s99
      %s102 = sphi 0, %s101
      %s116 = sphi 0, %s102
      %s120 = sphi 0, %s120
      %s122 = sphi 0, %s120
      %s123 = sphi 0, %s122
      %s137 = sphi 0, %s123
      %s141 = sphi 0, %s141
      %s143 = sphi 0, %s141
      %s144 = sphi 0, %s143
      %s158 = sphi 0, %s144
      %s162 = sphi 0, %s162
      %s164 = sphi 0, %s162
      %s165 = sphi 0, %s164
      %s179 = sphi 0, %s165
      %s183 = sphi 0, %s183
      %s185 = sphi 0, %s183
      %s186 = sphi 0, %s185
      %s200 = sphi 0, %s186
      %s204 = sphi 0, %s204
      %s206 = sphi 0, %s204
      %s207 = sphi 0, %s206
      %s221 = sphi 0, %s207
      %s225 = sphi 0, %s225
      %s227 = sphi 0, %s225
      %s228 = sphi 0, %s227
      %s242 = sphi 0, %s228
      %s246 = sphi 0, %s246
      %s248 = sphi 0, %s246
      %s249 = sphi 0, %s248
      %s263 = sphi 0, %s249
      %s267 = sphi 0, %s267
      %s269 = sphi 0, %s267
      %s270 = sphi 0, %s269
      %s284 = sphi 0, %s270
      %s288 = sphi 0, %s288
      %s290 = sphi 0, %s288
      %s291 = sphi 0, %s290
      %s305 = sphi 0, %s291
      %s309 = sphi 0, %s309
      %s311 = sphi 0, %s309
      %s312 = sphi 0, %s311
      %s326 = sphi 0, %s312
      %s332 = sphi 0, %s334
      %s335 = sphi 0, %s332
      %s336 = sphi 0, %s335
      %s352 = sphi 0, %s336
    $region4: #{tpu_custom_call.1} parent=1 // loop_header_branch
      %26 = sbr.rel (%p24) target = $region8
    $region5: #{tpu_custom_call.1} parent=1 // loop_body
      %s28 = ssub.s32 %s23, 1
      %s29 = ssub.s32 %s23, 2
      %s30 = sadd.s32 %s23, 1
      %s31 = ssub.s32 %s23, %s30
      %p32 = scmp.eq.s32.totalorder %s31, 0
      %s34 = sadd.s32 %s33, 1
      %s35 = scalar_select %p32, %s33, %s34
      %p38 = pneg %p32
      %p39 = scmp.eq.s32.totalorder %s23, 1
      %p40 = por %p38, %p39
      %p41 = scmp.ne.s32.totalorder %s33, %s36
      %p42 = scmp.eq.s32.totalorder %s23, 0
      %p43 = por %p41, %p42
      %p44 = scmp.ne.s32.totalorder %s33, %s36
      %p45 = scmp.eq.s32.totalorder %s28, 1
      %p46 = por %p44, %p45
      %p47 = scmp.ne.s32.totalorder %s36, %s37
      %p48 = scmp.eq.s32.totalorder %s28, 0
      %p49 = por %p47, %p48
      %p50 = scmp.ne.s32.totalorder %s36, %s37
      %p51 = scmp.eq.s32.totalorder %s29, 1
      %p52 = por %p50, %p51
      %p54 = scmp.ne.s32.totalorder %s37, %s53
      %p55 = scmp.eq.s32.totalorder %s29, 0
      %p56 = por %p54, %p55
      %s58 = sadd.s32 %s57, 1
      %p61 = scmp.eq.s32.totalorder %s23, 1
      %p62 = scmp.ne.s32.totalorder %s57, %s59
      %p63 = scmp.eq.s32.totalorder %s23, 0
      %p64 = por %p62, %p63
      %p65 = scmp.ne.s32.totalorder %s57, %s59
      %p66 = scmp.eq.s32.totalorder %s28, 1
      %p67 = por %p65, %p66
      %p68 = scmp.ne.s32.totalorder %s59, %s60
      %p69 = scmp.eq.s32.totalorder %s28, 0
      %p70 = por %p68, %p69
      %p71 = scmp.ne.s32.totalorder %s59, %s60
      %p72 = scmp.eq.s32.totalorder %s29, 1
      %p73 = por %p71, %p72
      %p75 = scmp.ne.s32.totalorder %s60, %s74
      %p76 = scmp.eq.s32.totalorder %s29, 0
      %p77 = por %p75, %p76
      %s79 = sadd.s32 %s78, 1
      %p82 = scmp.eq.s32.totalorder %s23, 1
      %p83 = scmp.ne.s32.totalorder %s78, %s80
      %p84 = scmp.eq.s32.totalorder %s23, 0
      %p85 = por %p83, %p84
      %p86 = scmp.ne.s32.totalorder %s78, %s80
      %p87 = scmp.eq.s32.totalorder %s28, 1
      %p88 = por %p86, %p87
      %p89 = scmp.ne.s32.totalorder %s80, %s81
      %p90 = scmp.eq.s32.totalorder %s28, 0
      %p91 = por %p89, %p90
      %p92 = scmp.ne.s32.totalorder %s80, %s81
      %p93 = scmp.eq.s32.totalorder %s29, 1
      %p94 = por %p92, %p93
      %p96 = scmp.ne.s32.totalorder %s81, %s95
      %p97 = scmp.eq.s32.totalorder %s29, 0
      %p98 = por %p96, %p97
      %s100 = sadd.s32 %s99, 1
      %p103 = scmp.eq.s32.totalorder %s23, 1
      %p104 = scmp.ne.s32.totalorder %s99, %s101
      %p105 = scmp.eq.s32.totalorder %s23, 0
      %p106 = por %p104, %p105
      %p107 = scmp.ne.s32.totalorder %s99, %s101
      %p108 = scmp.eq.s32.totalorder %s28, 1
      %p109 = por %p107, %p108
      %p110 = scmp.ne.s32.totalorder %s101, %s102
      %p111 = scmp.eq.s32.totalorder %s28, 0
      %p112 = por %p110, %p111
      %p113 = scmp.ne.s32.totalorder %s101, %s102
      %p114 = scmp.eq.s32.totalorder %s29, 1
      %p115 = por %p113, %p114
      %p117 = scmp.ne.s32.totalorder %s102, %s116
      %p118 = scmp.eq.s32.totalorder %s29, 0
      %p119 = por %p117, %p118
      %s121 = sadd.s32 %s120, 1
      %p124 = scmp.eq.s32.totalorder %s23, 1
      %p125 = scmp.ne.s32.totalorder %s120, %s122
      %p126 = scmp.eq.s32.totalorder %s23, 0
      %p127 = por %p125, %p126
      %p128 = scmp.ne.s32.totalorder %s120, %s122
      %p129 = scmp.eq.s32.totalorder %s28, 1
      %p130 = por %p128, %p129
      %p131 = scmp.ne.s32.totalorder %s122, %s123
      %p132 = scmp.eq.s32.totalorder %s28, 0
      %p133 = por %p131, %p132
      %p134 = scmp.ne.s32.totalorder %s122, %s123
      %p135 = scmp.eq.s32.totalorder %s29, 1
      %p136 = por %p134, %p135
      %p138 = scmp.ne.s32.totalorder %s123, %s137
      %p139 = scmp.eq.s32.totalorder %s29, 0
      %p140 = por %p138, %p139
      %s142 = sadd.s32 %s141, 1
      %p145 = scmp.eq.s32.totalorder %s23, 1
      %p146 = scmp.ne.s32.totalorder %s141, %s143
      %p147 = scmp.eq.s32.totalorder %s23, 0
      %p148 = por %p146, %p147
      %p149 = scmp.ne.s32.totalorder %s141, %s143
      %p150 = scmp.eq.s32.totalorder %s28, 1
      %p151 = por %p149, %p150
      %p152 = scmp.ne.s32.totalorder %s143, %s144
      %p153 = scmp.eq.s32.totalorder %s28, 0
      %p154 = por %p152, %p153
      %p155 = scmp.ne.s32.totalorder %s143, %s144
      %p156 = scmp.eq.s32.totalorder %s29, 1
      %p157 = por %p155, %p156
      %p159 = scmp.ne.s32.totalorder %s144, %s158
      %p160 = scmp.eq.s32.totalorder %s29, 0
      %p161 = por %p159, %p160
      %s163 = sadd.s32 %s162, 1
      %p166 = scmp.eq.s32.totalorder %s23, 1
      %p167 = scmp.ne.s32.totalorder %s162, %s164
      %p168 = scmp.eq.s32.totalorder %s23, 0
      %p169 = por %p167, %p168
      %p170 = scmp.ne.s32.totalorder %s162, %s164
      %p171 = scmp.eq.s32.totalorder %s28, 1
      %p172 = por %p170, %p171
      %p173 = scmp.ne.s32.totalorder %s164, %s165
      %p174 = scmp.eq.s32.totalorder %s28, 0
      %p175 = por %p173, %p174
      %p176 = scmp.ne.s32.totalorder %s164, %s165
      %p177 = scmp.eq.s32.totalorder %s29, 1
      %p178 = por %p176, %p177
      %p180 = scmp.ne.s32.totalorder %s165, %s179
      %p181 = scmp.eq.s32.totalorder %s29, 0
      %p182 = por %p180, %p181
      %s184 = sadd.s32 %s183, 1
      %p187 = scmp.eq.s32.totalorder %s23, 1
      %p188 = scmp.ne.s32.totalorder %s183, %s185
      %p189 = scmp.eq.s32.totalorder %s23, 0
      %p190 = por %p188, %p189
      %p191 = scmp.ne.s32.totalorder %s183, %s185
      %p192 = scmp.eq.s32.totalorder %s28, 1
      %p193 = por %p191, %p192
      %p194 = scmp.ne.s32.totalorder %s185, %s186
      %p195 = scmp.eq.s32.totalorder %s28, 0
      %p196 = por %p194, %p195
      %p197 = scmp.ne.s32.totalorder %s185, %s186
      %p198 = scmp.eq.s32.totalorder %s29, 1
      %p199 = por %p197, %p198
      %p201 = scmp.ne.s32.totalorder %s186, %s200
      %p202 = scmp.eq.s32.totalorder %s29, 0
      %p203 = por %p201, %p202
      %s205 = sadd.s32 %s204, 1
      %p208 = scmp.eq.s32.totalorder %s23, 1
      %p209 = scmp.ne.s32.totalorder %s204, %s206
      %p210 = scmp.eq.s32.totalorder %s23, 0
      %p211 = por %p209, %p210
      %p212 = scmp.ne.s32.totalorder %s204, %s206
      %p213 = scmp.eq.s32.totalorder %s28, 1
      %p214 = por %p212, %p213
      %p215 = scmp.ne.s32.totalorder %s206, %s207
      %p216 = scmp.eq.s32.totalorder %s28, 0
      %p217 = por %p215, %p216
      %p218 = scmp.ne.s32.totalorder %s206, %s207
      %p219 = scmp.eq.s32.totalorder %s29, 1
      %p220 = por %p218, %p219
      %p222 = scmp.ne.s32.totalorder %s207, %s221
      %p223 = scmp.eq.s32.totalorder %s29, 0
      %p224 = por %p222, %p223
      %s226 = sadd.s32 %s225, 1
      %p229 = scmp.eq.s32.totalorder %s23, 1
      %p230 = scmp.ne.s32.totalorder %s225, %s227
      %p231 = scmp.eq.s32.totalorder %s23, 0
      %p232 = por %p230, %p231
      %p233 = scmp.ne.s32.totalorder %s225, %s227
      %p234 = scmp.eq.s32.totalorder %s28, 1
      %p235 = por %p233, %p234
      %p236 = scmp.ne.s32.totalorder %s227, %s228
      %p237 = scmp.eq.s32.totalorder %s28, 0
      %p238 = por %p236, %p237
      %p239 = scmp.ne.s32.totalorder %s227, %s228
      %p240 = scmp.eq.s32.totalorder %s29, 1
      %p241 = por %p239, %p240
      %p243 = scmp.ne.s32.totalorder %s228, %s242
      %p244 = scmp.eq.s32.totalorder %s29, 0
      %p245 = por %p243, %p244
      %s247 = sadd.s32 %s246, 1
      %p250 = scmp.eq.s32.totalorder %s23, 1
      %p251 = scmp.ne.s32.totalorder %s246, %s248
      %p252 = scmp.eq.s32.totalorder %s23, 0
      %p253 = por %p251, %p252
      %p254 = scmp.ne.s32.totalorder %s246, %s248
      %p255 = scmp.eq.s32.totalorder %s28, 1
      %p256 = por %p254, %p255
      %p257 = scmp.ne.s32.totalorder %s248, %s249
      %p258 = scmp.eq.s32.totalorder %s28, 0
      %p259 = por %p257, %p258
      %p260 = scmp.ne.s32.totalorder %s248, %s249
      %p261 = scmp.eq.s32.totalorder %s29, 1
      %p262 = por %p260, %p261
      %p264 = scmp.ne.s32.totalorder %s249, %s263
      %p265 = scmp.eq.s32.totalorder %s29, 0
      %p266 = por %p264, %p265
      %s268 = sadd.s32 %s267, 1
      %p271 = scmp.eq.s32.totalorder %s23, 1
      %p272 = scmp.ne.s32.totalorder %s267, %s269
      %p273 = scmp.eq.s32.totalorder %s23, 0
      %p274 = por %p272, %p273
      %p275 = scmp.ne.s32.totalorder %s267, %s269
      %p276 = scmp.eq.s32.totalorder %s28, 1
      %p277 = por %p275, %p276
      %p278 = scmp.ne.s32.totalorder %s269, %s270
      %p279 = scmp.eq.s32.totalorder %s28, 0
      %p280 = por %p278, %p279
      %p281 = scmp.ne.s32.totalorder %s269, %s270
      %p282 = scmp.eq.s32.totalorder %s29, 1
      %p283 = por %p281, %p282
      %p285 = scmp.ne.s32.totalorder %s270, %s284
      %p286 = scmp.eq.s32.totalorder %s29, 0
      %p287 = por %p285, %p286
      %s289 = sadd.s32 %s288, 1
      %p292 = scmp.eq.s32.totalorder %s23, 1
      %p293 = scmp.ne.s32.totalorder %s288, %s290
      %p294 = scmp.eq.s32.totalorder %s23, 0
      %p295 = por %p293, %p294
      %p296 = scmp.ne.s32.totalorder %s288, %s290
      %p297 = scmp.eq.s32.totalorder %s28, 1
      %p298 = por %p296, %p297
      %p299 = scmp.ne.s32.totalorder %s290, %s291
      %p300 = scmp.eq.s32.totalorder %s28, 0
      %p301 = por %p299, %p300
      %p302 = scmp.ne.s32.totalorder %s290, %s291
      %p303 = scmp.eq.s32.totalorder %s29, 1
      %p304 = por %p302, %p303
      %p306 = scmp.ne.s32.totalorder %s291, %s305
      %p307 = scmp.eq.s32.totalorder %s29, 0
      %p308 = por %p306, %p307
      %s310 = sadd.s32 %s309, 1
      %p313 = scmp.eq.s32.totalorder %s23, 1
      %p314 = scmp.ne.s32.totalorder %s309, %s311
      %p315 = scmp.eq.s32.totalorder %s23, 0
      %p316 = por %p314, %p315
      %p317 = scmp.ne.s32.totalorder %s309, %s311
      %p318 = scmp.eq.s32.totalorder %s28, 1
      %p319 = por %p317, %p318
      %p320 = scmp.ne.s32.totalorder %s311, %s312
      %p321 = scmp.eq.s32.totalorder %s28, 0
      %p322 = por %p320, %p321
      %p323 = scmp.ne.s32.totalorder %s311, %s312
      %p324 = scmp.eq.s32.totalorder %s29, 1
      %p325 = por %p323, %p324
      %p327 = scmp.ne.s32.totalorder %s312, %s326
      %p328 = scmp.eq.s32.totalorder %s29, 0
      %p329 = por %p327, %p328
      %s330 = ssub.s32 %s23, %s30
      %p331 = scmp.eq.s32.totalorder %s330, 0
      %s333 = sadd.s32 %s332, 1
      %s334 = scalar_select %p331, %s332, %s333
      %p337 = pneg %p331
      %p338 = scmp.eq.s32.totalorder %s23, 1
      %p339 = por %p337, %p338
      %p340 = scmp.ne.s32.totalorder %s332, %s335
      %p341 = scmp.eq.s32.totalorder %s23, 0
      %p342 = por %p340, %p341
      %p343 = scmp.ne.s32.totalorder %s332, %s335
      %p344 = scmp.eq.s32.totalorder %s28, 1
      %p345 = por %p343, %p344
      %p346 = scmp.ne.s32.totalorder %s335, %s336
      %p347 = scmp.eq.s32.totalorder %s28, 0
      %p348 = por %p346, %p347
      %p349 = scmp.ne.s32.totalorder %s335, %s336
      %p350 = scmp.eq.s32.totalorder %s29, 1
      %p351 = por %p349, %p350
      %p353 = scmp.ne.s32.totalorder %s336, %s352
      %p354 = scmp.eq.s32.totalorder %s29, 0
      %p355 = por %p353, %p354
      %p356 = scmp.le.s32.totalorder 1, %s23
      %p357 = scmp.lt.s32.totalorder %s23, 3
      %p358 = pnand %p356, %p357
      %p359 = pneg %p358
      // Predicated region
      $region9: #{tpu_custom_call.1} parent=5 // pred_check
        _
      $region10: #{tpu_custom_call.1} parent=5 // pred_check_branch
        %361 = sbr.rel (%p358) target = $region12
      $region11: #{tpu_custom_call.1} parent=5 // pred_region
        %s362 = ssub.s32 %s23, 1
        // Predicated region
        $region13: #{tpu_custom_call.1} parent=11 // pred_check
          %p363 = pneg %p70
        $region14: #{tpu_custom_call.1} parent=11 // pred_check_branch
          %365 = sbr.rel (%p363) target = $region16
        $region15: #{tpu_custom_call.1} parent=11 // pred_region
          _
        $region16: #{tpu_custom_call.1} parent=11 // pred_fallthru
          _
        // Predicated region
        $region17: #{tpu_custom_call.1} parent=11 // pred_check
          %p366 = pneg %p91
        $region18: #{tpu_custom_call.1} parent=11 // pred_check_branch
          %368 = sbr.rel (%p366) target = $region20
        $region19: #{tpu_custom_call.1} parent=11 // pred_region
          _
        $region20: #{tpu_custom_call.1} parent=11 // pred_fallthru
          _
        // Predicated region
        $region21: #{tpu_custom_call.1} parent=11 // pred_check
          %p369 = pneg %p112
        $region22: #{tpu_custom_call.1} parent=11 // pred_check_branch
          %371 = sbr.rel (%p369) target = $region24
        $region23: #{tpu_custom_call.1} parent=11 // pred_region
          _
        $region24: #{tpu_custom_call.1} parent=11 // pred_fallthru
          _
        // Predicated region
        $region25: #{tpu_custom_call.1} parent=11 // pred_check
          %p372 = pneg %p133
        $region26: #{tpu_custom_call.1} parent=11 // pred_check_branch
          %374 = sbr.rel (%p372) target = $region28
        $region27: #{tpu_custom_call.1} parent=11 // pred_region
          _
        $region28: #{tpu_custom_call.1} parent=11 // pred_fallthru
          _
        // Predicated region
        $region29: #{tpu_custom_call.1} parent=11 // pred_check
          %p375 = pneg %p154
        $region30: #{tpu_custom_call.1} parent=11 // pred_check_branch
          %377 = sbr.rel (%p375) target = $region32
        $region31: #{tpu_custom_call.1} parent=11 // pred_region
          _
        $region32: #{tpu_custom_call.1} parent=11 // pred_fallthru
          _
        // Predicated region
        $region33: #{tpu_custom_call.1} parent=11 // pred_check
          %p378 = pneg %p175
        $region34: #{tpu_custom_call.1} parent=11 // pred_check_branch
          %380 = sbr.rel (%p378) target = $region36
        $region35: #{tpu_custom_call.1} parent=11 // pred_region
          _
        $region36: #{tpu_custom_call.1} parent=11 // pred_fallthru
          _
        // Predicated region
        $region37: #{tpu_custom_call.1} parent=11 // pred_check
          %p381 = pneg %p196
        $region38: #{tpu_custom_call.1} parent=11 // pred_check_branch
          %383 = sbr.rel (%p381) target = $region40
        $region39: #{tpu_custom_call.1} parent=11 // pred_region
          _
        $region40: #{tpu_custom_call.1} parent=11 // pred_fallthru
          _
        // Predicated region
        $region41: #{tpu_custom_call.1} parent=11 // pred_check
          %p384 = pneg %p217
        $region42: #{tpu_custom_call.1} parent=11 // pred_check_branch
          %386 = sbr.rel (%p384) target = $region44
        $region43: #{tpu_custom_call.1} parent=11 // pred_region
          _
        $region44: #{tpu_custom_call.1} parent=11 // pred_fallthru
          _
        // Predicated region
        $region45: #{tpu_custom_call.1} parent=11 // pred_check
          %p387 = pneg %p238
        $region46: #{tpu_custom_call.1} parent=11 // pred_check_branch
          %389 = sbr.rel (%p387) target = $region48
        $region47: #{tpu_custom_call.1} parent=11 // pred_region
          _
        $region48: #{tpu_custom_call.1} parent=11 // pred_fallthru
          _
        // Predicated region
        $region49: #{tpu_custom_call.1} parent=11 // pred_check
          %p390 = pneg %p259
        $region50: #{tpu_custom_call.1} parent=11 // pred_check_branch
          %392 = sbr.rel (%p390) target = $region52
        $region51: #{tpu_custom_call.1} parent=11 // pred_region
          _
        $region52: #{tpu_custom_call.1} parent=11 // pred_fallthru
          _
        // Predicated region
        $region53: #{tpu_custom_call.1} parent=11 // pred_check
          %p393 = pneg %p280
        $region54: #{tpu_custom_call.1} parent=11 // pred_check_branch
          %395 = sbr.rel (%p393) target = $region56
        $region55: #{tpu_custom_call.1} parent=11 // pred_region
          _
        $region56: #{tpu_custom_call.1} parent=11 // pred_fallthru
          _
        // Predicated region
        $region57: #{tpu_custom_call.1} parent=11 // pred_check
          %p396 = pneg %p301
        $region58: #{tpu_custom_call.1} parent=11 // pred_check_branch
          %398 = sbr.rel (%p396) target = $region60
        $region59: #{tpu_custom_call.1} parent=11 // pred_region
          _
        $region60: #{tpu_custom_call.1} parent=11 // pred_fallthru
          _
        // Predicated region
        $region61: #{tpu_custom_call.1} parent=11 // pred_check
          %p399 = pneg %p322
        $region62: #{tpu_custom_call.1} parent=11 // pred_check_branch
          %401 = sbr.rel (%p399) target = $region64
        $region63: #{tpu_custom_call.1} parent=11 // pred_region
          _
        $region64: #{tpu_custom_call.1} parent=11 // pred_fallthru
          _
      $region12: #{tpu_custom_call.1} parent=5 // pred_fallthru
        _
      %p402 = scmp.lt.s32.totalorder %s23, 2
      // Predicated region
      $region65: #{tpu_custom_call.1} parent=5 // pred_check
        %p403 = pneg %p402
      $region66: #{tpu_custom_call.1} parent=5 // pred_check_branch
        %405 = sbr.rel (%p403) target = $region68
      $region67: #{tpu_custom_call.1} parent=5 // pred_region
        // Predicated region
        $region69: #{tpu_custom_call.1} parent=67 // pred_check
          %p406 = pneg %p43
        $region70: #{tpu_custom_call.1} parent=67 // pred_check_branch
          %408 = sbr.rel (%p406) target = $region72
        $region71: #{tpu_custom_call.1} parent=67 // pred_region
          %p409 = scmp.lt.s32.totalorder %s23, 1
          %s410 = scalar_select %p409, %s23, 1
          %s411 = smul.addr %s410, 57
          %s412 = smul.addr %s411, 8
          %s413 = scalar_lea.vmem %s0, %s412
        $region72: #{tpu_custom_call.1} parent=67 // pred_fallthru
          _
      $region68: #{tpu_custom_call.1} parent=5 // pred_fallthru
        _
      %p414 = scmp.le.s32.totalorder 1, %s23
      %p415 = scmp.lt.s32.totalorder %s23, 3
      %p416 = pnand %p414, %p415
      %p417 = pneg %p416
      // Predicated region
      $region73: #{tpu_custom_call.1} parent=5 // pred_check
        _
      $region74: #{tpu_custom_call.1} parent=5 // pred_check_branch
        %419 = sbr.rel (%p416) target = $region76
      $region75: #{tpu_custom_call.1} parent=5 // pred_region
        %s420 = ssub.s32 %s23, 1
        %p421 = scmp.lt.s32.totalorder %s28, 1
        %s422 = scalar_select %p421, %s28, 1
        %s423 = smul.addr %s422, 57
        %s424 = smul.addr %s423, 8
        %s425 = scalar_lea.vmem %s0, %s424
        %p426 = pneg %p49
        %p427 = pneg %p46
        %p428 = pneg %p70
        %p429 = pneg %p67
        %p430 = pneg %p91
        %p431 = pneg %p88
        %p432 = pneg %p112
        %p433 = pneg %p109
        %p434 = pneg %p133
        %p435 = pneg %p130
        %p436 = pneg %p154
        %p437 = pneg %p151
        %p438 = pneg %p175
        %p439 = pneg %p172
        %p440 = pneg %p196
        %p441 = pneg %p193
        %p442 = pneg %p217
        %p443 = pneg %p214
        %p444 = pneg %p238
        %p445 = pneg %p235
        %p446 = pneg %p259
        %p447 = pneg %p256
        %p448 = pneg %p280
        %p449 = pneg %p277
        %p450 = pneg %p301
        %p451 = pneg %p298
        %p452 = pneg %p322
        %p453 = pneg %p319
        %p454 = pneg %p348
        %p455 = pneg %p345
        %s456 = sand.u32 %s335, 1
        %s457 = scalar_lea.sflag [#allocation4], %s456
        %s458 = sand.u32 %s335, 1
        %s459 = smul.addr %s458, 32
        %s460 = scalar_lea.vmem [#allocation3], %s459
        %p461 = scmp.lt.s32.totalorder %s28, 1
        %s462 = scalar_select %p461, %s28, 1
        %s463 = smul.addr %s462, 57
        %s464 = smul.addr %s463, 8
        %s465 = scalar_lea.vmem %s0, %s464
        %v466 = vld [vmem:[%s465] sm:$0xff]
        %v467 = vld [vmem:[%s465 + $0x8] sm:$0xff]
        %v468 = vld [vmem:[%s465 + $0x10] sm:$0xff]
        %v469 = vld [vmem:[%s465 + $0x18] sm:$0xff]
        %v470 = vld [vmem:[%s465 + $0x20] sm:$0xff]
        %v471 = vld [vmem:[%s465 + $0x28] sm:$0xff]
        %v472 = vld [vmem:[%s465 + $0x30] sm:$0xff]
        %v473 = vld [vmem:[%s465 + $0x38] sm:$0xff]
        %v474 = vld [vmem:[%s465 + $0x40] sm:$0xff]
        %v475 = vld [vmem:[%s465 + $0x48] sm:$0xff]
        %v476 = vld [vmem:[%s465 + $0x50] sm:$0xff]
        %v477 = vld [vmem:[%s465 + $0x58] sm:$0xff]
        %v478 = vld [vmem:[%s465 + $0x60] sm:$0xff]
        %v479 = vld [vmem:[%s465 + $0x68] sm:$0xff]
        %v480 = vld [vmem:[%s465 + $0x70] sm:$0xff]
        %v481 = vld [vmem:[%s465 + $0x78] sm:$0xff]
        %v482 = vld [vmem:[%s465 + $0x80] sm:$0xff]
        %v483 = vld [vmem:[%s465 + $0x88] sm:$0xff]
        %v484 = vld [vmem:[%s465 + $0x90] sm:$0xff]
        %v485 = vld [vmem:[%s465 + $0x98] sm:$0xff]
        %v486 = vld [vmem:[%s465 + $0xa0] sm:$0xff]
        %v487 = vld [vmem:[%s465 + $0xa8] sm:$0xff]
        %v488 = vld [vmem:[%s465 + $0xb0] sm:$0xff]
        %v489 = vld [vmem:[%s465 + $0xb8] sm:$0xff]
        %v490 = vld [vmem:[%s465 + $0xc0] sm:$0xff]
        %v491 = vld [vmem:[%s465 + $0xc8] sm:$0xff]
        %v492 = vld [vmem:[%s465 + $0xd0] sm:$0xff]
        %v493 = vld [vmem:[%s465 + $0xd8] sm:$0xff]
        %v494 = vld [vmem:[%s465 + $0xe0] sm:$0xff]
        %v495 = vld [vmem:[%s465 + $0xe8] sm:$0xff]
        %v496 = vld [vmem:[%s465 + $0xf0] sm:$0xff]
        %v497 = vld [vmem:[%s465 + $0xf8] sm:$0xff]
        %v498 = vld [vmem:[%s465 + $0x100] sm:$0xff]
        %v499 = vld [vmem:[%s465 + $0x108] sm:$0xff]
        %v500 = vld [vmem:[%s465 + $0x110] sm:$0xff]
        %v501 = vld [vmem:[%s465 + $0x118] sm:$0xff]
        %v502 = vld [vmem:[%s465 + $0x120] sm:$0xff]
        %v503 = vld [vmem:[%s465 + $0x128] sm:$0xff]
        %v504 = vld [vmem:[%s465 + $0x130] sm:$0xff]
        %v505 = vld [vmem:[%s465 + $0x138] sm:$0xff]
        %v506 = vld [vmem:[%s465 + $0x140] sm:$0xff]
        %v507 = vld [vmem:[%s465 + $0x148] sm:$0xff]
        %v508 = vld [vmem:[%s465 + $0x150] sm:$0xff]
        %v509 = vld [vmem:[%s465 + $0x158] sm:$0xff]
        %v510 = vld [vmem:[%s465 + $0x160] sm:$0xff]
        %v511 = vld [vmem:[%s465 + $0x168] sm:$0xff]
        %v512 = vld [vmem:[%s465 + $0x170] sm:$0xff]
        %v513 = vld [vmem:[%s465 + $0x178] sm:$0xff]
        %v514 = vld [vmem:[%s465 + $0x1] sm:$0xff]
        %v515 = vld [vmem:[%s465 + $0x9] sm:$0xff]
        %v516 = vld [vmem:[%s465 + $0x11] sm:$0xff]
        %v517 = vld [vmem:[%s465 + $0x19] sm:$0xff]
        %v518 = vld [vmem:[%s465 + $0x21] sm:$0xff]
        %v519 = vld [vmem:[%s465 + $0x29] sm:$0xff]
        %v520 = vld [vmem:[%s465 + $0x31] sm:$0xff]
        %v521 = vld [vmem:[%s465 + $0x39] sm:$0xff]
        %v522 = vld [vmem:[%s465 + $0x41] sm:$0xff]
        %v523 = vld [vmem:[%s465 + $0x49] sm:$0xff]
        %v524 = vld [vmem:[%s465 + $0x51] sm:$0xff]
        %v525 = vld [vmem:[%s465 + $0x59] sm:$0xff]
        %v526 = vld [vmem:[%s465 + $0x61] sm:$0xff]
        %v527 = vld [vmem:[%s465 + $0x69] sm:$0xff]
        %v528 = vld [vmem:[%s465 + $0x71] sm:$0xff]
        %v529 = vld [vmem:[%s465 + $0x79] sm:$0xff]
        %v530 = vld [vmem:[%s465 + $0x81] sm:$0xff]
        %v531 = vld [vmem:[%s465 + $0x89] sm:$0xff]
        %v532 = vld [vmem:[%s465 + $0x91] sm:$0xff]
        %v533 = vld [vmem:[%s465 + $0x99] sm:$0xff]
        %v534 = vld [vmem:[%s465 + $0xa1] sm:$0xff]
        %v535 = vld [vmem:[%s465 + $0xa9] sm:$0xff]
        %v536 = vld [vmem:[%s465 + $0xb1] sm:$0xff]
        %v537 = vld [vmem:[%s465 + $0xb9] sm:$0xff]
        %v538 = vld [vmem:[%s465 + $0xc1] sm:$0xff]
        %v539 = vld [vmem:[%s465 + $0xc9] sm:$0xff]
        %v540 = vld [vmem:[%s465 + $0xd1] sm:$0xff]
        %v541 = vld [vmem:[%s465 + $0xd9] sm:$0xff]
        %v542 = vld [vmem:[%s465 + $0xe1] sm:$0xff]
        %v543 = vld [vmem:[%s465 + $0xe9] sm:$0xff]
        %v544 = vld [vmem:[%s465 + $0xf1] sm:$0xff]
        %v545 = vld [vmem:[%s465 + $0xf9] sm:$0xff]
        %v546 = vld [vmem:[%s465 + $0x101] sm:$0xff]
        %v547 = vld [vmem:[%s465 + $0x109] sm:$0xff]
        %v548 = vld [vmem:[%s465 + $0x111] sm:$0xff]
        %v549 = vld [vmem:[%s465 + $0x119] sm:$0xff]
        %v550 = vld [vmem:[%s465 + $0x121] sm:$0xff]
        %v551 = vld [vmem:[%s465 + $0x129] sm:$0xff]
        %v552 = vld [vmem:[%s465 + $0x131] sm:$0xff]
        %v553 = vld [vmem:[%s465 + $0x139] sm:$0xff]
        %v554 = vld [vmem:[%s465 + $0x141] sm:$0xff]
        %v555 = vld [vmem:[%s465 + $0x149] sm:$0xff]
        %v556 = vld [vmem:[%s465 + $0x151] sm:$0xff]
        %v557 = vld [vmem:[%s465 + $0x159] sm:$0xff]
        %v558 = vld [vmem:[%s465 + $0x161] sm:$0xff]
        %v559 = vld [vmem:[%s465 + $0x169] sm:$0xff]
        %v560 = vld [vmem:[%s465 + $0x171] sm:$0xff]
        %v561 = vld [vmem:[%s465 + $0x179] sm:$0xff]
        %v562 = vld [vmem:[%s465 + $0x2] sm:$0xff]
        %v563 = vld [vmem:[%s465 + $0xa] sm:$0xff]
        %v564 = vld [vmem:[%s465 + $0x12] sm:$0xff]
        %v565 = vld [vmem:[%s465 + $0x1a] sm:$0xff]
        %v566 = vld [vmem:[%s465 + $0x22] sm:$0xff]
        %v567 = vld [vmem:[%s465 + $0x2a] sm:$0xff]
        %v568 = vld [vmem:[%s465 + $0x32] sm:$0xff]
        %v569 = vld [vmem:[%s465 + $0x3a] sm:$0xff]
        %v570 = vld [vmem:[%s465 + $0x42] sm:$0xff]
        %v571 = vld [vmem:[%s465 + $0x4a] sm:$0xff]
        %v572 = vld [vmem:[%s465 + $0x52] sm:$0xff]
        %v573 = vld [vmem:[%s465 + $0x5a] sm:$0xff]
        %v574 = vld [vmem:[%s465 + $0x62] sm:$0xff]
        %v575 = vld [vmem:[%s465 + $0x6a] sm:$0xff]
        %v576 = vld [vmem:[%s465 + $0x72] sm:$0xff]
        %v577 = vld [vmem:[%s465 + $0x7a] sm:$0xff]
        %v578 = vld [vmem:[%s465 + $0x82] sm:$0xff]
        %v579 = vld [vmem:[%s465 + $0x8a] sm:$0xff]
        %v580 = vld [vmem:[%s465 + $0x92] sm:$0xff]
        %v581 = vld [vmem:[%s465 + $0x9a] sm:$0xff]
        %v582 = vld [vmem:[%s465 + $0xa2] sm:$0xff]
        %v583 = vld [vmem:[%s465 + $0xaa] sm:$0xff]
        %v584 = vld [vmem:[%s465 + $0xb2] sm:$0xff]
        %v585 = vld [vmem:[%s465 + $0xba] sm:$0xff]
        %v586 = vld [vmem:[%s465 + $0xc2] sm:$0xff]
        %v587 = vld [vmem:[%s465 + $0xca] sm:$0xff]
        %v588 = vld [vmem:[%s465 + $0xd2] sm:$0xff]
        %v589 = vld [vmem:[%s465 + $0xda] sm:$0xff]
        %v590 = vld [vmem:[%s465 + $0xe2] sm:$0xff]
        %v591 = vld [vmem:[%s465 + $0xea] sm:$0xff]
        %v592 = vld [vmem:[%s465 + $0xf2] sm:$0xff]
        %v593 = vld [vmem:[%s465 + $0xfa] sm:$0xff]
        %v594 = vld [vmem:[%s465 + $0x102] sm:$0xff]
        %v595 = vld [vmem:[%s465 + $0x10a] sm:$0xff]
        %v596 = vld [vmem:[%s465 + $0x112] sm:$0xff]
        %v597 = vld [vmem:[%s465 + $0x11a] sm:$0xff]
        %v598 = vld [vmem:[%s465 + $0x122] sm:$0xff]
        %v599 = vld [vmem:[%s465 + $0x12a] sm:$0xff]
        %v600 = vld [vmem:[%s465 + $0x132] sm:$0xff]
        %v601 = vld [vmem:[%s465 + $0x13a] sm:$0xff]
        %v602 = vld [vmem:[%s465 + $0x142] sm:$0xff]
        %v603 = vld [vmem:[%s465 + $0x14a] sm:$0xff]
        %v604 = vld [vmem:[%s465 + $0x152] sm:$0xff]
        %v605 = vld [vmem:[%s465 + $0x15a] sm:$0xff]
        %v606 = vld [vmem:[%s465 + $0x162] sm:$0xff]
        %v607 = vld [vmem:[%s465 + $0x16a] sm:$0xff]
        %v608 = vld [vmem:[%s465 + $0x172] sm:$0xff]
        %v609 = vld [vmem:[%s465 + $0x17a] sm:$0xff]
        %v610 = vld [vmem:[%s465 + $0x180] sm:$0xff]
        %v611 = vld [vmem:[%s465 + $0x188] sm:$0xff]
        %v612 = vld [vmem:[%s465 + $0x190] sm:$0xff]
        %v613 = vld [vmem:[%s465 + $0x181] sm:$0xff]
        %v614 = vld [vmem:[%s465 + $0x189] sm:$0xff]
        %v615 = vld [vmem:[%s465 + $0x191] sm:$0xff]
        %v616 = vld [vmem:[%s465 + $0x182] sm:$0xff]
        %v617 = vld [vmem:[%s465 + $0x18a] sm:$0xff]
        %v618 = vld [vmem:[%s465 + $0x192] sm:$0xff]
        %v619 = vld [vmem:[%s465 + $0x198] sm:$0xff]
        %v620 = vld [vmem:[%s465 + $0x1a0] sm:$0xff]
        %v621 = vld [vmem:[%s465 + $0x1a8] sm:$0xff]
        %v622 = vld [vmem:[%s465 + $0x199] sm:$0xff]
        %v623 = vld [vmem:[%s465 + $0x1a1] sm:$0xff]
        %v624 = vld [vmem:[%s465 + $0x1a9] sm:$0xff]
        %v625 = vld [vmem:[%s465 + $0x19a] sm:$0xff]
        %v626 = vld [vmem:[%s465 + $0x1a2] sm:$0xff]
        %v627 = vld [vmem:[%s465 + $0x1aa] sm:$0xff]
        %676 = vrot.lane.b32.xlu0 %v514, 4
        %v677 = vpop.permute.xlu0 %676
        %678 = vrot.lane.b32.xlu0 %v515, 4
        %v679 = vpop.permute.xlu0 %678
        %680 = vrot.lane.b32.xlu0 %v516, 4
        %v681 = vpop.permute.xlu0 %680
        %682 = vrot.lane.b32.xlu0 %v517, 4
        %v683 = vpop.permute.xlu0 %682
        %684 = vrot.lane.b32.xlu0 %v518, 4
        %v685 = vpop.permute.xlu0 %684
        %686 = vrot.lane.b32.xlu0 %v519, 4
        %v687 = vpop.permute.xlu0 %686
        %688 = vrot.lane.b32.xlu0 %v520, 4
        %v689 = vpop.permute.xlu0 %688
        %690 = vrot.lane.b32.xlu0 %v521, 4
        %v691 = vpop.permute.xlu0 %690
        %692 = vrot.lane.b32.xlu0 %v522, 4
        %v693 = vpop.permute.xlu0 %692
        %694 = vrot.lane.b32.xlu0 %v523, 4
        %v695 = vpop.permute.xlu0 %694
        %696 = vrot.lane.b32.xlu0 %v524, 4
        %v697 = vpop.permute.xlu0 %696
        %698 = vrot.lane.b32.xlu0 %v525, 4
        %v699 = vpop.permute.xlu0 %698
        %700 = vrot.lane.b32.xlu0 %v526, 4
        %v701 = vpop.permute.xlu0 %700
        %702 = vrot.lane.b32.xlu0 %v527, 4
        %v703 = vpop.permute.xlu0 %702
        %704 = vrot.lane.b32.xlu0 %v528, 4
        %v705 = vpop.permute.xlu0 %704
        %706 = vrot.lane.b32.xlu0 %v529, 4
        %v707 = vpop.permute.xlu0 %706
        %708 = vrot.lane.b32.xlu0 %v530, 4
        %v709 = vpop.permute.xlu0 %708
        %710 = vrot.lane.b32.xlu0 %v531, 4
        %v711 = vpop.permute.xlu0 %710
        %712 = vrot.lane.b32.xlu0 %v532, 4
        %v713 = vpop.permute.xlu0 %712
        %714 = vrot.lane.b32.xlu0 %v533, 4
        %v715 = vpop.permute.xlu0 %714
        %716 = vrot.lane.b32.xlu0 %v534, 4
        %v717 = vpop.permute.xlu0 %716
        %718 = vrot.lane.b32.xlu0 %v535, 4
        %v719 = vpop.permute.xlu0 %718
        %720 = vrot.lane.b32.xlu0 %v536, 4
        %v721 = vpop.permute.xlu0 %720
        %722 = vrot.lane.b32.xlu0 %v537, 4
        %v723 = vpop.permute.xlu0 %722
        %724 = vrot.lane.b32.xlu0 %v538, 4
        %v725 = vpop.permute.xlu0 %724
        %726 = vrot.lane.b32.xlu0 %v539, 4
        %v727 = vpop.permute.xlu0 %726
        %728 = vrot.lane.b32.xlu0 %v540, 4
        %v729 = vpop.permute.xlu0 %728
        %730 = vrot.lane.b32.xlu0 %v541, 4
        %v731 = vpop.permute.xlu0 %730
        %732 = vrot.lane.b32.xlu0 %v542, 4
        %v733 = vpop.permute.xlu0 %732
        %734 = vrot.lane.b32.xlu0 %v543, 4
        %v735 = vpop.permute.xlu0 %734
        %736 = vrot.lane.b32.xlu0 %v544, 4
        %v737 = vpop.permute.xlu0 %736
        %738 = vrot.lane.b32.xlu0 %v545, 4
        %v739 = vpop.permute.xlu0 %738
        %740 = vrot.lane.b32.xlu0 %v546, 4
        %v741 = vpop.permute.xlu0 %740
        %742 = vrot.lane.b32.xlu0 %v547, 4
        %v743 = vpop.permute.xlu0 %742
        %744 = vrot.lane.b32.xlu0 %v548, 4
        %v745 = vpop.permute.xlu0 %744
        %746 = vrot.lane.b32.xlu0 %v549, 4
        %v747 = vpop.permute.xlu0 %746
        %748 = vrot.lane.b32.xlu0 %v550, 4
        %v749 = vpop.permute.xlu0 %748
        %750 = vrot.lane.b32.xlu0 %v551, 4
        %v751 = vpop.permute.xlu0 %750
        %752 = vrot.lane.b32.xlu0 %v552, 4
        %v753 = vpop.permute.xlu0 %752
        %754 = vrot.lane.b32.xlu0 %v553, 4
        %v755 = vpop.permute.xlu0 %754
        %756 = vrot.lane.b32.xlu0 %v554, 4
        %v757 = vpop.permute.xlu0 %756
        %758 = vrot.lane.b32.xlu0 %v555, 4
        %v759 = vpop.permute.xlu0 %758
        %760 = vrot.lane.b32.xlu0 %v556, 4
        %v761 = vpop.permute.xlu0 %760
        %762 = vrot.lane.b32.xlu0 %v557, 4
        %v763 = vpop.permute.xlu0 %762
        %764 = vrot.lane.b32.xlu0 %v558, 4
        %v765 = vpop.permute.xlu0 %764
        %766 = vrot.lane.b32.xlu0 %v559, 4
        %v767 = vpop.permute.xlu0 %766
        %768 = vrot.lane.b32.xlu0 %v560, 4
        %v769 = vpop.permute.xlu0 %768
        %770 = vrot.lane.b32.xlu0 %v561, 4
        %v771 = vpop.permute.xlu0 %770
        %868 = vrot.lane.b32.xlu0 %v562, 8
        %v869 = vpop.permute.xlu0 %868
        %870 = vrot.lane.b32.xlu0 %v563, 8
        %v871 = vpop.permute.xlu0 %870
        %872 = vrot.lane.b32.xlu0 %v564, 8
        %v873 = vpop.permute.xlu0 %872
        %874 = vrot.lane.b32.xlu0 %v565, 8
        %v875 = vpop.permute.xlu0 %874
        %876 = vrot.lane.b32.xlu0 %v566, 8
        %v877 = vpop.permute.xlu0 %876
        %878 = vrot.lane.b32.xlu0 %v567, 8
        %v879 = vpop.permute.xlu0 %878
        %880 = vrot.lane.b32.xlu0 %v568, 8
        %v881 = vpop.permute.xlu0 %880
        %882 = vrot.lane.b32.xlu0 %v569, 8
        %v883 = vpop.permute.xlu0 %882
        %884 = vrot.lane.b32.xlu0 %v570, 8
        %v885 = vpop.permute.xlu0 %884
        %886 = vrot.lane.b32.xlu0 %v571, 8
        %v887 = vpop.permute.xlu0 %886
        %888 = vrot.lane.b32.xlu0 %v572, 8
        %v889 = vpop.permute.xlu0 %888
        %890 = vrot.lane.b32.xlu0 %v573, 8
        %v891 = vpop.permute.xlu0 %890
        %892 = vrot.lane.b32.xlu0 %v574, 8
        %v893 = vpop.permute.xlu0 %892
        %894 = vrot.lane.b32.xlu0 %v575, 8
        %v895 = vpop.permute.xlu0 %894
        %896 = vrot.lane.b32.xlu0 %v576, 8
        %v897 = vpop.permute.xlu0 %896
        %898 = vrot.lane.b32.xlu0 %v577, 8
        %v899 = vpop.permute.xlu0 %898
        %900 = vrot.lane.b32.xlu0 %v578, 8
        %v901 = vpop.permute.xlu0 %900
        %902 = vrot.lane.b32.xlu0 %v579, 8
        %v903 = vpop.permute.xlu0 %902
        %904 = vrot.lane.b32.xlu0 %v580, 8
        %v905 = vpop.permute.xlu0 %904
        %906 = vrot.lane.b32.xlu0 %v581, 8
        %v907 = vpop.permute.xlu0 %906
        %908 = vrot.lane.b32.xlu0 %v582, 8
        %v909 = vpop.permute.xlu0 %908
        %910 = vrot.lane.b32.xlu0 %v583, 8
        %v911 = vpop.permute.xlu0 %910
        %912 = vrot.lane.b32.xlu0 %v584, 8
        %v913 = vpop.permute.xlu0 %912
        %914 = vrot.lane.b32.xlu0 %v585, 8
        %v915 = vpop.permute.xlu0 %914
        %916 = vrot.lane.b32.xlu0 %v586, 8
        %v917 = vpop.permute.xlu0 %916
        %918 = vrot.lane.b32.xlu0 %v587, 8
        %v919 = vpop.permute.xlu0 %918
        %920 = vrot.lane.b32.xlu0 %v588, 8
        %v921 = vpop.permute.xlu0 %920
        %922 = vrot.lane.b32.xlu0 %v589, 8
        %v923 = vpop.permute.xlu0 %922
        %924 = vrot.lane.b32.xlu0 %v590, 8
        %v925 = vpop.permute.xlu0 %924
        %926 = vrot.lane.b32.xlu0 %v591, 8
        %v927 = vpop.permute.xlu0 %926
        %928 = vrot.lane.b32.xlu0 %v592, 8
        %v929 = vpop.permute.xlu0 %928
        %930 = vrot.lane.b32.xlu0 %v593, 8
        %v931 = vpop.permute.xlu0 %930
        %932 = vrot.lane.b32.xlu0 %v594, 8
        %v933 = vpop.permute.xlu0 %932
        %934 = vrot.lane.b32.xlu0 %v595, 8
        %v935 = vpop.permute.xlu0 %934
        %936 = vrot.lane.b32.xlu0 %v596, 8
        %v937 = vpop.permute.xlu0 %936
        %938 = vrot.lane.b32.xlu0 %v597, 8
        %v939 = vpop.permute.xlu0 %938
        %940 = vrot.lane.b32.xlu0 %v598, 8
        %v941 = vpop.permute.xlu0 %940
        %942 = vrot.lane.b32.xlu0 %v599, 8
        %v943 = vpop.permute.xlu0 %942
        %944 = vrot.lane.b32.xlu0 %v600, 8
        %v945 = vpop.permute.xlu0 %944
        %946 = vrot.lane.b32.xlu0 %v601, 8
        %v947 = vpop.permute.xlu0 %946
        %948 = vrot.lane.b32.xlu0 %v602, 8
        %v949 = vpop.permute.xlu0 %948
        %950 = vrot.lane.b32.xlu0 %v603, 8
        %v951 = vpop.permute.xlu0 %950
        %952 = vrot.lane.b32.xlu0 %v604, 8
        %v953 = vpop.permute.xlu0 %952
        %954 = vrot.lane.b32.xlu0 %v605, 8
        %v955 = vpop.permute.xlu0 %954
        %956 = vrot.lane.b32.xlu0 %v606, 8
        %v957 = vpop.permute.xlu0 %956
        %958 = vrot.lane.b32.xlu0 %v607, 8
        %v959 = vpop.permute.xlu0 %958
        %960 = vrot.lane.b32.xlu0 %v608, 8
        %v961 = vpop.permute.xlu0 %960
        %962 = vrot.lane.b32.xlu0 %v609, 8
        %v963 = vpop.permute.xlu0 %962
        %1060 = vrot.lane.b32.xlu0 %v469, 12
        %v1061 = vpop.permute.xlu0 %1060
        %1062 = vrot.lane.b32.xlu0 %v470, 12
        %v1063 = vpop.permute.xlu0 %1062
        %1064 = vrot.lane.b32.xlu0 %v471, 12
        %v1065 = vpop.permute.xlu0 %1064
        %1066 = vrot.lane.b32.xlu0 %v472, 12
        %v1067 = vpop.permute.xlu0 %1066
        %1068 = vrot.lane.b32.xlu0 %v473, 12
        %v1069 = vpop.permute.xlu0 %1068
        %1070 = vrot.lane.b32.xlu0 %v474, 12
        %v1071 = vpop.permute.xlu0 %1070
        %1072 = vrot.lane.b32.xlu0 %v475, 12
        %v1073 = vpop.permute.xlu0 %1072
        %1074 = vrot.lane.b32.xlu0 %v476, 12
        %v1075 = vpop.permute.xlu0 %1074
        %1076 = vrot.lane.b32.xlu0 %v477, 12
        %v1077 = vpop.permute.xlu0 %1076
        %1078 = vrot.lane.b32.xlu0 %v478, 12
        %v1079 = vpop.permute.xlu0 %1078
        %1080 = vrot.lane.b32.xlu0 %v479, 12
        %v1081 = vpop.permute.xlu0 %1080
        %1082 = vrot.lane.b32.xlu0 %v480, 12
        %v1083 = vpop.permute.xlu0 %1082
        %1084 = vrot.lane.b32.xlu0 %v481, 12
        %v1085 = vpop.permute.xlu0 %1084
        %1086 = vrot.lane.b32.xlu0 %v482, 12
        %v1087 = vpop.permute.xlu0 %1086
        %1088 = vrot.lane.b32.xlu0 %v483, 12
        %v1089 = vpop.permute.xlu0 %1088
        %1090 = vrot.lane.b32.xlu0 %v484, 12
        %v1091 = vpop.permute.xlu0 %1090
        %1092 = vrot.lane.b32.xlu0 %v485, 12
        %v1093 = vpop.permute.xlu0 %1092
        %1094 = vrot.lane.b32.xlu0 %v486, 12
        %v1095 = vpop.permute.xlu0 %1094
        %1096 = vrot.lane.b32.xlu0 %v487, 12
        %v1097 = vpop.permute.xlu0 %1096
        %1098 = vrot.lane.b32.xlu0 %v488, 12
        %v1099 = vpop.permute.xlu0 %1098
        %1100 = vrot.lane.b32.xlu0 %v489, 12
        %v1101 = vpop.permute.xlu0 %1100
        %1102 = vrot.lane.b32.xlu0 %v490, 12
        %v1103 = vpop.permute.xlu0 %1102
        %1104 = vrot.lane.b32.xlu0 %v491, 12
        %v1105 = vpop.permute.xlu0 %1104
        %1106 = vrot.lane.b32.xlu0 %v492, 12
        %v1107 = vpop.permute.xlu0 %1106
        %1108 = vrot.lane.b32.xlu0 %v493, 12
        %v1109 = vpop.permute.xlu0 %1108
        %1110 = vrot.lane.b32.xlu0 %v494, 12
        %v1111 = vpop.permute.xlu0 %1110
        %1112 = vrot.lane.b32.xlu0 %v495, 12
        %v1113 = vpop.permute.xlu0 %1112
        %1114 = vrot.lane.b32.xlu0 %v496, 12
        %v1115 = vpop.permute.xlu0 %1114
        %1116 = vrot.lane.b32.xlu0 %v497, 12
        %v1117 = vpop.permute.xlu0 %1116
        %1118 = vrot.lane.b32.xlu0 %v498, 12
        %v1119 = vpop.permute.xlu0 %1118
        %1120 = vrot.lane.b32.xlu0 %v499, 12
        %v1121 = vpop.permute.xlu0 %1120
        %1122 = vrot.lane.b32.xlu0 %v500, 12
        %v1123 = vpop.permute.xlu0 %1122
        %1124 = vrot.lane.b32.xlu0 %v501, 12
        %v1125 = vpop.permute.xlu0 %1124
        %1126 = vrot.lane.b32.xlu0 %v502, 12
        %v1127 = vpop.permute.xlu0 %1126
        %1128 = vrot.lane.b32.xlu0 %v503, 12
        %v1129 = vpop.permute.xlu0 %1128
        %1130 = vrot.lane.b32.xlu0 %v504, 12
        %v1131 = vpop.permute.xlu0 %1130
        %1132 = vrot.lane.b32.xlu0 %v505, 12
        %v1133 = vpop.permute.xlu0 %1132
        %1134 = vrot.lane.b32.xlu0 %v506, 12
        %v1135 = vpop.permute.xlu0 %1134
        %1136 = vrot.lane.b32.xlu0 %v507, 12
        %v1137 = vpop.permute.xlu0 %1136
        %1138 = vrot.lane.b32.xlu0 %v508, 12
        %v1139 = vpop.permute.xlu0 %1138
        %1140 = vrot.lane.b32.xlu0 %v509, 12
        %v1141 = vpop.permute.xlu0 %1140
        %1142 = vrot.lane.b32.xlu0 %v510, 12
        %v1143 = vpop.permute.xlu0 %1142
        %1144 = vrot.lane.b32.xlu0 %v511, 12
        %v1145 = vpop.permute.xlu0 %1144
        %1146 = vrot.lane.b32.xlu0 %v512, 12
        %v1147 = vpop.permute.xlu0 %1146
        %1148 = vrot.lane.b32.xlu0 %v513, 12
        %v1149 = vpop.permute.xlu0 %1148
        %1150 = vrot.lane.b32.xlu0 %v610, 12
        %v1151 = vpop.permute.xlu0 %1150
        %1152 = vrot.lane.b32.xlu0 %v611, 12
        %v1153 = vpop.permute.xlu0 %1152
        %1154 = vrot.lane.b32.xlu0 %v612, 12
        %v1155 = vpop.permute.xlu0 %1154
        %1207 = vrot.lane.b32.xlu0 %v517, 16
        %v1208 = vpop.permute.xlu0 %1207
        %1209 = vrot.lane.b32.xlu0 %v518, 16
        %v1210 = vpop.permute.xlu0 %1209
        %1211 = vrot.lane.b32.xlu0 %v519, 16
        %v1212 = vpop.permute.xlu0 %1211
        %1213 = vrot.lane.b32.xlu0 %v520, 16
        %v1214 = vpop.permute.xlu0 %1213
        %1215 = vrot.lane.b32.xlu0 %v521, 16
        %v1216 = vpop.permute.xlu0 %1215
        %1217 = vrot.lane.b32.xlu0 %v522, 16
        %v1218 = vpop.permute.xlu0 %1217
        %1219 = vrot.lane.b32.xlu0 %v523, 16
        %v1220 = vpop.permute.xlu0 %1219
        %1221 = vrot.lane.b32.xlu0 %v524, 16
        %v1222 = vpop.permute.xlu0 %1221
        %1223 = vrot.lane.b32.xlu0 %v525, 16
        %v1224 = vpop.permute.xlu0 %1223
        %1225 = vrot.lane.b32.xlu0 %v526, 16
        %v1226 = vpop.permute.xlu0 %1225
        %1227 = vrot.lane.b32.xlu0 %v527, 16
        %v1228 = vpop.permute.xlu0 %1227
        %1229 = vrot.lane.b32.xlu0 %v528, 16
        %v1230 = vpop.permute.xlu0 %1229
        %1231 = vrot.lane.b32.xlu0 %v529, 16
        %v1232 = vpop.permute.xlu0 %1231
        %1233 = vrot.lane.b32.xlu0 %v530, 16
        %v1234 = vpop.permute.xlu0 %1233
        %1235 = vrot.lane.b32.xlu0 %v531, 16
        %v1236 = vpop.permute.xlu0 %1235
        %1237 = vrot.lane.b32.xlu0 %v532, 16
        %v1238 = vpop.permute.xlu0 %1237
        %1239 = vrot.lane.b32.xlu0 %v533, 16
        %v1240 = vpop.permute.xlu0 %1239
        %1241 = vrot.lane.b32.xlu0 %v534, 16
        %v1242 = vpop.permute.xlu0 %1241
        %1243 = vrot.lane.b32.xlu0 %v535, 16
        %v1244 = vpop.permute.xlu0 %1243
        %1245 = vrot.lane.b32.xlu0 %v536, 16
        %v1246 = vpop.permute.xlu0 %1245
        %1247 = vrot.lane.b32.xlu0 %v537, 16
        %v1248 = vpop.permute.xlu0 %1247
        %1249 = vrot.lane.b32.xlu0 %v538, 16
        %v1250 = vpop.permute.xlu0 %1249
        %1251 = vrot.lane.b32.xlu0 %v539, 16
        %v1252 = vpop.permute.xlu0 %1251
        %1253 = vrot.lane.b32.xlu0 %v540, 16
        %v1254 = vpop.permute.xlu0 %1253
        %1255 = vrot.lane.b32.xlu0 %v541, 16
        %v1256 = vpop.permute.xlu0 %1255
        %1257 = vrot.lane.b32.xlu0 %v542, 16
        %v1258 = vpop.permute.xlu0 %1257
        %1259 = vrot.lane.b32.xlu0 %v543, 16
        %v1260 = vpop.permute.xlu0 %1259
        %1261 = vrot.lane.b32.xlu0 %v544, 16
        %v1262 = vpop.permute.xlu0 %1261
        %1263 = vrot.lane.b32.xlu0 %v545, 16
        %v1264 = vpop.permute.xlu0 %1263
        %1265 = vrot.lane.b32.xlu0 %v546, 16
        %v1266 = vpop.permute.xlu0 %1265
        %1267 = vrot.lane.b32.xlu0 %v547, 16
        %v1268 = vpop.permute.xlu0 %1267
        %1269 = vrot.lane.b32.xlu0 %v548, 16
        %v1270 = vpop.permute.xlu0 %1269
        %1271 = vrot.lane.b32.xlu0 %v549, 16
        %v1272 = vpop.permute.xlu0 %1271
        %1273 = vrot.lane.b32.xlu0 %v550, 16
        %v1274 = vpop.permute.xlu0 %1273
        %1275 = vrot.lane.b32.xlu0 %v551, 16
        %v1276 = vpop.permute.xlu0 %1275
        %1277 = vrot.lane.b32.xlu0 %v552, 16
        %v1278 = vpop.permute.xlu0 %1277
        %1279 = vrot.lane.b32.xlu0 %v553, 16
        %v1280 = vpop.permute.xlu0 %1279
        %1281 = vrot.lane.b32.xlu0 %v554, 16
        %v1282 = vpop.permute.xlu0 %1281
        %1283 = vrot.lane.b32.xlu0 %v555, 16
        %v1284 = vpop.permute.xlu0 %1283
        %1285 = vrot.lane.b32.xlu0 %v556, 16
        %v1286 = vpop.permute.xlu0 %1285
        %1287 = vrot.lane.b32.xlu0 %v557, 16
        %v1288 = vpop.permute.xlu0 %1287
        %1289 = vrot.lane.b32.xlu0 %v558, 16
        %v1290 = vpop.permute.xlu0 %1289
        %1291 = vrot.lane.b32.xlu0 %v559, 16
        %v1292 = vpop.permute.xlu0 %1291
        %1293 = vrot.lane.b32.xlu0 %v560, 16
        %v1294 = vpop.permute.xlu0 %1293
        %1295 = vrot.lane.b32.xlu0 %v561, 16
        %v1296 = vpop.permute.xlu0 %1295
        %1297 = vrot.lane.b32.xlu0 %v613, 16
        %v1298 = vpop.permute.xlu0 %1297
        %1299 = vrot.lane.b32.xlu0 %v614, 16
        %v1300 = vpop.permute.xlu0 %1299
        %1301 = vrot.lane.b32.xlu0 %v615, 16
        %v1302 = vpop.permute.xlu0 %1301
        %1354 = vrot.lane.b32.xlu0 %v565, 20
        %v1355 = vpop.permute.xlu0 %1354
        %1356 = vrot.lane.b32.xlu0 %v566, 20
        %v1357 = vpop.permute.xlu0 %1356
        %1358 = vrot.lane.b32.xlu0 %v567, 20
        %v1359 = vpop.permute.xlu0 %1358
        %1360 = vrot.lane.b32.xlu0 %v568, 20
        %v1361 = vpop.permute.xlu0 %1360
        %1362 = vrot.lane.b32.xlu0 %v569, 20
        %v1363 = vpop.permute.xlu0 %1362
        %1364 = vrot.lane.b32.xlu0 %v570, 20
        %v1365 = vpop.permute.xlu0 %1364
        %1366 = vrot.lane.b32.xlu0 %v571, 20
        %v1367 = vpop.permute.xlu0 %1366
        %1368 = vrot.lane.b32.xlu0 %v572, 20
        %v1369 = vpop.permute.xlu0 %1368
        %1370 = vrot.lane.b32.xlu0 %v573, 20
        %v1371 = vpop.permute.xlu0 %1370
        %1372 = vrot.lane.b32.xlu0 %v574, 20
        %v1373 = vpop.permute.xlu0 %1372
        %1374 = vrot.lane.b32.xlu0 %v575, 20
        %v1375 = vpop.permute.xlu0 %1374
        %1376 = vrot.lane.b32.xlu0 %v576, 20
        %v1377 = vpop.permute.xlu0 %1376
        %1378 = vrot.lane.b32.xlu0 %v577, 20
        %v1379 = vpop.permute.xlu0 %1378
        %1380 = vrot.lane.b32.xlu0 %v578, 20
        %v1381 = vpop.permute.xlu0 %1380
        %1382 = vrot.lane.b32.xlu0 %v579, 20
        %v1383 = vpop.permute.xlu0 %1382
        %1384 = vrot.lane.b32.xlu0 %v580, 20
        %v1385 = vpop.permute.xlu0 %1384
        %1386 = vrot.lane.b32.xlu0 %v581, 20
        %v1387 = vpop.permute.xlu0 %1386
        %1388 = vrot.lane.b32.xlu0 %v582, 20
        %v1389 = vpop.permute.xlu0 %1388
        %1390 = vrot.lane.b32.xlu0 %v583, 20
        %v1391 = vpop.permute.xlu0 %1390
        %1392 = vrot.lane.b32.xlu0 %v584, 20
        %v1393 = vpop.permute.xlu0 %1392
        %1394 = vrot.lane.b32.xlu0 %v585, 20
        %v1395 = vpop.permute.xlu0 %1394
        %1396 = vrot.lane.b32.xlu0 %v586, 20
        %v1397 = vpop.permute.xlu0 %1396
        %1398 = vrot.lane.b32.xlu0 %v587, 20
        %v1399 = vpop.permute.xlu0 %1398
        %1400 = vrot.lane.b32.xlu0 %v588, 20
        %v1401 = vpop.permute.xlu0 %1400
        %1402 = vrot.lane.b32.xlu0 %v589, 20
        %v1403 = vpop.permute.xlu0 %1402
        %1404 = vrot.lane.b32.xlu0 %v590, 20
        %v1405 = vpop.permute.xlu0 %1404
        %1406 = vrot.lane.b32.xlu0 %v591, 20
        %v1407 = vpop.permute.xlu0 %1406
        %1408 = vrot.lane.b32.xlu0 %v592, 20
        %v1409 = vpop.permute.xlu0 %1408
        %1410 = vrot.lane.b32.xlu0 %v593, 20
        %v1411 = vpop.permute.xlu0 %1410
        %1412 = vrot.lane.b32.xlu0 %v594, 20
        %v1413 = vpop.permute.xlu0 %1412
        %1414 = vrot.lane.b32.xlu0 %v595, 20
        %v1415 = vpop.permute.xlu0 %1414
        %1416 = vrot.lane.b32.xlu0 %v596, 20
        %v1417 = vpop.permute.xlu0 %1416
        %1418 = vrot.lane.b32.xlu0 %v597, 20
        %v1419 = vpop.permute.xlu0 %1418
        %1420 = vrot.lane.b32.xlu0 %v598, 20
        %v1421 = vpop.permute.xlu0 %1420
        %1422 = vrot.lane.b32.xlu0 %v599, 20
        %v1423 = vpop.permute.xlu0 %1422
        %1424 = vrot.lane.b32.xlu0 %v600, 20
        %v1425 = vpop.permute.xlu0 %1424
        %1426 = vrot.lane.b32.xlu0 %v601, 20
        %v1427 = vpop.permute.xlu0 %1426
        %1428 = vrot.lane.b32.xlu0 %v602, 20
        %v1429 = vpop.permute.xlu0 %1428
        %1430 = vrot.lane.b32.xlu0 %v603, 20
        %v1431 = vpop.permute.xlu0 %1430
        %1432 = vrot.lane.b32.xlu0 %v604, 20
        %v1433 = vpop.permute.xlu0 %1432
        %1434 = vrot.lane.b32.xlu0 %v605, 20
        %v1435 = vpop.permute.xlu0 %1434
        %1436 = vrot.lane.b32.xlu0 %v606, 20
        %v1437 = vpop.permute.xlu0 %1436
        %1438 = vrot.lane.b32.xlu0 %v607, 20
        %v1439 = vpop.permute.xlu0 %1438
        %1440 = vrot.lane.b32.xlu0 %v608, 20
        %v1441 = vpop.permute.xlu0 %1440
        %1442 = vrot.lane.b32.xlu0 %v609, 20
        %v1443 = vpop.permute.xlu0 %1442
        %1444 = vrot.lane.b32.xlu0 %v616, 20
        %v1445 = vpop.permute.xlu0 %1444
        %1446 = vrot.lane.b32.xlu0 %v617, 20
        %v1447 = vpop.permute.xlu0 %1446
        %1448 = vrot.lane.b32.xlu0 %v618, 20
        %v1449 = vpop.permute.xlu0 %1448
        %1501 = vrot.lane.b32.xlu0 %v472, 24
        %v1502 = vpop.permute.xlu0 %1501
        %1503 = vrot.lane.b32.xlu0 %v473, 24
        %v1504 = vpop.permute.xlu0 %1503
        %1505 = vrot.lane.b32.xlu0 %v474, 24
        %v1506 = vpop.permute.xlu0 %1505
        %1507 = vrot.lane.b32.xlu0 %v475, 24
        %v1508 = vpop.permute.xlu0 %1507
        %1509 = vrot.lane.b32.xlu0 %v476, 24
        %v1510 = vpop.permute.xlu0 %1509
        %1511 = vrot.lane.b32.xlu0 %v477, 24
        %v1512 = vpop.permute.xlu0 %1511
        %1513 = vrot.lane.b32.xlu0 %v478, 24
        %v1514 = vpop.permute.xlu0 %1513
        %1515 = vrot.lane.b32.xlu0 %v479, 24
        %v1516 = vpop.permute.xlu0 %1515
        %1517 = vrot.lane.b32.xlu0 %v480, 24
        %v1518 = vpop.permute.xlu0 %1517
        %1519 = vrot.lane.b32.xlu0 %v481, 24
        %v1520 = vpop.permute.xlu0 %1519
        %1521 = vrot.lane.b32.xlu0 %v482, 24
        %v1522 = vpop.permute.xlu0 %1521
        %1523 = vrot.lane.b32.xlu0 %v483, 24
        %v1524 = vpop.permute.xlu0 %1523
        %1525 = vrot.lane.b32.xlu0 %v484, 24
        %v1526 = vpop.permute.xlu0 %1525
        %1527 = vrot.lane.b32.xlu0 %v485, 24
        %v1528 = vpop.permute.xlu0 %1527
        %1529 = vrot.lane.b32.xlu0 %v486, 24
        %v1530 = vpop.permute.xlu0 %1529
        %1531 = vrot.lane.b32.xlu0 %v487, 24
        %v1532 = vpop.permute.xlu0 %1531
        %1533 = vrot.lane.b32.xlu0 %v488, 24
        %v1534 = vpop.permute.xlu0 %1533
        %1535 = vrot.lane.b32.xlu0 %v489, 24
        %v1536 = vpop.permute.xlu0 %1535
        %1537 = vrot.lane.b32.xlu0 %v490, 24
        %v1538 = vpop.permute.xlu0 %1537
        %1539 = vrot.lane.b32.xlu0 %v491, 24
        %v1540 = vpop.permute.xlu0 %1539
        %1541 = vrot.lane.b32.xlu0 %v492, 24
        %v1542 = vpop.permute.xlu0 %1541
        %1543 = vrot.lane.b32.xlu0 %v493, 24
        %v1544 = vpop.permute.xlu0 %1543
        %1545 = vrot.lane.b32.xlu0 %v494, 24
        %v1546 = vpop.permute.xlu0 %1545
        %1547 = vrot.lane.b32.xlu0 %v495, 24
        %v1548 = vpop.permute.xlu0 %1547
        %1549 = vrot.lane.b32.xlu0 %v496, 24
        %v1550 = vpop.permute.xlu0 %1549
        %1551 = vrot.lane.b32.xlu0 %v497, 24
        %v1552 = vpop.permute.xlu0 %1551
        %1553 = vrot.lane.b32.xlu0 %v498, 24
        %v1554 = vpop.permute.xlu0 %1553
        %1555 = vrot.lane.b32.xlu0 %v499, 24
        %v1556 = vpop.permute.xlu0 %1555
        %1557 = vrot.lane.b32.xlu0 %v500, 24
        %v1558 = vpop.permute.xlu0 %1557
        %1559 = vrot.lane.b32.xlu0 %v501, 24
        %v1560 = vpop.permute.xlu0 %1559
        %1561 = vrot.lane.b32.xlu0 %v502, 24
        %v1562 = vpop.permute.xlu0 %1561
        %1563 = vrot.lane.b32.xlu0 %v503, 24
        %v1564 = vpop.permute.xlu0 %1563
        %1565 = vrot.lane.b32.xlu0 %v504, 24
        %v1566 = vpop.permute.xlu0 %1565
        %1567 = vrot.lane.b32.xlu0 %v505, 24
        %v1568 = vpop.permute.xlu0 %1567
        %1569 = vrot.lane.b32.xlu0 %v506, 24
        %v1570 = vpop.permute.xlu0 %1569
        %1571 = vrot.lane.b32.xlu0 %v507, 24
        %v1572 = vpop.permute.xlu0 %1571
        %1573 = vrot.lane.b32.xlu0 %v508, 24
        %v1574 = vpop.permute.xlu0 %1573
        %1575 = vrot.lane.b32.xlu0 %v509, 24
        %v1576 = vpop.permute.xlu0 %1575
        %1577 = vrot.lane.b32.xlu0 %v510, 24
        %v1578 = vpop.permute.xlu0 %1577
        %1579 = vrot.lane.b32.xlu0 %v511, 24
        %v1580 = vpop.permute.xlu0 %1579
        %1581 = vrot.lane.b32.xlu0 %v512, 24
        %v1582 = vpop.permute.xlu0 %1581
        %1583 = vrot.lane.b32.xlu0 %v513, 24
        %v1584 = vpop.permute.xlu0 %1583
        %1585 = vrot.lane.b32.xlu0 %v610, 24
        %v1586 = vpop.permute.xlu0 %1585
        %1587 = vrot.lane.b32.xlu0 %v611, 24
        %v1588 = vpop.permute.xlu0 %1587
        %1589 = vrot.lane.b32.xlu0 %v612, 24
        %v1590 = vpop.permute.xlu0 %1589
        %1591 = vrot.lane.b32.xlu0 %v619, 24
        %v1592 = vpop.permute.xlu0 %1591
        %1593 = vrot.lane.b32.xlu0 %v620, 24
        %v1594 = vpop.permute.xlu0 %1593
        %1595 = vrot.lane.b32.xlu0 %v621, 24
        %v1596 = vpop.permute.xlu0 %1595
        %1648 = vrot.lane.b32.xlu0 %v520, 28
        %v1649 = vpop.permute.xlu0 %1648
        %1650 = vrot.lane.b32.xlu0 %v521, 28
        %v1651 = vpop.permute.xlu0 %1650
        %1652 = vrot.lane.b32.xlu0 %v522, 28
        %v1653 = vpop.permute.xlu0 %1652
        %1654 = vrot.lane.b32.xlu0 %v523, 28
        %v1655 = vpop.permute.xlu0 %1654
        %1656 = vrot.lane.b32.xlu0 %v524, 28
        %v1657 = vpop.permute.xlu0 %1656
        %1658 = vrot.lane.b32.xlu0 %v525, 28
        %v1659 = vpop.permute.xlu0 %1658
        %1660 = vrot.lane.b32.xlu0 %v526, 28
        %v1661 = vpop.permute.xlu0 %1660
        %1662 = vrot.lane.b32.xlu0 %v527, 28
        %v1663 = vpop.permute.xlu0 %1662
        %1664 = vrot.lane.b32.xlu0 %v528, 28
        %v1665 = vpop.permute.xlu0 %1664
        %1666 = vrot.lane.b32.xlu0 %v529, 28
        %v1667 = vpop.permute.xlu0 %1666
        %1668 = vrot.lane.b32.xlu0 %v530, 28
        %v1669 = vpop.permute.xlu0 %1668
        %1670 = vrot.lane.b32.xlu0 %v531, 28
        %v1671 = vpop.permute.xlu0 %1670
        %1672 = vrot.lane.b32.xlu0 %v532, 28
        %v1673 = vpop.permute.xlu0 %1672
        %1674 = vrot.lane.b32.xlu0 %v533, 28
        %v1675 = vpop.permute.xlu0 %1674
        %1676 = vrot.lane.b32.xlu0 %v534, 28
        %v1677 = vpop.permute.xlu0 %1676
        %1678 = vrot.lane.b32.xlu0 %v535, 28
        %v1679 = vpop.permute.xlu0 %1678
        %1680 = vrot.lane.b32.xlu0 %v536, 28
        %v1681 = vpop.permute.xlu0 %1680
        %1682 = vrot.lane.b32.xlu0 %v537, 28
        %v1683 = vpop.permute.xlu0 %1682
        %1684 = vrot.lane.b32.xlu0 %v538, 28
        %v1685 = vpop.permute.xlu0 %1684
        %1686 = vrot.lane.b32.xlu0 %v539, 28
        %v1687 = vpop.permute.xlu0 %1686
        %1688 = vrot.lane.b32.xlu0 %v540, 28
        %v1689 = vpop.permute.xlu0 %1688
        %1690 = vrot.lane.b32.xlu0 %v541, 28
        %v1691 = vpop.permute.xlu0 %1690
        %1692 = vrot.lane.b32.xlu0 %v542, 28
        %v1693 = vpop.permute.xlu0 %1692
        %1694 = vrot.lane.b32.xlu0 %v543, 28
        %v1695 = vpop.permute.xlu0 %1694
        %1696 = vrot.lane.b32.xlu0 %v544, 28
        %v1697 = vpop.permute.xlu0 %1696
        %1698 = vrot.lane.b32.xlu0 %v545, 28
        %v1699 = vpop.permute.xlu0 %1698
        %1700 = vrot.lane.b32.xlu0 %v546, 28
        %v1701 = vpop.permute.xlu0 %1700
        %1702 = vrot.lane.b32.xlu0 %v547, 28
        %v1703 = vpop.permute.xlu0 %1702
        %1704 = vrot.lane.b32.xlu0 %v548, 28
        %v1705 = vpop.permute.xlu0 %1704
        %1706 = vrot.lane.b32.xlu0 %v549, 28
        %v1707 = vpop.permute.xlu0 %1706
        %1708 = vrot.lane.b32.xlu0 %v550, 28
        %v1709 = vpop.permute.xlu0 %1708
        %1710 = vrot.lane.b32.xlu0 %v551, 28
        %v1711 = vpop.permute.xlu0 %1710
        %1712 = vrot.lane.b32.xlu0 %v552, 28
        %v1713 = vpop.permute.xlu0 %1712
        %1714 = vrot.lane.b32.xlu0 %v553, 28
        %v1715 = vpop.permute.xlu0 %1714
        %1716 = vrot.lane.b32.xlu0 %v554, 28
        %v1717 = vpop.permute.xlu0 %1716
        %1718 = vrot.lane.b32.xlu0 %v555, 28
        %v1719 = vpop.permute.xlu0 %1718
        %1720 = vrot.lane.b32.xlu0 %v556, 28
        %v1721 = vpop.permute.xlu0 %1720
        %1722 = vrot.lane.b32.xlu0 %v557, 28
        %v1723 = vpop.permute.xlu0 %1722
        %1724 = vrot.lane.b32.xlu0 %v558, 28
        %v1725 = vpop.permute.xlu0 %1724
        %1726 = vrot.lane.b32.xlu0 %v559, 28
        %v1727 = vpop.permute.xlu0 %1726
        %1728 = vrot.lane.b32.xlu0 %v560, 28
        %v1729 = vpop.permute.xlu0 %1728
        %1730 = vrot.lane.b32.xlu0 %v561, 28
        %v1731 = vpop.permute.xlu0 %1730
        %1732 = vrot.lane.b32.xlu0 %v613, 28
        %v1733 = vpop.permute.xlu0 %1732
        %1734 = vrot.lane.b32.xlu0 %v614, 28
        %v1735 = vpop.permute.xlu0 %1734
        %1736 = vrot.lane.b32.xlu0 %v615, 28
        %v1737 = vpop.permute.xlu0 %1736
        %1738 = vrot.lane.b32.xlu0 %v622, 28
        %v1739 = vpop.permute.xlu0 %1738
        %1740 = vrot.lane.b32.xlu0 %v623, 28
        %v1741 = vpop.permute.xlu0 %1740
        %1742 = vrot.lane.b32.xlu0 %v624, 28
        %v1743 = vpop.permute.xlu0 %1742
        %1795 = vrot.lane.b32.xlu0 %v568, 32
        %v1796 = vpop.permute.xlu0 %1795
        %1797 = vrot.lane.b32.xlu0 %v569, 32
        %v1798 = vpop.permute.xlu0 %1797
        %1799 = vrot.lane.b32.xlu0 %v570, 32
        %v1800 = vpop.permute.xlu0 %1799
        %1801 = vrot.lane.b32.xlu0 %v571, 32
        %v1802 = vpop.permute.xlu0 %1801
        %1803 = vrot.lane.b32.xlu0 %v572, 32
        %v1804 = vpop.permute.xlu0 %1803
        %1805 = vrot.lane.b32.xlu0 %v573, 32
        %v1806 = vpop.permute.xlu0 %1805
        %1807 = vrot.lane.b32.xlu0 %v574, 32
        %v1808 = vpop.permute.xlu0 %1807
        %1809 = vrot.lane.b32.xlu0 %v575, 32
        %v1810 = vpop.permute.xlu0 %1809
        %1811 = vrot.lane.b32.xlu0 %v576, 32
        %v1812 = vpop.permute.xlu0 %1811
        %1813 = vrot.lane.b32.xlu0 %v577, 32
        %v1814 = vpop.permute.xlu0 %1813
        %1815 = vrot.lane.b32.xlu0 %v578, 32
        %v1816 = vpop.permute.xlu0 %1815
        %1817 = vrot.lane.b32.xlu0 %v579, 32
        %v1818 = vpop.permute.xlu0 %1817
        %1819 = vrot.lane.b32.xlu0 %v580, 32
        %v1820 = vpop.permute.xlu0 %1819
        %1821 = vrot.lane.b32.xlu0 %v581, 32
        %v1822 = vpop.permute.xlu0 %1821
        %1823 = vrot.lane.b32.xlu0 %v582, 32
        %v1824 = vpop.permute.xlu0 %1823
        %1825 = vrot.lane.b32.xlu0 %v583, 32
        %v1826 = vpop.permute.xlu0 %1825
        %1827 = vrot.lane.b32.xlu0 %v584, 32
        %v1828 = vpop.permute.xlu0 %1827
        %1829 = vrot.lane.b32.xlu0 %v585, 32
        %v1830 = vpop.permute.xlu0 %1829
        %1831 = vrot.lane.b32.xlu0 %v586, 32
        %v1832 = vpop.permute.xlu0 %1831
        %1833 = vrot.lane.b32.xlu0 %v587, 32
        %v1834 = vpop.permute.xlu0 %1833
        %1835 = vrot.lane.b32.xlu0 %v588, 32
        %v1836 = vpop.permute.xlu0 %1835
        %1837 = vrot.lane.b32.xlu0 %v589, 32
        %v1838 = vpop.permute.xlu0 %1837
        %1839 = vrot.lane.b32.xlu0 %v590, 32
        %v1840 = vpop.permute.xlu0 %1839
        %1841 = vrot.lane.b32.xlu0 %v591, 32
        %v1842 = vpop.permute.xlu0 %1841
        %1843 = vrot.lane.b32.xlu0 %v592, 32
        %v1844 = vpop.permute.xlu0 %1843
        %1845 = vrot.lane.b32.xlu0 %v593, 32
        %v1846 = vpop.permute.xlu0 %1845
        %1847 = vrot.lane.b32.xlu0 %v594, 32
        %v1848 = vpop.permute.xlu0 %1847
        %1849 = vrot.lane.b32.xlu0 %v595, 32
        %v1850 = vpop.permute.xlu0 %1849
        %1851 = vrot.lane.b32.xlu0 %v596, 32
        %v1852 = vpop.permute.xlu0 %1851
        %1853 = vrot.lane.b32.xlu0 %v597, 32
        %v1854 = vpop.permute.xlu0 %1853
        %1855 = vrot.lane.b32.xlu0 %v598, 32
        %v1856 = vpop.permute.xlu0 %1855
        %1857 = vrot.lane.b32.xlu0 %v599, 32
        %v1858 = vpop.permute.xlu0 %1857
        %1859 = vrot.lane.b32.xlu0 %v600, 32
        %v1860 = vpop.permute.xlu0 %1859
        %1861 = vrot.lane.b32.xlu0 %v601, 32
        %v1862 = vpop.permute.xlu0 %1861
        %1863 = vrot.lane.b32.xlu0 %v602, 32
        %v1864 = vpop.permute.xlu0 %1863
        %1865 = vrot.lane.b32.xlu0 %v603, 32
        %v1866 = vpop.permute.xlu0 %1865
        %1867 = vrot.lane.b32.xlu0 %v604, 32
        %v1868 = vpop.permute.xlu0 %1867
        %1869 = vrot.lane.b32.xlu0 %v605, 32
        %v1870 = vpop.permute.xlu0 %1869
        %1871 = vrot.lane.b32.xlu0 %v606, 32
        %v1872 = vpop.permute.xlu0 %1871
        %1873 = vrot.lane.b32.xlu0 %v607, 32
        %v1874 = vpop.permute.xlu0 %1873
        %1875 = vrot.lane.b32.xlu0 %v608, 32
        %v1876 = vpop.permute.xlu0 %1875
        %1877 = vrot.lane.b32.xlu0 %v609, 32
        %v1878 = vpop.permute.xlu0 %1877
        %1879 = vrot.lane.b32.xlu0 %v616, 32
        %v1880 = vpop.permute.xlu0 %1879
        %1881 = vrot.lane.b32.xlu0 %v617, 32
        %v1882 = vpop.permute.xlu0 %1881
        %1883 = vrot.lane.b32.xlu0 %v618, 32
        %v1884 = vpop.permute.xlu0 %1883
        %1885 = vrot.lane.b32.xlu0 %v625, 32
        %v1886 = vpop.permute.xlu0 %1885
        %1887 = vrot.lane.b32.xlu0 %v626, 32
        %v1888 = vpop.permute.xlu0 %1887
        %1889 = vrot.lane.b32.xlu0 %v627, 32
        %v1890 = vpop.permute.xlu0 %1889
        %vm1939 = vcmask 31744
        %v1940 = vsel %vm1939, %v466, %v677
        %v1941 = vsel %vm1939, %v467, %v679
        %v1942 = vsel %vm1939, %v468, %v681
        %v1943 = vsel %vm1939, %v469, %v683
        %v1944 = vsel %vm1939, %v470, %v685
        %v1945 = vsel %vm1939, %v471, %v687
        %v1946 = vsel %vm1939, %v472, %v689
        %v1947 = vsel %vm1939, %v473, %v691
        %v1948 = vsel %vm1939, %v474, %v693
        %v1949 = vsel %vm1939, %v475, %v695
        %v1950 = vsel %vm1939, %v476, %v697
        %v1951 = vsel %vm1939, %v477, %v699
        %v1952 = vsel %vm1939, %v478, %v701
        %v1953 = vsel %vm1939, %v479, %v703
        %v1954 = vsel %vm1939, %v480, %v705
        %v1955 = vsel %vm1939, %v481, %v707
        %v1956 = vsel %vm1939, %v482, %v709
        %v1957 = vsel %vm1939, %v483, %v711
        %v1958 = vsel %vm1939, %v484, %v713
        %v1959 = vsel %vm1939, %v485, %v715
        %v1960 = vsel %vm1939, %v486, %v717
        %v1961 = vsel %vm1939, %v487, %v719
        %v1962 = vsel %vm1939, %v488, %v721
        %v1963 = vsel %vm1939, %v489, %v723
        %v1964 = vsel %vm1939, %v490, %v725
        %v1965 = vsel %vm1939, %v491, %v727
        %v1966 = vsel %vm1939, %v492, %v729
        %v1967 = vsel %vm1939, %v493, %v731
        %v1968 = vsel %vm1939, %v494, %v733
        %v1969 = vsel %vm1939, %v495, %v735
        %v1970 = vsel %vm1939, %v496, %v737
        %v1971 = vsel %vm1939, %v497, %v739
        %v1972 = vsel %vm1939, %v498, %v741
        %v1973 = vsel %vm1939, %v499, %v743
        %v1974 = vsel %vm1939, %v500, %v745
        %v1975 = vsel %vm1939, %v501, %v747
        %v1976 = vsel %vm1939, %v502, %v749
        %v1977 = vsel %vm1939, %v503, %v751
        %v1978 = vsel %vm1939, %v504, %v753
        %v1979 = vsel %vm1939, %v505, %v755
        %v1980 = vsel %vm1939, %v506, %v757
        %v1981 = vsel %vm1939, %v507, %v759
        %v1982 = vsel %vm1939, %v508, %v761
        %v1983 = vsel %vm1939, %v509, %v763
        %v1984 = vsel %vm1939, %v510, %v765
        %v1985 = vsel %vm1939, %v511, %v767
        %v1986 = vsel %vm1939, %v512, %v769
        %v1987 = vsel %vm1939, %v513, %v771
        %vm1988 = vcmask 64512
        %v1989 = vsel %vm1988, %v1940, %v869
        %v1990 = vsel %vm1988, %v1941, %v871
        %v1991 = vsel %vm1988, %v1942, %v873
        %v1992 = vsel %vm1988, %v1943, %v875
        %v1993 = vsel %vm1988, %v1944, %v877
        %v1994 = vsel %vm1988, %v1945, %v879
        %v1995 = vsel %vm1988, %v1946, %v881
        %v1996 = vsel %vm1988, %v1947, %v883
        %v1997 = vsel %vm1988, %v1948, %v885
        %v1998 = vsel %vm1988, %v1949, %v887
        %v1999 = vsel %vm1988, %v1950, %v889
        %v2000 = vsel %vm1988, %v1951, %v891
        %v2001 = vsel %vm1988, %v1952, %v893
        %v2002 = vsel %vm1988, %v1953, %v895
        %v2003 = vsel %vm1988, %v1954, %v897
        %v2004 = vsel %vm1988, %v1955, %v899
        %v2005 = vsel %vm1988, %v1956, %v901
        %v2006 = vsel %vm1988, %v1957, %v903
        %v2007 = vsel %vm1988, %v1958, %v905
        %v2008 = vsel %vm1988, %v1959, %v907
        %v2009 = vsel %vm1988, %v1960, %v909
        %v2010 = vsel %vm1988, %v1961, %v911
        %v2011 = vsel %vm1988, %v1962, %v913
        %v2012 = vsel %vm1988, %v1963, %v915
        %v2013 = vsel %vm1988, %v1964, %v917
        %v2014 = vsel %vm1988, %v1965, %v919
        %v2015 = vsel %vm1988, %v1966, %v921
        %v2016 = vsel %vm1988, %v1967, %v923
        %v2017 = vsel %vm1988, %v1968, %v925
        %v2018 = vsel %vm1988, %v1969, %v927
        %v2019 = vsel %vm1988, %v1970, %v929
        %v2020 = vsel %vm1988, %v1971, %v931
        %v2021 = vsel %vm1988, %v1972, %v933
        %v2022 = vsel %vm1988, %v1973, %v935
        %v2023 = vsel %vm1988, %v1974, %v937
        %v2024 = vsel %vm1988, %v1975, %v939
        %v2025 = vsel %vm1988, %v1976, %v941
        %v2026 = vsel %vm1988, %v1977, %v943
        %v2027 = vsel %vm1988, %v1978, %v945
        %v2028 = vsel %vm1988, %v1979, %v947
        %v2029 = vsel %vm1988, %v1980, %v949
        %v2030 = vsel %vm1988, %v1981, %v951
        %v2031 = vsel %vm1988, %v1982, %v953
        %v2032 = vsel %vm1988, %v1983, %v955
        %v2033 = vsel %vm1988, %v1984, %v957
        %v2034 = vsel %vm1988, %v1985, %v959
        %v2035 = vsel %vm1988, %v1986, %v961
        %v2036 = vsel %vm1988, %v1987, %v963
        %vm2037 = vcmask 97280
        %v2038 = vsel %vm2037, %v1989, %v1061
        %v2039 = vsel %vm2037, %v1990, %v1063
        %v2040 = vsel %vm2037, %v1991, %v1065
        %v2041 = vsel %vm2037, %v1992, %v1067
        %v2042 = vsel %vm2037, %v1993, %v1069
        %v2043 = vsel %vm2037, %v1994, %v1071
        %v2044 = vsel %vm2037, %v1995, %v1073
        %v2045 = vsel %vm2037, %v1996, %v1075
        %v2046 = vsel %vm2037, %v1997, %v1077
        %v2047 = vsel %vm2037, %v1998, %v1079
        %v2048 = vsel %vm2037, %v1999, %v1081
        %v2049 = vsel %vm2037, %v2000, %v1083
        %v2050 = vsel %vm2037, %v2001, %v1085
        %v2051 = vsel %vm2037, %v2002, %v1087
        %v2052 = vsel %vm2037, %v2003, %v1089
        %v2053 = vsel %vm2037, %v2004, %v1091
        %v2054 = vsel %vm2037, %v2005, %v1093
        %v2055 = vsel %vm2037, %v2006, %v1095
        %v2056 = vsel %vm2037, %v2007, %v1097
        %v2057 = vsel %vm2037, %v2008, %v1099
        %v2058 = vsel %vm2037, %v2009, %v1101
        %v2059 = vsel %vm2037, %v2010, %v1103
        %v2060 = vsel %vm2037, %v2011, %v1105
        %v2061 = vsel %vm2037, %v2012, %v1107
        %v2062 = vsel %vm2037, %v2013, %v1109
        %v2063 = vsel %vm2037, %v2014, %v1111
        %v2064 = vsel %vm2037, %v2015, %v1113
        %v2065 = vsel %vm2037, %v2016, %v1115
        %v2066 = vsel %vm2037, %v2017, %v1117
        %v2067 = vsel %vm2037, %v2018, %v1119
        %v2068 = vsel %vm2037, %v2019, %v1121
        %v2069 = vsel %vm2037, %v2020, %v1123
        %v2070 = vsel %vm2037, %v2021, %v1125
        %v2071 = vsel %vm2037, %v2022, %v1127
        %v2072 = vsel %vm2037, %v2023, %v1129
        %v2073 = vsel %vm2037, %v2024, %v1131
        %v2074 = vsel %vm2037, %v2025, %v1133
        %v2075 = vsel %vm2037, %v2026, %v1135
        %v2076 = vsel %vm2037, %v2027, %v1137
        %v2077 = vsel %vm2037, %v2028, %v1139
        %v2078 = vsel %vm2037, %v2029, %v1141
        %v2079 = vsel %vm2037, %v2030, %v1143
        %v2080 = vsel %vm2037, %v2031, %v1145
        %v2081 = vsel %vm2037, %v2032, %v1147
        %v2082 = vsel %vm2037, %v2033, %v1149
        %v2083 = vsel %vm2037, %v2034, %v1151
        %v2084 = vsel %vm2037, %v2035, %v1153
        %v2085 = vsel %vm2037, %v2036, %v1155
        %vm2086 = vcmask 130048
        %v2087 = vsel %vm2086, %v2038, %v1208
        %v2088 = vsel %vm2086, %v2039, %v1210
        %v2089 = vsel %vm2086, %v2040, %v1212
        %v2090 = vsel %vm2086, %v2041, %v1214
        %v2091 = vsel %vm2086, %v2042, %v1216
        %v2092 = vsel %vm2086, %v2043, %v1218
        %v2093 = vsel %vm2086, %v2044, %v1220
        %v2094 = vsel %vm2086, %v2045, %v1222
        %v2095 = vsel %vm2086, %v2046, %v1224
        %v2096 = vsel %vm2086, %v2047, %v1226
        %v2097 = vsel %vm2086, %v2048, %v1228
        %v2098 = vsel %vm2086, %v2049, %v1230
        %v2099 = vsel %vm2086, %v2050, %v1232
        %v2100 = vsel %vm2086, %v2051, %v1234
        %v2101 = vsel %vm2086, %v2052, %v1236
        %v2102 = vsel %vm2086, %v2053, %v1238
        %v2103 = vsel %vm2086, %v2054, %v1240
        %v2104 = vsel %vm2086, %v2055, %v1242
        %v2105 = vsel %vm2086, %v2056, %v1244
        %v2106 = vsel %vm2086, %v2057, %v1246
        %v2107 = vsel %vm2086, %v2058, %v1248
        %v2108 = vsel %vm2086, %v2059, %v1250
        %v2109 = vsel %vm2086, %v2060, %v1252
        %v2110 = vsel %vm2086, %v2061, %v1254
        %v2111 = vsel %vm2086, %v2062, %v1256
        %v2112 = vsel %vm2086, %v2063, %v1258
        %v2113 = vsel %vm2086, %v2064, %v1260
        %v2114 = vsel %vm2086, %v2065, %v1262
        %v2115 = vsel %vm2086, %v2066, %v1264
        %v2116 = vsel %vm2086, %v2067, %v1266
        %v2117 = vsel %vm2086, %v2068, %v1268
        %v2118 = vsel %vm2086, %v2069, %v1270
        %v2119 = vsel %vm2086, %v2070, %v1272
        %v2120 = vsel %vm2086, %v2071, %v1274
        %v2121 = vsel %vm2086, %v2072, %v1276
        %v2122 = vsel %vm2086, %v2073, %v1278
        %v2123 = vsel %vm2086, %v2074, %v1280
        %v2124 = vsel %vm2086, %v2075, %v1282
        %v2125 = vsel %vm2086, %v2076, %v1284
        %v2126 = vsel %vm2086, %v2077, %v1286
        %v2127 = vsel %vm2086, %v2078, %v1288
        %v2128 = vsel %vm2086, %v2079, %v1290
        %v2129 = vsel %vm2086, %v2080, %v1292
        %v2130 = vsel %vm2086, %v2081, %v1294
        %v2131 = vsel %vm2086, %v2082, %v1296
        %v2132 = vsel %vm2086, %v2083, %v1298
        %v2133 = vsel %vm2086, %v2084, %v1300
        %v2134 = vsel %vm2086, %v2085, %v1302
        %vm2135 = vcmask 162816
        %v2136 = vsel %vm2135, %v2087, %v1355
        %v2137 = vsel %vm2135, %v2088, %v1357
        %v2138 = vsel %vm2135, %v2089, %v1359
        %v2139 = vsel %vm2135, %v2090, %v1361
        %v2140 = vsel %vm2135, %v2091, %v1363
        %v2141 = vsel %vm2135, %v2092, %v1365
        %v2142 = vsel %vm2135, %v2093, %v1367
        %v2143 = vsel %vm2135, %v2094, %v1369
        %v2144 = vsel %vm2135, %v2095, %v1371
        %v2145 = vsel %vm2135, %v2096, %v1373
        %v2146 = vsel %vm2135, %v2097, %v1375
        %v2147 = vsel %vm2135, %v2098, %v1377
        %v2148 = vsel %vm2135, %v2099, %v1379
        %v2149 = vsel %vm2135, %v2100, %v1381
        %v2150 = vsel %vm2135, %v2101, %v1383
        %v2151 = vsel %vm2135, %v2102, %v1385
        %v2152 = vsel %vm2135, %v2103, %v1387
        %v2153 = vsel %vm2135, %v2104, %v1389
        %v2154 = vsel %vm2135, %v2105, %v1391
        %v2155 = vsel %vm2135, %v2106, %v1393
        %v2156 = vsel %vm2135, %v2107, %v1395
        %v2157 = vsel %vm2135, %v2108, %v1397
        %v2158 = vsel %vm2135, %v2109, %v1399
        %v2159 = vsel %vm2135, %v2110, %v1401
        %v2160 = vsel %vm2135, %v2111, %v1403
        %v2161 = vsel %vm2135, %v2112, %v1405
        %v2162 = vsel %vm2135, %v2113, %v1407
        %v2163 = vsel %vm2135, %v2114, %v1409
        %v2164 = vsel %vm2135, %v2115, %v1411
        %v2165 = vsel %vm2135, %v2116, %v1413
        %v2166 = vsel %vm2135, %v2117, %v1415
        %v2167 = vsel %vm2135, %v2118, %v1417
        %v2168 = vsel %vm2135, %v2119, %v1419
        %v2169 = vsel %vm2135, %v2120, %v1421
        %v2170 = vsel %vm2135, %v2121, %v1423
        %v2171 = vsel %vm2135, %v2122, %v1425
        %v2172 = vsel %vm2135, %v2123, %v1427
        %v2173 = vsel %vm2135, %v2124, %v1429
        %v2174 = vsel %vm2135, %v2125, %v1431
        %v2175 = vsel %vm2135, %v2126, %v1433
        %v2176 = vsel %vm2135, %v2127, %v1435
        %v2177 = vsel %vm2135, %v2128, %v1437
        %v2178 = vsel %vm2135, %v2129, %v1439
        %v2179 = vsel %vm2135, %v2130, %v1441
        %v2180 = vsel %vm2135, %v2131, %v1443
        %v2181 = vsel %vm2135, %v2132, %v1445
        %v2182 = vsel %vm2135, %v2133, %v1447
        %v2183 = vsel %vm2135, %v2134, %v1449
        %vm2184 = vcmask 195584
        %v2185 = vsel %vm2184, %v2136, %v1502
        %v2186 = vsel %vm2184, %v2137, %v1504
        %v2187 = vsel %vm2184, %v2138, %v1506
        %v2188 = vsel %vm2184, %v2139, %v1508
        %v2189 = vsel %vm2184, %v2140, %v1510
        %v2190 = vsel %vm2184, %v2141, %v1512
        %v2191 = vsel %vm2184, %v2142, %v1514
        %v2192 = vsel %vm2184, %v2143, %v1516
        %v2193 = vsel %vm2184, %v2144, %v1518
        %v2194 = vsel %vm2184, %v2145, %v1520
        %v2195 = vsel %vm2184, %v2146, %v1522
        %v2196 = vsel %vm2184, %v2147, %v1524
        %v2197 = vsel %vm2184, %v2148, %v1526
        %v2198 = vsel %vm2184, %v2149, %v1528
        %v2199 = vsel %vm2184, %v2150, %v1530
        %v2200 = vsel %vm2184, %v2151, %v1532
        %v2201 = vsel %vm2184, %v2152, %v1534
        %v2202 = vsel %vm2184, %v2153, %v1536
        %v2203 = vsel %vm2184, %v2154, %v1538
        %v2204 = vsel %vm2184, %v2155, %v1540
        %v2205 = vsel %vm2184, %v2156, %v1542
        %v2206 = vsel %vm2184, %v2157, %v1544
        %v2207 = vsel %vm2184, %v2158, %v1546
        %v2208 = vsel %vm2184, %v2159, %v1548
        %v2209 = vsel %vm2184, %v2160, %v1550
        %v2210 = vsel %vm2184, %v2161, %v1552
        %v2211 = vsel %vm2184, %v2162, %v1554
        %v2212 = vsel %vm2184, %v2163, %v1556
        %v2213 = vsel %vm2184, %v2164, %v1558
        %v2214 = vsel %vm2184, %v2165, %v1560
        %v2215 = vsel %vm2184, %v2166, %v1562
        %v2216 = vsel %vm2184, %v2167, %v1564
        %v2217 = vsel %vm2184, %v2168, %v1566
        %v2218 = vsel %vm2184, %v2169, %v1568
        %v2219 = vsel %vm2184, %v2170, %v1570
        %v2220 = vsel %vm2184, %v2171, %v1572
        %v2221 = vsel %vm2184, %v2172, %v1574
        %v2222 = vsel %vm2184, %v2173, %v1576
        %v2223 = vsel %vm2184, %v2174, %v1578
        %v2224 = vsel %vm2184, %v2175, %v1580
        %v2225 = vsel %vm2184, %v2176, %v1582
        %v2226 = vsel %vm2184, %v2177, %v1584
        %v2227 = vsel %vm2184, %v2178, %v1586
        %v2228 = vsel %vm2184, %v2179, %v1588
        %v2229 = vsel %vm2184, %v2180, %v1590
        %v2230 = vsel %vm2184, %v2181, %v1592
        %v2231 = vsel %vm2184, %v2182, %v1594
        %v2232 = vsel %vm2184, %v2183, %v1596
        %vm2233 = vcmask 228352
        %v2234 = vsel %vm2233, %v2185, %v1649
        %v2235 = vsel %vm2233, %v2186, %v1651
        %v2236 = vsel %vm2233, %v2187, %v1653
        %v2237 = vsel %vm2233, %v2188, %v1655
        %v2238 = vsel %vm2233, %v2189, %v1657
        %v2239 = vsel %vm2233, %v2190, %v1659
        %v2240 = vsel %vm2233, %v2191, %v1661
        %v2241 = vsel %vm2233, %v2192, %v1663
        %v2242 = vsel %vm2233, %v2193, %v1665
        %v2243 = vsel %vm2233, %v2194, %v1667
        %v2244 = vsel %vm2233, %v2195, %v1669
        %v2245 = vsel %vm2233, %v2196, %v1671
        %v2246 = vsel %vm2233, %v2197, %v1673
        %v2247 = vsel %vm2233, %v2198, %v1675
        %v2248 = vsel %vm2233, %v2199, %v1677
        %v2249 = vsel %vm2233, %v2200, %v1679
        %v2250 = vsel %vm2233, %v2201, %v1681
        %v2251 = vsel %vm2233, %v2202, %v1683
        %v2252 = vsel %vm2233, %v2203, %v1685
        %v2253 = vsel %vm2233, %v2204, %v1687
        %v2254 = vsel %vm2233, %v2205, %v1689
        %v2255 = vsel %vm2233, %v2206, %v1691
        %v2256 = vsel %vm2233, %v2207, %v1693
        %v2257 = vsel %vm2233, %v2208, %v1695
        %v2258 = vsel %vm2233, %v2209, %v1697
        %v2259 = vsel %vm2233, %v2210, %v1699
        %v2260 = vsel %vm2233, %v2211, %v1701
        %v2261 = vsel %vm2233, %v2212, %v1703
        %v2262 = vsel %vm2233, %v2213, %v1705
        %v2263 = vsel %vm2233, %v2214, %v1707
        %v2264 = vsel %vm2233, %v2215, %v1709
        %v2265 = vsel %vm2233, %v2216, %v1711
        %v2266 = vsel %vm2233, %v2217, %v1713
        %v2267 = vsel %vm2233, %v2218, %v1715
        %v2268 = vsel %vm2233, %v2219, %v1717
        %v2269 = vsel %vm2233, %v2220, %v1719
        %v2270 = vsel %vm2233, %v2221, %v1721
        %v2271 = vsel %vm2233, %v2222, %v1723
        %v2272 = vsel %vm2233, %v2223, %v1725
        %v2273 = vsel %vm2233, %v2224, %v1727
        %v2274 = vsel %vm2233, %v2225, %v1729
        %v2275 = vsel %vm2233, %v2226, %v1731
        %v2276 = vsel %vm2233, %v2227, %v1733
        %v2277 = vsel %vm2233, %v2228, %v1735
        %v2278 = vsel %vm2233, %v2229, %v1737
        %v2279 = vsel %vm2233, %v2230, %v1739
        %v2280 = vsel %vm2233, %v2231, %v1741
        %v2281 = vsel %vm2233, %v2232, %v1743
        %vm2282 = vcmask 261120
        %v2283 = vsel %vm2282, %v2234, %v1796
        %v2284 = vsel %vm2282, %v2235, %v1798
        %v2285 = vsel %vm2282, %v2236, %v1800
        %v2286 = vsel %vm2282, %v2237, %v1802
        %v2287 = vsel %vm2282, %v2238, %v1804
        %v2288 = vsel %vm2282, %v2239, %v1806
        %v2289 = vsel %vm2282, %v2240, %v1808
        %v2290 = vsel %vm2282, %v2241, %v1810
        %v2291 = vsel %vm2282, %v2242, %v1812
        %v2292 = vsel %vm2282, %v2243, %v1814
        %v2293 = vsel %vm2282, %v2244, %v1816
        %v2294 = vsel %vm2282, %v2245, %v1818
        %v2295 = vsel %vm2282, %v2246, %v1820
        %v2296 = vsel %vm2282, %v2247, %v1822
        %v2297 = vsel %vm2282, %v2248, %v1824
        %v2298 = vsel %vm2282, %v2249, %v1826
        %v2299 = vsel %vm2282, %v2250, %v1828
        %v2300 = vsel %vm2282, %v2251, %v1830
        %v2301 = vsel %vm2282, %v2252, %v1832
        %v2302 = vsel %vm2282, %v2253, %v1834
        %v2303 = vsel %vm2282, %v2254, %v1836
        %v2304 = vsel %vm2282, %v2255, %v1838
        %v2305 = vsel %vm2282, %v2256, %v1840
        %v2306 = vsel %vm2282, %v2257, %v1842
        %v2307 = vsel %vm2282, %v2258, %v1844
        %v2308 = vsel %vm2282, %v2259, %v1846
        %v2309 = vsel %vm2282, %v2260, %v1848
        %v2310 = vsel %vm2282, %v2261, %v1850
        %v2311 = vsel %vm2282, %v2262, %v1852
        %v2312 = vsel %vm2282, %v2263, %v1854
        %v2313 = vsel %vm2282, %v2264, %v1856
        %v2314 = vsel %vm2282, %v2265, %v1858
        %v2315 = vsel %vm2282, %v2266, %v1860
        %v2316 = vsel %vm2282, %v2267, %v1862
        %v2317 = vsel %vm2282, %v2268, %v1864
        %v2318 = vsel %vm2282, %v2269, %v1866
        %v2319 = vsel %vm2282, %v2270, %v1868
        %v2320 = vsel %vm2282, %v2271, %v1870
        %v2321 = vsel %vm2282, %v2272, %v1872
        %v2322 = vsel %vm2282, %v2273, %v1874
        %v2323 = vsel %vm2282, %v2274, %v1876
        %v2324 = vsel %vm2282, %v2275, %v1878
        %v2325 = vsel %vm2282, %v2276, %v1880
        %v2326 = vsel %vm2282, %v2277, %v1882
        %v2327 = vsel %vm2282, %v2278, %v1884
        %v2328 = vsel %vm2282, %v2279, %v1886
        %v2329 = vsel %vm2282, %v2280, %v1888
        %v2330 = vsel %vm2282, %v2281, %v1890
        %v2331 = vld [vmem:[%s1] sm:$0xff]
        %v2332 = vld [vmem:[%s1 + $0x8] sm:$0xff]
        %v2333 = vld [vmem:[%s1 + $0x10] sm:$0xff]
        %v2334 = vld [vmem:[%s1 + $0x18] sm:$0xff]
        %v2335 = vld [vmem:[%s1 + $0x20] sm:$0xf]
        %v2336 = vld [vmem:[%s2] sm:$0x1]
        %v2338 = vlaneseq
        %v2339 = vshrl.u32 %v2338, 7
        %v2340 = vsub.s32 0, %v2339
        %v2341 = vrot.slane %v2336, %v2340
        %vm2343 = vcmask 293888
        %v2345 = vsel %vm2343, %v2283, 0
        %v2348 = vsel %vm2343, %v2284, 0
        %v2351 = vsel %vm2343, %v2285, 0
        %v2354 = vsel %vm2343, %v2286, 0
        %v2357 = vsel %vm2343, %v2287, 0
        %v2360 = vsel %vm2343, %v2288, 0
        %v2363 = vsel %vm2343, %v2289, 0
        %v2366 = vsel %vm2343, %v2290, 0
        %v2369 = vsel %vm2343, %v2291, 0
        %v2372 = vsel %vm2343, %v2292, 0
        %v2375 = vsel %vm2343, %v2293, 0
        %v2378 = vsel %vm2343, %v2294, 0
        %v2381 = vsel %vm2343, %v2295, 0
        %v2384 = vsel %vm2343, %v2296, 0
        %v2387 = vsel %vm2343, %v2297, 0
        %v2390 = vsel %vm2343, %v2298, 0
        %v2393 = vsel %vm2343, %v2299, 0
        %v2396 = vsel %vm2343, %v2300, 0
        %v2399 = vsel %vm2343, %v2301, 0
        %v2402 = vsel %vm2343, %v2302, 0
        %v2405 = vsel %vm2343, %v2303, 0
        %v2408 = vsel %vm2343, %v2304, 0
        %v2411 = vsel %vm2343, %v2305, 0
        %v2414 = vsel %vm2343, %v2306, 0
        %v2417 = vsel %vm2343, %v2307, 0
        %v2420 = vsel %vm2343, %v2308, 0
        %v2423 = vsel %vm2343, %v2309, 0
        %v2426 = vsel %vm2343, %v2310, 0
        %v2429 = vsel %vm2343, %v2311, 0
        %v2432 = vsel %vm2343, %v2312, 0
        %v2435 = vsel %vm2343, %v2313, 0
        %v2438 = vsel %vm2343, %v2314, 0
        %v2441 = vsel %vm2343, %v2315, 0
        %v2444 = vsel %vm2343, %v2316, 0
        %v2447 = vsel %vm2343, %v2317, 0
        %v2450 = vsel %vm2343, %v2318, 0
        %v2453 = vsel %vm2343, %v2319, 0
        %v2456 = vsel %vm2343, %v2320, 0
        %v2459 = vsel %vm2343, %v2321, 0
        %v2462 = vsel %vm2343, %v2322, 0
        %v2465 = vsel %vm2343, %v2323, 0
        %v2468 = vsel %vm2343, %v2324, 0
        %v2471 = vsel %vm2343, %v2325, 0
        %v2474 = vsel %vm2343, %v2326, 0
        %v2477 = vsel %vm2343, %v2327, 0
        %v2480 = vsel %vm2343, %v2328, 0
        %v2483 = vsel %vm2343, %v2329, 0
        %v2486 = vsel %vm2343, %v2330, 0
        %vm2488 = vcmask 1043456
        %v2490 = vsel %vm2488, %v2335, 0
        %2492 = vmatprep.subr.mxu0 0.0
        %2493 = vmatpush1.msra.mxu0 0.0
        %2494 = vmatprep.subr.mxu0 0.0
        %2495 = vmatpush1.msra.mxu0 0.0
        %2496 = vmatprep.subr.mxu0 0.0
        %2497 = vmatpush1.msra.mxu0 0.0
        %2498 = vmatprep.subr.mxu0 0.0
        %2499 = vmatpush1.msra.mxu0 0.0
        %2500 = vmatprep.subr.mxu0 0.0
        %2501 = vmatpush1.msra.mxu0 0.0
        %2502 = vmatprep.subr.mxu0 0.0
        %2503 = vmatpush1.msra.mxu0 0.0
        %2504 = vmatprep.subr.mxu0 0.0
        %2505 = vmatpush1.msra.mxu0 0.0
        %2506 = vmatprep.subr.mxu0 0.0
        %2507 = vmatpush1.msra.mxu0 0.0
        %2508 = vmatprep.subr.mxu0 0.0
        %2509 = vmatpush1.msra.mxu0 0.0
        %2510 = vmatprep.subr.mxu0 0.0
        %2511 = vmatpush1.msra.mxu0 0.0
        %2512 = vmatprep.subr.mxu0 0.0
        %2513 = vmatpush1.msra.mxu0 0.0
        %2514 = vmatprep.subr.mxu0 0.0
        %2515 = vmatpush1.msra.mxu0 %v2490
        %2516 = vmatprep.subr.mxu0 0.0
        %2517 = vmatpush1.msra.mxu0 %v2334
        %2518 = vmatprep.subr.mxu0 0.0
        %2519 = vmatpush1.msra.mxu0 %v2333
        %2520 = vmatprep.subr.mxu0 0.0
        %2521 = vmatpush1.msra.mxu0 %v2332
        %2522 = vmatprep.subr.mxu0 0.0
        %2523 = vmatpush1.msra.mxu0 %v2331
        %2524 = vmatprep.subr.mxu0 0.0
        %2525 = vmatpush2.msra.mxu0 0.0
        %2526 = vmatprep.subr.mxu0 0.0
        %2527 = vmatpush2.msra.mxu0 0.0
        %2528 = vmatprep.subr.mxu0 0.0
        %2529 = vmatpush2.msra.mxu0 0.0
        %2530 = vmatprep.subr.mxu0 0.0
        %2531 = vmatpush2.msra.mxu0 0.0
        %2532 = vmatprep.subr.mxu0 0.0
        %2533 = vmatpush2.msra.mxu0 0.0
        %2534 = vmatprep.subr.mxu0 0.0
        %2535 = vmatpush2.msra.mxu0 0.0
        %2536 = vmatprep.subr.mxu0 0.0
        %2537 = vmatpush2.msra.mxu0 0.0
        %2538 = vmatprep.subr.mxu0 0.0
        %2539 = vmatpush2.msra.mxu0 0.0
        %2540 = vmatprep.subr.mxu0 0.0
        %2541 = vmatpush2.msra.mxu0 0.0
        %2542 = vmatprep.subr.mxu0 0.0
        %2543 = vmatpush2.msra.mxu0 0.0
        %2544 = vmatprep.subr.mxu0 0.0
        %2545 = vmatpush2.msra.mxu0 0.0
        %2546 = vmatprep.subr.mxu0 0.0
        %2547 = vmatpush2.msra.mxu0 0.0
        %2548 = vmatprep.subr.mxu0 0.0
        %2549 = vmatpush2.msra.mxu0 0.0
        %2550 = vmatprep.subr.mxu0 0.0
        %2551 = vmatpush2.msra.mxu0 0.0
        %2552 = vmatprep.subr.mxu0 0.0
        %2553 = vmatpush2.msra.mxu0 0.0
        %2554 = vmatprep.subr.mxu0 0.0
        %2555 = vmatpush2.msra.mxu0 0.0
        %2556 = vmatprep.mubr.f32.mxu0 0.0
        %2557 = vmatmul.mubr.f32.gmra.mxu0 %v2345
        %v2558 = vpop.f32.mrf.mxu0
        %v2559 = vadd.f32 %v2341, %v2558
        %v2560 = vpop.f32.mrf.mxu0
        %2561 = vmatprep.mubr.f32.mxu0 0.0
        %2562 = vmatmul.mubr.f32.gmra.mxu0 %v2348
        %v2563 = vpop.f32.mrf.mxu0
        %v2564 = vadd.f32 %v2341, %v2563
        %v2565 = vpop.f32.mrf.mxu0
        %2566 = vmatprep.mubr.f32.mxu0 0.0
        %2567 = vmatmul.mubr.f32.gmra.mxu0 %v2351
        %v2568 = vpop.f32.mrf.mxu0
        %v2569 = vadd.f32 %v2341, %v2568
        %v2570 = vpop.f32.mrf.mxu0
        %2571 = vmatprep.mubr.f32.mxu0 0.0
        %2572 = vmatmul.mubr.f32.gmra.mxu0 %v2354
        %v2573 = vpop.f32.mrf.mxu0
        %v2574 = vadd.f32 %v2341, %v2573
        %v2575 = vpop.f32.mrf.mxu0
        %2576 = vmatprep.mubr.f32.mxu0 0.0
        %2577 = vmatmul.mubr.f32.gmra.mxu0 %v2357
        %v2578 = vpop.f32.mrf.mxu0
        %v2579 = vadd.f32 %v2341, %v2578
        %v2580 = vpop.f32.mrf.mxu0
        %2581 = vmatprep.mubr.f32.mxu0 0.0
        %2582 = vmatmul.mubr.f32.gmra.mxu0 %v2360
        %v2583 = vpop.f32.mrf.mxu0
        %v2584 = vadd.f32 %v2341, %v2583
        %v2585 = vpop.f32.mrf.mxu0
        %2586 = vmatprep.mubr.f32.mxu0 0.0
        %2587 = vmatmul.mubr.f32.gmra.mxu0 %v2363
        %v2588 = vpop.f32.mrf.mxu0
        %v2589 = vadd.f32 %v2341, %v2588
        %v2590 = vpop.f32.mrf.mxu0
        %2591 = vmatprep.mubr.f32.mxu0 0.0
        %2592 = vmatmul.mubr.f32.gmra.mxu0 %v2366
        %v2593 = vpop.f32.mrf.mxu0
        %v2594 = vadd.f32 %v2341, %v2593
        %v2595 = vpop.f32.mrf.mxu0
        %2596 = vmatprep.mubr.f32.mxu0 0.0
        %2597 = vmatmul.mubr.f32.gmra.mxu0 %v2369
        %v2598 = vpop.f32.mrf.mxu0
        %v2599 = vadd.f32 %v2341, %v2598
        %v2600 = vpop.f32.mrf.mxu0
        %2601 = vmatprep.mubr.f32.mxu0 0.0
        %2602 = vmatmul.mubr.f32.gmra.mxu0 %v2372
        %v2603 = vpop.f32.mrf.mxu0
        %v2604 = vadd.f32 %v2341, %v2603
        %v2605 = vpop.f32.mrf.mxu0
        %2606 = vmatprep.mubr.f32.mxu0 0.0
        %2607 = vmatmul.mubr.f32.gmra.mxu0 %v2375
        %v2608 = vpop.f32.mrf.mxu0
        %v2609 = vadd.f32 %v2341, %v2608
        %v2610 = vpop.f32.mrf.mxu0
        %2611 = vmatprep.mubr.f32.mxu0 0.0
        %2612 = vmatmul.mubr.f32.gmra.mxu0 %v2378
        %v2613 = vpop.f32.mrf.mxu0
        %v2614 = vadd.f32 %v2341, %v2613
        %v2615 = vpop.f32.mrf.mxu0
        %2616 = vmatprep.mubr.f32.mxu0 0.0
        %2617 = vmatmul.mubr.f32.gmra.mxu0 %v2381
        %v2618 = vpop.f32.mrf.mxu0
        %v2619 = vadd.f32 %v2341, %v2618
        %v2620 = vpop.f32.mrf.mxu0
        %2621 = vmatprep.mubr.f32.mxu0 0.0
        %2622 = vmatmul.mubr.f32.gmra.mxu0 %v2384
        %v2623 = vpop.f32.mrf.mxu0
        %v2624 = vadd.f32 %v2341, %v2623
        %v2625 = vpop.f32.mrf.mxu0
        %2626 = vmatprep.mubr.f32.mxu0 0.0
        %2627 = vmatmul.mubr.f32.gmra.mxu0 %v2387
        %v2628 = vpop.f32.mrf.mxu0
        %v2629 = vadd.f32 %v2341, %v2628
        %v2630 = vpop.f32.mrf.mxu0
        %2631 = vmatprep.mubr.f32.mxu0 0.0
        %2632 = vmatmul.mubr.f32.gmra.mxu0 %v2390
        %v2633 = vpop.f32.mrf.mxu0
        %v2634 = vadd.f32 %v2341, %v2633
        %v2635 = vpop.f32.mrf.mxu0
        %2636 = vmatprep.mubr.f32.mxu0 0.0
        %2637 = vmatmul.mubr.f32.gmra.mxu0 %v2393
        %v2638 = vpop.f32.mrf.mxu0
        %v2639 = vadd.f32 %v2341, %v2638
        %v2640 = vpop.f32.mrf.mxu0
        %2641 = vmatprep.mubr.f32.mxu0 0.0
        %2642 = vmatmul.mubr.f32.gmra.mxu0 %v2396
        %v2643 = vpop.f32.mrf.mxu0
        %v2644 = vadd.f32 %v2341, %v2643
        %v2645 = vpop.f32.mrf.mxu0
        %2646 = vmatprep.mubr.f32.mxu0 0.0
        %2647 = vmatmul.mubr.f32.gmra.mxu0 %v2399
        %v2648 = vpop.f32.mrf.mxu0
        %v2649 = vadd.f32 %v2341, %v2648
        %v2650 = vpop.f32.mrf.mxu0
        %2651 = vmatprep.mubr.f32.mxu0 0.0
        %2652 = vmatmul.mubr.f32.gmra.mxu0 %v2402
        %v2653 = vpop.f32.mrf.mxu0
        %v2654 = vadd.f32 %v2341, %v2653
        %v2655 = vpop.f32.mrf.mxu0
        %2656 = vmatprep.mubr.f32.mxu0 0.0
        %2657 = vmatmul.mubr.f32.gmra.mxu0 %v2405
        %v2658 = vpop.f32.mrf.mxu0
        %v2659 = vadd.f32 %v2341, %v2658
        %v2660 = vpop.f32.mrf.mxu0
        %2661 = vmatprep.mubr.f32.mxu0 0.0
        %2662 = vmatmul.mubr.f32.gmra.mxu0 %v2408
        %v2663 = vpop.f32.mrf.mxu0
        %v2664 = vadd.f32 %v2341, %v2663
        %v2665 = vpop.f32.mrf.mxu0
        %2666 = vmatprep.mubr.f32.mxu0 0.0
        %2667 = vmatmul.mubr.f32.gmra.mxu0 %v2411
        %v2668 = vpop.f32.mrf.mxu0
        %v2669 = vadd.f32 %v2341, %v2668
        %v2670 = vpop.f32.mrf.mxu0
        %2671 = vmatprep.mubr.f32.mxu0 0.0
        %2672 = vmatmul.mubr.f32.gmra.mxu0 %v2414
        %v2673 = vpop.f32.mrf.mxu0
        %v2674 = vadd.f32 %v2341, %v2673
        %v2675 = vpop.f32.mrf.mxu0
        %2676 = vmatprep.mubr.f32.mxu0 0.0
        %2677 = vmatmul.mubr.f32.gmra.mxu0 %v2417
        %v2678 = vpop.f32.mrf.mxu0
        %v2679 = vadd.f32 %v2341, %v2678
        %v2680 = vpop.f32.mrf.mxu0
        %2681 = vmatprep.mubr.f32.mxu0 0.0
        %2682 = vmatmul.mubr.f32.gmra.mxu0 %v2420
        %v2683 = vpop.f32.mrf.mxu0
        %v2684 = vadd.f32 %v2341, %v2683
        %v2685 = vpop.f32.mrf.mxu0
        %2686 = vmatprep.mubr.f32.mxu0 0.0
        %2687 = vmatmul.mubr.f32.gmra.mxu0 %v2423
        %v2688 = vpop.f32.mrf.mxu0
        %v2689 = vadd.f32 %v2341, %v2688
        %v2690 = vpop.f32.mrf.mxu0
        %2691 = vmatprep.mubr.f32.mxu0 0.0
        %2692 = vmatmul.mubr.f32.gmra.mxu0 %v2426
        %v2693 = vpop.f32.mrf.mxu0
        %v2694 = vadd.f32 %v2341, %v2693
        %v2695 = vpop.f32.mrf.mxu0
        %2696 = vmatprep.mubr.f32.mxu0 0.0
        %2697 = vmatmul.mubr.f32.gmra.mxu0 %v2429
        %v2698 = vpop.f32.mrf.mxu0
        %v2699 = vadd.f32 %v2341, %v2698
        %v2700 = vpop.f32.mrf.mxu0
        %2701 = vmatprep.mubr.f32.mxu0 0.0
        %2702 = vmatmul.mubr.f32.gmra.mxu0 %v2432
        %v2703 = vpop.f32.mrf.mxu0
        %v2704 = vadd.f32 %v2341, %v2703
        %v2705 = vpop.f32.mrf.mxu0
        %2706 = vmatprep.mubr.f32.mxu0 0.0
        %2707 = vmatmul.mubr.f32.gmra.mxu0 %v2435
        %v2708 = vpop.f32.mrf.mxu0
        %v2709 = vadd.f32 %v2341, %v2708
        %v2710 = vpop.f32.mrf.mxu0
        %2711 = vmatprep.mubr.f32.mxu0 0.0
        %2712 = vmatmul.mubr.f32.gmra.mxu0 %v2438
        %v2713 = vpop.f32.mrf.mxu0
        %v2714 = vadd.f32 %v2341, %v2713
        %v2715 = vpop.f32.mrf.mxu0
        %2716 = vmatprep.mubr.f32.mxu0 0.0
        %2717 = vmatmul.mubr.f32.gmra.mxu0 %v2441
        %v2718 = vpop.f32.mrf.mxu0
        %v2719 = vadd.f32 %v2341, %v2718
        %v2720 = vpop.f32.mrf.mxu0
        %2721 = vmatprep.mubr.f32.mxu0 0.0
        %2722 = vmatmul.mubr.f32.gmra.mxu0 %v2444
        %v2723 = vpop.f32.mrf.mxu0
        %v2724 = vadd.f32 %v2341, %v2723
        %v2725 = vpop.f32.mrf.mxu0
        %2726 = vmatprep.mubr.f32.mxu0 0.0
        %2727 = vmatmul.mubr.f32.gmra.mxu0 %v2447
        %v2728 = vpop.f32.mrf.mxu0
        %v2729 = vadd.f32 %v2341, %v2728
        %v2730 = vpop.f32.mrf.mxu0
        %2731 = vmatprep.mubr.f32.mxu0 0.0
        %2732 = vmatmul.mubr.f32.gmra.mxu0 %v2450
        %v2733 = vpop.f32.mrf.mxu0
        %v2734 = vadd.f32 %v2341, %v2733
        %v2735 = vpop.f32.mrf.mxu0
        %2736 = vmatprep.mubr.f32.mxu0 0.0
        %2737 = vmatmul.mubr.f32.gmra.mxu0 %v2453
        %v2738 = vpop.f32.mrf.mxu0
        %v2739 = vadd.f32 %v2341, %v2738
        %v2740 = vpop.f32.mrf.mxu0
        %2741 = vmatprep.mubr.f32.mxu0 0.0
        %2742 = vmatmul.mubr.f32.gmra.mxu0 %v2456
        %v2743 = vpop.f32.mrf.mxu0
        %v2744 = vadd.f32 %v2341, %v2743
        %v2745 = vpop.f32.mrf.mxu0
        %2746 = vmatprep.mubr.f32.mxu0 0.0
        %2747 = vmatmul.mubr.f32.gmra.mxu0 %v2459
        %v2748 = vpop.f32.mrf.mxu0
        %v2749 = vadd.f32 %v2341, %v2748
        %v2750 = vpop.f32.mrf.mxu0
        %2751 = vmatprep.mubr.f32.mxu0 0.0
        %2752 = vmatmul.mubr.f32.gmra.mxu0 %v2462
        %v2753 = vpop.f32.mrf.mxu0
        %v2754 = vadd.f32 %v2341, %v2753
        %v2755 = vpop.f32.mrf.mxu0
        %2756 = vmatprep.mubr.f32.mxu0 0.0
        %2757 = vmatmul.mubr.f32.gmra.mxu0 %v2465
        %v2758 = vpop.f32.mrf.mxu0
        %v2759 = vadd.f32 %v2341, %v2758
        %v2760 = vpop.f32.mrf.mxu0
        %2761 = vmatprep.mubr.f32.mxu0 0.0
        %2762 = vmatmul.mubr.f32.gmra.mxu0 %v2468
        %v2763 = vpop.f32.mrf.mxu0
        %v2764 = vadd.f32 %v2341, %v2763
        %v2765 = vpop.f32.mrf.mxu0
        %2766 = vmatprep.mubr.f32.mxu0 0.0
        %2767 = vmatmul.mubr.f32.gmra.mxu0 %v2471
        %v2768 = vpop.f32.mrf.mxu0
        %v2769 = vadd.f32 %v2341, %v2768
        %v2770 = vpop.f32.mrf.mxu0
        %2771 = vmatprep.mubr.f32.mxu0 0.0
        %2772 = vmatmul.mubr.f32.gmra.mxu0 %v2474
        %v2773 = vpop.f32.mrf.mxu0
        %v2774 = vadd.f32 %v2341, %v2773
        %v2775 = vpop.f32.mrf.mxu0
        %2776 = vmatprep.mubr.f32.mxu0 0.0
        %2777 = vmatmul.mubr.f32.gmra.mxu0 %v2477
        %v2778 = vpop.f32.mrf.mxu0
        %v2779 = vadd.f32 %v2341, %v2778
        %v2780 = vpop.f32.mrf.mxu0
        %2781 = vmatprep.mubr.f32.mxu0 0.0
        %2782 = vmatmul.mubr.f32.gmra.mxu0 %v2480
        %v2783 = vpop.f32.mrf.mxu0
        %v2784 = vadd.f32 %v2341, %v2783
        %v2785 = vpop.f32.mrf.mxu0
        %2786 = vmatprep.mubr.f32.mxu0 0.0
        %2787 = vmatmul.mubr.f32.gmra.mxu0 %v2483
        %v2788 = vpop.f32.mrf.mxu0
        %v2789 = vadd.f32 %v2341, %v2788
        %v2790 = vpop.f32.mrf.mxu0
        %2791 = vmatprep.mubr.f32.mxu0 0.0
        %2792 = vmatmul.mubr.f32.gmra.mxu0 %v2486
        %v2793 = vpop.f32.mrf.mxu0
        %v2794 = vadd.f32 %v2341, %v2793
        %v2795 = vpop.f32.mrf.mxu0
        %2796 = vdwg.mxu0
        %v2797 = vld [vmem:[%s3] sm:$0x1]
        %v2799 = vlaneseq
        %v2800 = vshrl.u32 %v2799, 7
        %v2801 = vsub.s32 0, %v2800
        %v2802 = vrot.slane %v2797, %v2801
        %v2804 = vmul.f32 %v2559, %v2802
        %v2805 = vmul.f32 %v2564, %v2802
        %v2806 = vmul.f32 %v2569, %v2802
        %v2807 = vmul.f32 %v2574, %v2802
        %v2808 = vmul.f32 %v2579, %v2802
        %v2809 = vmul.f32 %v2584, %v2802
        %v2810 = vmul.f32 %v2589, %v2802
        %v2811 = vmul.f32 %v2594, %v2802
        %v2812 = vmul.f32 %v2599, %v2802
        %v2813 = vmul.f32 %v2604, %v2802
        %v2814 = vmul.f32 %v2609, %v2802
        %v2815 = vmul.f32 %v2614, %v2802
        %v2816 = vmul.f32 %v2619, %v2802
        %v2817 = vmul.f32 %v2624, %v2802
        %v2818 = vmul.f32 %v2629, %v2802
        %v2819 = vmul.f32 %v2634, %v2802
        %v2820 = vmul.f32 %v2639, %v2802
        %v2821 = vmul.f32 %v2644, %v2802
        %v2822 = vmul.f32 %v2649, %v2802
        %v2823 = vmul.f32 %v2654, %v2802
        %v2824 = vmul.f32 %v2659, %v2802
        %v2825 = vmul.f32 %v2664, %v2802
        %v2826 = vmul.f32 %v2669, %v2802
        %v2827 = vmul.f32 %v2674, %v2802
        %v2828 = vmul.f32 %v2679, %v2802
        %v2829 = vmul.f32 %v2684, %v2802
        %v2830 = vmul.f32 %v2689, %v2802
        %v2831 = vmul.f32 %v2694, %v2802
        %v2832 = vmul.f32 %v2699, %v2802
        %v2833 = vmul.f32 %v2704, %v2802
        %v2834 = vmul.f32 %v2709, %v2802
        %v2835 = vmul.f32 %v2714, %v2802
        %v2836 = vmul.f32 %v2719, %v2802
        %v2837 = vmul.f32 %v2724, %v2802
        %v2838 = vmul.f32 %v2729, %v2802
        %v2839 = vmul.f32 %v2734, %v2802
        %v2840 = vmul.f32 %v2739, %v2802
        %v2841 = vmul.f32 %v2744, %v2802
        %v2842 = vmul.f32 %v2749, %v2802
        %v2843 = vmul.f32 %v2754, %v2802
        %v2844 = vmul.f32 %v2759, %v2802
        %v2845 = vmul.f32 %v2764, %v2802
        %v2846 = vmul.f32 %v2769, %v2802
        %v2847 = vmul.f32 %v2774, %v2802
        %v2848 = vmul.f32 %v2779, %v2802
        %v2849 = vmul.f32 %v2784, %v2802
        %v2850 = vmul.f32 %v2789, %v2802
        %v2851 = vmul.f32 %v2794, %v2802
        %v2852 = vld [vmem:[%s4] sm:$0x1]
        %v2854 = vlaneseq
        %v2855 = vshrl.u32 %v2854, 7
        %v2856 = vsub.s32 0, %v2855
        %v2857 = vrot.slane %v2852, %v2856
        %v2859 = vadd.f32 %v2804, %v2857
        %v2860 = vadd.f32 %v2805, %v2857
        %v2861 = vadd.f32 %v2806, %v2857
        %v2862 = vadd.f32 %v2807, %v2857
        %v2863 = vadd.f32 %v2808, %v2857
        %v2864 = vadd.f32 %v2809, %v2857
        %v2865 = vadd.f32 %v2810, %v2857
        %v2866 = vadd.f32 %v2811, %v2857
        %v2867 = vadd.f32 %v2812, %v2857
        %v2868 = vadd.f32 %v2813, %v2857
        %v2869 = vadd.f32 %v2814, %v2857
        %v2870 = vadd.f32 %v2815, %v2857
        %v2871 = vadd.f32 %v2816, %v2857
        %v2872 = vadd.f32 %v2817, %v2857
        %v2873 = vadd.f32 %v2818, %v2857
        %v2874 = vadd.f32 %v2819, %v2857
        %v2875 = vadd.f32 %v2820, %v2857
        %v2876 = vadd.f32 %v2821, %v2857
        %v2877 = vadd.f32 %v2822, %v2857
        %v2878 = vadd.f32 %v2823, %v2857
        %v2879 = vadd.f32 %v2824, %v2857
        %v2880 = vadd.f32 %v2825, %v2857
        %v2881 = vadd.f32 %v2826, %v2857
        %v2882 = vadd.f32 %v2827, %v2857
        %v2883 = vadd.f32 %v2828, %v2857
        %v2884 = vadd.f32 %v2829, %v2857
        %v2885 = vadd.f32 %v2830, %v2857
        %v2886 = vadd.f32 %v2831, %v2857
        %v2887 = vadd.f32 %v2832, %v2857
        %v2888 = vadd.f32 %v2833, %v2857
        %v2889 = vadd.f32 %v2834, %v2857
        %v2890 = vadd.f32 %v2835, %v2857
        %v2891 = vadd.f32 %v2836, %v2857
        %v2892 = vadd.f32 %v2837, %v2857
        %v2893 = vadd.f32 %v2838, %v2857
        %v2894 = vadd.f32 %v2839, %v2857
        %v2895 = vadd.f32 %v2840, %v2857
        %v2896 = vadd.f32 %v2841, %v2857
        %v2897 = vadd.f32 %v2842, %v2857
        %v2898 = vadd.f32 %v2843, %v2857
        %v2899 = vadd.f32 %v2844, %v2857
        %v2900 = vadd.f32 %v2845, %v2857
        %v2901 = vadd.f32 %v2846, %v2857
        %v2902 = vadd.f32 %v2847, %v2857
        %v2903 = vadd.f32 %v2848, %v2857
        %v2904 = vadd.f32 %v2849, %v2857
        %v2905 = vadd.f32 %v2850, %v2857
        %v2906 = vadd.f32 %v2851, %v2857
        %v2907 = vsub.f32 0.0, %v2859
        %v2908 = vsub.f32 0.0, %v2860
        %v2909 = vsub.f32 0.0, %v2861
        %v2910 = vsub.f32 0.0, %v2862
        %v2911 = vsub.f32 0.0, %v2863
        %v2912 = vsub.f32 0.0, %v2864
        %v2913 = vsub.f32 0.0, %v2865
        %v2914 = vsub.f32 0.0, %v2866
        %v2915 = vsub.f32 0.0, %v2867
        %v2916 = vsub.f32 0.0, %v2868
        %v2917 = vsub.f32 0.0, %v2869
        %v2918 = vsub.f32 0.0, %v2870
        %v2919 = vsub.f32 0.0, %v2871
        %v2920 = vsub.f32 0.0, %v2872
        %v2921 = vsub.f32 0.0, %v2873
        %v2922 = vsub.f32 0.0, %v2874
        %v2923 = vsub.f32 0.0, %v2875
        %v2924 = vsub.f32 0.0, %v2876
        %v2925 = vsub.f32 0.0, %v2877
        %v2926 = vsub.f32 0.0, %v2878
        %v2927 = vsub.f32 0.0, %v2879
        %v2928 = vsub.f32 0.0, %v2880
        %v2929 = vsub.f32 0.0, %v2881
        %v2930 = vsub.f32 0.0, %v2882
        %v2931 = vsub.f32 0.0, %v2883
        %v2932 = vsub.f32 0.0, %v2884
        %v2933 = vsub.f32 0.0, %v2885
        %v2934 = vsub.f32 0.0, %v2886
        %v2935 = vsub.f32 0.0, %v2887
        %v2936 = vsub.f32 0.0, %v2888
        %v2937 = vsub.f32 0.0, %v2889
        %v2938 = vsub.f32 0.0, %v2890
        %v2939 = vsub.f32 0.0, %v2891
        %v2940 = vsub.f32 0.0, %v2892
        %v2941 = vsub.f32 0.0, %v2893
        %v2942 = vsub.f32 0.0, %v2894
        %v2943 = vsub.f32 0.0, %v2895
        %v2944 = vsub.f32 0.0, %v2896
        %v2945 = vsub.f32 0.0, %v2897
        %v2946 = vsub.f32 0.0, %v2898
        %v2947 = vsub.f32 0.0, %v2899
        %v2948 = vsub.f32 0.0, %v2900
        %v2949 = vsub.f32 0.0, %v2901
        %v2950 = vsub.f32 0.0, %v2902
        %v2951 = vsub.f32 0.0, %v2903
        %v2952 = vsub.f32 0.0, %v2904
        %v2953 = vsub.f32 0.0, %v2905
        %v2954 = vsub.f32 0.0, %v2906
        %v2955 = vmul.f32 %v2907, 1.442695
        %v2956 = vpow.pop %v2955
        %v2957 = vmul.f32 %v2908, 1.442695
        %v2958 = vpow.pop %v2957
        %v2959 = vmul.f32 %v2909, 1.442695
        %v2960 = vpow.pop %v2959
        %v2961 = vmul.f32 %v2910, 1.442695
        %v2962 = vpow.pop %v2961
        %v2963 = vmul.f32 %v2911, 1.442695
        %v2964 = vpow.pop %v2963
        %v2965 = vmul.f32 %v2912, 1.442695
        %v2966 = vpow.pop %v2965
        %v2967 = vmul.f32 %v2913, 1.442695
        %v2968 = vpow.pop %v2967
        %v2969 = vmul.f32 %v2914, 1.442695
        %v2970 = vpow.pop %v2969
        %v2971 = vmul.f32 %v2915, 1.442695
        %v2972 = vpow.pop %v2971
        %v2973 = vmul.f32 %v2916, 1.442695
        %v2974 = vpow.pop %v2973
        %v2975 = vmul.f32 %v2917, 1.442695
        %v2976 = vpow.pop %v2975
        %v2977 = vmul.f32 %v2918, 1.442695
        %v2978 = vpow.pop %v2977
        %v2979 = vmul.f32 %v2919, 1.442695
        %v2980 = vpow.pop %v2979
        %v2981 = vmul.f32 %v2920, 1.442695
        %v2982 = vpow.pop %v2981
        %v2983 = vmul.f32 %v2921, 1.442695
        %v2984 = vpow.pop %v2983
        %v2985 = vmul.f32 %v2922, 1.442695
        %v2986 = vpow.pop %v2985
        %v2987 = vmul.f32 %v2923, 1.442695
        %v2988 = vpow.pop %v2987
        %v2989 = vmul.f32 %v2924, 1.442695
        %v2990 = vpow.pop %v2989
        %v2991 = vmul.f32 %v2925, 1.442695
        %v2992 = vpow.pop %v2991
        %v2993 = vmul.f32 %v2926, 1.442695
        %v2994 = vpow.pop %v2993
        %v2995 = vmul.f32 %v2927, 1.442695
        %v2996 = vpow.pop %v2995
        %v2997 = vmul.f32 %v2928, 1.442695
        %v2998 = vpow.pop %v2997
        %v2999 = vmul.f32 %v2929, 1.442695
        %v3000 = vpow.pop %v2999
        %v3001 = vmul.f32 %v2930, 1.442695
        %v3002 = vpow.pop %v3001
        %v3003 = vmul.f32 %v2931, 1.442695
        %v3004 = vpow.pop %v3003
        %v3005 = vmul.f32 %v2932, 1.442695
        %v3006 = vpow.pop %v3005
        %v3007 = vmul.f32 %v2933, 1.442695
        %v3008 = vpow.pop %v3007
        %v3009 = vmul.f32 %v2934, 1.442695
        %v3010 = vpow.pop %v3009
        %v3011 = vmul.f32 %v2935, 1.442695
        %v3012 = vpow.pop %v3011
        %v3013 = vmul.f32 %v2936, 1.442695
        %v3014 = vpow.pop %v3013
        %v3015 = vmul.f32 %v2937, 1.442695
        %v3016 = vpow.pop %v3015
        %v3017 = vmul.f32 %v2938, 1.442695
        %v3018 = vpow.pop %v3017
        %v3019 = vmul.f32 %v2939, 1.442695
        %v3020 = vpow.pop %v3019
        %v3021 = vmul.f32 %v2940, 1.442695
        %v3022 = vpow.pop %v3021
        %v3023 = vmul.f32 %v2941, 1.442695
        %v3024 = vpow.pop %v3023
        %v3025 = vmul.f32 %v2942, 1.442695
        %v3026 = vpow.pop %v3025
        %v3027 = vmul.f32 %v2943, 1.442695
        %v3028 = vpow.pop %v3027
        %v3029 = vmul.f32 %v2944, 1.442695
        %v3030 = vpow.pop %v3029
        %v3031 = vmul.f32 %v2945, 1.442695
        %v3032 = vpow.pop %v3031
        %v3033 = vmul.f32 %v2946, 1.442695
        %v3034 = vpow.pop %v3033
        %v3035 = vmul.f32 %v2947, 1.442695
        %v3036 = vpow.pop %v3035
        %v3037 = vmul.f32 %v2948, 1.442695
        %v3038 = vpow.pop %v3037
        %v3039 = vmul.f32 %v2949, 1.442695
        %v3040 = vpow.pop %v3039
        %v3041 = vmul.f32 %v2950, 1.442695
        %v3042 = vpow.pop %v3041
        %v3043 = vmul.f32 %v2951, 1.442695
        %v3044 = vpow.pop %v3043
        %v3045 = vmul.f32 %v2952, 1.442695
        %v3046 = vpow.pop %v3045
        %v3047 = vmul.f32 %v2953, 1.442695
        %v3048 = vpow.pop %v3047
        %v3049 = vmul.f32 %v2954, 1.442695
        %v3050 = vpow.pop %v3049
        %v3051 = vadd.f32 %v2956, 1.0
        %v3052 = vadd.f32 %v2958, 1.0
        %v3053 = vadd.f32 %v2960, 1.0
        %v3054 = vadd.f32 %v2962, 1.0
        %v3055 = vadd.f32 %v2964, 1.0
        %v3056 = vadd.f32 %v2966, 1.0
        %v3057 = vadd.f32 %v2968, 1.0
        %v3058 = vadd.f32 %v2970, 1.0
        %v3059 = vadd.f32 %v2972, 1.0
        %v3060 = vadd.f32 %v2974, 1.0
        %v3061 = vadd.f32 %v2976, 1.0
        %v3062 = vadd.f32 %v2978, 1.0
        %v3063 = vadd.f32 %v2980, 1.0
        %v3064 = vadd.f32 %v2982, 1.0
        %v3065 = vadd.f32 %v2984, 1.0
        %v3066 = vadd.f32 %v2986, 1.0
        %v3067 = vadd.f32 %v2988, 1.0
        %v3068 = vadd.f32 %v2990, 1.0
        %v3069 = vadd.f32 %v2992, 1.0
        %v3070 = vadd.f32 %v2994, 1.0
        %v3071 = vadd.f32 %v2996, 1.0
        %v3072 = vadd.f32 %v2998, 1.0
        %v3073 = vadd.f32 %v3000, 1.0
        %v3074 = vadd.f32 %v3002, 1.0
        %v3075 = vadd.f32 %v3004, 1.0
        %v3076 = vadd.f32 %v3006, 1.0
        %v3077 = vadd.f32 %v3008, 1.0
        %v3078 = vadd.f32 %v3010, 1.0
        %v3079 = vadd.f32 %v3012, 1.0
        %v3080 = vadd.f32 %v3014, 1.0
        %v3081 = vadd.f32 %v3016, 1.0
        %v3082 = vadd.f32 %v3018, 1.0
        %v3083 = vadd.f32 %v3020, 1.0
        %v3084 = vadd.f32 %v3022, 1.0
        %v3085 = vadd.f32 %v3024, 1.0
        %v3086 = vadd.f32 %v3026, 1.0
        %v3087 = vadd.f32 %v3028, 1.0
        %v3088 = vadd.f32 %v3030, 1.0
        %v3089 = vadd.f32 %v3032, 1.0
        %v3090 = vadd.f32 %v3034, 1.0
        %v3091 = vadd.f32 %v3036, 1.0
        %v3092 = vadd.f32 %v3038, 1.0
        %v3093 = vadd.f32 %v3040, 1.0
        %v3094 = vadd.f32 %v3042, 1.0
        %v3095 = vadd.f32 %v3044, 1.0
        %v3096 = vadd.f32 %v3046, 1.0
        %v3097 = vadd.f32 %v3048, 1.0
        %v3098 = vadd.f32 %v3050, 1.0
        %v3099 = vrcp.pop %v3051
        %v3100 = vmul.f32 1.0, %v3099
        %v3101 = vrcp.pop %v3052
        %v3102 = vmul.f32 1.0, %v3101
        %v3103 = vrcp.pop %v3053
        %v3104 = vmul.f32 1.0, %v3103
        %v3105 = vrcp.pop %v3054
        %v3106 = vmul.f32 1.0, %v3105
        %v3107 = vrcp.pop %v3055
        %v3108 = vmul.f32 1.0, %v3107
        %v3109 = vrcp.pop %v3056
        %v3110 = vmul.f32 1.0, %v3109
        %v3111 = vrcp.pop %v3057
        %v3112 = vmul.f32 1.0, %v3111
        %v3113 = vrcp.pop %v3058
        %v3114 = vmul.f32 1.0, %v3113
        %v3115 = vrcp.pop %v3059
        %v3116 = vmul.f32 1.0, %v3115
        %v3117 = vrcp.pop %v3060
        %v3118 = vmul.f32 1.0, %v3117
        %v3119 = vrcp.pop %v3061
        %v3120 = vmul.f32 1.0, %v3119
        %v3121 = vrcp.pop %v3062
        %v3122 = vmul.f32 1.0, %v3121
        %v3123 = vrcp.pop %v3063
        %v3124 = vmul.f32 1.0, %v3123
        %v3125 = vrcp.pop %v3064
        %v3126 = vmul.f32 1.0, %v3125
        %v3127 = vrcp.pop %v3065
        %v3128 = vmul.f32 1.0, %v3127
        %v3129 = vrcp.pop %v3066
        %v3130 = vmul.f32 1.0, %v3129
        %v3131 = vrcp.pop %v3067
        %v3132 = vmul.f32 1.0, %v3131
        %v3133 = vrcp.pop %v3068
        %v3134 = vmul.f32 1.0, %v3133
        %v3135 = vrcp.pop %v3069
        %v3136 = vmul.f32 1.0, %v3135
        %v3137 = vrcp.pop %v3070
        %v3138 = vmul.f32 1.0, %v3137
        %v3139 = vrcp.pop %v3071
        %v3140 = vmul.f32 1.0, %v3139
        %v3141 = vrcp.pop %v3072
        %v3142 = vmul.f32 1.0, %v3141
        %v3143 = vrcp.pop %v3073
        %v3144 = vmul.f32 1.0, %v3143
        %v3145 = vrcp.pop %v3074
        %v3146 = vmul.f32 1.0, %v3145
        %v3147 = vrcp.pop %v3075
        %v3148 = vmul.f32 1.0, %v3147
        %v3149 = vrcp.pop %v3076
        %v3150 = vmul.f32 1.0, %v3149
        %v3151 = vrcp.pop %v3077
        %v3152 = vmul.f32 1.0, %v3151
        %v3153 = vrcp.pop %v3078
        %v3154 = vmul.f32 1.0, %v3153
        %v3155 = vrcp.pop %v3079
        %v3156 = vmul.f32 1.0, %v3155
        %v3157 = vrcp.pop %v3080
        %v3158 = vmul.f32 1.0, %v3157
        %v3159 = vrcp.pop %v3081
        %v3160 = vmul.f32 1.0, %v3159
        %v3161 = vrcp.pop %v3082
        %v3162 = vmul.f32 1.0, %v3161
        %v3163 = vrcp.pop %v3083
        %v3164 = vmul.f32 1.0, %v3163
        %v3165 = vrcp.pop %v3084
        %v3166 = vmul.f32 1.0, %v3165
        %v3167 = vrcp.pop %v3085
        %v3168 = vmul.f32 1.0, %v3167
        %v3169 = vrcp.pop %v3086
        %v3170 = vmul.f32 1.0, %v3169
        %v3171 = vrcp.pop %v3087
        %v3172 = vmul.f32 1.0, %v3171
        %v3173 = vrcp.pop %v3088
        %v3174 = vmul.f32 1.0, %v3173
        %v3175 = vrcp.pop %v3089
        %v3176 = vmul.f32 1.0, %v3175
        %v3177 = vrcp.pop %v3090
        %v3178 = vmul.f32 1.0, %v3177
        %v3179 = vrcp.pop %v3091
        %v3180 = vmul.f32 1.0, %v3179
        %v3181 = vrcp.pop %v3092
        %v3182 = vmul.f32 1.0, %v3181
        %v3183 = vrcp.pop %v3093
        %v3184 = vmul.f32 1.0, %v3183
        %v3185 = vrcp.pop %v3094
        %v3186 = vmul.f32 1.0, %v3185
        %v3187 = vrcp.pop %v3095
        %v3188 = vmul.f32 1.0, %v3187
        %v3189 = vrcp.pop %v3096
        %v3190 = vmul.f32 1.0, %v3189
        %v3191 = vrcp.pop %v3097
        %v3192 = vmul.f32 1.0, %v3191
        %v3193 = vrcp.pop %v3098
        %v3194 = vmul.f32 1.0, %v3193
        %v3195 = vmul.f32 %v2859, %v3100
        %v3196 = vmul.f32 %v2860, %v3102
        %v3197 = vmul.f32 %v2861, %v3104
        %v3198 = vmul.f32 %v2862, %v3106
        %v3199 = vmul.f32 %v2863, %v3108
        %v3200 = vmul.f32 %v2864, %v3110
        %v3201 = vmul.f32 %v2865, %v3112
        %v3202 = vmul.f32 %v2866, %v3114
        %v3203 = vmul.f32 %v2867, %v3116
        %v3204 = vmul.f32 %v2868, %v3118
        %v3205 = vmul.f32 %v2869, %v3120
        %v3206 = vmul.f32 %v2870, %v3122
        %v3207 = vmul.f32 %v2871, %v3124
        %v3208 = vmul.f32 %v2872, %v3126
        %v3209 = vmul.f32 %v2873, %v3128
        %v3210 = vmul.f32 %v2874, %v3130
        %v3211 = vmul.f32 %v2875, %v3132
        %v3212 = vmul.f32 %v2876, %v3134
        %v3213 = vmul.f32 %v2877, %v3136
        %v3214 = vmul.f32 %v2878, %v3138
        %v3215 = vmul.f32 %v2879, %v3140
        %v3216 = vmul.f32 %v2880, %v3142
        %v3217 = vmul.f32 %v2881, %v3144
        %v3218 = vmul.f32 %v2882, %v3146
        %v3219 = vmul.f32 %v2883, %v3148
        %v3220 = vmul.f32 %v2884, %v3150
        %v3221 = vmul.f32 %v2885, %v3152
        %v3222 = vmul.f32 %v2886, %v3154
        %v3223 = vmul.f32 %v2887, %v3156
        %v3224 = vmul.f32 %v2888, %v3158
        %v3225 = vmul.f32 %v2889, %v3160
        %v3226 = vmul.f32 %v2890, %v3162
        %v3227 = vmul.f32 %v2891, %v3164
        %v3228 = vmul.f32 %v2892, %v3166
        %v3229 = vmul.f32 %v2893, %v3168
        %v3230 = vmul.f32 %v2894, %v3170
        %v3231 = vmul.f32 %v2895, %v3172
        %v3232 = vmul.f32 %v2896, %v3174
        %v3233 = vmul.f32 %v2897, %v3176
        %v3234 = vmul.f32 %v2898, %v3178
        %v3235 = vmul.f32 %v2899, %v3180
        %v3236 = vmul.f32 %v2900, %v3182
        %v3237 = vmul.f32 %v2901, %v3184
        %v3238 = vmul.f32 %v2902, %v3186
        %v3239 = vmul.f32 %v2903, %v3188
        %v3240 = vmul.f32 %v2904, %v3190
        %v3241 = vmul.f32 %v2905, %v3192
        %v3242 = vmul.f32 %v2906, %v3194
        %v3243 = vlaneseq
        %v3244 = vshrl.u32 %v3243, 7
        %v3245 = vadd.s32 %v3244, 8
        %v3246 = vadd.s32 %v3244, 16
        %vm3247 = vcmp.lt.s32.totalorder %v3244, 16
        %vm3248 = vcmp.lt.s32.totalorder %v3245, 16
        %vm3249 = vcmp.lt.s32.totalorder %v3246, 16
        %v3250 = vsel %vm3247, 1, 0
        %v3251 = vsel %vm3248, 1, 0
        %v3252 = vsel %vm3249, 1, 0
        %v3253 = vcvt.s32.f32 %v3250
        %v3254 = vcvt.s32.f32 %v3251
        %v3255 = vcvt.s32.f32 %v3252
        %v3256 = vmul.f32 %v3195, %v3253
        %v3257 = vmul.f32 %v3196, %v3254
        %v3258 = vmul.f32 %v3197, %v3255
        %v3259 = vmul.f32 %v3198, %v3253
        %v3260 = vmul.f32 %v3199, %v3254
        %v3261 = vmul.f32 %v3200, %v3255
        %v3262 = vmul.f32 %v3201, %v3253
        %v3263 = vmul.f32 %v3202, %v3254
        %v3264 = vmul.f32 %v3203, %v3255
        %v3265 = vmul.f32 %v3204, %v3253
        %v3266 = vmul.f32 %v3205, %v3254
        %v3267 = vmul.f32 %v3206, %v3255
        %v3268 = vmul.f32 %v3207, %v3253
        %v3269 = vmul.f32 %v3208, %v3254
        %v3270 = vmul.f32 %v3209, %v3255
        %v3271 = vmul.f32 %v3210, %v3253
        %v3272 = vmul.f32 %v3211, %v3254
        %v3273 = vmul.f32 %v3212, %v3255
        %v3274 = vmul.f32 %v3213, %v3253
        %v3275 = vmul.f32 %v3214, %v3254
        %v3276 = vmul.f32 %v3215, %v3255
        %v3277 = vmul.f32 %v3216, %v3253
        %v3278 = vmul.f32 %v3217, %v3254
        %v3279 = vmul.f32 %v3218, %v3255
        %v3280 = vmul.f32 %v3219, %v3253
        %v3281 = vmul.f32 %v3220, %v3254
        %v3282 = vmul.f32 %v3221, %v3255
        %v3283 = vmul.f32 %v3222, %v3253
        %v3284 = vmul.f32 %v3223, %v3254
        %v3285 = vmul.f32 %v3224, %v3255
        %v3286 = vmul.f32 %v3225, %v3253
        %v3287 = vmul.f32 %v3226, %v3254
        %v3288 = vmul.f32 %v3227, %v3255
        %v3289 = vmul.f32 %v3228, %v3253
        %v3290 = vmul.f32 %v3229, %v3254
        %v3291 = vmul.f32 %v3230, %v3255
        %v3292 = vmul.f32 %v3231, %v3253
        %v3293 = vmul.f32 %v3232, %v3254
        %v3294 = vmul.f32 %v3233, %v3255
        %v3295 = vmul.f32 %v3234, %v3253
        %v3296 = vmul.f32 %v3235, %v3254
        %v3297 = vmul.f32 %v3236, %v3255
        %v3298 = vmul.f32 %v3237, %v3253
        %v3299 = vmul.f32 %v3238, %v3254
        %v3300 = vmul.f32 %v3239, %v3255
        %v3301 = vmul.f32 %v3240, %v3253
        %v3302 = vmul.f32 %v3241, %v3254
        %v3303 = vmul.f32 %v3242, %v3255
        %3304 = vmatprep.subr.mxu0 0.0
        %3305 = vmatpush1.msra.mxu0 %v3271
        %3306 = vmatprep.subr.mxu0 0.0
        %3307 = vmatpush1.msra.mxu0 %v3270
        %3308 = vmatprep.subr.mxu0 0.0
        %3309 = vmatpush1.msra.mxu0 %v3269
        %3310 = vmatprep.subr.mxu0 0.0
        %3311 = vmatpush1.msra.mxu0 %v3268
        %3312 = vmatprep.subr.mxu0 0.0
        %3313 = vmatpush1.msra.mxu0 %v3267
        %3314 = vmatprep.subr.mxu0 0.0
        %3315 = vmatpush1.msra.mxu0 %v3266
        %3316 = vmatprep.subr.mxu0 0.0
        %3317 = vmatpush1.msra.mxu0 %v3265
        %3318 = vmatprep.subr.mxu0 0.0
        %3319 = vmatpush1.msra.mxu0 %v3264
        %3320 = vmatprep.subr.mxu0 0.0
        %3321 = vmatpush1.msra.mxu0 %v3263
        %3322 = vmatprep.subr.mxu0 0.0
        %3323 = vmatpush1.msra.mxu0 %v3262
        %3324 = vmatprep.subr.mxu0 0.0
        %3325 = vmatpush1.msra.mxu0 %v3261
        %3326 = vmatprep.subr.mxu0 0.0
        %3327 = vmatpush1.msra.mxu0 %v3260
        %3328 = vmatprep.subr.mxu0 0.0
        %3329 = vmatpush1.msra.mxu0 %v3259
        %3330 = vmatprep.subr.mxu0 0.0
        %3331 = vmatpush1.msra.mxu0 %v3258
        %3332 = vmatprep.subr.mxu0 0.0
        %3333 = vmatpush1.msra.mxu0 %v3257
        %3334 = vmatprep.subr.mxu0 0.0
        %3335 = vmatpush1.msra.mxu0 %v3256
        %3336 = vmatprep.subr.mxu0 0.0
        %3337 = vmatpush2.msra.mxu0 %v3287
        %3338 = vmatprep.subr.mxu0 0.0
        %3339 = vmatpush2.msra.mxu0 %v3286
        %3340 = vmatprep.subr.mxu0 0.0
        %3341 = vmatpush2.msra.mxu0 %v3285
        %3342 = vmatprep.subr.mxu0 0.0
        %3343 = vmatpush2.msra.mxu0 %v3284
        %3344 = vmatprep.subr.mxu0 0.0
        %3345 = vmatpush2.msra.mxu0 %v3283
        %3346 = vmatprep.subr.mxu0 0.0
        %3347 = vmatpush2.msra.mxu0 %v3282
        %3348 = vmatprep.subr.mxu0 0.0
        %3349 = vmatpush2.msra.mxu0 %v3281
        %3350 = vmatprep.subr.mxu0 0.0
        %3351 = vmatpush2.msra.mxu0 %v3280
        %3352 = vmatprep.subr.mxu0 0.0
        %3353 = vmatpush2.msra.mxu0 %v3279
        %3354 = vmatprep.subr.mxu0 0.0
        %3355 = vmatpush2.msra.mxu0 %v3278
        %3356 = vmatprep.subr.mxu0 0.0
        %3357 = vmatpush2.msra.mxu0 %v3277
        %3358 = vmatprep.subr.mxu0 0.0
        %3359 = vmatpush2.msra.mxu0 %v3276
        %3360 = vmatprep.subr.mxu0 0.0
        %3361 = vmatpush2.msra.mxu0 %v3275
        %3362 = vmatprep.subr.mxu0 0.0
        %3363 = vmatpush2.msra.mxu0 %v3274
        %3364 = vmatprep.subr.mxu0 0.0
        %3365 = vmatpush2.msra.mxu0 %v3273
        %3366 = vmatprep.subr.mxu0 0.0
        %3367 = vmatpush2.msra.mxu0 %v3272
        %3368 = vmatprep.mubr.f32.mxu0 1.0
        %3369 = vmatmul.mubr.f32.gmra.mxu0 1.0
        %v3370 = vpop.f32.mrf.mxu0
        %v3371 = vadd.f32 0.0, %v3370
        %v3372 = vpop.f32.mrf.mxu0
        %3373 = vdwg.mxu0
        %3374 = vmatprep.subr.mxu0 0.0
        %3375 = vmatpush1.msra.mxu0 %v3303
        %3376 = vmatprep.subr.mxu0 0.0
        %3377 = vmatpush1.msra.mxu0 %v3302
        %3378 = vmatprep.subr.mxu0 0.0
        %3379 = vmatpush1.msra.mxu0 %v3301
        %3380 = vmatprep.subr.mxu0 0.0
        %3381 = vmatpush1.msra.mxu0 %v3300
        %3382 = vmatprep.subr.mxu0 0.0
        %3383 = vmatpush1.msra.mxu0 %v3299
        %3384 = vmatprep.subr.mxu0 0.0
        %3385 = vmatpush1.msra.mxu0 %v3298
        %3386 = vmatprep.subr.mxu0 0.0
        %3387 = vmatpush1.msra.mxu0 %v3297
        %3388 = vmatprep.subr.mxu0 0.0
        %3389 = vmatpush1.msra.mxu0 %v3296
        %3390 = vmatprep.subr.mxu0 0.0
        %3391 = vmatpush1.msra.mxu0 %v3295
        %3392 = vmatprep.subr.mxu0 0.0
        %3393 = vmatpush1.msra.mxu0 %v3294
        %3394 = vmatprep.subr.mxu0 0.0
        %3395 = vmatpush1.msra.mxu0 %v3293
        %3396 = vmatprep.subr.mxu0 0.0
        %3397 = vmatpush1.msra.mxu0 %v3292
        %3398 = vmatprep.subr.mxu0 0.0
        %3399 = vmatpush1.msra.mxu0 %v3291
        %3400 = vmatprep.subr.mxu0 0.0
        %3401 = vmatpush1.msra.mxu0 %v3290
        %3402 = vmatprep.subr.mxu0 0.0
        %3403 = vmatpush1.msra.mxu0 %v3289
        %3404 = vmatprep.subr.mxu0 0.0
        %3405 = vmatpush1.msra.mxu0 %v3288
        %3406 = vmatprep.subr.mxu0 0.0
        %3407 = vmatpush2.msra.mxu0 0.0
        %3408 = vmatprep.subr.mxu0 0.0
        %3409 = vmatpush2.msra.mxu0 0.0
        %3410 = vmatprep.subr.mxu0 0.0
        %3411 = vmatpush2.msra.mxu0 0.0
        %3412 = vmatprep.subr.mxu0 0.0
        %3413 = vmatpush2.msra.mxu0 0.0
        %3414 = vmatprep.subr.mxu0 0.0
        %3415 = vmatpush2.msra.mxu0 0.0
        %3416 = vmatprep.subr.mxu0 0.0
        %3417 = vmatpush2.msra.mxu0 0.0
        %3418 = vmatprep.subr.mxu0 0.0
        %3419 = vmatpush2.msra.mxu0 0.0
        %3420 = vmatprep.subr.mxu0 0.0
        %3421 = vmatpush2.msra.mxu0 0.0
        %3422 = vmatprep.subr.mxu0 0.0
        %3423 = vmatpush2.msra.mxu0 0.0
        %3424 = vmatprep.subr.mxu0 0.0
        %3425 = vmatpush2.msra.mxu0 0.0
        %3426 = vmatprep.subr.mxu0 0.0
        %3427 = vmatpush2.msra.mxu0 0.0
        %3428 = vmatprep.subr.mxu0 0.0
        %3429 = vmatpush2.msra.mxu0 0.0
        %3430 = vmatprep.subr.mxu0 0.0
        %3431 = vmatpush2.msra.mxu0 0.0
        %3432 = vmatprep.subr.mxu0 0.0
        %3433 = vmatpush2.msra.mxu0 0.0
        %3434 = vmatprep.subr.mxu0 0.0
        %3435 = vmatpush2.msra.mxu0 0.0
        %3436 = vmatprep.subr.mxu0 0.0
        %3437 = vmatpush2.msra.mxu0 0.0
        %3438 = vmatprep.mubr.f32.mxu0 0.0
        %3439 = vmatmul.mubr.f32.gmra.mxu0 1.0
        %v3440 = vpop.f32.mrf.mxu0
        %v3441 = vadd.f32 %v3371, %v3440
        %v3442 = vpop.f32.mrf.mxu0
        %3443 = vdwg.mxu0
        %v3444 = vmul.f32 %v3441, 0.00390625
        %v3445 = vld [vmem:[%s5] sm:$0xff]
        %v3446 = vld [vmem:[%s5 + $0x8] sm:$0xff]
        %v3447 = vld [vmem:[%s5 + $0x10] sm:$0xff]
        %v3448 = vld [vmem:[%s5 + $0x18] sm:$0xff]
        %v3450 = vsel %vm2282, %v3444, 0
        %3452 = vmatprep.subr.mxu0 0.0
        %3453 = vmatpush1.msra.mxu0 0.0
        %3454 = vmatprep.subr.mxu0 0.0
        %3455 = vmatpush1.msra.mxu0 0.0
        %3456 = vmatprep.subr.mxu0 0.0
        %3457 = vmatpush1.msra.mxu0 0.0
        %3458 = vmatprep.subr.mxu0 0.0
        %3459 = vmatpush1.msra.mxu0 0.0
        %3460 = vmatprep.subr.mxu0 0.0
        %3461 = vmatpush1.msra.mxu0 0.0
        %3462 = vmatprep.subr.mxu0 0.0
        %3463 = vmatpush1.msra.mxu0 0.0
        %3464 = vmatprep.subr.mxu0 0.0
        %3465 = vmatpush1.msra.mxu0 0.0
        %3466 = vmatprep.subr.mxu0 0.0
        %3467 = vmatpush1.msra.mxu0 0.0
        %3468 = vmatprep.subr.mxu0 0.0
        %3469 = vmatpush1.msra.mxu0 0.0
        %3470 = vmatprep.subr.mxu0 0.0
        %3471 = vmatpush1.msra.mxu0 0.0
        %3472 = vmatprep.subr.mxu0 0.0
        %3473 = vmatpush1.msra.mxu0 0.0
        %3474 = vmatprep.subr.mxu0 0.0
        %3475 = vmatpush1.msra.mxu0 0.0
        %3476 = vmatprep.subr.mxu0 0.0
        %3477 = vmatpush1.msra.mxu0 %v3448
        %3478 = vmatprep.subr.mxu0 0.0
        %3479 = vmatpush1.msra.mxu0 %v3447
        %3480 = vmatprep.subr.mxu0 0.0
        %3481 = vmatpush1.msra.mxu0 %v3446
        %3482 = vmatprep.subr.mxu0 0.0
        %3483 = vmatpush1.msra.mxu0 %v3445
        %3484 = vmatprep.subr.mxu0 0.0
        %3485 = vmatpush2.msra.mxu0 0.0
        %3486 = vmatprep.subr.mxu0 0.0
        %3487 = vmatpush2.msra.mxu0 0.0
        %3488 = vmatprep.subr.mxu0 0.0
        %3489 = vmatpush2.msra.mxu0 0.0
        %3490 = vmatprep.subr.mxu0 0.0
        %3491 = vmatpush2.msra.mxu0 0.0
        %3492 = vmatprep.subr.mxu0 0.0
        %3493 = vmatpush2.msra.mxu0 0.0
        %3494 = vmatprep.subr.mxu0 0.0
        %3495 = vmatpush2.msra.mxu0 0.0
        %3496 = vmatprep.subr.mxu0 0.0
        %3497 = vmatpush2.msra.mxu0 0.0
        %3498 = vmatprep.subr.mxu0 0.0
        %3499 = vmatpush2.msra.mxu0 0.0
        %3500 = vmatprep.subr.mxu0 0.0
        %3501 = vmatpush2.msra.mxu0 0.0
        %3502 = vmatprep.subr.mxu0 0.0
        %3503 = vmatpush2.msra.mxu0 0.0
        %3504 = vmatprep.subr.mxu0 0.0
        %3505 = vmatpush2.msra.mxu0 0.0
        %3506 = vmatprep.subr.mxu0 0.0
        %3507 = vmatpush2.msra.mxu0 0.0
        %3508 = vmatprep.subr.mxu0 0.0
        %3509 = vmatpush2.msra.mxu0 0.0
        %3510 = vmatprep.subr.mxu0 0.0
        %3511 = vmatpush2.msra.mxu0 0.0
        %3512 = vmatprep.subr.mxu0 0.0
        %3513 = vmatpush2.msra.mxu0 0.0
        %3514 = vmatprep.subr.mxu0 0.0
        %3515 = vmatpush2.msra.mxu0 0.0
        %3516 = vmatprep.mubr.f32.mxu0 0.0
        %3517 = vmatmul.mubr.f32.gmra.mxu0 %v3450
        %v3518 = vpop.f32.mrf.mxu0
        %v3519 = vadd.f32 0.0, %v3518
        %v3520 = vpop.f32.mrf.mxu0
        %3521 = vdwg.mxu0
        %v3522 = vmax.f32 %v3519, 0.0
        %v3523 = vld [vmem:[%s6] sm:$0x3]
        %vm3524 = vcmask 15360
        %v3526 = vsel %vm3524, %v3522, 0
        %vm3528 = vcmask 1041408
        %v3530 = vsel %vm3528, %v3523, 0
        %3532 = vmatprep.subr.mxu0 0.0
        %3533 = vmatpush1.msra.mxu0 0.0
        %3534 = vmatprep.subr.mxu0 0.0
        %3535 = vmatpush1.msra.mxu0 0.0
        %3536 = vmatprep.subr.mxu0 0.0
        %3537 = vmatpush1.msra.mxu0 0.0
        %3538 = vmatprep.subr.mxu0 0.0
        %3539 = vmatpush1.msra.mxu0 0.0
        %3540 = vmatprep.subr.mxu0 0.0
        %3541 = vmatpush1.msra.mxu0 0.0
        %3542 = vmatprep.subr.mxu0 0.0
        %3543 = vmatpush1.msra.mxu0 0.0
        %3544 = vmatprep.subr.mxu0 0.0
        %3545 = vmatpush1.msra.mxu0 0.0
        %3546 = vmatprep.subr.mxu0 0.0
        %3547 = vmatpush1.msra.mxu0 0.0
        %3548 = vmatprep.subr.mxu0 0.0
        %3549 = vmatpush1.msra.mxu0 0.0
        %3550 = vmatprep.subr.mxu0 0.0
        %3551 = vmatpush1.msra.mxu0 0.0
        %3552 = vmatprep.subr.mxu0 0.0
        %3553 = vmatpush1.msra.mxu0 0.0
        %3554 = vmatprep.subr.mxu0 0.0
        %3555 = vmatpush1.msra.mxu0 0.0
        %3556 = vmatprep.subr.mxu0 0.0
        %3557 = vmatpush1.msra.mxu0 0.0
        %3558 = vmatprep.subr.mxu0 0.0
        %3559 = vmatpush1.msra.mxu0 0.0
        %3560 = vmatprep.subr.mxu0 0.0
        %3561 = vmatpush1.msra.mxu0 0.0
        %3562 = vmatprep.subr.mxu0 0.0
        %3563 = vmatpush1.msra.mxu0 %v3530
        %3564 = vmatprep.subr.mxu0 0.0
        %3565 = vmatpush2.msra.mxu0 0.0
        %3566 = vmatprep.subr.mxu0 0.0
        %3567 = vmatpush2.msra.mxu0 0.0
        %3568 = vmatprep.subr.mxu0 0.0
        %3569 = vmatpush2.msra.mxu0 0.0
        %3570 = vmatprep.subr.mxu0 0.0
        %3571 = vmatpush2.msra.mxu0 0.0
        %3572 = vmatprep.subr.mxu0 0.0
        %3573 = vmatpush2.msra.mxu0 0.0
        %3574 = vmatprep.subr.mxu0 0.0
        %3575 = vmatpush2.msra.mxu0 0.0
        %3576 = vmatprep.subr.mxu0 0.0
        %3577 = vmatpush2.msra.mxu0 0.0
        %3578 = vmatprep.subr.mxu0 0.0
        %3579 = vmatpush2.msra.mxu0 0.0
        %3580 = vmatprep.subr.mxu0 0.0
        %3581 = vmatpush2.msra.mxu0 0.0
        %3582 = vmatprep.subr.mxu0 0.0
        %3583 = vmatpush2.msra.mxu0 0.0
        %3584 = vmatprep.subr.mxu0 0.0
        %3585 = vmatpush2.msra.mxu0 0.0
        %3586 = vmatprep.subr.mxu0 0.0
        %3587 = vmatpush2.msra.mxu0 0.0
        %3588 = vmatprep.subr.mxu0 0.0
        %3589 = vmatpush2.msra.mxu0 0.0
        %3590 = vmatprep.subr.mxu0 0.0
        %3591 = vmatpush2.msra.mxu0 0.0
        %3592 = vmatprep.subr.mxu0 0.0
        %3593 = vmatpush2.msra.mxu0 0.0
        %3594 = vmatprep.subr.mxu0 0.0
        %3595 = vmatpush2.msra.mxu0 0.0
        %3596 = vmatprep.mubr.f32.mxu0 0.0
        %3597 = vmatmul.mubr.f32.gmra.mxu0 %v3526
        %v3598 = vpop.f32.mrf.mxu0
        %v3599 = vadd.f32 0.0, %v3598
        %v3600 = vpop.f32.mrf.mxu0
        %3601 = vdwg.mxu0
        %v3602 = vsub.f32 0.0, %v3599
        %v3603 = vmul.f32 %v3602, 1.442695
        %v3604 = vpow.pop %v3603
        %v3605 = vadd.f32 %v3604, 1.0
        %v3606 = vrcp.pop %v3605
        %v3607 = vmul.f32 1.0, %v3606
        %v3608 = vlaneseq
        %v3609 = vshrl.u32 %v3608, 7
        %v3610 = vsub.s32 0, %v3609
        %v3611 = vrot.slane %v3607, %v3610
        %v3612 = vmul.f32 %v3256, %v3611
        %v3613 = vmul.f32 %v3257, %v3611
        %v3614 = vmul.f32 %v3258, %v3611
        %v3615 = vmul.f32 %v3259, %v3611
        %v3616 = vmul.f32 %v3260, %v3611
        %v3617 = vmul.f32 %v3261, %v3611
        %v3618 = vmul.f32 %v3262, %v3611
        %v3619 = vmul.f32 %v3263, %v3611
        %v3620 = vmul.f32 %v3264, %v3611
        %v3621 = vmul.f32 %v3265, %v3611
        %v3622 = vmul.f32 %v3266, %v3611
        %v3623 = vmul.f32 %v3267, %v3611
        %v3624 = vmul.f32 %v3268, %v3611
        %v3625 = vmul.f32 %v3269, %v3611
        %v3626 = vmul.f32 %v3270, %v3611
        %v3627 = vmul.f32 %v3271, %v3611
        %v3628 = vmul.f32 %v3272, %v3611
        %v3629 = vmul.f32 %v3273, %v3611
        %v3630 = vmul.f32 %v3274, %v3611
        %v3631 = vmul.f32 %v3275, %v3611
        %v3632 = vmul.f32 %v3276, %v3611
        %v3633 = vmul.f32 %v3277, %v3611
        %v3634 = vmul.f32 %v3278, %v3611
        %v3635 = vmul.f32 %v3279, %v3611
        %v3636 = vmul.f32 %v3280, %v3611
        %v3637 = vmul.f32 %v3281, %v3611
        %v3638 = vmul.f32 %v3282, %v3611
        %v3639 = vmul.f32 %v3283, %v3611
        %v3640 = vmul.f32 %v3284, %v3611
        %v3641 = vmul.f32 %v3285, %v3611
        %v3642 = vmul.f32 %v3286, %v3611
        %v3643 = vmul.f32 %v3287, %v3611
        %v3644 = vmul.f32 %v3288, %v3611
        %v3645 = vmul.f32 %v3289, %v3611
        %v3646 = vmul.f32 %v3290, %v3611
        %v3647 = vmul.f32 %v3291, %v3611
        %v3648 = vmul.f32 %v3292, %v3611
        %v3649 = vmul.f32 %v3293, %v3611
        %v3650 = vmul.f32 %v3294, %v3611
        %v3651 = vmul.f32 %v3295, %v3611
        %v3652 = vmul.f32 %v3296, %v3611
        %v3653 = vmul.f32 %v3297, %v3611
        %v3654 = vmul.f32 %v3298, %v3611
        %v3655 = vmul.f32 %v3299, %v3611
        %v3656 = vmul.f32 %v3300, %v3611
        %v3657 = vmul.f32 %v3301, %v3611
        %v3658 = vmul.f32 %v3302, %v3611
        %v3659 = vmul.f32 %v3303, %v3611
        %3660 = vst.msk [vmem:[#allocation2] sm:$0xff] %vm2282, 0.0
        %3661 = vst.msk [vmem:[#allocation2 + $0x8] sm:$0xff] %vm2282, 0.0
        %3662 = vst.msk [vmem:[#allocation2 + $0x10] sm:$0xff] %vm2282, 0.0
        %vm3663 = vcmask 253952
        %3664 = vst.msk [vmem:[#allocation2 + $0x18] sm:$0x1] %vm3663, 0.0
        %3665 = vst.msk [vmem:[#allocation2 + $0x199] sm:$0xff] %vm2282, 0.0
        %3666 = vst.msk [vmem:[#allocation2 + $0x1a1] sm:$0xff] %vm2282, 0.0
        %3667 = vst.msk [vmem:[#allocation2 + $0x1a9] sm:$0xff] %vm2282, 0.0
        %3668 = vst.msk [vmem:[#allocation2 + $0x1b1] sm:$0xff] %vm2282, 0.0
        %3669 = vst.msk [vmem:[#allocation2 + $0x1b9] sm:$0xff] %vm2282, 0.0
        %vm3670 = vcmask 260096
        %3671 = vst.msk [vmem:[#allocation2 + $0x1c1] sm:$0x7f] %vm3670, 0.0
        %3672 = vst.msk [vmem:[#allocation2 + $0x19] sm:$0xff] %vm2282, %v3612
        %3673 = vst.msk [vmem:[#allocation2 + $0x21] sm:$0xff] %vm2282, %v3613
        %3674 = vst.msk [vmem:[#allocation2 + $0x29] sm:$0xff] %vm2282, %v3614
        %3675 = vst.msk [vmem:[#allocation2 + $0x31] sm:$0xff] %vm2282, %v3615
        %3676 = vst.msk [vmem:[#allocation2 + $0x39] sm:$0xff] %vm2282, %v3616
        %3677 = vst.msk [vmem:[#allocation2 + $0x41] sm:$0xff] %vm2282, %v3617
        %3678 = vst.msk [vmem:[#allocation2 + $0x49] sm:$0xff] %vm2282, %v3618
        %3679 = vst.msk [vmem:[#allocation2 + $0x51] sm:$0xff] %vm2282, %v3619
        %3680 = vst.msk [vmem:[#allocation2 + $0x59] sm:$0xff] %vm2282, %v3620
        %3681 = vst.msk [vmem:[#allocation2 + $0x61] sm:$0xff] %vm2282, %v3621
        %3682 = vst.msk [vmem:[#allocation2 + $0x69] sm:$0xff] %vm2282, %v3622
        %3683 = vst.msk [vmem:[#allocation2 + $0x71] sm:$0xff] %vm2282, %v3623
        %3684 = vst.msk [vmem:[#allocation2 + $0x79] sm:$0xff] %vm2282, %v3624
        %3685 = vst.msk [vmem:[#allocation2 + $0x81] sm:$0xff] %vm2282, %v3625
        %3686 = vst.msk [vmem:[#allocation2 + $0x89] sm:$0xff] %vm2282, %v3626
        %3687 = vst.msk [vmem:[#allocation2 + $0x91] sm:$0xff] %vm2282, %v3627
        %3688 = vst.msk [vmem:[#allocation2 + $0x99] sm:$0xff] %vm2282, %v3628
        %3689 = vst.msk [vmem:[#allocation2 + $0xa1] sm:$0xff] %vm2282, %v3629
        %3690 = vst.msk [vmem:[#allocation2 + $0xa9] sm:$0xff] %vm2282, %v3630
        %3691 = vst.msk [vmem:[#allocation2 + $0xb1] sm:$0xff] %vm2282, %v3631
        %3692 = vst.msk [vmem:[#allocation2 + $0xb9] sm:$0xff] %vm2282, %v3632
        %3693 = vst.msk [vmem:[#allocation2 + $0xc1] sm:$0xff] %vm2282, %v3633
        %3694 = vst.msk [vmem:[#allocation2 + $0xc9] sm:$0xff] %vm2282, %v3634
        %3695 = vst.msk [vmem:[#allocation2 + $0xd1] sm:$0xff] %vm2282, %v3635
        %3696 = vst.msk [vmem:[#allocation2 + $0xd9] sm:$0xff] %vm2282, %v3636
        %3697 = vst.msk [vmem:[#allocation2 + $0xe1] sm:$0xff] %vm2282, %v3637
        %3698 = vst.msk [vmem:[#allocation2 + $0xe9] sm:$0xff] %vm2282, %v3638
        %3699 = vst.msk [vmem:[#allocation2 + $0xf1] sm:$0xff] %vm2282, %v3639
        %3700 = vst.msk [vmem:[#allocation2 + $0xf9] sm:$0xff] %vm2282, %v3640
        %3701 = vst.msk [vmem:[#allocation2 + $0x101] sm:$0xff] %vm2282, %v3641
        %3702 = vst.msk [vmem:[#allocation2 + $0x109] sm:$0xff] %vm2282, %v3642
        %3703 = vst.msk [vmem:[#allocation2 + $0x111] sm:$0xff] %vm2282, %v3643
        %3704 = vst.msk [vmem:[#allocation2 + $0x119] sm:$0xff] %vm2282, %v3644
        %3705 = vst.msk [vmem:[#allocation2 + $0x121] sm:$0xff] %vm2282, %v3645
        %3706 = vst.msk [vmem:[#allocation2 + $0x129] sm:$0xff] %vm2282, %v3646
        %3707 = vst.msk [vmem:[#allocation2 + $0x131] sm:$0xff] %vm2282, %v3647
        %3708 = vst.msk [vmem:[#allocation2 + $0x139] sm:$0xff] %vm2282, %v3648
        %3709 = vst.msk [vmem:[#allocation2 + $0x141] sm:$0xff] %vm2282, %v3649
        %3710 = vst.msk [vmem:[#allocation2 + $0x149] sm:$0xff] %vm2282, %v3650
        %3711 = vst.msk [vmem:[#allocation2 + $0x151] sm:$0xff] %vm2282, %v3651
        %3712 = vst.msk [vmem:[#allocation2 + $0x159] sm:$0xff] %vm2282, %v3652
        %3713 = vst.msk [vmem:[#allocation2 + $0x161] sm:$0xff] %vm2282, %v3653
        %3714 = vst.msk [vmem:[#allocation2 + $0x169] sm:$0xff] %vm2282, %v3654
        %3715 = vst.msk [vmem:[#allocation2 + $0x171] sm:$0xff] %vm2282, %v3655
        %3716 = vst.msk [vmem:[#allocation2 + $0x179] sm:$0xff] %vm2282, %v3656
        %3717 = vst.msk [vmem:[#allocation2 + $0x181] sm:$0xff] %vm2282, %v3657
        %3718 = vst.msk [vmem:[#allocation2 + $0x189] sm:$0xff] %vm2282, %v3658
        %3719 = vst.msk [vmem:[#allocation2 + $0x191] sm:$0xff] %vm2282, %v3659
        %v3720 = vld [vmem:[#allocation2] sm:$0xff]
        %v3721 = vld [vmem:[#allocation2 + $0x8] sm:$0xff]
        %v3722 = vld [vmem:[#allocation2 + $0x10] sm:$0xff]
        %v3723 = vld [vmem:[#allocation2 + $0x18] sm:$0xff]
        %v3724 = vld [vmem:[#allocation2 + $0x20] sm:$0xff]
        %v3725 = vld [vmem:[#allocation2 + $0x28] sm:$0xff]
        %v3726 = vld [vmem:[#allocation2 + $0x30] sm:$0xff]
        %v3727 = vld [vmem:[#allocation2 + $0x38] sm:$0xff]
        %v3728 = vld [vmem:[#allocation2 + $0x40] sm:$0xff]
        %v3729 = vld [vmem:[#allocation2 + $0x48] sm:$0xff]
        %v3730 = vld [vmem:[#allocation2 + $0x50] sm:$0xff]
        %v3731 = vld [vmem:[#allocation2 + $0x58] sm:$0xff]
        %v3732 = vld [vmem:[#allocation2 + $0x60] sm:$0xff]
        %v3733 = vld [vmem:[#allocation2 + $0x68] sm:$0xff]
        %v3734 = vld [vmem:[#allocation2 + $0x70] sm:$0xff]
        %v3735 = vld [vmem:[#allocation2 + $0x78] sm:$0xff]
        %v3736 = vld [vmem:[#allocation2 + $0x80] sm:$0xff]
        %v3737 = vld [vmem:[#allocation2 + $0x88] sm:$0xff]
        %v3738 = vld [vmem:[#allocation2 + $0x90] sm:$0xff]
        %v3739 = vld [vmem:[#allocation2 + $0x98] sm:$0xff]
        %v3740 = vld [vmem:[#allocation2 + $0xa0] sm:$0xff]
        %v3741 = vld [vmem:[#allocation2 + $0xa8] sm:$0xff]
        %v3742 = vld [vmem:[#allocation2 + $0xb0] sm:$0xff]
        %v3743 = vld [vmem:[#allocation2 + $0xb8] sm:$0xff]
        %v3744 = vld [vmem:[#allocation2 + $0xc0] sm:$0xff]
        %v3745 = vld [vmem:[#allocation2 + $0xc8] sm:$0xff]
        %v3746 = vld [vmem:[#allocation2 + $0xd0] sm:$0xff]
        %v3747 = vld [vmem:[#allocation2 + $0xd8] sm:$0xff]
        %v3748 = vld [vmem:[#allocation2 + $0xe0] sm:$0xff]
        %v3749 = vld [vmem:[#allocation2 + $0xe8] sm:$0xff]
        %v3750 = vld [vmem:[#allocation2 + $0xf0] sm:$0xff]
        %v3751 = vld [vmem:[#allocation2 + $0xf8] sm:$0xff]
        %v3752 = vld [vmem:[#allocation2 + $0x100] sm:$0xff]
        %v3753 = vld [vmem:[#allocation2 + $0x108] sm:$0xff]
        %v3754 = vld [vmem:[#allocation2 + $0x110] sm:$0xff]
        %v3755 = vld [vmem:[#allocation2 + $0x118] sm:$0xff]
        %v3756 = vld [vmem:[#allocation2 + $0x120] sm:$0xff]
        %v3757 = vld [vmem:[#allocation2 + $0x128] sm:$0xff]
        %v3758 = vld [vmem:[#allocation2 + $0x130] sm:$0xff]
        %v3759 = vld [vmem:[#allocation2 + $0x138] sm:$0xff]
        %v3760 = vld [vmem:[#allocation2 + $0x140] sm:$0xff]
        %v3761 = vld [vmem:[#allocation2 + $0x148] sm:$0xff]
        %v3762 = vld [vmem:[#allocation2 + $0x150] sm:$0xff]
        %v3763 = vld [vmem:[#allocation2 + $0x158] sm:$0xff]
        %v3764 = vld [vmem:[#allocation2 + $0x160] sm:$0xff]
        %v3765 = vld [vmem:[#allocation2 + $0x168] sm:$0xff]
        %v3766 = vld [vmem:[#allocation2 + $0x170] sm:$0xff]
        %v3767 = vld [vmem:[#allocation2 + $0x178] sm:$0xff]
        %v3768 = vld [vmem:[#allocation2 + $0x1] sm:$0xff]
        %v3769 = vld [vmem:[#allocation2 + $0x9] sm:$0xff]
        %v3770 = vld [vmem:[#allocation2 + $0x11] sm:$0xff]
        %v3771 = vld [vmem:[#allocation2 + $0x19] sm:$0xff]
        %v3772 = vld [vmem:[#allocation2 + $0x21] sm:$0xff]
        %v3773 = vld [vmem:[#allocation2 + $0x29] sm:$0xff]
        %v3774 = vld [vmem:[#allocation2 + $0x31] sm:$0xff]
        %v3775 = vld [vmem:[#allocation2 + $0x39] sm:$0xff]
        %v3776 = vld [vmem:[#allocation2 + $0x41] sm:$0xff]
        %v3777 = vld [vmem:[#allocation2 + $0x49] sm:$0xff]
        %v3778 = vld [vmem:[#allocation2 + $0x51] sm:$0xff]
        %v3779 = vld [vmem:[#allocation2 + $0x59] sm:$0xff]
        %v3780 = vld [vmem:[#allocation2 + $0x61] sm:$0xff]
        %v3781 = vld [vmem:[#allocation2 + $0x69] sm:$0xff]
        %v3782 = vld [vmem:[#allocation2 + $0x71] sm:$0xff]
        %v3783 = vld [vmem:[#allocation2 + $0x79] sm:$0xff]
        %v3784 = vld [vmem:[#allocation2 + $0x81] sm:$0xff]
        %v3785 = vld [vmem:[#allocation2 + $0x89] sm:$0xff]
        %v3786 = vld [vmem:[#allocation2 + $0x91] sm:$0xff]
        %v3787 = vld [vmem:[#allocation2 + $0x99] sm:$0xff]
        %v3788 = vld [vmem:[#allocation2 + $0xa1] sm:$0xff]
        %v3789 = vld [vmem:[#allocation2 + $0xa9] sm:$0xff]
        %v3790 = vld [vmem:[#allocation2 + $0xb1] sm:$0xff]
        %v3791 = vld [vmem:[#allocation2 + $0xb9] sm:$0xff]
        %v3792 = vld [vmem:[#allocation2 + $0xc1] sm:$0xff]
        %v3793 = vld [vmem:[#allocation2 + $0xc9] sm:$0xff]
        %v3794 = vld [vmem:[#allocation2 + $0xd1] sm:$0xff]
        %v3795 = vld [vmem:[#allocation2 + $0xd9] sm:$0xff]
        %v3796 = vld [vmem:[#allocation2 + $0xe1] sm:$0xff]
        %v3797 = vld [vmem:[#allocation2 + $0xe9] sm:$0xff]
        %v3798 = vld [vmem:[#allocation2 + $0xf1] sm:$0xff]
        %v3799 = vld [vmem:[#allocation2 + $0xf9] sm:$0xff]
        %v3800 = vld [vmem:[#allocation2 + $0x101] sm:$0xff]
        %v3801 = vld [vmem:[#allocation2 + $0x109] sm:$0xff]
        %v3802 = vld [vmem:[#allocation2 + $0x111] sm:$0xff]
        %v3803 = vld [vmem:[#allocation2 + $0x119] sm:$0xff]
        %v3804 = vld [vmem:[#allocation2 + $0x121] sm:$0xff]
        %v3805 = vld [vmem:[#allocation2 + $0x129] sm:$0xff]
        %v3806 = vld [vmem:[#allocation2 + $0x131] sm:$0xff]
        %v3807 = vld [vmem:[#allocation2 + $0x139] sm:$0xff]
        %v3808 = vld [vmem:[#allocation2 + $0x141] sm:$0xff]
        %v3809 = vld [vmem:[#allocation2 + $0x149] sm:$0xff]
        %v3810 = vld [vmem:[#allocation2 + $0x151] sm:$0xff]
        %v3811 = vld [vmem:[#allocation2 + $0x159] sm:$0xff]
        %v3812 = vld [vmem:[#allocation2 + $0x161] sm:$0xff]
        %v3813 = vld [vmem:[#allocation2 + $0x169] sm:$0xff]
        %v3814 = vld [vmem:[#allocation2 + $0x171] sm:$0xff]
        %v3815 = vld [vmem:[#allocation2 + $0x179] sm:$0xff]
        %v3816 = vld [vmem:[#allocation2 + $0x2] sm:$0xff]
        %v3817 = vld [vmem:[#allocation2 + $0xa] sm:$0xff]
        %v3818 = vld [vmem:[#allocation2 + $0x12] sm:$0xff]
        %v3819 = vld [vmem:[#allocation2 + $0x1a] sm:$0xff]
        %v3820 = vld [vmem:[#allocation2 + $0x22] sm:$0xff]
        %v3821 = vld [vmem:[#allocation2 + $0x2a] sm:$0xff]
        %v3822 = vld [vmem:[#allocation2 + $0x32] sm:$0xff]
        %v3823 = vld [vmem:[#allocation2 + $0x3a] sm:$0xff]
        %v3824 = vld [vmem:[#allocation2 + $0x42] sm:$0xff]
        %v3825 = vld [vmem:[#allocation2 + $0x4a] sm:$0xff]
        %v3826 = vld [vmem:[#allocation2 + $0x52] sm:$0xff]
        %v3827 = vld [vmem:[#allocation2 + $0x5a] sm:$0xff]
        %v3828 = vld [vmem:[#allocation2 + $0x62] sm:$0xff]
        %v3829 = vld [vmem:[#allocation2 + $0x6a] sm:$0xff]
        %v3830 = vld [vmem:[#allocation2 + $0x72] sm:$0xff]
        %v3831 = vld [vmem:[#allocation2 + $0x7a] sm:$0xff]
        %v3832 = vld [vmem:[#allocation2 + $0x82] sm:$0xff]
        %v3833 = vld [vmem:[#allocation2 + $0x8a] sm:$0xff]
        %v3834 = vld [vmem:[#allocation2 + $0x92] sm:$0xff]
        %v3835 = vld [vmem:[#allocation2 + $0x9a] sm:$0xff]
        %v3836 = vld [vmem:[#allocation2 + $0xa2] sm:$0xff]
        %v3837 = vld [vmem:[#allocation2 + $0xaa] sm:$0xff]
        %v3838 = vld [vmem:[#allocation2 + $0xb2] sm:$0xff]
        %v3839 = vld [vmem:[#allocation2 + $0xba] sm:$0xff]
        %v3840 = vld [vmem:[#allocation2 + $0xc2] sm:$0xff]
        %v3841 = vld [vmem:[#allocation2 + $0xca] sm:$0xff]
        %v3842 = vld [vmem:[#allocation2 + $0xd2] sm:$0xff]
        %v3843 = vld [vmem:[#allocation2 + $0xda] sm:$0xff]
        %v3844 = vld [vmem:[#allocation2 + $0xe2] sm:$0xff]
        %v3845 = vld [vmem:[#allocation2 + $0xea] sm:$0xff]
        %v3846 = vld [vmem:[#allocation2 + $0xf2] sm:$0xff]
        %v3847 = vld [vmem:[#allocation2 + $0xfa] sm:$0xff]
        %v3848 = vld [vmem:[#allocation2 + $0x102] sm:$0xff]
        %v3849 = vld [vmem:[#allocation2 + $0x10a] sm:$0xff]
        %v3850 = vld [vmem:[#allocation2 + $0x112] sm:$0xff]
        %v3851 = vld [vmem:[#allocation2 + $0x11a] sm:$0xff]
        %v3852 = vld [vmem:[#allocation2 + $0x122] sm:$0xff]
        %v3853 = vld [vmem:[#allocation2 + $0x12a] sm:$0xff]
        %v3854 = vld [vmem:[#allocation2 + $0x132] sm:$0xff]
        %v3855 = vld [vmem:[#allocation2 + $0x13a] sm:$0xff]
        %v3856 = vld [vmem:[#allocation2 + $0x142] sm:$0xff]
        %v3857 = vld [vmem:[#allocation2 + $0x14a] sm:$0xff]
        %v3858 = vld [vmem:[#allocation2 + $0x152] sm:$0xff]
        %v3859 = vld [vmem:[#allocation2 + $0x15a] sm:$0xff]
        %v3860 = vld [vmem:[#allocation2 + $0x162] sm:$0xff]
        %v3861 = vld [vmem:[#allocation2 + $0x16a] sm:$0xff]
        %v3862 = vld [vmem:[#allocation2 + $0x172] sm:$0xff]
        %v3863 = vld [vmem:[#allocation2 + $0x17a] sm:$0xff]
        %v3864 = vld [vmem:[#allocation2 + $0x180] sm:$0xff]
        %v3865 = vld [vmem:[#allocation2 + $0x188] sm:$0xff]
        %v3866 = vld [vmem:[#allocation2 + $0x190] sm:$0xff]
        %v3867 = vld [vmem:[#allocation2 + $0x181] sm:$0xff]
        %v3868 = vld [vmem:[#allocation2 + $0x189] sm:$0xff]
        %v3869 = vld [vmem:[#allocation2 + $0x191] sm:$0xff]
        %v3870 = vld [vmem:[#allocation2 + $0x182] sm:$0xff]
        %v3871 = vld [vmem:[#allocation2 + $0x18a] sm:$0xff]
        %v3872 = vld [vmem:[#allocation2 + $0x192] sm:$0xff]
        %v3873 = vld [vmem:[#allocation2 + $0x198] sm:$0xff]
        %v3874 = vld [vmem:[#allocation2 + $0x1a0] sm:$0xff]
        %v3875 = vld [vmem:[#allocation2 + $0x1a8] sm:$0xff]
        %v3876 = vld [vmem:[#allocation2 + $0x199] sm:$0xff]
        %v3877 = vld [vmem:[#allocation2 + $0x1a1] sm:$0xff]
        %v3878 = vld [vmem:[#allocation2 + $0x1a9] sm:$0xff]
        %v3879 = vld [vmem:[#allocation2 + $0x19a] sm:$0xff]
        %v3880 = vld [vmem:[#allocation2 + $0x1a2] sm:$0xff]
        %v3881 = vld [vmem:[#allocation2 + $0x1aa] sm:$0xff]
        %3930 = vrot.lane.b32.xlu0 %v3768, 32
        %v3931 = vpop.permute.xlu0 %3930
        %3932 = vrot.lane.b32.xlu0 %v3769, 32
        %v3933 = vpop.permute.xlu0 %3932
        %3934 = vrot.lane.b32.xlu0 %v3770, 32
        %v3935 = vpop.permute.xlu0 %3934
        %3936 = vrot.lane.b32.xlu0 %v3771, 32
        %v3937 = vpop.permute.xlu0 %3936
        %3938 = vrot.lane.b32.xlu0 %v3772, 32
        %v3939 = vpop.permute.xlu0 %3938
        %3940 = vrot.lane.b32.xlu0 %v3773, 32
        %v3941 = vpop.permute.xlu0 %3940
        %3942 = vrot.lane.b32.xlu0 %v3774, 32
        %v3943 = vpop.permute.xlu0 %3942
        %3944 = vrot.lane.b32.xlu0 %v3775, 32
        %v3945 = vpop.permute.xlu0 %3944
        %3946 = vrot.lane.b32.xlu0 %v3776, 32
        %v3947 = vpop.permute.xlu0 %3946
        %3948 = vrot.lane.b32.xlu0 %v3777, 32
        %v3949 = vpop.permute.xlu0 %3948
        %3950 = vrot.lane.b32.xlu0 %v3778, 32
        %v3951 = vpop.permute.xlu0 %3950
        %3952 = vrot.lane.b32.xlu0 %v3779, 32
        %v3953 = vpop.permute.xlu0 %3952
        %3954 = vrot.lane.b32.xlu0 %v3780, 32
        %v3955 = vpop.permute.xlu0 %3954
        %3956 = vrot.lane.b32.xlu0 %v3781, 32
        %v3957 = vpop.permute.xlu0 %3956
        %3958 = vrot.lane.b32.xlu0 %v3782, 32
        %v3959 = vpop.permute.xlu0 %3958
        %3960 = vrot.lane.b32.xlu0 %v3783, 32
        %v3961 = vpop.permute.xlu0 %3960
        %3962 = vrot.lane.b32.xlu0 %v3784, 32
        %v3963 = vpop.permute.xlu0 %3962
        %3964 = vrot.lane.b32.xlu0 %v3785, 32
        %v3965 = vpop.permute.xlu0 %3964
        %3966 = vrot.lane.b32.xlu0 %v3786, 32
        %v3967 = vpop.permute.xlu0 %3966
        %3968 = vrot.lane.b32.xlu0 %v3787, 32
        %v3969 = vpop.permute.xlu0 %3968
        %3970 = vrot.lane.b32.xlu0 %v3788, 32
        %v3971 = vpop.permute.xlu0 %3970
        %3972 = vrot.lane.b32.xlu0 %v3789, 32
        %v3973 = vpop.permute.xlu0 %3972
        %3974 = vrot.lane.b32.xlu0 %v3790, 32
        %v3975 = vpop.permute.xlu0 %3974
        %3976 = vrot.lane.b32.xlu0 %v3791, 32
        %v3977 = vpop.permute.xlu0 %3976
        %3978 = vrot.lane.b32.xlu0 %v3792, 32
        %v3979 = vpop.permute.xlu0 %3978
        %3980 = vrot.lane.b32.xlu0 %v3793, 32
        %v3981 = vpop.permute.xlu0 %3980
        %3982 = vrot.lane.b32.xlu0 %v3794, 32
        %v3983 = vpop.permute.xlu0 %3982
        %3984 = vrot.lane.b32.xlu0 %v3795, 32
        %v3985 = vpop.permute.xlu0 %3984
        %3986 = vrot.lane.b32.xlu0 %v3796, 32
        %v3987 = vpop.permute.xlu0 %3986
        %3988 = vrot.lane.b32.xlu0 %v3797, 32
        %v3989 = vpop.permute.xlu0 %3988
        %3990 = vrot.lane.b32.xlu0 %v3798, 32
        %v3991 = vpop.permute.xlu0 %3990
        %3992 = vrot.lane.b32.xlu0 %v3799, 32
        %v3993 = vpop.permute.xlu0 %3992
        %3994 = vrot.lane.b32.xlu0 %v3800, 32
        %v3995 = vpop.permute.xlu0 %3994
        %3996 = vrot.lane.b32.xlu0 %v3801, 32
        %v3997 = vpop.permute.xlu0 %3996
        %3998 = vrot.lane.b32.xlu0 %v3802, 32
        %v3999 = vpop.permute.xlu0 %3998
        %4000 = vrot.lane.b32.xlu0 %v3803, 32
        %v4001 = vpop.permute.xlu0 %4000
        %4002 = vrot.lane.b32.xlu0 %v3804, 32
        %v4003 = vpop.permute.xlu0 %4002
        %4004 = vrot.lane.b32.xlu0 %v3805, 32
        %v4005 = vpop.permute.xlu0 %4004
        %4006 = vrot.lane.b32.xlu0 %v3806, 32
        %v4007 = vpop.permute.xlu0 %4006
        %4008 = vrot.lane.b32.xlu0 %v3807, 32
        %v4009 = vpop.permute.xlu0 %4008
        %4010 = vrot.lane.b32.xlu0 %v3808, 32
        %v4011 = vpop.permute.xlu0 %4010
        %4012 = vrot.lane.b32.xlu0 %v3809, 32
        %v4013 = vpop.permute.xlu0 %4012
        %4014 = vrot.lane.b32.xlu0 %v3810, 32
        %v4015 = vpop.permute.xlu0 %4014
        %4016 = vrot.lane.b32.xlu0 %v3811, 32
        %v4017 = vpop.permute.xlu0 %4016
        %4018 = vrot.lane.b32.xlu0 %v3812, 32
        %v4019 = vpop.permute.xlu0 %4018
        %4020 = vrot.lane.b32.xlu0 %v3813, 32
        %v4021 = vpop.permute.xlu0 %4020
        %4022 = vrot.lane.b32.xlu0 %v3814, 32
        %v4023 = vpop.permute.xlu0 %4022
        %4024 = vrot.lane.b32.xlu0 %v3815, 32
        %v4025 = vpop.permute.xlu0 %4024
        %4122 = vrot.lane.b32.xlu0 %v3816, 64
        %v4123 = vpop.permute.xlu0 %4122
        %4124 = vrot.lane.b32.xlu0 %v3817, 64
        %v4125 = vpop.permute.xlu0 %4124
        %4126 = vrot.lane.b32.xlu0 %v3818, 64
        %v4127 = vpop.permute.xlu0 %4126
        %4128 = vrot.lane.b32.xlu0 %v3819, 64
        %v4129 = vpop.permute.xlu0 %4128
        %4130 = vrot.lane.b32.xlu0 %v3820, 64
        %v4131 = vpop.permute.xlu0 %4130
        %4132 = vrot.lane.b32.xlu0 %v3821, 64
        %v4133 = vpop.permute.xlu0 %4132
        %4134 = vrot.lane.b32.xlu0 %v3822, 64
        %v4135 = vpop.permute.xlu0 %4134
        %4136 = vrot.lane.b32.xlu0 %v3823, 64
        %v4137 = vpop.permute.xlu0 %4136
        %4138 = vrot.lane.b32.xlu0 %v3824, 64
        %v4139 = vpop.permute.xlu0 %4138
        %4140 = vrot.lane.b32.xlu0 %v3825, 64
        %v4141 = vpop.permute.xlu0 %4140
        %4142 = vrot.lane.b32.xlu0 %v3826, 64
        %v4143 = vpop.permute.xlu0 %4142
        %4144 = vrot.lane.b32.xlu0 %v3827, 64
        %v4145 = vpop.permute.xlu0 %4144
        %4146 = vrot.lane.b32.xlu0 %v3828, 64
        %v4147 = vpop.permute.xlu0 %4146
        %4148 = vrot.lane.b32.xlu0 %v3829, 64
        %v4149 = vpop.permute.xlu0 %4148
        %4150 = vrot.lane.b32.xlu0 %v3830, 64
        %v4151 = vpop.permute.xlu0 %4150
        %4152 = vrot.lane.b32.xlu0 %v3831, 64
        %v4153 = vpop.permute.xlu0 %4152
        %4154 = vrot.lane.b32.xlu0 %v3832, 64
        %v4155 = vpop.permute.xlu0 %4154
        %4156 = vrot.lane.b32.xlu0 %v3833, 64
        %v4157 = vpop.permute.xlu0 %4156
        %4158 = vrot.lane.b32.xlu0 %v3834, 64
        %v4159 = vpop.permute.xlu0 %4158
        %4160 = vrot.lane.b32.xlu0 %v3835, 64
        %v4161 = vpop.permute.xlu0 %4160
        %4162 = vrot.lane.b32.xlu0 %v3836, 64
        %v4163 = vpop.permute.xlu0 %4162
        %4164 = vrot.lane.b32.xlu0 %v3837, 64
        %v4165 = vpop.permute.xlu0 %4164
        %4166 = vrot.lane.b32.xlu0 %v3838, 64
        %v4167 = vpop.permute.xlu0 %4166
        %4168 = vrot.lane.b32.xlu0 %v3839, 64
        %v4169 = vpop.permute.xlu0 %4168
        %4170 = vrot.lane.b32.xlu0 %v3840, 64
        %v4171 = vpop.permute.xlu0 %4170
        %4172 = vrot.lane.b32.xlu0 %v3841, 64
        %v4173 = vpop.permute.xlu0 %4172
        %4174 = vrot.lane.b32.xlu0 %v3842, 64
        %v4175 = vpop.permute.xlu0 %4174
        %4176 = vrot.lane.b32.xlu0 %v3843, 64
        %v4177 = vpop.permute.xlu0 %4176
        %4178 = vrot.lane.b32.xlu0 %v3844, 64
        %v4179 = vpop.permute.xlu0 %4178
        %4180 = vrot.lane.b32.xlu0 %v3845, 64
        %v4181 = vpop.permute.xlu0 %4180
        %4182 = vrot.lane.b32.xlu0 %v3846, 64
        %v4183 = vpop.permute.xlu0 %4182
        %4184 = vrot.lane.b32.xlu0 %v3847, 64
        %v4185 = vpop.permute.xlu0 %4184
        %4186 = vrot.lane.b32.xlu0 %v3848, 64
        %v4187 = vpop.permute.xlu0 %4186
        %4188 = vrot.lane.b32.xlu0 %v3849, 64
        %v4189 = vpop.permute.xlu0 %4188
        %4190 = vrot.lane.b32.xlu0 %v3850, 64
        %v4191 = vpop.permute.xlu0 %4190
        %4192 = vrot.lane.b32.xlu0 %v3851, 64
        %v4193 = vpop.permute.xlu0 %4192
        %4194 = vrot.lane.b32.xlu0 %v3852, 64
        %v4195 = vpop.permute.xlu0 %4194
        %4196 = vrot.lane.b32.xlu0 %v3853, 64
        %v4197 = vpop.permute.xlu0 %4196
        %4198 = vrot.lane.b32.xlu0 %v3854, 64
        %v4199 = vpop.permute.xlu0 %4198
        %4200 = vrot.lane.b32.xlu0 %v3855, 64
        %v4201 = vpop.permute.xlu0 %4200
        %4202 = vrot.lane.b32.xlu0 %v3856, 64
        %v4203 = vpop.permute.xlu0 %4202
        %4204 = vrot.lane.b32.xlu0 %v3857, 64
        %v4205 = vpop.permute.xlu0 %4204
        %4206 = vrot.lane.b32.xlu0 %v3858, 64
        %v4207 = vpop.permute.xlu0 %4206
        %4208 = vrot.lane.b32.xlu0 %v3859, 64
        %v4209 = vpop.permute.xlu0 %4208
        %4210 = vrot.lane.b32.xlu0 %v3860, 64
        %v4211 = vpop.permute.xlu0 %4210
        %4212 = vrot.lane.b32.xlu0 %v3861, 64
        %v4213 = vpop.permute.xlu0 %4212
        %4214 = vrot.lane.b32.xlu0 %v3862, 64
        %v4215 = vpop.permute.xlu0 %4214
        %4216 = vrot.lane.b32.xlu0 %v3863, 64
        %v4217 = vpop.permute.xlu0 %4216
        %4314 = vrot.lane.b32.xlu0 %v3723, 96
        %v4315 = vpop.permute.xlu0 %4314
        %4316 = vrot.lane.b32.xlu0 %v3724, 96
        %v4317 = vpop.permute.xlu0 %4316
        %4318 = vrot.lane.b32.xlu0 %v3725, 96
        %v4319 = vpop.permute.xlu0 %4318
        %4320 = vrot.lane.b32.xlu0 %v3726, 96
        %v4321 = vpop.permute.xlu0 %4320
        %4322 = vrot.lane.b32.xlu0 %v3727, 96
        %v4323 = vpop.permute.xlu0 %4322
        %4324 = vrot.lane.b32.xlu0 %v3728, 96
        %v4325 = vpop.permute.xlu0 %4324
        %4326 = vrot.lane.b32.xlu0 %v3729, 96
        %v4327 = vpop.permute.xlu0 %4326
        %4328 = vrot.lane.b32.xlu0 %v3730, 96
        %v4329 = vpop.permute.xlu0 %4328
        %4330 = vrot.lane.b32.xlu0 %v3731, 96
        %v4331 = vpop.permute.xlu0 %4330
        %4332 = vrot.lane.b32.xlu0 %v3732, 96
        %v4333 = vpop.permute.xlu0 %4332
        %4334 = vrot.lane.b32.xlu0 %v3733, 96
        %v4335 = vpop.permute.xlu0 %4334
        %4336 = vrot.lane.b32.xlu0 %v3734, 96
        %v4337 = vpop.permute.xlu0 %4336
        %4338 = vrot.lane.b32.xlu0 %v3735, 96
        %v4339 = vpop.permute.xlu0 %4338
        %4340 = vrot.lane.b32.xlu0 %v3736, 96
        %v4341 = vpop.permute.xlu0 %4340
        %4342 = vrot.lane.b32.xlu0 %v3737, 96
        %v4343 = vpop.permute.xlu0 %4342
        %4344 = vrot.lane.b32.xlu0 %v3738, 96
        %v4345 = vpop.permute.xlu0 %4344
        %4346 = vrot.lane.b32.xlu0 %v3739, 96
        %v4347 = vpop.permute.xlu0 %4346
        %4348 = vrot.lane.b32.xlu0 %v3740, 96
        %v4349 = vpop.permute.xlu0 %4348
        %4350 = vrot.lane.b32.xlu0 %v3741, 96
        %v4351 = vpop.permute.xlu0 %4350
        %4352 = vrot.lane.b32.xlu0 %v3742, 96
        %v4353 = vpop.permute.xlu0 %4352
        %4354 = vrot.lane.b32.xlu0 %v3743, 96
        %v4355 = vpop.permute.xlu0 %4354
        %4356 = vrot.lane.b32.xlu0 %v3744, 96
        %v4357 = vpop.permute.xlu0 %4356
        %4358 = vrot.lane.b32.xlu0 %v3745, 96
        %v4359 = vpop.permute.xlu0 %4358
        %4360 = vrot.lane.b32.xlu0 %v3746, 96
        %v4361 = vpop.permute.xlu0 %4360
        %4362 = vrot.lane.b32.xlu0 %v3747, 96
        %v4363 = vpop.permute.xlu0 %4362
        %4364 = vrot.lane.b32.xlu0 %v3748, 96
        %v4365 = vpop.permute.xlu0 %4364
        %4366 = vrot.lane.b32.xlu0 %v3749, 96
        %v4367 = vpop.permute.xlu0 %4366
        %4368 = vrot.lane.b32.xlu0 %v3750, 96
        %v4369 = vpop.permute.xlu0 %4368
        %4370 = vrot.lane.b32.xlu0 %v3751, 96
        %v4371 = vpop.permute.xlu0 %4370
        %4372 = vrot.lane.b32.xlu0 %v3752, 96
        %v4373 = vpop.permute.xlu0 %4372
        %4374 = vrot.lane.b32.xlu0 %v3753, 96
        %v4375 = vpop.permute.xlu0 %4374
        %4376 = vrot.lane.b32.xlu0 %v3754, 96
        %v4377 = vpop.permute.xlu0 %4376
        %4378 = vrot.lane.b32.xlu0 %v3755, 96
        %v4379 = vpop.permute.xlu0 %4378
        %4380 = vrot.lane.b32.xlu0 %v3756, 96
        %v4381 = vpop.permute.xlu0 %4380
        %4382 = vrot.lane.b32.xlu0 %v3757, 96
        %v4383 = vpop.permute.xlu0 %4382
        %4384 = vrot.lane.b32.xlu0 %v3758, 96
        %v4385 = vpop.permute.xlu0 %4384
        %4386 = vrot.lane.b32.xlu0 %v3759, 96
        %v4387 = vpop.permute.xlu0 %4386
        %4388 = vrot.lane.b32.xlu0 %v3760, 96
        %v4389 = vpop.permute.xlu0 %4388
        %4390 = vrot.lane.b32.xlu0 %v3761, 96
        %v4391 = vpop.permute.xlu0 %4390
        %4392 = vrot.lane.b32.xlu0 %v3762, 96
        %v4393 = vpop.permute.xlu0 %4392
        %4394 = vrot.lane.b32.xlu0 %v3763, 96
        %v4395 = vpop.permute.xlu0 %4394
        %4396 = vrot.lane.b32.xlu0 %v3764, 96
        %v4397 = vpop.permute.xlu0 %4396
        %4398 = vrot.lane.b32.xlu0 %v3765, 96
        %v4399 = vpop.permute.xlu0 %4398
        %4400 = vrot.lane.b32.xlu0 %v3766, 96
        %v4401 = vpop.permute.xlu0 %4400
        %4402 = vrot.lane.b32.xlu0 %v3767, 96
        %v4403 = vpop.permute.xlu0 %4402
        %4404 = vrot.lane.b32.xlu0 %v3864, 96
        %v4405 = vpop.permute.xlu0 %4404
        %4406 = vrot.lane.b32.xlu0 %v3865, 96
        %v4407 = vpop.permute.xlu0 %4406
        %4408 = vrot.lane.b32.xlu0 %v3866, 96
        %v4409 = vpop.permute.xlu0 %4408
        %4461 = vrot.lane.b32.xlu0 %v3819, 32
        %v4462 = vpop.permute.xlu0 %4461
        %4463 = vrot.lane.b32.xlu0 %v3820, 32
        %v4464 = vpop.permute.xlu0 %4463
        %4465 = vrot.lane.b32.xlu0 %v3821, 32
        %v4466 = vpop.permute.xlu0 %4465
        %4467 = vrot.lane.b32.xlu0 %v3822, 32
        %v4468 = vpop.permute.xlu0 %4467
        %4469 = vrot.lane.b32.xlu0 %v3823, 32
        %v4470 = vpop.permute.xlu0 %4469
        %4471 = vrot.lane.b32.xlu0 %v3824, 32
        %v4472 = vpop.permute.xlu0 %4471
        %4473 = vrot.lane.b32.xlu0 %v3825, 32
        %v4474 = vpop.permute.xlu0 %4473
        %4475 = vrot.lane.b32.xlu0 %v3826, 32
        %v4476 = vpop.permute.xlu0 %4475
        %4477 = vrot.lane.b32.xlu0 %v3827, 32
        %v4478 = vpop.permute.xlu0 %4477
        %4479 = vrot.lane.b32.xlu0 %v3828, 32
        %v4480 = vpop.permute.xlu0 %4479
        %4481 = vrot.lane.b32.xlu0 %v3829, 32
        %v4482 = vpop.permute.xlu0 %4481
        %4483 = vrot.lane.b32.xlu0 %v3830, 32
        %v4484 = vpop.permute.xlu0 %4483
        %4485 = vrot.lane.b32.xlu0 %v3831, 32
        %v4486 = vpop.permute.xlu0 %4485
        %4487 = vrot.lane.b32.xlu0 %v3832, 32
        %v4488 = vpop.permute.xlu0 %4487
        %4489 = vrot.lane.b32.xlu0 %v3833, 32
        %v4490 = vpop.permute.xlu0 %4489
        %4491 = vrot.lane.b32.xlu0 %v3834, 32
        %v4492 = vpop.permute.xlu0 %4491
        %4493 = vrot.lane.b32.xlu0 %v3835, 32
        %v4494 = vpop.permute.xlu0 %4493
        %4495 = vrot.lane.b32.xlu0 %v3836, 32
        %v4496 = vpop.permute.xlu0 %4495
        %4497 = vrot.lane.b32.xlu0 %v3837, 32
        %v4498 = vpop.permute.xlu0 %4497
        %4499 = vrot.lane.b32.xlu0 %v3838, 32
        %v4500 = vpop.permute.xlu0 %4499
        %4501 = vrot.lane.b32.xlu0 %v3839, 32
        %v4502 = vpop.permute.xlu0 %4501
        %4503 = vrot.lane.b32.xlu0 %v3840, 32
        %v4504 = vpop.permute.xlu0 %4503
        %4505 = vrot.lane.b32.xlu0 %v3841, 32
        %v4506 = vpop.permute.xlu0 %4505
        %4507 = vrot.lane.b32.xlu0 %v3842, 32
        %v4508 = vpop.permute.xlu0 %4507
        %4509 = vrot.lane.b32.xlu0 %v3843, 32
        %v4510 = vpop.permute.xlu0 %4509
        %4511 = vrot.lane.b32.xlu0 %v3844, 32
        %v4512 = vpop.permute.xlu0 %4511
        %4513 = vrot.lane.b32.xlu0 %v3845, 32
        %v4514 = vpop.permute.xlu0 %4513
        %4515 = vrot.lane.b32.xlu0 %v3846, 32
        %v4516 = vpop.permute.xlu0 %4515
        %4517 = vrot.lane.b32.xlu0 %v3847, 32
        %v4518 = vpop.permute.xlu0 %4517
        %4519 = vrot.lane.b32.xlu0 %v3848, 32
        %v4520 = vpop.permute.xlu0 %4519
        %4521 = vrot.lane.b32.xlu0 %v3849, 32
        %v4522 = vpop.permute.xlu0 %4521
        %4523 = vrot.lane.b32.xlu0 %v3850, 32
        %v4524 = vpop.permute.xlu0 %4523
        %4525 = vrot.lane.b32.xlu0 %v3851, 32
        %v4526 = vpop.permute.xlu0 %4525
        %4527 = vrot.lane.b32.xlu0 %v3852, 32
        %v4528 = vpop.permute.xlu0 %4527
        %4529 = vrot.lane.b32.xlu0 %v3853, 32
        %v4530 = vpop.permute.xlu0 %4529
        %4531 = vrot.lane.b32.xlu0 %v3854, 32
        %v4532 = vpop.permute.xlu0 %4531
        %4533 = vrot.lane.b32.xlu0 %v3855, 32
        %v4534 = vpop.permute.xlu0 %4533
        %4535 = vrot.lane.b32.xlu0 %v3856, 32
        %v4536 = vpop.permute.xlu0 %4535
        %4537 = vrot.lane.b32.xlu0 %v3857, 32
        %v4538 = vpop.permute.xlu0 %4537
        %4539 = vrot.lane.b32.xlu0 %v3858, 32
        %v4540 = vpop.permute.xlu0 %4539
        %4541 = vrot.lane.b32.xlu0 %v3859, 32
        %v4542 = vpop.permute.xlu0 %4541
        %4543 = vrot.lane.b32.xlu0 %v3860, 32
        %v4544 = vpop.permute.xlu0 %4543
        %4545 = vrot.lane.b32.xlu0 %v3861, 32
        %v4546 = vpop.permute.xlu0 %4545
        %4547 = vrot.lane.b32.xlu0 %v3862, 32
        %v4548 = vpop.permute.xlu0 %4547
        %4549 = vrot.lane.b32.xlu0 %v3863, 32
        %v4550 = vpop.permute.xlu0 %4549
        %4551 = vrot.lane.b32.xlu0 %v3870, 32
        %v4552 = vpop.permute.xlu0 %4551
        %4553 = vrot.lane.b32.xlu0 %v3871, 32
        %v4554 = vpop.permute.xlu0 %4553
        %4555 = vrot.lane.b32.xlu0 %v3872, 32
        %v4556 = vpop.permute.xlu0 %4555
        %4608 = vrot.lane.b32.xlu0 %v3726, 64
        %v4609 = vpop.permute.xlu0 %4608
        %4610 = vrot.lane.b32.xlu0 %v3727, 64
        %v4611 = vpop.permute.xlu0 %4610
        %4612 = vrot.lane.b32.xlu0 %v3728, 64
        %v4613 = vpop.permute.xlu0 %4612
        %4614 = vrot.lane.b32.xlu0 %v3729, 64
        %v4615 = vpop.permute.xlu0 %4614
        %4616 = vrot.lane.b32.xlu0 %v3730, 64
        %v4617 = vpop.permute.xlu0 %4616
        %4618 = vrot.lane.b32.xlu0 %v3731, 64
        %v4619 = vpop.permute.xlu0 %4618
        %4620 = vrot.lane.b32.xlu0 %v3732, 64
        %v4621 = vpop.permute.xlu0 %4620
        %4622 = vrot.lane.b32.xlu0 %v3733, 64
        %v4623 = vpop.permute.xlu0 %4622
        %4624 = vrot.lane.b32.xlu0 %v3734, 64
        %v4625 = vpop.permute.xlu0 %4624
        %4626 = vrot.lane.b32.xlu0 %v3735, 64
        %v4627 = vpop.permute.xlu0 %4626
        %4628 = vrot.lane.b32.xlu0 %v3736, 64
        %v4629 = vpop.permute.xlu0 %4628
        %4630 = vrot.lane.b32.xlu0 %v3737, 64
        %v4631 = vpop.permute.xlu0 %4630
        %4632 = vrot.lane.b32.xlu0 %v3738, 64
        %v4633 = vpop.permute.xlu0 %4632
        %4634 = vrot.lane.b32.xlu0 %v3739, 64
        %v4635 = vpop.permute.xlu0 %4634
        %4636 = vrot.lane.b32.xlu0 %v3740, 64
        %v4637 = vpop.permute.xlu0 %4636
        %4638 = vrot.lane.b32.xlu0 %v3741, 64
        %v4639 = vpop.permute.xlu0 %4638
        %4640 = vrot.lane.b32.xlu0 %v3742, 64
        %v4641 = vpop.permute.xlu0 %4640
        %4642 = vrot.lane.b32.xlu0 %v3743, 64
        %v4643 = vpop.permute.xlu0 %4642
        %4644 = vrot.lane.b32.xlu0 %v3744, 64
        %v4645 = vpop.permute.xlu0 %4644
        %4646 = vrot.lane.b32.xlu0 %v3745, 64
        %v4647 = vpop.permute.xlu0 %4646
        %4648 = vrot.lane.b32.xlu0 %v3746, 64
        %v4649 = vpop.permute.xlu0 %4648
        %4650 = vrot.lane.b32.xlu0 %v3747, 64
        %v4651 = vpop.permute.xlu0 %4650
        %4652 = vrot.lane.b32.xlu0 %v3748, 64
        %v4653 = vpop.permute.xlu0 %4652
        %4654 = vrot.lane.b32.xlu0 %v3749, 64
        %v4655 = vpop.permute.xlu0 %4654
        %4656 = vrot.lane.b32.xlu0 %v3750, 64
        %v4657 = vpop.permute.xlu0 %4656
        %4658 = vrot.lane.b32.xlu0 %v3751, 64
        %v4659 = vpop.permute.xlu0 %4658
        %4660 = vrot.lane.b32.xlu0 %v3752, 64
        %v4661 = vpop.permute.xlu0 %4660
        %4662 = vrot.lane.b32.xlu0 %v3753, 64
        %v4663 = vpop.permute.xlu0 %4662
        %4664 = vrot.lane.b32.xlu0 %v3754, 64
        %v4665 = vpop.permute.xlu0 %4664
        %4666 = vrot.lane.b32.xlu0 %v3755, 64
        %v4667 = vpop.permute.xlu0 %4666
        %4668 = vrot.lane.b32.xlu0 %v3756, 64
        %v4669 = vpop.permute.xlu0 %4668
        %4670 = vrot.lane.b32.xlu0 %v3757, 64
        %v4671 = vpop.permute.xlu0 %4670
        %4672 = vrot.lane.b32.xlu0 %v3758, 64
        %v4673 = vpop.permute.xlu0 %4672
        %4674 = vrot.lane.b32.xlu0 %v3759, 64
        %v4675 = vpop.permute.xlu0 %4674
        %4676 = vrot.lane.b32.xlu0 %v3760, 64
        %v4677 = vpop.permute.xlu0 %4676
        %4678 = vrot.lane.b32.xlu0 %v3761, 64
        %v4679 = vpop.permute.xlu0 %4678
        %4680 = vrot.lane.b32.xlu0 %v3762, 64
        %v4681 = vpop.permute.xlu0 %4680
        %4682 = vrot.lane.b32.xlu0 %v3763, 64
        %v4683 = vpop.permute.xlu0 %4682
        %4684 = vrot.lane.b32.xlu0 %v3764, 64
        %v4685 = vpop.permute.xlu0 %4684
        %4686 = vrot.lane.b32.xlu0 %v3765, 64
        %v4687 = vpop.permute.xlu0 %4686
        %4688 = vrot.lane.b32.xlu0 %v3766, 64
        %v4689 = vpop.permute.xlu0 %4688
        %4690 = vrot.lane.b32.xlu0 %v3767, 64
        %v4691 = vpop.permute.xlu0 %4690
        %4692 = vrot.lane.b32.xlu0 %v3864, 64
        %v4693 = vpop.permute.xlu0 %4692
        %4694 = vrot.lane.b32.xlu0 %v3865, 64
        %v4695 = vpop.permute.xlu0 %4694
        %4696 = vrot.lane.b32.xlu0 %v3866, 64
        %v4697 = vpop.permute.xlu0 %4696
        %4698 = vrot.lane.b32.xlu0 %v3873, 64
        %v4699 = vpop.permute.xlu0 %4698
        %4700 = vrot.lane.b32.xlu0 %v3874, 64
        %v4701 = vpop.permute.xlu0 %4700
        %4702 = vrot.lane.b32.xlu0 %v3875, 64
        %v4703 = vpop.permute.xlu0 %4702
        %4758 = vrot.lane.b32.xlu0 %v3774, 96
        %v4759 = vpop.permute.xlu0 %4758
        %4760 = vrot.lane.b32.xlu0 %v3775, 96
        %v4761 = vpop.permute.xlu0 %4760
        %4762 = vrot.lane.b32.xlu0 %v3776, 96
        %v4763 = vpop.permute.xlu0 %4762
        %4764 = vrot.lane.b32.xlu0 %v3777, 96
        %v4765 = vpop.permute.xlu0 %4764
        %4766 = vrot.lane.b32.xlu0 %v3778, 96
        %v4767 = vpop.permute.xlu0 %4766
        %4768 = vrot.lane.b32.xlu0 %v3779, 96
        %v4769 = vpop.permute.xlu0 %4768
        %4770 = vrot.lane.b32.xlu0 %v3780, 96
        %v4771 = vpop.permute.xlu0 %4770
        %4772 = vrot.lane.b32.xlu0 %v3781, 96
        %v4773 = vpop.permute.xlu0 %4772
        %4774 = vrot.lane.b32.xlu0 %v3782, 96
        %v4775 = vpop.permute.xlu0 %4774
        %4776 = vrot.lane.b32.xlu0 %v3783, 96
        %v4777 = vpop.permute.xlu0 %4776
        %4778 = vrot.lane.b32.xlu0 %v3784, 96
        %v4779 = vpop.permute.xlu0 %4778
        %4780 = vrot.lane.b32.xlu0 %v3785, 96
        %v4781 = vpop.permute.xlu0 %4780
        %4782 = vrot.lane.b32.xlu0 %v3786, 96
        %v4783 = vpop.permute.xlu0 %4782
        %4784 = vrot.lane.b32.xlu0 %v3787, 96
        %v4785 = vpop.permute.xlu0 %4784
        %4786 = vrot.lane.b32.xlu0 %v3788, 96
        %v4787 = vpop.permute.xlu0 %4786
        %4788 = vrot.lane.b32.xlu0 %v3789, 96
        %v4789 = vpop.permute.xlu0 %4788
        %4790 = vrot.lane.b32.xlu0 %v3790, 96
        %v4791 = vpop.permute.xlu0 %4790
        %4792 = vrot.lane.b32.xlu0 %v3791, 96
        %v4793 = vpop.permute.xlu0 %4792
        %4794 = vrot.lane.b32.xlu0 %v3792, 96
        %v4795 = vpop.permute.xlu0 %4794
        %4796 = vrot.lane.b32.xlu0 %v3793, 96
        %v4797 = vpop.permute.xlu0 %4796
        %4798 = vrot.lane.b32.xlu0 %v3794, 96
        %v4799 = vpop.permute.xlu0 %4798
        %4800 = vrot.lane.b32.xlu0 %v3795, 96
        %v4801 = vpop.permute.xlu0 %4800
        %4802 = vrot.lane.b32.xlu0 %v3796, 96
        %v4803 = vpop.permute.xlu0 %4802
        %4804 = vrot.lane.b32.xlu0 %v3797, 96
        %v4805 = vpop.permute.xlu0 %4804
        %4806 = vrot.lane.b32.xlu0 %v3798, 96
        %v4807 = vpop.permute.xlu0 %4806
        %4808 = vrot.lane.b32.xlu0 %v3799, 96
        %v4809 = vpop.permute.xlu0 %4808
        %4810 = vrot.lane.b32.xlu0 %v3800, 96
        %v4811 = vpop.permute.xlu0 %4810
        %4812 = vrot.lane.b32.xlu0 %v3801, 96
        %v4813 = vpop.permute.xlu0 %4812
        %4814 = vrot.lane.b32.xlu0 %v3802, 96
        %v4815 = vpop.permute.xlu0 %4814
        %4816 = vrot.lane.b32.xlu0 %v3803, 96
        %v4817 = vpop.permute.xlu0 %4816
        %4818 = vrot.lane.b32.xlu0 %v3804, 96
        %v4819 = vpop.permute.xlu0 %4818
        %4820 = vrot.lane.b32.xlu0 %v3805, 96
        %v4821 = vpop.permute.xlu0 %4820
        %4822 = vrot.lane.b32.xlu0 %v3806, 96
        %v4823 = vpop.permute.xlu0 %4822
        %4824 = vrot.lane.b32.xlu0 %v3807, 96
        %v4825 = vpop.permute.xlu0 %4824
        %4826 = vrot.lane.b32.xlu0 %v3808, 96
        %v4827 = vpop.permute.xlu0 %4826
        %4828 = vrot.lane.b32.xlu0 %v3809, 96
        %v4829 = vpop.permute.xlu0 %4828
        %4830 = vrot.lane.b32.xlu0 %v3810, 96
        %v4831 = vpop.permute.xlu0 %4830
        %4832 = vrot.lane.b32.xlu0 %v3811, 96
        %v4833 = vpop.permute.xlu0 %4832
        %4834 = vrot.lane.b32.xlu0 %v3812, 96
        %v4835 = vpop.permute.xlu0 %4834
        %4836 = vrot.lane.b32.xlu0 %v3813, 96
        %v4837 = vpop.permute.xlu0 %4836
        %4838 = vrot.lane.b32.xlu0 %v3814, 96
        %v4839 = vpop.permute.xlu0 %4838
        %4840 = vrot.lane.b32.xlu0 %v3815, 96
        %v4841 = vpop.permute.xlu0 %4840
        %4842 = vrot.lane.b32.xlu0 %v3867, 96
        %v4843 = vpop.permute.xlu0 %4842
        %4844 = vrot.lane.b32.xlu0 %v3868, 96
        %v4845 = vpop.permute.xlu0 %4844
        %4846 = vrot.lane.b32.xlu0 %v3869, 96
        %v4847 = vpop.permute.xlu0 %4846
        %4848 = vrot.lane.b32.xlu0 %v3876, 96
        %v4849 = vpop.permute.xlu0 %4848
        %4850 = vrot.lane.b32.xlu0 %v3877, 96
        %v4851 = vpop.permute.xlu0 %4850
        %4852 = vrot.lane.b32.xlu0 %v3878, 96
        %v4853 = vpop.permute.xlu0 %4852
        %v4902 = vsel %vm2282, %v3720, %v3931
        %v4903 = vsel %vm2282, %v3721, %v3933
        %v4904 = vsel %vm2282, %v3722, %v3935
        %v4905 = vsel %vm2282, %v3723, %v3937
        %v4906 = vsel %vm2282, %v3724, %v3939
        %v4907 = vsel %vm2282, %v3725, %v3941
        %v4908 = vsel %vm2282, %v3726, %v3943
        %v4909 = vsel %vm2282, %v3727, %v3945
        %v4910 = vsel %vm2282, %v3728, %v3947
        %v4911 = vsel %vm2282, %v3729, %v3949
        %v4912 = vsel %vm2282, %v3730, %v3951
        %v4913 = vsel %vm2282, %v3731, %v3953
        %v4914 = vsel %vm2282, %v3732, %v3955
        %v4915 = vsel %vm2282, %v3733, %v3957
        %v4916 = vsel %vm2282, %v3734, %v3959
        %v4917 = vsel %vm2282, %v3735, %v3961
        %v4918 = vsel %vm2282, %v3736, %v3963
        %v4919 = vsel %vm2282, %v3737, %v3965
        %v4920 = vsel %vm2282, %v3738, %v3967
        %v4921 = vsel %vm2282, %v3739, %v3969
        %v4922 = vsel %vm2282, %v3740, %v3971
        %v4923 = vsel %vm2282, %v3741, %v3973
        %v4924 = vsel %vm2282, %v3742, %v3975
        %v4925 = vsel %vm2282, %v3743, %v3977
        %v4926 = vsel %vm2282, %v3744, %v3979
        %v4927 = vsel %vm2282, %v3745, %v3981
        %v4928 = vsel %vm2282, %v3746, %v3983
        %v4929 = vsel %vm2282, %v3747, %v3985
        %v4930 = vsel %vm2282, %v3748, %v3987
        %v4931 = vsel %vm2282, %v3749, %v3989
        %v4932 = vsel %vm2282, %v3750, %v3991
        %v4933 = vsel %vm2282, %v3751, %v3993
        %v4934 = vsel %vm2282, %v3752, %v3995
        %v4935 = vsel %vm2282, %v3753, %v3997
        %v4936 = vsel %vm2282, %v3754, %v3999
        %v4937 = vsel %vm2282, %v3755, %v4001
        %v4938 = vsel %vm2282, %v3756, %v4003
        %v4939 = vsel %vm2282, %v3757, %v4005
        %v4940 = vsel %vm2282, %v3758, %v4007
        %v4941 = vsel %vm2282, %v3759, %v4009
        %v4942 = vsel %vm2282, %v3760, %v4011
        %v4943 = vsel %vm2282, %v3761, %v4013
        %v4944 = vsel %vm2282, %v3762, %v4015
        %v4945 = vsel %vm2282, %v3763, %v4017
        %v4946 = vsel %vm2282, %v3764, %v4019
        %v4947 = vsel %vm2282, %v3765, %v4021
        %v4948 = vsel %vm2282, %v3766, %v4023
        %v4949 = vsel %vm2282, %v3767, %v4025
        %vm4950 = vcmask 523264
        %v4951 = vsel %vm4950, %v4902, %v4123
        %v4952 = vsel %vm4950, %v4903, %v4125
        %v4953 = vsel %vm4950, %v4904, %v4127
        %v4954 = vsel %vm4950, %v4905, %v4129
        %v4955 = vsel %vm4950, %v4906, %v4131
        %v4956 = vsel %vm4950, %v4907, %v4133
        %v4957 = vsel %vm4950, %v4908, %v4135
        %v4958 = vsel %vm4950, %v4909, %v4137
        %v4959 = vsel %vm4950, %v4910, %v4139
        %v4960 = vsel %vm4950, %v4911, %v4141
        %v4961 = vsel %vm4950, %v4912, %v4143
        %v4962 = vsel %vm4950, %v4913, %v4145
        %v4963 = vsel %vm4950, %v4914, %v4147
        %v4964 = vsel %vm4950, %v4915, %v4149
        %v4965 = vsel %vm4950, %v4916, %v4151
        %v4966 = vsel %vm4950, %v4917, %v4153
        %v4967 = vsel %vm4950, %v4918, %v4155
        %v4968 = vsel %vm4950, %v4919, %v4157
        %v4969 = vsel %vm4950, %v4920, %v4159
        %v4970 = vsel %vm4950, %v4921, %v4161
        %v4971 = vsel %vm4950, %v4922, %v4163
        %v4972 = vsel %vm4950, %v4923, %v4165
        %v4973 = vsel %vm4950, %v4924, %v4167
        %v4974 = vsel %vm4950, %v4925, %v4169
        %v4975 = vsel %vm4950, %v4926, %v4171
        %v4976 = vsel %vm4950, %v4927, %v4173
        %v4977 = vsel %vm4950, %v4928, %v4175
        %v4978 = vsel %vm4950, %v4929, %v4177
        %v4979 = vsel %vm4950, %v4930, %v4179
        %v4980 = vsel %vm4950, %v4931, %v4181
        %v4981 = vsel %vm4950, %v4932, %v4183
        %v4982 = vsel %vm4950, %v4933, %v4185
        %v4983 = vsel %vm4950, %v4934, %v4187
        %v4984 = vsel %vm4950, %v4935, %v4189
        %v4985 = vsel %vm4950, %v4936, %v4191
        %v4986 = vsel %vm4950, %v4937, %v4193
        %v4987 = vsel %vm4950, %v4938, %v4195
        %v4988 = vsel %vm4950, %v4939, %v4197
        %v4989 = vsel %vm4950, %v4940, %v4199
        %v4990 = vsel %vm4950, %v4941, %v4201
        %v4991 = vsel %vm4950, %v4942, %v4203
        %v4992 = vsel %vm4950, %v4943, %v4205
        %v4993 = vsel %vm4950, %v4944, %v4207
        %v4994 = vsel %vm4950, %v4945, %v4209
        %v4995 = vsel %vm4950, %v4946, %v4211
        %v4996 = vsel %vm4950, %v4947, %v4213
        %v4997 = vsel %vm4950, %v4948, %v4215
        %v4998 = vsel %vm4950, %v4949, %v4217
        %vm4999 = vcmask 785408
        %v5000 = vsel %vm4999, %v4951, %v4315
        %v5001 = vsel %vm4999, %v4952, %v4317
        %v5002 = vsel %vm4999, %v4953, %v4319
        %v5003 = vsel %vm4999, %v4954, %v4321
        %v5004 = vsel %vm4999, %v4955, %v4323
        %v5005 = vsel %vm4999, %v4956, %v4325
        %v5006 = vsel %vm4999, %v4957, %v4327
        %v5007 = vsel %vm4999, %v4958, %v4329
        %v5008 = vsel %vm4999, %v4959, %v4331
        %v5009 = vsel %vm4999, %v4960, %v4333
        %v5010 = vsel %vm4999, %v4961, %v4335
        %v5011 = vsel %vm4999, %v4962, %v4337
        %v5012 = vsel %vm4999, %v4963, %v4339
        %v5013 = vsel %vm4999, %v4964, %v4341
        %v5014 = vsel %vm4999, %v4965, %v4343
        %v5015 = vsel %vm4999, %v4966, %v4345
        %v5016 = vsel %vm4999, %v4967, %v4347
        %v5017 = vsel %vm4999, %v4968, %v4349
        %v5018 = vsel %vm4999, %v4969, %v4351
        %v5019 = vsel %vm4999, %v4970, %v4353
        %v5020 = vsel %vm4999, %v4971, %v4355
        %v5021 = vsel %vm4999, %v4972, %v4357
        %v5022 = vsel %vm4999, %v4973, %v4359
        %v5023 = vsel %vm4999, %v4974, %v4361
        %v5024 = vsel %vm4999, %v4975, %v4363
        %v5025 = vsel %vm4999, %v4976, %v4365
        %v5026 = vsel %vm4999, %v4977, %v4367
        %v5027 = vsel %vm4999, %v4978, %v4369
        %v5028 = vsel %vm4999, %v4979, %v4371
        %v5029 = vsel %vm4999, %v4980, %v4373
        %v5030 = vsel %vm4999, %v4981, %v4375
        %v5031 = vsel %vm4999, %v4982, %v4377
        %v5032 = vsel %vm4999, %v4983, %v4379
        %v5033 = vsel %vm4999, %v4984, %v4381
        %v5034 = vsel %vm4999, %v4985, %v4383
        %v5035 = vsel %vm4999, %v4986, %v4385
        %v5036 = vsel %vm4999, %v4987, %v4387
        %v5037 = vsel %vm4999, %v4988, %v4389
        %v5038 = vsel %vm4999, %v4989, %v4391
        %v5039 = vsel %vm4999, %v4990, %v4393
        %v5040 = vsel %vm4999, %v4991, %v4395
        %v5041 = vsel %vm4999, %v4992, %v4397
        %v5042 = vsel %vm4999, %v4993, %v4399
        %v5043 = vsel %vm4999, %v4994, %v4401
        %v5044 = vsel %vm4999, %v4995, %v4403
        %v5045 = vsel %vm4999, %v4996, %v4405
        %v5046 = vsel %vm4999, %v4997, %v4407
        %v5047 = vsel %vm4999, %v4998, %v4409
        %v5048 = vsel %vm2282, %v3771, %v4462
        %v5049 = vsel %vm2282, %v3772, %v4464
        %v5050 = vsel %vm2282, %v3773, %v4466
        %v5051 = vsel %vm2282, %v3774, %v4468
        %v5052 = vsel %vm2282, %v3775, %v4470
        %v5053 = vsel %vm2282, %v3776, %v4472
        %v5054 = vsel %vm2282, %v3777, %v4474
        %v5055 = vsel %vm2282, %v3778, %v4476
        %v5056 = vsel %vm2282, %v3779, %v4478
        %v5057 = vsel %vm2282, %v3780, %v4480
        %v5058 = vsel %vm2282, %v3781, %v4482
        %v5059 = vsel %vm2282, %v3782, %v4484
        %v5060 = vsel %vm2282, %v3783, %v4486
        %v5061 = vsel %vm2282, %v3784, %v4488
        %v5062 = vsel %vm2282, %v3785, %v4490
        %v5063 = vsel %vm2282, %v3786, %v4492
        %v5064 = vsel %vm2282, %v3787, %v4494
        %v5065 = vsel %vm2282, %v3788, %v4496
        %v5066 = vsel %vm2282, %v3789, %v4498
        %v5067 = vsel %vm2282, %v3790, %v4500
        %v5068 = vsel %vm2282, %v3791, %v4502
        %v5069 = vsel %vm2282, %v3792, %v4504
        %v5070 = vsel %vm2282, %v3793, %v4506
        %v5071 = vsel %vm2282, %v3794, %v4508
        %v5072 = vsel %vm2282, %v3795, %v4510
        %v5073 = vsel %vm2282, %v3796, %v4512
        %v5074 = vsel %vm2282, %v3797, %v4514
        %v5075 = vsel %vm2282, %v3798, %v4516
        %v5076 = vsel %vm2282, %v3799, %v4518
        %v5077 = vsel %vm2282, %v3800, %v4520
        %v5078 = vsel %vm2282, %v3801, %v4522
        %v5079 = vsel %vm2282, %v3802, %v4524
        %v5080 = vsel %vm2282, %v3803, %v4526
        %v5081 = vsel %vm2282, %v3804, %v4528
        %v5082 = vsel %vm2282, %v3805, %v4530
        %v5083 = vsel %vm2282, %v3806, %v4532
        %v5084 = vsel %vm2282, %v3807, %v4534
        %v5085 = vsel %vm2282, %v3808, %v4536
        %v5086 = vsel %vm2282, %v3809, %v4538
        %v5087 = vsel %vm2282, %v3810, %v4540
        %v5088 = vsel %vm2282, %v3811, %v4542
        %v5089 = vsel %vm2282, %v3812, %v4544
        %v5090 = vsel %vm2282, %v3813, %v4546
        %v5091 = vsel %vm2282, %v3814, %v4548
        %v5092 = vsel %vm2282, %v3815, %v4550
        %v5093 = vsel %vm2282, %v3867, %v4552
        %v5094 = vsel %vm2282, %v3868, %v4554
        %v5095 = vsel %vm2282, %v3869, %v4556
        %v5096 = vsel %vm4950, %v5048, %v4609
        %v5097 = vsel %vm4950, %v5049, %v4611
        %v5098 = vsel %vm4950, %v5050, %v4613
        %v5099 = vsel %vm4950, %v5051, %v4615
        %v5100 = vsel %vm4950, %v5052, %v4617
        %v5101 = vsel %vm4950, %v5053, %v4619
        %v5102 = vsel %vm4950, %v5054, %v4621
        %v5103 = vsel %vm4950, %v5055, %v4623
        %v5104 = vsel %vm4950, %v5056, %v4625
        %v5105 = vsel %vm4950, %v5057, %v4627
        %v5106 = vsel %vm4950, %v5058, %v4629
        %v5107 = vsel %vm4950, %v5059, %v4631
        %v5108 = vsel %vm4950, %v5060, %v4633
        %v5109 = vsel %vm4950, %v5061, %v4635
        %v5110 = vsel %vm4950, %v5062, %v4637
        %v5111 = vsel %vm4950, %v5063, %v4639
        %v5112 = vsel %vm4950, %v5064, %v4641
        %v5113 = vsel %vm4950, %v5065, %v4643
        %v5114 = vsel %vm4950, %v5066, %v4645
        %v5115 = vsel %vm4950, %v5067, %v4647
        %v5116 = vsel %vm4950, %v5068, %v4649
        %v5117 = vsel %vm4950, %v5069, %v4651
        %v5118 = vsel %vm4950, %v5070, %v4653
        %v5119 = vsel %vm4950, %v5071, %v4655
        %v5120 = vsel %vm4950, %v5072, %v4657
        %v5121 = vsel %vm4950, %v5073, %v4659
        %v5122 = vsel %vm4950, %v5074, %v4661
        %v5123 = vsel %vm4950, %v5075, %v4663
        %v5124 = vsel %vm4950, %v5076, %v4665
        %v5125 = vsel %vm4950, %v5077, %v4667
        %v5126 = vsel %vm4950, %v5078, %v4669
        %v5127 = vsel %vm4950, %v5079, %v4671
        %v5128 = vsel %vm4950, %v5080, %v4673
        %v5129 = vsel %vm4950, %v5081, %v4675
        %v5130 = vsel %vm4950, %v5082, %v4677
        %v5131 = vsel %vm4950, %v5083, %v4679
        %v5132 = vsel %vm4950, %v5084, %v4681
        %v5133 = vsel %vm4950, %v5085, %v4683
        %v5134 = vsel %vm4950, %v5086, %v4685
        %v5135 = vsel %vm4950, %v5087, %v4687
        %v5136 = vsel %vm4950, %v5088, %v4689
        %v5137 = vsel %vm4950, %v5089, %v4691
        %v5138 = vsel %vm4950, %v5090, %v4693
        %v5139 = vsel %vm4950, %v5091, %v4695
        %v5140 = vsel %vm4950, %v5092, %v4697
        %v5141 = vsel %vm4950, %v5093, %v4699
        %v5142 = vsel %vm4950, %v5094, %v4701
        %v5143 = vsel %vm4950, %v5095, %v4703
        %v5144 = vsel %vm4999, %v5096, %v4759
        %v5145 = vsel %vm4999, %v5097, %v4761
        %v5146 = vsel %vm4999, %v5098, %v4763
        %v5147 = vsel %vm4999, %v5099, %v4765
        %v5148 = vsel %vm4999, %v5100, %v4767
        %v5149 = vsel %vm4999, %v5101, %v4769
        %v5150 = vsel %vm4999, %v5102, %v4771
        %v5151 = vsel %vm4999, %v5103, %v4773
        %v5152 = vsel %vm4999, %v5104, %v4775
        %v5153 = vsel %vm4999, %v5105, %v4777
        %v5154 = vsel %vm4999, %v5106, %v4779
        %v5155 = vsel %vm4999, %v5107, %v4781
        %v5156 = vsel %vm4999, %v5108, %v4783
        %v5157 = vsel %vm4999, %v5109, %v4785
        %v5158 = vsel %vm4999, %v5110, %v4787
        %v5159 = vsel %vm4999, %v5111, %v4789
        %v5160 = vsel %vm4999, %v5112, %v4791
        %v5161 = vsel %vm4999, %v5113, %v4793
        %v5162 = vsel %vm4999, %v5114, %v4795
        %v5163 = vsel %vm4999, %v5115, %v4797
        %v5164 = vsel %vm4999, %v5116, %v4799
        %v5165 = vsel %vm4999, %v5117, %v4801
        %v5166 = vsel %vm4999, %v5118, %v4803
        %v5167 = vsel %vm4999, %v5119, %v4805
        %v5168 = vsel %vm4999, %v5120, %v4807
        %v5169 = vsel %vm4999, %v5121, %v4809
        %v5170 = vsel %vm4999, %v5122, %v4811
        %v5171 = vsel %vm4999, %v5123, %v4813
        %v5172 = vsel %vm4999, %v5124, %v4815
        %v5173 = vsel %vm4999, %v5125, %v4817
        %v5174 = vsel %vm4999, %v5126, %v4819
        %v5175 = vsel %vm4999, %v5127, %v4821
        %v5176 = vsel %vm4999, %v5128, %v4823
        %v5177 = vsel %vm4999, %v5129, %v4825
        %v5178 = vsel %vm4999, %v5130, %v4827
        %v5179 = vsel %vm4999, %v5131, %v4829
        %v5180 = vsel %vm4999, %v5132, %v4831
        %v5181 = vsel %vm4999, %v5133, %v4833
        %v5182 = vsel %vm4999, %v5134, %v4835
        %v5183 = vsel %vm4999, %v5135, %v4837
        %v5184 = vsel %vm4999, %v5136, %v4839
        %v5185 = vsel %vm4999, %v5137, %v4841
        %v5186 = vsel %vm4999, %v5138, %v4843
        %v5187 = vsel %vm4999, %v5139, %v4845
        %v5188 = vsel %vm4999, %v5140, %v4847
        %v5189 = vsel %vm4999, %v5141, %v4849
        %v5190 = vsel %vm4999, %v5142, %v4851
        %v5191 = vsel %vm4999, %v5143, %v4853
        %v5192 = vld [vmem:[%s7] sm:$0xff]
        %v5193 = vld [vmem:[%s7 + $0x8] sm:$0xff]
        %v5194 = vld [vmem:[%s7 + $0x10] sm:$0xff]
        %v5195 = vld [vmem:[%s7 + $0x18] sm:$0xff]
        %v5196 = vld [vmem:[%s7 + $0x20] sm:$0xff]
        %v5197 = vld [vmem:[%s7 + $0x28] sm:$0xff]
        %v5198 = vld [vmem:[%s7 + $0x30] sm:$0xff]
        %v5199 = vld [vmem:[%s7 + $0x38] sm:$0xff]
        %v5200 = vld [vmem:[%s7 + $0x40] sm:$0xff]
        %v5201 = vld [vmem:[%s7 + $0x48] sm:$0xff]
        %v5202 = vld [vmem:[%s7 + $0x50] sm:$0xff]
        %v5203 = vld [vmem:[%s7 + $0x58] sm:$0xff]
        %v5204 = vld [vmem:[%s7 + $0x60] sm:$0xff]
        %v5205 = vld [vmem:[%s7 + $0x68] sm:$0xff]
        %v5206 = vld [vmem:[%s7 + $0x70] sm:$0xff]
        %v5207 = vld [vmem:[%s7 + $0x78] sm:$0xff]
        %v5208 = vld [vmem:[%s7 + $0x80] sm:$0xff]
        %v5209 = vld [vmem:[%s7 + $0x88] sm:$0xff]
        %v5210 = vld [vmem:[%s7 + $0x90] sm:$0xff]
        %v5211 = vld [vmem:[%s7 + $0x98] sm:$0xff]
        %v5212 = vld [vmem:[%s7 + $0xa0] sm:$0xff]
        %v5213 = vld [vmem:[%s7 + $0xa8] sm:$0xff]
        %v5214 = vld [vmem:[%s7 + $0xb0] sm:$0xff]
        %v5215 = vld [vmem:[%s7 + $0xb8] sm:$0xff]
        %v5216 = vld [vmem:[%s7 + $0xc0] sm:$0xff]
        %v5217 = vld [vmem:[%s7 + $0xc8] sm:$0xff]
        %v5218 = vld [vmem:[%s7 + $0xd0] sm:$0xff]
        %v5219 = vld [vmem:[%s7 + $0xd8] sm:$0xff]
        %v5220 = vld [vmem:[%s7 + $0xe0] sm:$0xff]
        %v5221 = vld [vmem:[%s7 + $0xe8] sm:$0xff]
        %v5222 = vld [vmem:[%s7 + $0xf0] sm:$0xff]
        %v5223 = vld [vmem:[%s7 + $0xf8] sm:$0xff]
        %v5224 = vld [vmem:[%s7 + $0x100] sm:$0xff]
        %v5225 = vld [vmem:[%s7 + $0x108] sm:$0xff]
        %v5226 = vld [vmem:[%s7 + $0x110] sm:$0xff]
        %v5227 = vld [vmem:[%s7 + $0x118] sm:$0xff]
        %v5228 = vld [vmem:[%s8] sm:$0x1]
        %v5230 = vlaneseq
        %v5231 = vshrl.u32 %v5230, 7
        %v5232 = vsub.s32 0, %v5231
        %v5233 = vrot.slane %v5228, %v5232
        %v5235 = vsel %vm2282, %v3822, 0
        %v5237 = vsel %vm2282, %v3823, 0
        %v5239 = vsel %vm2282, %v3824, 0
        %v5241 = vsel %vm2282, %v3825, 0
        %v5243 = vsel %vm2282, %v3826, 0
        %v5245 = vsel %vm2282, %v3827, 0
        %v5247 = vsel %vm2282, %v3828, 0
        %v5249 = vsel %vm2282, %v3829, 0
        %v5251 = vsel %vm2282, %v3830, 0
        %v5253 = vsel %vm2282, %v3831, 0
        %v5255 = vsel %vm2282, %v3832, 0
        %v5257 = vsel %vm2282, %v3833, 0
        %v5259 = vsel %vm2282, %v3834, 0
        %v5261 = vsel %vm2282, %v3835, 0
        %v5263 = vsel %vm2282, %v3836, 0
        %v5265 = vsel %vm2282, %v3837, 0
        %v5267 = vsel %vm2282, %v3838, 0
        %v5269 = vsel %vm2282, %v3839, 0
        %v5271 = vsel %vm2282, %v3840, 0
        %v5273 = vsel %vm2282, %v3841, 0
        %v5275 = vsel %vm2282, %v3842, 0
        %v5277 = vsel %vm2282, %v3843, 0
        %v5279 = vsel %vm2282, %v3844, 0
        %v5281 = vsel %vm2282, %v3845, 0
        %v5283 = vsel %vm2282, %v3846, 0
        %v5285 = vsel %vm2282, %v3847, 0
        %v5287 = vsel %vm2282, %v3848, 0
        %v5289 = vsel %vm2282, %v3849, 0
        %v5291 = vsel %vm2282, %v3850, 0
        %v5293 = vsel %vm2282, %v3851, 0
        %v5295 = vsel %vm2282, %v3852, 0
        %v5297 = vsel %vm2282, %v3853, 0
        %v5299 = vsel %vm2282, %v3854, 0
        %v5301 = vsel %vm2282, %v3855, 0
        %v5303 = vsel %vm2282, %v3856, 0
        %v5305 = vsel %vm2282, %v3857, 0
        %v5307 = vsel %vm2282, %v3858, 0
        %v5309 = vsel %vm2282, %v3859, 0
        %v5311 = vsel %vm2282, %v3860, 0
        %v5313 = vsel %vm2282, %v3861, 0
        %v5315 = vsel %vm2282, %v3862, 0
        %v5317 = vsel %vm2282, %v3863, 0
        %v5319 = vsel %vm2282, %v3870, 0
        %v5321 = vsel %vm2282, %v3871, 0
        %v5323 = vsel %vm2282, %v3872, 0
        %v5326 = vsel %vm2282, %v3879, 0
        %v5329 = vsel %vm2282, %v3880, 0
        %v5332 = vsel %vm2282, %v3881, 0
        %5334 = vmatprep.subr.mxu0 0.0
        %5335 = vmatpush1.msra.mxu0 %v5207
        %5336 = vmatprep.subr.mxu0 0.0
        %5337 = vmatpush1.msra.mxu0 %v5206
        %5338 = vmatprep.subr.mxu0 0.0
        %5339 = vmatpush1.msra.mxu0 %v5205
        %5340 = vmatprep.subr.mxu0 0.0
        %5341 = vmatpush1.msra.mxu0 %v5204
        %5342 = vmatprep.subr.mxu0 0.0
        %5343 = vmatpush1.msra.mxu0 %v5203
        %5344 = vmatprep.subr.mxu0 0.0
        %5345 = vmatpush1.msra.mxu0 %v5202
        %5346 = vmatprep.subr.mxu0 0.0
        %5347 = vmatpush1.msra.mxu0 %v5201
        %5348 = vmatprep.subr.mxu0 0.0
        %5349 = vmatpush1.msra.mxu0 %v5200
        %5350 = vmatprep.subr.mxu0 0.0
        %5351 = vmatpush1.msra.mxu0 %v5199
        %5352 = vmatprep.subr.mxu0 0.0
        %5353 = vmatpush1.msra.mxu0 %v5198
        %5354 = vmatprep.subr.mxu0 0.0
        %5355 = vmatpush1.msra.mxu0 %v5197
        %5356 = vmatprep.subr.mxu0 0.0
        %5357 = vmatpush1.msra.mxu0 %v5196
        %5358 = vmatprep.subr.mxu0 0.0
        %5359 = vmatpush1.msra.mxu0 %v5195
        %5360 = vmatprep.subr.mxu0 0.0
        %5361 = vmatpush1.msra.mxu0 %v5194
        %5362 = vmatprep.subr.mxu0 0.0
        %5363 = vmatpush1.msra.mxu0 %v5193
        %5364 = vmatprep.subr.mxu0 0.0
        %5365 = vmatpush1.msra.mxu0 %v5192
        %5366 = vmatprep.subr.mxu0 0.0
        %5367 = vmatpush2.msra.mxu0 %v5223
        %5368 = vmatprep.subr.mxu0 0.0
        %5369 = vmatpush2.msra.mxu0 %v5222
        %5370 = vmatprep.subr.mxu0 0.0
        %5371 = vmatpush2.msra.mxu0 %v5221
        %5372 = vmatprep.subr.mxu0 0.0
        %5373 = vmatpush2.msra.mxu0 %v5220
        %5374 = vmatprep.subr.mxu0 0.0
        %5375 = vmatpush2.msra.mxu0 %v5219
        %5376 = vmatprep.subr.mxu0 0.0
        %5377 = vmatpush2.msra.mxu0 %v5218
        %5378 = vmatprep.subr.mxu0 0.0
        %5379 = vmatpush2.msra.mxu0 %v5217
        %5380 = vmatprep.subr.mxu0 0.0
        %5381 = vmatpush2.msra.mxu0 %v5216
        %5382 = vmatprep.subr.mxu0 0.0
        %5383 = vmatpush2.msra.mxu0 %v5215
        %5384 = vmatprep.subr.mxu0 0.0
        %5385 = vmatpush2.msra.mxu0 %v5214
        %5386 = vmatprep.subr.mxu0 0.0
        %5387 = vmatpush2.msra.mxu0 %v5213
        %5388 = vmatprep.subr.mxu0 0.0
        %5389 = vmatpush2.msra.mxu0 %v5212
        %5390 = vmatprep.subr.mxu0 0.0
        %5391 = vmatpush2.msra.mxu0 %v5211
        %5392 = vmatprep.subr.mxu0 0.0
        %5393 = vmatpush2.msra.mxu0 %v5210
        %5394 = vmatprep.subr.mxu0 0.0
        %5395 = vmatpush2.msra.mxu0 %v5209
        %5396 = vmatprep.subr.mxu0 0.0
        %5397 = vmatpush2.msra.mxu0 %v5208
        %5398 = vmatprep.mubr.f32.mxu0 %v5144
        %5399 = vmatmul.mubr.f32.gmra.mxu0 %v5000
        %v5400 = vpop.f32.mrf.mxu0
        %v5401 = vadd.f32 %v5233, %v5400
        %v5402 = vpop.f32.mrf.mxu0
        %5403 = vmatprep.mubr.f32.mxu0 %v5145
        %5404 = vmatmul.mubr.f32.gmra.mxu0 %v5001
        %v5405 = vpop.f32.mrf.mxu0
        %v5406 = vadd.f32 %v5233, %v5405
        %v5407 = vpop.f32.mrf.mxu0
        %5408 = vmatprep.mubr.f32.mxu0 %v5146
        %5409 = vmatmul.mubr.f32.gmra.mxu0 %v5002
        %v5410 = vpop.f32.mrf.mxu0
        %v5411 = vadd.f32 %v5233, %v5410
        %v5412 = vpop.f32.mrf.mxu0
        %5413 = vmatprep.mubr.f32.mxu0 %v5147
        %5414 = vmatmul.mubr.f32.gmra.mxu0 %v5003
        %v5415 = vpop.f32.mrf.mxu0
        %v5416 = vadd.f32 %v5233, %v5415
        %v5417 = vpop.f32.mrf.mxu0
        %5418 = vmatprep.mubr.f32.mxu0 %v5148
        %5419 = vmatmul.mubr.f32.gmra.mxu0 %v5004
        %v5420 = vpop.f32.mrf.mxu0
        %v5421 = vadd.f32 %v5233, %v5420
        %v5422 = vpop.f32.mrf.mxu0
        %5423 = vmatprep.mubr.f32.mxu0 %v5149
        %5424 = vmatmul.mubr.f32.gmra.mxu0 %v5005
        %v5425 = vpop.f32.mrf.mxu0
        %v5426 = vadd.f32 %v5233, %v5425
        %v5427 = vpop.f32.mrf.mxu0
        %5428 = vmatprep.mubr.f32.mxu0 %v5150
        %5429 = vmatmul.mubr.f32.gmra.mxu0 %v5006
        %v5430 = vpop.f32.mrf.mxu0
        %v5431 = vadd.f32 %v5233, %v5430
        %v5432 = vpop.f32.mrf.mxu0
        %5433 = vmatprep.mubr.f32.mxu0 %v5151
        %5434 = vmatmul.mubr.f32.gmra.mxu0 %v5007
        %v5435 = vpop.f32.mrf.mxu0
        %v5436 = vadd.f32 %v5233, %v5435
        %v5437 = vpop.f32.mrf.mxu0
        %5438 = vmatprep.mubr.f32.mxu0 %v5152
        %5439 = vmatmul.mubr.f32.gmra.mxu0 %v5008
        %v5440 = vpop.f32.mrf.mxu0
        %v5441 = vadd.f32 %v5233, %v5440
        %v5442 = vpop.f32.mrf.mxu0
        %5443 = vmatprep.mubr.f32.mxu0 %v5153
        %5444 = vmatmul.mubr.f32.gmra.mxu0 %v5009
        %v5445 = vpop.f32.mrf.mxu0
        %v5446 = vadd.f32 %v5233, %v5445
        %v5447 = vpop.f32.mrf.mxu0
        %5448 = vmatprep.mubr.f32.mxu0 %v5154
        %5449 = vmatmul.mubr.f32.gmra.mxu0 %v5010
        %v5450 = vpop.f32.mrf.mxu0
        %v5451 = vadd.f32 %v5233, %v5450
        %v5452 = vpop.f32.mrf.mxu0
        %5453 = vmatprep.mubr.f32.mxu0 %v5155
        %5454 = vmatmul.mubr.f32.gmra.mxu0 %v5011
        %v5455 = vpop.f32.mrf.mxu0
        %v5456 = vadd.f32 %v5233, %v5455
        %v5457 = vpop.f32.mrf.mxu0
        %5458 = vmatprep.mubr.f32.mxu0 %v5156
        %5459 = vmatmul.mubr.f32.gmra.mxu0 %v5012
        %v5460 = vpop.f32.mrf.mxu0
        %v5461 = vadd.f32 %v5233, %v5460
        %v5462 = vpop.f32.mrf.mxu0
        %5463 = vmatprep.mubr.f32.mxu0 %v5157
        %5464 = vmatmul.mubr.f32.gmra.mxu0 %v5013
        %v5465 = vpop.f32.mrf.mxu0
        %v5466 = vadd.f32 %v5233, %v5465
        %v5467 = vpop.f32.mrf.mxu0
        %5468 = vmatprep.mubr.f32.mxu0 %v5158
        %5469 = vmatmul.mubr.f32.gmra.mxu0 %v5014
        %v5470 = vpop.f32.mrf.mxu0
        %v5471 = vadd.f32 %v5233, %v5470
        %v5472 = vpop.f32.mrf.mxu0
        %5473 = vmatprep.mubr.f32.mxu0 %v5159
        %5474 = vmatmul.mubr.f32.gmra.mxu0 %v5015
        %v5475 = vpop.f32.mrf.mxu0
        %v5476 = vadd.f32 %v5233, %v5475
        %v5477 = vpop.f32.mrf.mxu0
        %5478 = vmatprep.mubr.f32.mxu0 %v5160
        %5479 = vmatmul.mubr.f32.gmra.mxu0 %v5016
        %v5480 = vpop.f32.mrf.mxu0
        %v5481 = vadd.f32 %v5233, %v5480
        %v5482 = vpop.f32.mrf.mxu0
        %5483 = vmatprep.mubr.f32.mxu0 %v5161
        %5484 = vmatmul.mubr.f32.gmra.mxu0 %v5017
        %v5485 = vpop.f32.mrf.mxu0
        %v5486 = vadd.f32 %v5233, %v5485
        %v5487 = vpop.f32.mrf.mxu0
        %5488 = vmatprep.mubr.f32.mxu0 %v5162
        %5489 = vmatmul.mubr.f32.gmra.mxu0 %v5018
        %v5490 = vpop.f32.mrf.mxu0
        %v5491 = vadd.f32 %v5233, %v5490
        %v5492 = vpop.f32.mrf.mxu0
        %5493 = vmatprep.mubr.f32.mxu0 %v5163
        %5494 = vmatmul.mubr.f32.gmra.mxu0 %v5019
        %v5495 = vpop.f32.mrf.mxu0
        %v5496 = vadd.f32 %v5233, %v5495
        %v5497 = vpop.f32.mrf.mxu0
        %5498 = vmatprep.mubr.f32.mxu0 %v5164
        %5499 = vmatmul.mubr.f32.gmra.mxu0 %v5020
        %v5500 = vpop.f32.mrf.mxu0
        %v5501 = vadd.f32 %v5233, %v5500
        %v5502 = vpop.f32.mrf.mxu0
        %5503 = vmatprep.mubr.f32.mxu0 %v5165
        %5504 = vmatmul.mubr.f32.gmra.mxu0 %v5021
        %v5505 = vpop.f32.mrf.mxu0
        %v5506 = vadd.f32 %v5233, %v5505
        %v5507 = vpop.f32.mrf.mxu0
        %5508 = vmatprep.mubr.f32.mxu0 %v5166
        %5509 = vmatmul.mubr.f32.gmra.mxu0 %v5022
        %v5510 = vpop.f32.mrf.mxu0
        %v5511 = vadd.f32 %v5233, %v5510
        %v5512 = vpop.f32.mrf.mxu0
        %5513 = vmatprep.mubr.f32.mxu0 %v5167
        %5514 = vmatmul.mubr.f32.gmra.mxu0 %v5023
        %v5515 = vpop.f32.mrf.mxu0
        %v5516 = vadd.f32 %v5233, %v5515
        %v5517 = vpop.f32.mrf.mxu0
        %5518 = vmatprep.mubr.f32.mxu0 %v5168
        %5519 = vmatmul.mubr.f32.gmra.mxu0 %v5024
        %v5520 = vpop.f32.mrf.mxu0
        %v5521 = vadd.f32 %v5233, %v5520
        %v5522 = vpop.f32.mrf.mxu0
        %5523 = vmatprep.mubr.f32.mxu0 %v5169
        %5524 = vmatmul.mubr.f32.gmra.mxu0 %v5025
        %v5525 = vpop.f32.mrf.mxu0
        %v5526 = vadd.f32 %v5233, %v5525
        %v5527 = vpop.f32.mrf.mxu0
        %5528 = vmatprep.mubr.f32.mxu0 %v5170
        %5529 = vmatmul.mubr.f32.gmra.mxu0 %v5026
        %v5530 = vpop.f32.mrf.mxu0
        %v5531 = vadd.f32 %v5233, %v5530
        %v5532 = vpop.f32.mrf.mxu0
        %5533 = vmatprep.mubr.f32.mxu0 %v5171
        %5534 = vmatmul.mubr.f32.gmra.mxu0 %v5027
        %v5535 = vpop.f32.mrf.mxu0
        %v5536 = vadd.f32 %v5233, %v5535
        %v5537 = vpop.f32.mrf.mxu0
        %5538 = vmatprep.mubr.f32.mxu0 %v5172
        %5539 = vmatmul.mubr.f32.gmra.mxu0 %v5028
        %v5540 = vpop.f32.mrf.mxu0
        %v5541 = vadd.f32 %v5233, %v5540
        %v5542 = vpop.f32.mrf.mxu0
        %5543 = vmatprep.mubr.f32.mxu0 %v5173
        %5544 = vmatmul.mubr.f32.gmra.mxu0 %v5029
        %v5545 = vpop.f32.mrf.mxu0
        %v5546 = vadd.f32 %v5233, %v5545
        %v5547 = vpop.f32.mrf.mxu0
        %5548 = vmatprep.mubr.f32.mxu0 %v5174
        %5549 = vmatmul.mubr.f32.gmra.mxu0 %v5030
        %v5550 = vpop.f32.mrf.mxu0
        %v5551 = vadd.f32 %v5233, %v5550
        %v5552 = vpop.f32.mrf.mxu0
        %5553 = vmatprep.mubr.f32.mxu0 %v5175
        %5554 = vmatmul.mubr.f32.gmra.mxu0 %v5031
        %v5555 = vpop.f32.mrf.mxu0
        %v5556 = vadd.f32 %v5233, %v5555
        %v5557 = vpop.f32.mrf.mxu0
        %5558 = vmatprep.mubr.f32.mxu0 %v5176
        %5559 = vmatmul.mubr.f32.gmra.mxu0 %v5032
        %v5560 = vpop.f32.mrf.mxu0
        %v5561 = vadd.f32 %v5233, %v5560
        %v5562 = vpop.f32.mrf.mxu0
        %5563 = vmatprep.mubr.f32.mxu0 %v5177
        %5564 = vmatmul.mubr.f32.gmra.mxu0 %v5033
        %v5565 = vpop.f32.mrf.mxu0
        %v5566 = vadd.f32 %v5233, %v5565
        %v5567 = vpop.f32.mrf.mxu0
        %5568 = vmatprep.mubr.f32.mxu0 %v5178
        %5569 = vmatmul.mubr.f32.gmra.mxu0 %v5034
        %v5570 = vpop.f32.mrf.mxu0
        %v5571 = vadd.f32 %v5233, %v5570
        %v5572 = vpop.f32.mrf.mxu0
        %5573 = vmatprep.mubr.f32.mxu0 %v5179
        %5574 = vmatmul.mubr.f32.gmra.mxu0 %v5035
        %v5575 = vpop.f32.mrf.mxu0
        %v5576 = vadd.f32 %v5233, %v5575
        %v5577 = vpop.f32.mrf.mxu0
        %5578 = vmatprep.mubr.f32.mxu0 %v5180
        %5579 = vmatmul.mubr.f32.gmra.mxu0 %v5036
        %v5580 = vpop.f32.mrf.mxu0
        %v5581 = vadd.f32 %v5233, %v5580
        %v5582 = vpop.f32.mrf.mxu0
        %5583 = vmatprep.mubr.f32.mxu0 %v5181
        %5584 = vmatmul.mubr.f32.gmra.mxu0 %v5037
        %v5585 = vpop.f32.mrf.mxu0
        %v5586 = vadd.f32 %v5233, %v5585
        %v5587 = vpop.f32.mrf.mxu0
        %5588 = vmatprep.mubr.f32.mxu0 %v5182
        %5589 = vmatmul.mubr.f32.gmra.mxu0 %v5038
        %v5590 = vpop.f32.mrf.mxu0
        %v5591 = vadd.f32 %v5233, %v5590
        %v5592 = vpop.f32.mrf.mxu0
        %5593 = vmatprep.mubr.f32.mxu0 %v5183
        %5594 = vmatmul.mubr.f32.gmra.mxu0 %v5039
        %v5595 = vpop.f32.mrf.mxu0
        %v5596 = vadd.f32 %v5233, %v5595
        %v5597 = vpop.f32.mrf.mxu0
        %5598 = vmatprep.mubr.f32.mxu0 %v5184
        %5599 = vmatmul.mubr.f32.gmra.mxu0 %v5040
        %v5600 = vpop.f32.mrf.mxu0
        %v5601 = vadd.f32 %v5233, %v5600
        %v5602 = vpop.f32.mrf.mxu0
        %5603 = vmatprep.mubr.f32.mxu0 %v5185
        %5604 = vmatmul.mubr.f32.gmra.mxu0 %v5041
        %v5605 = vpop.f32.mrf.mxu0
        %v5606 = vadd.f32 %v5233, %v5605
        %v5607 = vpop.f32.mrf.mxu0
        %5608 = vmatprep.mubr.f32.mxu0 %v5186
        %5609 = vmatmul.mubr.f32.gmra.mxu0 %v5042
        %v5610 = vpop.f32.mrf.mxu0
        %v5611 = vadd.f32 %v5233, %v5610
        %v5612 = vpop.f32.mrf.mxu0
        %5613 = vmatprep.mubr.f32.mxu0 %v5187
        %5614 = vmatmul.mubr.f32.gmra.mxu0 %v5043
        %v5615 = vpop.f32.mrf.mxu0
        %v5616 = vadd.f32 %v5233, %v5615
        %v5617 = vpop.f32.mrf.mxu0
        %5618 = vmatprep.mubr.f32.mxu0 %v5188
        %5619 = vmatmul.mubr.f32.gmra.mxu0 %v5044
        %v5620 = vpop.f32.mrf.mxu0
        %v5621 = vadd.f32 %v5233, %v5620
        %v5622 = vpop.f32.mrf.mxu0
        %5623 = vmatprep.mubr.f32.mxu0 %v5189
        %5624 = vmatmul.mubr.f32.gmra.mxu0 %v5045
        %v5625 = vpop.f32.mrf.mxu0
        %v5626 = vadd.f32 %v5233, %v5625
        %v5627 = vpop.f32.mrf.mxu0
        %5628 = vmatprep.mubr.f32.mxu0 %v5190
        %5629 = vmatmul.mubr.f32.gmra.mxu0 %v5046
        %v5630 = vpop.f32.mrf.mxu0
        %v5631 = vadd.f32 %v5233, %v5630
        %v5632 = vpop.f32.mrf.mxu0
        %5633 = vmatprep.mubr.f32.mxu0 %v5191
        %5634 = vmatmul.mubr.f32.gmra.mxu0 %v5047
        %v5635 = vpop.f32.mrf.mxu0
        %v5636 = vadd.f32 %v5233, %v5635
        %v5637 = vpop.f32.mrf.mxu0
        %5638 = vdwg.mxu0
        %5639 = vmatprep.subr.mxu0 0.0
        %5640 = vmatpush1.msra.mxu0 0.0
        %5641 = vmatprep.subr.mxu0 0.0
        %5642 = vmatpush1.msra.mxu0 0.0
        %5643 = vmatprep.subr.mxu0 0.0
        %5644 = vmatpush1.msra.mxu0 0.0
        %5645 = vmatprep.subr.mxu0 0.0
        %5646 = vmatpush1.msra.mxu0 0.0
        %5647 = vmatprep.subr.mxu0 0.0
        %5648 = vmatpush1.msra.mxu0 0.0
        %5649 = vmatprep.subr.mxu0 0.0
        %5650 = vmatpush1.msra.mxu0 0.0
        %5651 = vmatprep.subr.mxu0 0.0
        %5652 = vmatpush1.msra.mxu0 0.0
        %5653 = vmatprep.subr.mxu0 0.0
        %5654 = vmatpush1.msra.mxu0 0.0
        %5655 = vmatprep.subr.mxu0 0.0
        %5656 = vmatpush1.msra.mxu0 0.0
        %5657 = vmatprep.subr.mxu0 0.0
        %5658 = vmatpush1.msra.mxu0 0.0
        %5659 = vmatprep.subr.mxu0 0.0
        %5660 = vmatpush1.msra.mxu0 0.0
        %5661 = vmatprep.subr.mxu0 0.0
        %5662 = vmatpush1.msra.mxu0 0.0
        %5663 = vmatprep.subr.mxu0 0.0
        %5664 = vmatpush1.msra.mxu0 %v5227
        %5665 = vmatprep.subr.mxu0 0.0
        %5666 = vmatpush1.msra.mxu0 %v5226
        %5667 = vmatprep.subr.mxu0 0.0
        %5668 = vmatpush1.msra.mxu0 %v5225
        %5669 = vmatprep.subr.mxu0 0.0
        %5670 = vmatpush1.msra.mxu0 %v5224
        %5671 = vmatprep.subr.mxu0 0.0
        %5672 = vmatpush2.msra.mxu0 0.0
        %5673 = vmatprep.subr.mxu0 0.0
        %5674 = vmatpush2.msra.mxu0 0.0
        %5675 = vmatprep.subr.mxu0 0.0
        %5676 = vmatpush2.msra.mxu0 0.0
        %5677 = vmatprep.subr.mxu0 0.0
        %5678 = vmatpush2.msra.mxu0 0.0
        %5679 = vmatprep.subr.mxu0 0.0
        %5680 = vmatpush2.msra.mxu0 0.0
        %5681 = vmatprep.subr.mxu0 0.0
        %5682 = vmatpush2.msra.mxu0 0.0
        %5683 = vmatprep.subr.mxu0 0.0
        %5684 = vmatpush2.msra.mxu0 0.0
        %5685 = vmatprep.subr.mxu0 0.0
        %5686 = vmatpush2.msra.mxu0 0.0
        %5687 = vmatprep.subr.mxu0 0.0
        %5688 = vmatpush2.msra.mxu0 0.0
        %5689 = vmatprep.subr.mxu0 0.0
        %5690 = vmatpush2.msra.mxu0 0.0
        %5691 = vmatprep.subr.mxu0 0.0
        %5692 = vmatpush2.msra.mxu0 0.0
        %5693 = vmatprep.subr.mxu0 0.0
        %5694 = vmatpush2.msra.mxu0 0.0
        %5695 = vmatprep.subr.mxu0 0.0
        %5696 = vmatpush2.msra.mxu0 0.0
        %5697 = vmatprep.subr.mxu0 0.0
        %5698 = vmatpush2.msra.mxu0 0.0
        %5699 = vmatprep.subr.mxu0 0.0
        %5700 = vmatpush2.msra.mxu0 0.0
        %5701 = vmatprep.subr.mxu0 0.0
        %5702 = vmatpush2.msra.mxu0 0.0
        %5703 = vmatprep.mubr.f32.mxu0 0.0
        %5704 = vmatmul.mubr.f32.gmra.mxu0 %v5235
        %v5705 = vpop.f32.mrf.mxu0
        %v5706 = vadd.f32 %v5401, %v5705
        %v5707 = vpop.f32.mrf.mxu0
        %5708 = vmatprep.mubr.f32.mxu0 0.0
        %5709 = vmatmul.mubr.f32.gmra.mxu0 %v5237
        %v5710 = vpop.f32.mrf.mxu0
        %v5711 = vadd.f32 %v5406, %v5710
        %v5712 = vpop.f32.mrf.mxu0
        %5713 = vmatprep.mubr.f32.mxu0 0.0
        %5714 = vmatmul.mubr.f32.gmra.mxu0 %v5239
        %v5715 = vpop.f32.mrf.mxu0
        %v5716 = vadd.f32 %v5411, %v5715
        %v5717 = vpop.f32.mrf.mxu0
        %5718 = vmatprep.mubr.f32.mxu0 0.0
        %5719 = vmatmul.mubr.f32.gmra.mxu0 %v5241
        %v5720 = vpop.f32.mrf.mxu0
        %v5721 = vadd.f32 %v5416, %v5720
        %v5722 = vpop.f32.mrf.mxu0
        %5723 = vmatprep.mubr.f32.mxu0 0.0
        %5724 = vmatmul.mubr.f32.gmra.mxu0 %v5243
        %v5725 = vpop.f32.mrf.mxu0
        %v5726 = vadd.f32 %v5421, %v5725
        %v5727 = vpop.f32.mrf.mxu0
        %5728 = vmatprep.mubr.f32.mxu0 0.0
        %5729 = vmatmul.mubr.f32.gmra.mxu0 %v5245
        %v5730 = vpop.f32.mrf.mxu0
        %v5731 = vadd.f32 %v5426, %v5730
        %v5732 = vpop.f32.mrf.mxu0
        %5733 = vmatprep.mubr.f32.mxu0 0.0
        %5734 = vmatmul.mubr.f32.gmra.mxu0 %v5247
        %v5735 = vpop.f32.mrf.mxu0
        %v5736 = vadd.f32 %v5431, %v5735
        %v5737 = vpop.f32.mrf.mxu0
        %5738 = vmatprep.mubr.f32.mxu0 0.0
        %5739 = vmatmul.mubr.f32.gmra.mxu0 %v5249
        %v5740 = vpop.f32.mrf.mxu0
        %v5741 = vadd.f32 %v5436, %v5740
        %v5742 = vpop.f32.mrf.mxu0
        %5743 = vmatprep.mubr.f32.mxu0 0.0
        %5744 = vmatmul.mubr.f32.gmra.mxu0 %v5251
        %v5745 = vpop.f32.mrf.mxu0
        %v5746 = vadd.f32 %v5441, %v5745
        %v5747 = vpop.f32.mrf.mxu0
        %5748 = vmatprep.mubr.f32.mxu0 0.0
        %5749 = vmatmul.mubr.f32.gmra.mxu0 %v5253
        %v5750 = vpop.f32.mrf.mxu0
        %v5751 = vadd.f32 %v5446, %v5750
        %v5752 = vpop.f32.mrf.mxu0
        %5753 = vmatprep.mubr.f32.mxu0 0.0
        %5754 = vmatmul.mubr.f32.gmra.mxu0 %v5255
        %v5755 = vpop.f32.mrf.mxu0
        %v5756 = vadd.f32 %v5451, %v5755
        %v5757 = vpop.f32.mrf.mxu0
        %5758 = vmatprep.mubr.f32.mxu0 0.0
        %5759 = vmatmul.mubr.f32.gmra.mxu0 %v5257
        %v5760 = vpop.f32.mrf.mxu0
        %v5761 = vadd.f32 %v5456, %v5760
        %v5762 = vpop.f32.mrf.mxu0
        %5763 = vmatprep.mubr.f32.mxu0 0.0
        %5764 = vmatmul.mubr.f32.gmra.mxu0 %v5259
        %v5765 = vpop.f32.mrf.mxu0
        %v5766 = vadd.f32 %v5461, %v5765
        %v5767 = vpop.f32.mrf.mxu0
        %5768 = vmatprep.mubr.f32.mxu0 0.0
        %5769 = vmatmul.mubr.f32.gmra.mxu0 %v5261
        %v5770 = vpop.f32.mrf.mxu0
        %v5771 = vadd.f32 %v5466, %v5770
        %v5772 = vpop.f32.mrf.mxu0
        %5773 = vmatprep.mubr.f32.mxu0 0.0
        %5774 = vmatmul.mubr.f32.gmra.mxu0 %v5263
        %v5775 = vpop.f32.mrf.mxu0
        %v5776 = vadd.f32 %v5471, %v5775
        %v5777 = vpop.f32.mrf.mxu0
        %5778 = vmatprep.mubr.f32.mxu0 0.0
        %5779 = vmatmul.mubr.f32.gmra.mxu0 %v5265
        %v5780 = vpop.f32.mrf.mxu0
        %v5781 = vadd.f32 %v5476, %v5780
        %v5782 = vpop.f32.mrf.mxu0
        %5783 = vmatprep.mubr.f32.mxu0 0.0
        %5784 = vmatmul.mubr.f32.gmra.mxu0 %v5267
        %v5785 = vpop.f32.mrf.mxu0
        %v5786 = vadd.f32 %v5481, %v5785
        %v5787 = vpop.f32.mrf.mxu0
        %5788 = vmatprep.mubr.f32.mxu0 0.0
        %5789 = vmatmul.mubr.f32.gmra.mxu0 %v5269
        %v5790 = vpop.f32.mrf.mxu0
        %v5791 = vadd.f32 %v5486, %v5790
        %v5792 = vpop.f32.mrf.mxu0
        %5793 = vmatprep.mubr.f32.mxu0 0.0
        %5794 = vmatmul.mubr.f32.gmra.mxu0 %v5271
        %v5795 = vpop.f32.mrf.mxu0
        %v5796 = vadd.f32 %v5491, %v5795
        %v5797 = vpop.f32.mrf.mxu0
        %5798 = vmatprep.mubr.f32.mxu0 0.0
        %5799 = vmatmul.mubr.f32.gmra.mxu0 %v5273
        %v5800 = vpop.f32.mrf.mxu0
        %v5801 = vadd.f32 %v5496, %v5800
        %v5802 = vpop.f32.mrf.mxu0
        %5803 = vmatprep.mubr.f32.mxu0 0.0
        %5804 = vmatmul.mubr.f32.gmra.mxu0 %v5275
        %v5805 = vpop.f32.mrf.mxu0
        %v5806 = vadd.f32 %v5501, %v5805
        %v5807 = vpop.f32.mrf.mxu0
        %5808 = vmatprep.mubr.f32.mxu0 0.0
        %5809 = vmatmul.mubr.f32.gmra.mxu0 %v5277
        %v5810 = vpop.f32.mrf.mxu0
        %v5811 = vadd.f32 %v5506, %v5810
        %v5812 = vpop.f32.mrf.mxu0
        %5813 = vmatprep.mubr.f32.mxu0 0.0
        %5814 = vmatmul.mubr.f32.gmra.mxu0 %v5279
        %v5815 = vpop.f32.mrf.mxu0
        %v5816 = vadd.f32 %v5511, %v5815
        %v5817 = vpop.f32.mrf.mxu0
        %5818 = vmatprep.mubr.f32.mxu0 0.0
        %5819 = vmatmul.mubr.f32.gmra.mxu0 %v5281
        %v5820 = vpop.f32.mrf.mxu0
        %v5821 = vadd.f32 %v5516, %v5820
        %v5822 = vpop.f32.mrf.mxu0
        %5823 = vmatprep.mubr.f32.mxu0 0.0
        %5824 = vmatmul.mubr.f32.gmra.mxu0 %v5283
        %v5825 = vpop.f32.mrf.mxu0
        %v5826 = vadd.f32 %v5521, %v5825
        %v5827 = vpop.f32.mrf.mxu0
        %5828 = vmatprep.mubr.f32.mxu0 0.0
        %5829 = vmatmul.mubr.f32.gmra.mxu0 %v5285
        %v5830 = vpop.f32.mrf.mxu0
        %v5831 = vadd.f32 %v5526, %v5830
        %v5832 = vpop.f32.mrf.mxu0
        %5833 = vmatprep.mubr.f32.mxu0 0.0
        %5834 = vmatmul.mubr.f32.gmra.mxu0 %v5287
        %v5835 = vpop.f32.mrf.mxu0
        %v5836 = vadd.f32 %v5531, %v5835
        %v5837 = vpop.f32.mrf.mxu0
        %5838 = vmatprep.mubr.f32.mxu0 0.0
        %5839 = vmatmul.mubr.f32.gmra.mxu0 %v5289
        %v5840 = vpop.f32.mrf.mxu0
        %v5841 = vadd.f32 %v5536, %v5840
        %v5842 = vpop.f32.mrf.mxu0
        %5843 = vmatprep.mubr.f32.mxu0 0.0
        %5844 = vmatmul.mubr.f32.gmra.mxu0 %v5291
        %v5845 = vpop.f32.mrf.mxu0
        %v5846 = vadd.f32 %v5541, %v5845
        %v5847 = vpop.f32.mrf.mxu0
        %5848 = vmatprep.mubr.f32.mxu0 0.0
        %5849 = vmatmul.mubr.f32.gmra.mxu0 %v5293
        %v5850 = vpop.f32.mrf.mxu0
        %v5851 = vadd.f32 %v5546, %v5850
        %v5852 = vpop.f32.mrf.mxu0
        %5853 = vmatprep.mubr.f32.mxu0 0.0
        %5854 = vmatmul.mubr.f32.gmra.mxu0 %v5295
        %v5855 = vpop.f32.mrf.mxu0
        %v5856 = vadd.f32 %v5551, %v5855
        %v5857 = vpop.f32.mrf.mxu0
        %5858 = vmatprep.mubr.f32.mxu0 0.0
        %5859 = vmatmul.mubr.f32.gmra.mxu0 %v5297
        %v5860 = vpop.f32.mrf.mxu0
        %v5861 = vadd.f32 %v5556, %v5860
        %v5862 = vpop.f32.mrf.mxu0
        %5863 = vmatprep.mubr.f32.mxu0 0.0
        %5864 = vmatmul.mubr.f32.gmra.mxu0 %v5299
        %v5865 = vpop.f32.mrf.mxu0
        %v5866 = vadd.f32 %v5561, %v5865
        %v5867 = vpop.f32.mrf.mxu0
        %5868 = vmatprep.mubr.f32.mxu0 0.0
        %5869 = vmatmul.mubr.f32.gmra.mxu0 %v5301
        %v5870 = vpop.f32.mrf.mxu0
        %v5871 = vadd.f32 %v5566, %v5870
        %v5872 = vpop.f32.mrf.mxu0
        %5873 = vmatprep.mubr.f32.mxu0 0.0
        %5874 = vmatmul.mubr.f32.gmra.mxu0 %v5303
        %v5875 = vpop.f32.mrf.mxu0
        %v5876 = vadd.f32 %v5571, %v5875
        %v5877 = vpop.f32.mrf.mxu0
        %5878 = vmatprep.mubr.f32.mxu0 0.0
        %5879 = vmatmul.mubr.f32.gmra.mxu0 %v5305
        %v5880 = vpop.f32.mrf.mxu0
        %v5881 = vadd.f32 %v5576, %v5880
        %v5882 = vpop.f32.mrf.mxu0
        %5883 = vmatprep.mubr.f32.mxu0 0.0
        %5884 = vmatmul.mubr.f32.gmra.mxu0 %v5307
        %v5885 = vpop.f32.mrf.mxu0
        %v5886 = vadd.f32 %v5581, %v5885
        %v5887 = vpop.f32.mrf.mxu0
        %5888 = vmatprep.mubr.f32.mxu0 0.0
        %5889 = vmatmul.mubr.f32.gmra.mxu0 %v5309
        %v5890 = vpop.f32.mrf.mxu0
        %v5891 = vadd.f32 %v5586, %v5890
        %v5892 = vpop.f32.mrf.mxu0
        %5893 = vmatprep.mubr.f32.mxu0 0.0
        %5894 = vmatmul.mubr.f32.gmra.mxu0 %v5311
        %v5895 = vpop.f32.mrf.mxu0
        %v5896 = vadd.f32 %v5591, %v5895
        %v5897 = vpop.f32.mrf.mxu0
        %5898 = vmatprep.mubr.f32.mxu0 0.0
        %5899 = vmatmul.mubr.f32.gmra.mxu0 %v5313
        %v5900 = vpop.f32.mrf.mxu0
        %v5901 = vadd.f32 %v5596, %v5900
        %v5902 = vpop.f32.mrf.mxu0
        %5903 = vmatprep.mubr.f32.mxu0 0.0
        %5904 = vmatmul.mubr.f32.gmra.mxu0 %v5315
        %v5905 = vpop.f32.mrf.mxu0
        %v5906 = vadd.f32 %v5601, %v5905
        %v5907 = vpop.f32.mrf.mxu0
        %5908 = vmatprep.mubr.f32.mxu0 0.0
        %5909 = vmatmul.mubr.f32.gmra.mxu0 %v5317
        %v5910 = vpop.f32.mrf.mxu0
        %v5911 = vadd.f32 %v5606, %v5910
        %v5912 = vpop.f32.mrf.mxu0
        %5913 = vmatprep.mubr.f32.mxu0 0.0
        %5914 = vmatmul.mubr.f32.gmra.mxu0 %v5319
        %v5915 = vpop.f32.mrf.mxu0
        %v5916 = vadd.f32 %v5611, %v5915
        %v5917 = vpop.f32.mrf.mxu0
        %5918 = vmatprep.mubr.f32.mxu0 0.0
        %5919 = vmatmul.mubr.f32.gmra.mxu0 %v5321
        %v5920 = vpop.f32.mrf.mxu0
        %v5921 = vadd.f32 %v5616, %v5920
        %v5922 = vpop.f32.mrf.mxu0
        %5923 = vmatprep.mubr.f32.mxu0 0.0
        %5924 = vmatmul.mubr.f32.gmra.mxu0 %v5323
        %v5925 = vpop.f32.mrf.mxu0
        %v5926 = vadd.f32 %v5621, %v5925
        %v5927 = vpop.f32.mrf.mxu0
        %5928 = vmatprep.mubr.f32.mxu0 0.0
        %5929 = vmatmul.mubr.f32.gmra.mxu0 %v5326
        %v5930 = vpop.f32.mrf.mxu0
        %v5931 = vadd.f32 %v5626, %v5930
        %v5932 = vpop.f32.mrf.mxu0
        %5933 = vmatprep.mubr.f32.mxu0 0.0
        %5934 = vmatmul.mubr.f32.gmra.mxu0 %v5329
        %v5935 = vpop.f32.mrf.mxu0
        %v5936 = vadd.f32 %v5631, %v5935
        %v5937 = vpop.f32.mrf.mxu0
        %5938 = vmatprep.mubr.f32.mxu0 0.0
        %5939 = vmatmul.mubr.f32.gmra.mxu0 %v5332
        %v5940 = vpop.f32.mrf.mxu0
        %v5941 = vadd.f32 %v5636, %v5940
        %v5942 = vpop.f32.mrf.mxu0
        %5943 = vdwg.mxu0
        %v5944 = vld [vmem:[%s9] sm:$0x1]
        %v5946 = vlaneseq
        %v5947 = vshrl.u32 %v5946, 7
        %v5948 = vsub.s32 0, %v5947
        %v5949 = vrot.slane %v5944, %v5948
        %v5951 = vmul.f32 %v5706, %v5949
        %v5952 = vmul.f32 %v5711, %v5949
        %v5953 = vmul.f32 %v5716, %v5949
        %v5954 = vmul.f32 %v5721, %v5949
        %v5955 = vmul.f32 %v5726, %v5949
        %v5956 = vmul.f32 %v5731, %v5949
        %v5957 = vmul.f32 %v5736, %v5949
        %v5958 = vmul.f32 %v5741, %v5949
        %v5959 = vmul.f32 %v5746, %v5949
        %v5960 = vmul.f32 %v5751, %v5949
        %v5961 = vmul.f32 %v5756, %v5949
        %v5962 = vmul.f32 %v5761, %v5949
        %v5963 = vmul.f32 %v5766, %v5949
        %v5964 = vmul.f32 %v5771, %v5949
        %v5965 = vmul.f32 %v5776, %v5949
        %v5966 = vmul.f32 %v5781, %v5949
        %v5967 = vmul.f32 %v5786, %v5949
        %v5968 = vmul.f32 %v5791, %v5949
        %v5969 = vmul.f32 %v5796, %v5949
        %v5970 = vmul.f32 %v5801, %v5949
        %v5971 = vmul.f32 %v5806, %v5949
        %v5972 = vmul.f32 %v5811, %v5949
        %v5973 = vmul.f32 %v5816, %v5949
        %v5974 = vmul.f32 %v5821, %v5949
        %v5975 = vmul.f32 %v5826, %v5949
        %v5976 = vmul.f32 %v5831, %v5949
        %v5977 = vmul.f32 %v5836, %v5949
        %v5978 = vmul.f32 %v5841, %v5949
        %v5979 = vmul.f32 %v5846, %v5949
        %v5980 = vmul.f32 %v5851, %v5949
        %v5981 = vmul.f32 %v5856, %v5949
        %v5982 = vmul.f32 %v5861, %v5949
        %v5983 = vmul.f32 %v5866, %v5949
        %v5984 = vmul.f32 %v5871, %v5949
        %v5985 = vmul.f32 %v5876, %v5949
        %v5986 = vmul.f32 %v5881, %v5949
        %v5987 = vmul.f32 %v5886, %v5949
        %v5988 = vmul.f32 %v5891, %v5949
        %v5989 = vmul.f32 %v5896, %v5949
        %v5990 = vmul.f32 %v5901, %v5949
        %v5991 = vmul.f32 %v5906, %v5949
        %v5992 = vmul.f32 %v5911, %v5949
        %v5993 = vmul.f32 %v5916, %v5949
        %v5994 = vmul.f32 %v5921, %v5949
        %v5995 = vmul.f32 %v5926, %v5949
        %v5996 = vmul.f32 %v5931, %v5949
        %v5997 = vmul.f32 %v5936, %v5949
        %v5998 = vmul.f32 %v5941, %v5949
        %v5999 = vld [vmem:[%s10] sm:$0x1]
        %v6001 = vlaneseq
        %v6002 = vshrl.u32 %v6001, 7
        %v6003 = vsub.s32 0, %v6002
        %v6004 = vrot.slane %v5999, %v6003
        %v6006 = vadd.f32 %v5951, %v6004
        %v6007 = vadd.f32 %v5952, %v6004
        %v6008 = vadd.f32 %v5953, %v6004
        %v6009 = vadd.f32 %v5954, %v6004
        %v6010 = vadd.f32 %v5955, %v6004
        %v6011 = vadd.f32 %v5956, %v6004
        %v6012 = vadd.f32 %v5957, %v6004
        %v6013 = vadd.f32 %v5958, %v6004
        %v6014 = vadd.f32 %v5959, %v6004
        %v6015 = vadd.f32 %v5960, %v6004
        %v6016 = vadd.f32 %v5961, %v6004
        %v6017 = vadd.f32 %v5962, %v6004
        %v6018 = vadd.f32 %v5963, %v6004
        %v6019 = vadd.f32 %v5964, %v6004
        %v6020 = vadd.f32 %v5965, %v6004
        %v6021 = vadd.f32 %v5966, %v6004
        %v6022 = vadd.f32 %v5967, %v6004
        %v6023 = vadd.f32 %v5968, %v6004
        %v6024 = vadd.f32 %v5969, %v6004
        %v6025 = vadd.f32 %v5970, %v6004
        %v6026 = vadd.f32 %v5971, %v6004
        %v6027 = vadd.f32 %v5972, %v6004
        %v6028 = vadd.f32 %v5973, %v6004
        %v6029 = vadd.f32 %v5974, %v6004
        %v6030 = vadd.f32 %v5975, %v6004
        %v6031 = vadd.f32 %v5976, %v6004
        %v6032 = vadd.f32 %v5977, %v6004
        %v6033 = vadd.f32 %v5978, %v6004
        %v6034 = vadd.f32 %v5979, %v6004
        %v6035 = vadd.f32 %v5980, %v6004
        %v6036 = vadd.f32 %v5981, %v6004
        %v6037 = vadd.f32 %v5982, %v6004
        %v6038 = vadd.f32 %v5983, %v6004
        %v6039 = vadd.f32 %v5984, %v6004
        %v6040 = vadd.f32 %v5985, %v6004
        %v6041 = vadd.f32 %v5986, %v6004
        %v6042 = vadd.f32 %v5987, %v6004
        %v6043 = vadd.f32 %v5988, %v6004
        %v6044 = vadd.f32 %v5989, %v6004
        %v6045 = vadd.f32 %v5990, %v6004
        %v6046 = vadd.f32 %v5991, %v6004
        %v6047 = vadd.f32 %v5992, %v6004
        %v6048 = vadd.f32 %v5993, %v6004
        %v6049 = vadd.f32 %v5994, %v6004
        %v6050 = vadd.f32 %v5995, %v6004
        %v6051 = vadd.f32 %v5996, %v6004
        %v6052 = vadd.f32 %v5997, %v6004
        %v6053 = vadd.f32 %v5998, %v6004
        %v6054 = vsub.f32 0.0, %v6006
        %v6055 = vsub.f32 0.0, %v6007
        %v6056 = vsub.f32 0.0, %v6008
        %v6057 = vsub.f32 0.0, %v6009
        %v6058 = vsub.f32 0.0, %v6010
        %v6059 = vsub.f32 0.0, %v6011
        %v6060 = vsub.f32 0.0, %v6012
        %v6061 = vsub.f32 0.0, %v6013
        %v6062 = vsub.f32 0.0, %v6014
        %v6063 = vsub.f32 0.0, %v6015
        %v6064 = vsub.f32 0.0, %v6016
        %v6065 = vsub.f32 0.0, %v6017
        %v6066 = vsub.f32 0.0, %v6018
        %v6067 = vsub.f32 0.0, %v6019
        %v6068 = vsub.f32 0.0, %v6020
        %v6069 = vsub.f32 0.0, %v6021
        %v6070 = vsub.f32 0.0, %v6022
        %v6071 = vsub.f32 0.0, %v6023
        %v6072 = vsub.f32 0.0, %v6024
        %v6073 = vsub.f32 0.0, %v6025
        %v6074 = vsub.f32 0.0, %v6026
        %v6075 = vsub.f32 0.0, %v6027
        %v6076 = vsub.f32 0.0, %v6028
        %v6077 = vsub.f32 0.0, %v6029
        %v6078 = vsub.f32 0.0, %v6030
        %v6079 = vsub.f32 0.0, %v6031
        %v6080 = vsub.f32 0.0, %v6032
        %v6081 = vsub.f32 0.0, %v6033
        %v6082 = vsub.f32 0.0, %v6034
        %v6083 = vsub.f32 0.0, %v6035
        %v6084 = vsub.f32 0.0, %v6036
        %v6085 = vsub.f32 0.0, %v6037
        %v6086 = vsub.f32 0.0, %v6038
        %v6087 = vsub.f32 0.0, %v6039
        %v6088 = vsub.f32 0.0, %v6040
        %v6089 = vsub.f32 0.0, %v6041
        %v6090 = vsub.f32 0.0, %v6042
        %v6091 = vsub.f32 0.0, %v6043
        %v6092 = vsub.f32 0.0, %v6044
        %v6093 = vsub.f32 0.0, %v6045
        %v6094 = vsub.f32 0.0, %v6046
        %v6095 = vsub.f32 0.0, %v6047
        %v6096 = vsub.f32 0.0, %v6048
        %v6097 = vsub.f32 0.0, %v6049
        %v6098 = vsub.f32 0.0, %v6050
        %v6099 = vsub.f32 0.0, %v6051
        %v6100 = vsub.f32 0.0, %v6052
        %v6101 = vsub.f32 0.0, %v6053
        %v6102 = vmul.f32 %v6054, 1.442695
        %v6103 = vpow.pop %v6102
        %v6104 = vmul.f32 %v6055, 1.442695
        %v6105 = vpow.pop %v6104
        %v6106 = vmul.f32 %v6056, 1.442695
        %v6107 = vpow.pop %v6106
        %v6108 = vmul.f32 %v6057, 1.442695
        %v6109 = vpow.pop %v6108
        %v6110 = vmul.f32 %v6058, 1.442695
        %v6111 = vpow.pop %v6110
        %v6112 = vmul.f32 %v6059, 1.442695
        %v6113 = vpow.pop %v6112
        %v6114 = vmul.f32 %v6060, 1.442695
        %v6115 = vpow.pop %v6114
        %v6116 = vmul.f32 %v6061, 1.442695
        %v6117 = vpow.pop %v6116
        %v6118 = vmul.f32 %v6062, 1.442695
        %v6119 = vpow.pop %v6118
        %v6120 = vmul.f32 %v6063, 1.442695
        %v6121 = vpow.pop %v6120
        %v6122 = vmul.f32 %v6064, 1.442695
        %v6123 = vpow.pop %v6122
        %v6124 = vmul.f32 %v6065, 1.442695
        %v6125 = vpow.pop %v6124
        %v6126 = vmul.f32 %v6066, 1.442695
        %v6127 = vpow.pop %v6126
        %v6128 = vmul.f32 %v6067, 1.442695
        %v6129 = vpow.pop %v6128
        %v6130 = vmul.f32 %v6068, 1.442695
        %v6131 = vpow.pop %v6130
        %v6132 = vmul.f32 %v6069, 1.442695
        %v6133 = vpow.pop %v6132
        %v6134 = vmul.f32 %v6070, 1.442695
        %v6135 = vpow.pop %v6134
        %v6136 = vmul.f32 %v6071, 1.442695
        %v6137 = vpow.pop %v6136
        %v6138 = vmul.f32 %v6072, 1.442695
        %v6139 = vpow.pop %v6138
        %v6140 = vmul.f32 %v6073, 1.442695
        %v6141 = vpow.pop %v6140
        %v6142 = vmul.f32 %v6074, 1.442695
        %v6143 = vpow.pop %v6142
        %v6144 = vmul.f32 %v6075, 1.442695
        %v6145 = vpow.pop %v6144
        %v6146 = vmul.f32 %v6076, 1.442695
        %v6147 = vpow.pop %v6146
        %v6148 = vmul.f32 %v6077, 1.442695
        %v6149 = vpow.pop %v6148
        %v6150 = vmul.f32 %v6078, 1.442695
        %v6151 = vpow.pop %v6150
        %v6152 = vmul.f32 %v6079, 1.442695
        %v6153 = vpow.pop %v6152
        %v6154 = vmul.f32 %v6080, 1.442695
        %v6155 = vpow.pop %v6154
        %v6156 = vmul.f32 %v6081, 1.442695
        %v6157 = vpow.pop %v6156
        %v6158 = vmul.f32 %v6082, 1.442695
        %v6159 = vpow.pop %v6158
        %v6160 = vmul.f32 %v6083, 1.442695
        %v6161 = vpow.pop %v6160
        %v6162 = vmul.f32 %v6084, 1.442695
        %v6163 = vpow.pop %v6162
        %v6164 = vmul.f32 %v6085, 1.442695
        %v6165 = vpow.pop %v6164
        %v6166 = vmul.f32 %v6086, 1.442695
        %v6167 = vpow.pop %v6166
        %v6168 = vmul.f32 %v6087, 1.442695
        %v6169 = vpow.pop %v6168
        %v6170 = vmul.f32 %v6088, 1.442695
        %v6171 = vpow.pop %v6170
        %v6172 = vmul.f32 %v6089, 1.442695
        %v6173 = vpow.pop %v6172
        %v6174 = vmul.f32 %v6090, 1.442695
        %v6175 = vpow.pop %v6174
        %v6176 = vmul.f32 %v6091, 1.442695
        %v6177 = vpow.pop %v6176
        %v6178 = vmul.f32 %v6092, 1.442695
        %v6179 = vpow.pop %v6178
        %v6180 = vmul.f32 %v6093, 1.442695
        %v6181 = vpow.pop %v6180
        %v6182 = vmul.f32 %v6094, 1.442695
        %v6183 = vpow.pop %v6182
        %v6184 = vmul.f32 %v6095, 1.442695
        %v6185 = vpow.pop %v6184
        %v6186 = vmul.f32 %v6096, 1.442695
        %v6187 = vpow.pop %v6186
        %v6188 = vmul.f32 %v6097, 1.442695
        %v6189 = vpow.pop %v6188
        %v6190 = vmul.f32 %v6098, 1.442695
        %v6191 = vpow.pop %v6190
        %v6192 = vmul.f32 %v6099, 1.442695
        %v6193 = vpow.pop %v6192
        %v6194 = vmul.f32 %v6100, 1.442695
        %v6195 = vpow.pop %v6194
        %v6196 = vmul.f32 %v6101, 1.442695
        %v6197 = vpow.pop %v6196
        %v6198 = vadd.f32 %v6103, 1.0
        %v6199 = vadd.f32 %v6105, 1.0
        %v6200 = vadd.f32 %v6107, 1.0
        %v6201 = vadd.f32 %v6109, 1.0
        %v6202 = vadd.f32 %v6111, 1.0
        %v6203 = vadd.f32 %v6113, 1.0
        %v6204 = vadd.f32 %v6115, 1.0
        %v6205 = vadd.f32 %v6117, 1.0
        %v6206 = vadd.f32 %v6119, 1.0
        %v6207 = vadd.f32 %v6121, 1.0
        %v6208 = vadd.f32 %v6123, 1.0
        %v6209 = vadd.f32 %v6125, 1.0
        %v6210 = vadd.f32 %v6127, 1.0
        %v6211 = vadd.f32 %v6129, 1.0
        %v6212 = vadd.f32 %v6131, 1.0
        %v6213 = vadd.f32 %v6133, 1.0
        %v6214 = vadd.f32 %v6135, 1.0
        %v6215 = vadd.f32 %v6137, 1.0
        %v6216 = vadd.f32 %v6139, 1.0
        %v6217 = vadd.f32 %v6141, 1.0
        %v6218 = vadd.f32 %v6143, 1.0
        %v6219 = vadd.f32 %v6145, 1.0
        %v6220 = vadd.f32 %v6147, 1.0
        %v6221 = vadd.f32 %v6149, 1.0
        %v6222 = vadd.f32 %v6151, 1.0
        %v6223 = vadd.f32 %v6153, 1.0
        %v6224 = vadd.f32 %v6155, 1.0
        %v6225 = vadd.f32 %v6157, 1.0
        %v6226 = vadd.f32 %v6159, 1.0
        %v6227 = vadd.f32 %v6161, 1.0
        %v6228 = vadd.f32 %v6163, 1.0
        %v6229 = vadd.f32 %v6165, 1.0
        %v6230 = vadd.f32 %v6167, 1.0
        %v6231 = vadd.f32 %v6169, 1.0
        %v6232 = vadd.f32 %v6171, 1.0
        %v6233 = vadd.f32 %v6173, 1.0
        %v6234 = vadd.f32 %v6175, 1.0
        %v6235 = vadd.f32 %v6177, 1.0
        %v6236 = vadd.f32 %v6179, 1.0
        %v6237 = vadd.f32 %v6181, 1.0
        %v6238 = vadd.f32 %v6183, 1.0
        %v6239 = vadd.f32 %v6185, 1.0
        %v6240 = vadd.f32 %v6187, 1.0
        %v6241 = vadd.f32 %v6189, 1.0
        %v6242 = vadd.f32 %v6191, 1.0
        %v6243 = vadd.f32 %v6193, 1.0
        %v6244 = vadd.f32 %v6195, 1.0
        %v6245 = vadd.f32 %v6197, 1.0
        %v6246 = vrcp.pop %v6198
        %v6247 = vmul.f32 1.0, %v6246
        %v6248 = vrcp.pop %v6199
        %v6249 = vmul.f32 1.0, %v6248
        %v6250 = vrcp.pop %v6200
        %v6251 = vmul.f32 1.0, %v6250
        %v6252 = vrcp.pop %v6201
        %v6253 = vmul.f32 1.0, %v6252
        %v6254 = vrcp.pop %v6202
        %v6255 = vmul.f32 1.0, %v6254
        %v6256 = vrcp.pop %v6203
        %v6257 = vmul.f32 1.0, %v6256
        %v6258 = vrcp.pop %v6204
        %v6259 = vmul.f32 1.0, %v6258
        %v6260 = vrcp.pop %v6205
        %v6261 = vmul.f32 1.0, %v6260
        %v6262 = vrcp.pop %v6206
        %v6263 = vmul.f32 1.0, %v6262
        %v6264 = vrcp.pop %v6207
        %v6265 = vmul.f32 1.0, %v6264
        %v6266 = vrcp.pop %v6208
        %v6267 = vmul.f32 1.0, %v6266
        %v6268 = vrcp.pop %v6209
        %v6269 = vmul.f32 1.0, %v6268
        %v6270 = vrcp.pop %v6210
        %v6271 = vmul.f32 1.0, %v6270
        %v6272 = vrcp.pop %v6211
        %v6273 = vmul.f32 1.0, %v6272
        %v6274 = vrcp.pop %v6212
        %v6275 = vmul.f32 1.0, %v6274
        %v6276 = vrcp.pop %v6213
        %v6277 = vmul.f32 1.0, %v6276
        %v6278 = vrcp.pop %v6214
        %v6279 = vmul.f32 1.0, %v6278
        %v6280 = vrcp.pop %v6215
        %v6281 = vmul.f32 1.0, %v6280
        %v6282 = vrcp.pop %v6216
        %v6283 = vmul.f32 1.0, %v6282
        %v6284 = vrcp.pop %v6217
        %v6285 = vmul.f32 1.0, %v6284
        %v6286 = vrcp.pop %v6218
        %v6287 = vmul.f32 1.0, %v6286
        %v6288 = vrcp.pop %v6219
        %v6289 = vmul.f32 1.0, %v6288
        %v6290 = vrcp.pop %v6220
        %v6291 = vmul.f32 1.0, %v6290
        %v6292 = vrcp.pop %v6221
        %v6293 = vmul.f32 1.0, %v6292
        %v6294 = vrcp.pop %v6222
        %v6295 = vmul.f32 1.0, %v6294
        %v6296 = vrcp.pop %v6223
        %v6297 = vmul.f32 1.0, %v6296
        %v6298 = vrcp.pop %v6224
        %v6299 = vmul.f32 1.0, %v6298
        %v6300 = vrcp.pop %v6225
        %v6301 = vmul.f32 1.0, %v6300
        %v6302 = vrcp.pop %v6226
        %v6303 = vmul.f32 1.0, %v6302
        %v6304 = vrcp.pop %v6227
        %v6305 = vmul.f32 1.0, %v6304
        %v6306 = vrcp.pop %v6228
        %v6307 = vmul.f32 1.0, %v6306
        %v6308 = vrcp.pop %v6229
        %v6309 = vmul.f32 1.0, %v6308
        %v6310 = vrcp.pop %v6230
        %v6311 = vmul.f32 1.0, %v6310
        %v6312 = vrcp.pop %v6231
        %v6313 = vmul.f32 1.0, %v6312
        %v6314 = vrcp.pop %v6232
        %v6315 = vmul.f32 1.0, %v6314
        %v6316 = vrcp.pop %v6233
        %v6317 = vmul.f32 1.0, %v6316
        %v6318 = vrcp.pop %v6234
        %v6319 = vmul.f32 1.0, %v6318
        %v6320 = vrcp.pop %v6235
        %v6321 = vmul.f32 1.0, %v6320
        %v6322 = vrcp.pop %v6236
        %v6323 = vmul.f32 1.0, %v6322
        %v6324 = vrcp.pop %v6237
        %v6325 = vmul.f32 1.0, %v6324
        %v6326 = vrcp.pop %v6238
        %v6327 = vmul.f32 1.0, %v6326
        %v6328 = vrcp.pop %v6239
        %v6329 = vmul.f32 1.0, %v6328
        %v6330 = vrcp.pop %v6240
        %v6331 = vmul.f32 1.0, %v6330
        %v6332 = vrcp.pop %v6241
        %v6333 = vmul.f32 1.0, %v6332
        %v6334 = vrcp.pop %v6242
        %v6335 = vmul.f32 1.0, %v6334
        %v6336 = vrcp.pop %v6243
        %v6337 = vmul.f32 1.0, %v6336
        %v6338 = vrcp.pop %v6244
        %v6339 = vmul.f32 1.0, %v6338
        %v6340 = vrcp.pop %v6245
        %v6341 = vmul.f32 1.0, %v6340
        %v6342 = vmul.f32 %v6006, %v6247
        %v6343 = vmul.f32 %v6007, %v6249
        %v6344 = vmul.f32 %v6008, %v6251
        %v6345 = vmul.f32 %v6009, %v6253
        %v6346 = vmul.f32 %v6010, %v6255
        %v6347 = vmul.f32 %v6011, %v6257
        %v6348 = vmul.f32 %v6012, %v6259
        %v6349 = vmul.f32 %v6013, %v6261
        %v6350 = vmul.f32 %v6014, %v6263
        %v6351 = vmul.f32 %v6015, %v6265
        %v6352 = vmul.f32 %v6016, %v6267
        %v6353 = vmul.f32 %v6017, %v6269
        %v6354 = vmul.f32 %v6018, %v6271
        %v6355 = vmul.f32 %v6019, %v6273
        %v6356 = vmul.f32 %v6020, %v6275
        %v6357 = vmul.f32 %v6021, %v6277
        %v6358 = vmul.f32 %v6022, %v6279
        %v6359 = vmul.f32 %v6023, %v6281
        %v6360 = vmul.f32 %v6024, %v6283
        %v6361 = vmul.f32 %v6025, %v6285
        %v6362 = vmul.f32 %v6026, %v6287
        %v6363 = vmul.f32 %v6027, %v6289
        %v6364 = vmul.f32 %v6028, %v6291
        %v6365 = vmul.f32 %v6029, %v6293
        %v6366 = vmul.f32 %v6030, %v6295
        %v6367 = vmul.f32 %v6031, %v6297
        %v6368 = vmul.f32 %v6032, %v6299
        %v6369 = vmul.f32 %v6033, %v6301
        %v6370 = vmul.f32 %v6034, %v6303
        %v6371 = vmul.f32 %v6035, %v6305
        %v6372 = vmul.f32 %v6036, %v6307
        %v6373 = vmul.f32 %v6037, %v6309
        %v6374 = vmul.f32 %v6038, %v6311
        %v6375 = vmul.f32 %v6039, %v6313
        %v6376 = vmul.f32 %v6040, %v6315
        %v6377 = vmul.f32 %v6041, %v6317
        %v6378 = vmul.f32 %v6042, %v6319
        %v6379 = vmul.f32 %v6043, %v6321
        %v6380 = vmul.f32 %v6044, %v6323
        %v6381 = vmul.f32 %v6045, %v6325
        %v6382 = vmul.f32 %v6046, %v6327
        %v6383 = vmul.f32 %v6047, %v6329
        %v6384 = vmul.f32 %v6048, %v6331
        %v6385 = vmul.f32 %v6049, %v6333
        %v6386 = vmul.f32 %v6050, %v6335
        %v6387 = vmul.f32 %v6051, %v6337
        %v6388 = vmul.f32 %v6052, %v6339
        %v6389 = vmul.f32 %v6053, %v6341
        %v6390 = vld [vmem:[%s465 + $0x19] sm:$0xff]
        %v6391 = vld [vmem:[%s465 + $0x21] sm:$0xff]
        %v6392 = vld [vmem:[%s465 + $0x29] sm:$0xff]
        %v6393 = vld [vmem:[%s465 + $0x31] sm:$0xff]
        %v6394 = vld [vmem:[%s465 + $0x39] sm:$0xff]
        %v6395 = vld [vmem:[%s465 + $0x41] sm:$0xff]
        %v6396 = vld [vmem:[%s465 + $0x49] sm:$0xff]
        %v6397 = vld [vmem:[%s465 + $0x51] sm:$0xff]
        %v6398 = vld [vmem:[%s465 + $0x59] sm:$0xff]
        %v6399 = vld [vmem:[%s465 + $0x61] sm:$0xff]
        %v6400 = vld [vmem:[%s465 + $0x69] sm:$0xff]
        %v6401 = vld [vmem:[%s465 + $0x71] sm:$0xff]
        %v6402 = vld [vmem:[%s465 + $0x79] sm:$0xff]
        %v6403 = vld [vmem:[%s465 + $0x81] sm:$0xff]
        %v6404 = vld [vmem:[%s465 + $0x89] sm:$0xff]
        %v6405 = vld [vmem:[%s465 + $0x91] sm:$0xff]
        %v6406 = vld [vmem:[%s465 + $0x99] sm:$0xff]
        %v6407 = vld [vmem:[%s465 + $0xa1] sm:$0xff]
        %v6408 = vld [vmem:[%s465 + $0xa9] sm:$0xff]
        %v6409 = vld [vmem:[%s465 + $0xb1] sm:$0xff]
        %v6410 = vld [vmem:[%s465 + $0xb9] sm:$0xff]
        %v6411 = vld [vmem:[%s465 + $0xc1] sm:$0xff]
        %v6412 = vld [vmem:[%s465 + $0xc9] sm:$0xff]
        %v6413 = vld [vmem:[%s465 + $0xd1] sm:$0xff]
        %v6414 = vld [vmem:[%s465 + $0xd9] sm:$0xff]
        %v6415 = vld [vmem:[%s465 + $0xe1] sm:$0xff]
        %v6416 = vld [vmem:[%s465 + $0xe9] sm:$0xff]
        %v6417 = vld [vmem:[%s465 + $0xf1] sm:$0xff]
        %v6418 = vld [vmem:[%s465 + $0xf9] sm:$0xff]
        %v6419 = vld [vmem:[%s465 + $0x101] sm:$0xff]
        %v6420 = vld [vmem:[%s465 + $0x109] sm:$0xff]
        %v6421 = vld [vmem:[%s465 + $0x111] sm:$0xff]
        %v6422 = vld [vmem:[%s465 + $0x119] sm:$0xff]
        %v6423 = vld [vmem:[%s465 + $0x121] sm:$0xff]
        %v6424 = vld [vmem:[%s465 + $0x129] sm:$0xff]
        %v6425 = vld [vmem:[%s465 + $0x131] sm:$0xff]
        %v6426 = vld [vmem:[%s465 + $0x139] sm:$0xff]
        %v6427 = vld [vmem:[%s465 + $0x141] sm:$0xff]
        %v6428 = vld [vmem:[%s465 + $0x149] sm:$0xff]
        %v6429 = vld [vmem:[%s465 + $0x151] sm:$0xff]
        %v6430 = vld [vmem:[%s465 + $0x159] sm:$0xff]
        %v6431 = vld [vmem:[%s465 + $0x161] sm:$0xff]
        %v6432 = vld [vmem:[%s465 + $0x169] sm:$0xff]
        %v6433 = vld [vmem:[%s465 + $0x171] sm:$0xff]
        %v6434 = vld [vmem:[%s465 + $0x179] sm:$0xff]
        %v6435 = vld [vmem:[%s465 + $0x181] sm:$0xff]
        %v6436 = vld [vmem:[%s465 + $0x189] sm:$0xff]
        %v6437 = vld [vmem:[%s465 + $0x191] sm:$0xff]
        %v6438 = vld [vmem:[%s11] sm:$0xf]
        %v6440 = vsel %vm1939, %v6390, 0
        %v6443 = vsel %vm1939, %v6391, 0
        %v6446 = vsel %vm1939, %v6392, 0
        %v6449 = vsel %vm1939, %v6393, 0
        %v6452 = vsel %vm1939, %v6394, 0
        %v6455 = vsel %vm1939, %v6395, 0
        %v6458 = vsel %vm1939, %v6396, 0
        %v6461 = vsel %vm1939, %v6397, 0
        %v6464 = vsel %vm1939, %v6398, 0
        %v6467 = vsel %vm1939, %v6399, 0
        %v6470 = vsel %vm1939, %v6400, 0
        %v6473 = vsel %vm1939, %v6401, 0
        %v6476 = vsel %vm1939, %v6402, 0
        %v6479 = vsel %vm1939, %v6403, 0
        %v6482 = vsel %vm1939, %v6404, 0
        %v6485 = vsel %vm1939, %v6405, 0
        %v6488 = vsel %vm1939, %v6406, 0
        %v6491 = vsel %vm1939, %v6407, 0
        %v6494 = vsel %vm1939, %v6408, 0
        %v6497 = vsel %vm1939, %v6409, 0
        %v6500 = vsel %vm1939, %v6410, 0
        %v6503 = vsel %vm1939, %v6411, 0
        %v6506 = vsel %vm1939, %v6412, 0
        %v6509 = vsel %vm1939, %v6413, 0
        %v6512 = vsel %vm1939, %v6414, 0
        %v6515 = vsel %vm1939, %v6415, 0
        %v6518 = vsel %vm1939, %v6416, 0
        %v6521 = vsel %vm1939, %v6417, 0
        %v6524 = vsel %vm1939, %v6418, 0
        %v6527 = vsel %vm1939, %v6419, 0
        %v6530 = vsel %vm1939, %v6420, 0
        %v6533 = vsel %vm1939, %v6421, 0
        %v6536 = vsel %vm1939, %v6422, 0
        %v6539 = vsel %vm1939, %v6423, 0
        %v6542 = vsel %vm1939, %v6424, 0
        %v6545 = vsel %vm1939, %v6425, 0
        %v6548 = vsel %vm1939, %v6426, 0
        %v6551 = vsel %vm1939, %v6427, 0
        %v6554 = vsel %vm1939, %v6428, 0
        %v6557 = vsel %vm1939, %v6429, 0
        %v6560 = vsel %vm1939, %v6430, 0
        %v6563 = vsel %vm1939, %v6431, 0
        %v6566 = vsel %vm1939, %v6432, 0
        %v6569 = vsel %vm1939, %v6433, 0
        %v6572 = vsel %vm1939, %v6434, 0
        %v6575 = vsel %vm1939, %v6435, 0
        %v6578 = vsel %vm1939, %v6436, 0
        %v6581 = vsel %vm1939, %v6437, 0
        %v6584 = vsel %vm2488, %v6438, 0
        %6586 = vmatprep.subr.mxu0 0.0
        %6587 = vmatpush1.msra.mxu0 0.0
        %6588 = vmatprep.subr.mxu0 0.0
        %6589 = vmatpush1.msra.mxu0 0.0
        %6590 = vmatprep.subr.mxu0 0.0
        %6591 = vmatpush1.msra.mxu0 0.0
        %6592 = vmatprep.subr.mxu0 0.0
        %6593 = vmatpush1.msra.mxu0 0.0
        %6594 = vmatprep.subr.mxu0 0.0
        %6595 = vmatpush1.msra.mxu0 0.0
        %6596 = vmatprep.subr.mxu0 0.0
        %6597 = vmatpush1.msra.mxu0 0.0
        %6598 = vmatprep.subr.mxu0 0.0
        %6599 = vmatpush1.msra.mxu0 0.0
        %6600 = vmatprep.subr.mxu0 0.0
        %6601 = vmatpush1.msra.mxu0 0.0
        %6602 = vmatprep.subr.mxu0 0.0
        %6603 = vmatpush1.msra.mxu0 0.0
        %6604 = vmatprep.subr.mxu0 0.0
        %6605 = vmatpush1.msra.mxu0 0.0
        %6606 = vmatprep.subr.mxu0 0.0
        %6607 = vmatpush1.msra.mxu0 0.0
        %6608 = vmatprep.subr.mxu0 0.0
        %6609 = vmatpush1.msra.mxu0 0.0
        %6610 = vmatprep.subr.mxu0 0.0
        %6611 = vmatpush1.msra.mxu0 0.0
        %6612 = vmatprep.subr.mxu0 0.0
        %6613 = vmatpush1.msra.mxu0 0.0
        %6614 = vmatprep.subr.mxu0 0.0
        %6615 = vmatpush1.msra.mxu0 0.0
        %6616 = vmatprep.subr.mxu0 0.0
        %6617 = vmatpush1.msra.mxu0 %v6584
        %6618 = vmatprep.subr.mxu0 0.0
        %6619 = vmatpush2.msra.mxu0 0.0
        %6620 = vmatprep.subr.mxu0 0.0
        %6621 = vmatpush2.msra.mxu0 0.0
        %6622 = vmatprep.subr.mxu0 0.0
        %6623 = vmatpush2.msra.mxu0 0.0
        %6624 = vmatprep.subr.mxu0 0.0
        %6625 = vmatpush2.msra.mxu0 0.0
        %6626 = vmatprep.subr.mxu0 0.0
        %6627 = vmatpush2.msra.mxu0 0.0
        %6628 = vmatprep.subr.mxu0 0.0
        %6629 = vmatpush2.msra.mxu0 0.0
        %6630 = vmatprep.subr.mxu0 0.0
        %6631 = vmatpush2.msra.mxu0 0.0
        %6632 = vmatprep.subr.mxu0 0.0
        %6633 = vmatpush2.msra.mxu0 0.0
        %6634 = vmatprep.subr.mxu0 0.0
        %6635 = vmatpush2.msra.mxu0 0.0
        %6636 = vmatprep.subr.mxu0 0.0
        %6637 = vmatpush2.msra.mxu0 0.0
        %6638 = vmatprep.subr.mxu0 0.0
        %6639 = vmatpush2.msra.mxu0 0.0
        %6640 = vmatprep.subr.mxu0 0.0
        %6641 = vmatpush2.msra.mxu0 0.0
        %6642 = vmatprep.subr.mxu0 0.0
        %6643 = vmatpush2.msra.mxu0 0.0
        %6644 = vmatprep.subr.mxu0 0.0
        %6645 = vmatpush2.msra.mxu0 0.0
        %6646 = vmatprep.subr.mxu0 0.0
        %6647 = vmatpush2.msra.mxu0 0.0
        %6648 = vmatprep.subr.mxu0 0.0
        %6649 = vmatpush2.msra.mxu0 0.0
        %6650 = vmatprep.mubr.f32.mxu0 0.0
        %6651 = vmatmul.mubr.f32.gmra.mxu0 %v6440
        %v6652 = vpop.f32.mrf.mxu0
        %v6653 = vadd.f32 0.0, %v6652
        %v6654 = vpop.f32.mrf.mxu0
        %6655 = vmatprep.mubr.f32.mxu0 0.0
        %6656 = vmatmul.mubr.f32.gmra.mxu0 %v6443
        %v6657 = vpop.f32.mrf.mxu0
        %v6658 = vadd.f32 0.0, %v6657
        %v6659 = vpop.f32.mrf.mxu0
        %6660 = vmatprep.mubr.f32.mxu0 0.0
        %6661 = vmatmul.mubr.f32.gmra.mxu0 %v6446
        %v6662 = vpop.f32.mrf.mxu0
        %v6663 = vadd.f32 0.0, %v6662
        %v6664 = vpop.f32.mrf.mxu0
        %6665 = vmatprep.mubr.f32.mxu0 0.0
        %6666 = vmatmul.mubr.f32.gmra.mxu0 %v6449
        %v6667 = vpop.f32.mrf.mxu0
        %v6668 = vadd.f32 0.0, %v6667
        %v6669 = vpop.f32.mrf.mxu0
        %6670 = vmatprep.mubr.f32.mxu0 0.0
        %6671 = vmatmul.mubr.f32.gmra.mxu0 %v6452
        %v6672 = vpop.f32.mrf.mxu0
        %v6673 = vadd.f32 0.0, %v6672
        %v6674 = vpop.f32.mrf.mxu0
        %6675 = vmatprep.mubr.f32.mxu0 0.0
        %6676 = vmatmul.mubr.f32.gmra.mxu0 %v6455
        %v6677 = vpop.f32.mrf.mxu0
        %v6678 = vadd.f32 0.0, %v6677
        %v6679 = vpop.f32.mrf.mxu0
        %6680 = vmatprep.mubr.f32.mxu0 0.0
        %6681 = vmatmul.mubr.f32.gmra.mxu0 %v6458
        %v6682 = vpop.f32.mrf.mxu0
        %v6683 = vadd.f32 0.0, %v6682
        %v6684 = vpop.f32.mrf.mxu0
        %6685 = vmatprep.mubr.f32.mxu0 0.0
        %6686 = vmatmul.mubr.f32.gmra.mxu0 %v6461
        %v6687 = vpop.f32.mrf.mxu0
        %v6688 = vadd.f32 0.0, %v6687
        %v6689 = vpop.f32.mrf.mxu0
        %6690 = vmatprep.mubr.f32.mxu0 0.0
        %6691 = vmatmul.mubr.f32.gmra.mxu0 %v6464
        %v6692 = vpop.f32.mrf.mxu0
        %v6693 = vadd.f32 0.0, %v6692
        %v6694 = vpop.f32.mrf.mxu0
        %6695 = vmatprep.mubr.f32.mxu0 0.0
        %6696 = vmatmul.mubr.f32.gmra.mxu0 %v6467
        %v6697 = vpop.f32.mrf.mxu0
        %v6698 = vadd.f32 0.0, %v6697
        %v6699 = vpop.f32.mrf.mxu0
        %6700 = vmatprep.mubr.f32.mxu0 0.0
        %6701 = vmatmul.mubr.f32.gmra.mxu0 %v6470
        %v6702 = vpop.f32.mrf.mxu0
        %v6703 = vadd.f32 0.0, %v6702
        %v6704 = vpop.f32.mrf.mxu0
        %6705 = vmatprep.mubr.f32.mxu0 0.0
        %6706 = vmatmul.mubr.f32.gmra.mxu0 %v6473
        %v6707 = vpop.f32.mrf.mxu0
        %v6708 = vadd.f32 0.0, %v6707
        %v6709 = vpop.f32.mrf.mxu0
        %6710 = vmatprep.mubr.f32.mxu0 0.0
        %6711 = vmatmul.mubr.f32.gmra.mxu0 %v6476
        %v6712 = vpop.f32.mrf.mxu0
        %v6713 = vadd.f32 0.0, %v6712
        %v6714 = vpop.f32.mrf.mxu0
        %6715 = vmatprep.mubr.f32.mxu0 0.0
        %6716 = vmatmul.mubr.f32.gmra.mxu0 %v6479
        %v6717 = vpop.f32.mrf.mxu0
        %v6718 = vadd.f32 0.0, %v6717
        %v6719 = vpop.f32.mrf.mxu0
        %6720 = vmatprep.mubr.f32.mxu0 0.0
        %6721 = vmatmul.mubr.f32.gmra.mxu0 %v6482
        %v6722 = vpop.f32.mrf.mxu0
        %v6723 = vadd.f32 0.0, %v6722
        %v6724 = vpop.f32.mrf.mxu0
        %6725 = vmatprep.mubr.f32.mxu0 0.0
        %6726 = vmatmul.mubr.f32.gmra.mxu0 %v6485
        %v6727 = vpop.f32.mrf.mxu0
        %v6728 = vadd.f32 0.0, %v6727
        %v6729 = vpop.f32.mrf.mxu0
        %6730 = vmatprep.mubr.f32.mxu0 0.0
        %6731 = vmatmul.mubr.f32.gmra.mxu0 %v6488
        %v6732 = vpop.f32.mrf.mxu0
        %v6733 = vadd.f32 0.0, %v6732
        %v6734 = vpop.f32.mrf.mxu0
        %6735 = vmatprep.mubr.f32.mxu0 0.0
        %6736 = vmatmul.mubr.f32.gmra.mxu0 %v6491
        %v6737 = vpop.f32.mrf.mxu0
        %v6738 = vadd.f32 0.0, %v6737
        %v6739 = vpop.f32.mrf.mxu0
        %6740 = vmatprep.mubr.f32.mxu0 0.0
        %6741 = vmatmul.mubr.f32.gmra.mxu0 %v6494
        %v6742 = vpop.f32.mrf.mxu0
        %v6743 = vadd.f32 0.0, %v6742
        %v6744 = vpop.f32.mrf.mxu0
        %6745 = vmatprep.mubr.f32.mxu0 0.0
        %6746 = vmatmul.mubr.f32.gmra.mxu0 %v6497
        %v6747 = vpop.f32.mrf.mxu0
        %v6748 = vadd.f32 0.0, %v6747
        %v6749 = vpop.f32.mrf.mxu0
        %6750 = vmatprep.mubr.f32.mxu0 0.0
        %6751 = vmatmul.mubr.f32.gmra.mxu0 %v6500
        %v6752 = vpop.f32.mrf.mxu0
        %v6753 = vadd.f32 0.0, %v6752
        %v6754 = vpop.f32.mrf.mxu0
        %6755 = vmatprep.mubr.f32.mxu0 0.0
        %6756 = vmatmul.mubr.f32.gmra.mxu0 %v6503
        %v6757 = vpop.f32.mrf.mxu0
        %v6758 = vadd.f32 0.0, %v6757
        %v6759 = vpop.f32.mrf.mxu0
        %6760 = vmatprep.mubr.f32.mxu0 0.0
        %6761 = vmatmul.mubr.f32.gmra.mxu0 %v6506
        %v6762 = vpop.f32.mrf.mxu0
        %v6763 = vadd.f32 0.0, %v6762
        %v6764 = vpop.f32.mrf.mxu0
        %6765 = vmatprep.mubr.f32.mxu0 0.0
        %6766 = vmatmul.mubr.f32.gmra.mxu0 %v6509
        %v6767 = vpop.f32.mrf.mxu0
        %v6768 = vadd.f32 0.0, %v6767
        %v6769 = vpop.f32.mrf.mxu0
        %6770 = vmatprep.mubr.f32.mxu0 0.0
        %6771 = vmatmul.mubr.f32.gmra.mxu0 %v6512
        %v6772 = vpop.f32.mrf.mxu0
        %v6773 = vadd.f32 0.0, %v6772
        %v6774 = vpop.f32.mrf.mxu0
        %6775 = vmatprep.mubr.f32.mxu0 0.0
        %6776 = vmatmul.mubr.f32.gmra.mxu0 %v6515
        %v6777 = vpop.f32.mrf.mxu0
        %v6778 = vadd.f32 0.0, %v6777
        %v6779 = vpop.f32.mrf.mxu0
        %6780 = vmatprep.mubr.f32.mxu0 0.0
        %6781 = vmatmul.mubr.f32.gmra.mxu0 %v6518
        %v6782 = vpop.f32.mrf.mxu0
        %v6783 = vadd.f32 0.0, %v6782
        %v6784 = vpop.f32.mrf.mxu0
        %6785 = vmatprep.mubr.f32.mxu0 0.0
        %6786 = vmatmul.mubr.f32.gmra.mxu0 %v6521
        %v6787 = vpop.f32.mrf.mxu0
        %v6788 = vadd.f32 0.0, %v6787
        %v6789 = vpop.f32.mrf.mxu0
        %6790 = vmatprep.mubr.f32.mxu0 0.0
        %6791 = vmatmul.mubr.f32.gmra.mxu0 %v6524
        %v6792 = vpop.f32.mrf.mxu0
        %v6793 = vadd.f32 0.0, %v6792
        %v6794 = vpop.f32.mrf.mxu0
        %6795 = vmatprep.mubr.f32.mxu0 0.0
        %6796 = vmatmul.mubr.f32.gmra.mxu0 %v6527
        %v6797 = vpop.f32.mrf.mxu0
        %v6798 = vadd.f32 0.0, %v6797
        %v6799 = vpop.f32.mrf.mxu0
        %6800 = vmatprep.mubr.f32.mxu0 0.0
        %6801 = vmatmul.mubr.f32.gmra.mxu0 %v6530
        %v6802 = vpop.f32.mrf.mxu0
        %v6803 = vadd.f32 0.0, %v6802
        %v6804 = vpop.f32.mrf.mxu0
        %6805 = vmatprep.mubr.f32.mxu0 0.0
        %6806 = vmatmul.mubr.f32.gmra.mxu0 %v6533
        %v6807 = vpop.f32.mrf.mxu0
        %v6808 = vadd.f32 0.0, %v6807
        %v6809 = vpop.f32.mrf.mxu0
        %6810 = vmatprep.mubr.f32.mxu0 0.0
        %6811 = vmatmul.mubr.f32.gmra.mxu0 %v6536
        %v6812 = vpop.f32.mrf.mxu0
        %v6813 = vadd.f32 0.0, %v6812
        %v6814 = vpop.f32.mrf.mxu0
        %6815 = vmatprep.mubr.f32.mxu0 0.0
        %6816 = vmatmul.mubr.f32.gmra.mxu0 %v6539
        %v6817 = vpop.f32.mrf.mxu0
        %v6818 = vadd.f32 0.0, %v6817
        %v6819 = vpop.f32.mrf.mxu0
        %6820 = vmatprep.mubr.f32.mxu0 0.0
        %6821 = vmatmul.mubr.f32.gmra.mxu0 %v6542
        %v6822 = vpop.f32.mrf.mxu0
        %v6823 = vadd.f32 0.0, %v6822
        %v6824 = vpop.f32.mrf.mxu0
        %6825 = vmatprep.mubr.f32.mxu0 0.0
        %6826 = vmatmul.mubr.f32.gmra.mxu0 %v6545
        %v6827 = vpop.f32.mrf.mxu0
        %v6828 = vadd.f32 0.0, %v6827
        %v6829 = vpop.f32.mrf.mxu0
        %6830 = vmatprep.mubr.f32.mxu0 0.0
        %6831 = vmatmul.mubr.f32.gmra.mxu0 %v6548
        %v6832 = vpop.f32.mrf.mxu0
        %v6833 = vadd.f32 0.0, %v6832
        %v6834 = vpop.f32.mrf.mxu0
        %6835 = vmatprep.mubr.f32.mxu0 0.0
        %6836 = vmatmul.mubr.f32.gmra.mxu0 %v6551
        %v6837 = vpop.f32.mrf.mxu0
        %v6838 = vadd.f32 0.0, %v6837
        %v6839 = vpop.f32.mrf.mxu0
        %6840 = vmatprep.mubr.f32.mxu0 0.0
        %6841 = vmatmul.mubr.f32.gmra.mxu0 %v6554
        %v6842 = vpop.f32.mrf.mxu0
        %v6843 = vadd.f32 0.0, %v6842
        %v6844 = vpop.f32.mrf.mxu0
        %6845 = vmatprep.mubr.f32.mxu0 0.0
        %6846 = vmatmul.mubr.f32.gmra.mxu0 %v6557
        %v6847 = vpop.f32.mrf.mxu0
        %v6848 = vadd.f32 0.0, %v6847
        %v6849 = vpop.f32.mrf.mxu0
        %6850 = vmatprep.mubr.f32.mxu0 0.0
        %6851 = vmatmul.mubr.f32.gmra.mxu0 %v6560
        %v6852 = vpop.f32.mrf.mxu0
        %v6853 = vadd.f32 0.0, %v6852
        %v6854 = vpop.f32.mrf.mxu0
        %6855 = vmatprep.mubr.f32.mxu0 0.0
        %6856 = vmatmul.mubr.f32.gmra.mxu0 %v6563
        %v6857 = vpop.f32.mrf.mxu0
        %v6858 = vadd.f32 0.0, %v6857
        %v6859 = vpop.f32.mrf.mxu0
        %6860 = vmatprep.mubr.f32.mxu0 0.0
        %6861 = vmatmul.mubr.f32.gmra.mxu0 %v6566
        %v6862 = vpop.f32.mrf.mxu0
        %v6863 = vadd.f32 0.0, %v6862
        %v6864 = vpop.f32.mrf.mxu0
        %6865 = vmatprep.mubr.f32.mxu0 0.0
        %6866 = vmatmul.mubr.f32.gmra.mxu0 %v6569
        %v6867 = vpop.f32.mrf.mxu0
        %v6868 = vadd.f32 0.0, %v6867
        %v6869 = vpop.f32.mrf.mxu0
        %6870 = vmatprep.mubr.f32.mxu0 0.0
        %6871 = vmatmul.mubr.f32.gmra.mxu0 %v6572
        %v6872 = vpop.f32.mrf.mxu0
        %v6873 = vadd.f32 0.0, %v6872
        %v6874 = vpop.f32.mrf.mxu0
        %6875 = vmatprep.mubr.f32.mxu0 0.0
        %6876 = vmatmul.mubr.f32.gmra.mxu0 %v6575
        %v6877 = vpop.f32.mrf.mxu0
        %v6878 = vadd.f32 0.0, %v6877
        %v6879 = vpop.f32.mrf.mxu0
        %6880 = vmatprep.mubr.f32.mxu0 0.0
        %6881 = vmatmul.mubr.f32.gmra.mxu0 %v6578
        %v6882 = vpop.f32.mrf.mxu0
        %v6883 = vadd.f32 0.0, %v6882
        %v6884 = vpop.f32.mrf.mxu0
        %6885 = vmatprep.mubr.f32.mxu0 0.0
        %6886 = vmatmul.mubr.f32.gmra.mxu0 %v6581
        %v6887 = vpop.f32.mrf.mxu0
        %v6888 = vadd.f32 0.0, %v6887
        %v6889 = vpop.f32.mrf.mxu0
        %6890 = vdwg.mxu0
        %v6891 = vadd.f32 %v6342, %v6653
        %v6892 = vadd.f32 %v6343, %v6658
        %v6893 = vadd.f32 %v6344, %v6663
        %v6894 = vadd.f32 %v6345, %v6668
        %v6895 = vadd.f32 %v6346, %v6673
        %v6896 = vadd.f32 %v6347, %v6678
        %v6897 = vadd.f32 %v6348, %v6683
        %v6898 = vadd.f32 %v6349, %v6688
        %v6899 = vadd.f32 %v6350, %v6693
        %v6900 = vadd.f32 %v6351, %v6698
        %v6901 = vadd.f32 %v6352, %v6703
        %v6902 = vadd.f32 %v6353, %v6708
        %v6903 = vadd.f32 %v6354, %v6713
        %v6904 = vadd.f32 %v6355, %v6718
        %v6905 = vadd.f32 %v6356, %v6723
        %v6906 = vadd.f32 %v6357, %v6728
        %v6907 = vadd.f32 %v6358, %v6733
        %v6908 = vadd.f32 %v6359, %v6738
        %v6909 = vadd.f32 %v6360, %v6743
        %v6910 = vadd.f32 %v6361, %v6748
        %v6911 = vadd.f32 %v6362, %v6753
        %v6912 = vadd.f32 %v6363, %v6758
        %v6913 = vadd.f32 %v6364, %v6763
        %v6914 = vadd.f32 %v6365, %v6768
        %v6915 = vadd.f32 %v6366, %v6773
        %v6916 = vadd.f32 %v6367, %v6778
        %v6917 = vadd.f32 %v6368, %v6783
        %v6918 = vadd.f32 %v6369, %v6788
        %v6919 = vadd.f32 %v6370, %v6793
        %v6920 = vadd.f32 %v6371, %v6798
        %v6921 = vadd.f32 %v6372, %v6803
        %v6922 = vadd.f32 %v6373, %v6808
        %v6923 = vadd.f32 %v6374, %v6813
        %v6924 = vadd.f32 %v6375, %v6818
        %v6925 = vadd.f32 %v6376, %v6823
        %v6926 = vadd.f32 %v6377, %v6828
        %v6927 = vadd.f32 %v6378, %v6833
        %v6928 = vadd.f32 %v6379, %v6838
        %v6929 = vadd.f32 %v6380, %v6843
        %v6930 = vadd.f32 %v6381, %v6848
        %v6931 = vadd.f32 %v6382, %v6853
        %v6932 = vadd.f32 %v6383, %v6858
        %v6933 = vadd.f32 %v6384, %v6863
        %v6934 = vadd.f32 %v6385, %v6868
        %v6935 = vadd.f32 %v6386, %v6873
        %v6936 = vadd.f32 %v6387, %v6878
        %v6937 = vadd.f32 %v6388, %v6883
        %v6938 = vadd.f32 %v6389, %v6888
        %v6939 = vld [vmem:[%s12] sm:$0xff]
        %v6940 = vld [vmem:[%s12 + $0x8] sm:$0xff]
        %v6941 = vld [vmem:[%s12 + $0x10] sm:$0xff]
        %v6942 = vld [vmem:[%s12 + $0x18] sm:$0xff]
        %v6943 = vld [vmem:[%s12 + $0x20] sm:$0xff]
        %v6944 = vld [vmem:[%s12 + $0x28] sm:$0xff]
        %v6945 = vld [vmem:[%s12 + $0x30] sm:$0xff]
        %v6946 = vld [vmem:[%s12 + $0x38] sm:$0xff]
        %v6947 = vld [vmem:[%s12 + $0x40] sm:$0xff]
        %v6948 = vld [vmem:[%s12 + $0x48] sm:$0xff]
        %v6949 = vld [vmem:[%s12 + $0x50] sm:$0xff]
        %v6950 = vld [vmem:[%s12 + $0x58] sm:$0xff]
        %v6951 = vld [vmem:[%s12 + $0x60] sm:$0xff]
        %v6952 = vld [vmem:[%s12 + $0x68] sm:$0xff]
        %v6953 = vld [vmem:[%s12 + $0x70] sm:$0xff]
        %v6954 = vld [vmem:[%s12 + $0x78] sm:$0xff]
        %v6955 = vld [vmem:[%s12 + $0x80] sm:$0xff]
        %v6956 = vld [vmem:[%s12 + $0x88] sm:$0xff]
        %v6957 = vld [vmem:[%s12 + $0x90] sm:$0xff]
        %v6958 = vld [vmem:[%s12 + $0x98] sm:$0xff]
        %v6959 = vld [vmem:[%s12 + $0xa0] sm:$0xff]
        %v6960 = vld [vmem:[%s12 + $0xa8] sm:$0xff]
        %v6961 = vld [vmem:[%s12 + $0xb0] sm:$0xff]
        %v6962 = vld [vmem:[%s12 + $0xb8] sm:$0xff]
        %6963 = vmatprep.subr.mxu0 0.0
        %6964 = vmatpush1.msra.mxu0 %v6906
        %6965 = vmatprep.subr.mxu0 0.0
        %6966 = vmatpush1.msra.mxu0 %v6905
        %6967 = vmatprep.subr.mxu0 0.0
        %6968 = vmatpush1.msra.mxu0 %v6904
        %6969 = vmatprep.subr.mxu0 0.0
        %6970 = vmatpush1.msra.mxu0 %v6903
        %6971 = vmatprep.subr.mxu0 0.0
        %6972 = vmatpush1.msra.mxu0 %v6902
        %6973 = vmatprep.subr.mxu0 0.0
        %6974 = vmatpush1.msra.mxu0 %v6901
        %6975 = vmatprep.subr.mxu0 0.0
        %6976 = vmatpush1.msra.mxu0 %v6900
        %6977 = vmatprep.subr.mxu0 0.0
        %6978 = vmatpush1.msra.mxu0 %v6899
        %6979 = vmatprep.subr.mxu0 0.0
        %6980 = vmatpush1.msra.mxu0 %v6898
        %6981 = vmatprep.subr.mxu0 0.0
        %6982 = vmatpush1.msra.mxu0 %v6897
        %6983 = vmatprep.subr.mxu0 0.0
        %6984 = vmatpush1.msra.mxu0 %v6896
        %6985 = vmatprep.subr.mxu0 0.0
        %6986 = vmatpush1.msra.mxu0 %v6895
        %6987 = vmatprep.subr.mxu0 0.0
        %6988 = vmatpush1.msra.mxu0 %v6894
        %6989 = vmatprep.subr.mxu0 0.0
        %6990 = vmatpush1.msra.mxu0 %v6893
        %6991 = vmatprep.subr.mxu0 0.0
        %6992 = vmatpush1.msra.mxu0 %v6892
        %6993 = vmatprep.subr.mxu0 0.0
        %6994 = vmatpush1.msra.mxu0 %v6891
        %6995 = vmatprep.subr.mxu0 0.0
        %6996 = vmatpush2.msra.mxu0 %v6922
        %6997 = vmatprep.subr.mxu0 0.0
        %6998 = vmatpush2.msra.mxu0 %v6921
        %6999 = vmatprep.subr.mxu0 0.0
        %7000 = vmatpush2.msra.mxu0 %v6920
        %7001 = vmatprep.subr.mxu0 0.0
        %7002 = vmatpush2.msra.mxu0 %v6919
        %7003 = vmatprep.subr.mxu0 0.0
        %7004 = vmatpush2.msra.mxu0 %v6918
        %7005 = vmatprep.subr.mxu0 0.0
        %7006 = vmatpush2.msra.mxu0 %v6917
        %7007 = vmatprep.subr.mxu0 0.0
        %7008 = vmatpush2.msra.mxu0 %v6916
        %7009 = vmatprep.subr.mxu0 0.0
        %7010 = vmatpush2.msra.mxu0 %v6915
        %7011 = vmatprep.subr.mxu0 0.0
        %7012 = vmatpush2.msra.mxu0 %v6914
        %7013 = vmatprep.subr.mxu0 0.0
        %7014 = vmatpush2.msra.mxu0 %v6913
        %7015 = vmatprep.subr.mxu0 0.0
        %7016 = vmatpush2.msra.mxu0 %v6912
        %7017 = vmatprep.subr.mxu0 0.0
        %7018 = vmatpush2.msra.mxu0 %v6911
        %7019 = vmatprep.subr.mxu0 0.0
        %7020 = vmatpush2.msra.mxu0 %v6910
        %7021 = vmatprep.subr.mxu0 0.0
        %7022 = vmatpush2.msra.mxu0 %v6909
        %7023 = vmatprep.subr.mxu0 0.0
        %7024 = vmatpush2.msra.mxu0 %v6908
        %7025 = vmatprep.subr.mxu0 0.0
        %7026 = vmatpush2.msra.mxu0 %v6907
        %7027 = vmatprep.mubr.f32.mxu0 %v6940
        %7028 = vmatmul.mubr.f32.gmra.mxu0 %v6939
        %v7029 = vpop.f32.mrf.mxu0
        %v7030 = vadd.f32 0.0, %v7029
        %v7031 = vpop.f32.mrf.mxu0
        %7032 = vmatprep.mubr.f32.mxu0 %v6943
        %7033 = vmatmul.mubr.f32.gmra.mxu0 %v6942
        %v7034 = vpop.f32.mrf.mxu0
        %v7035 = vadd.f32 0.0, %v7034
        %v7036 = vpop.f32.mrf.mxu0
        %7037 = vmatprep.mubr.f32.mxu0 %v6946
        %7038 = vmatmul.mubr.f32.gmra.mxu0 %v6945
        %v7039 = vpop.f32.mrf.mxu0
        %v7040 = vadd.f32 0.0, %v7039
        %v7041 = vpop.f32.mrf.mxu0
        %7042 = vmatprep.mubr.f32.mxu0 %v6949
        %7043 = vmatmul.mubr.f32.gmra.mxu0 %v6948
        %v7044 = vpop.f32.mrf.mxu0
        %v7045 = vadd.f32 0.0, %v7044
        %v7046 = vpop.f32.mrf.mxu0
        %7047 = vmatprep.mubr.f32.mxu0 %v6952
        %7048 = vmatmul.mubr.f32.gmra.mxu0 %v6951
        %v7049 = vpop.f32.mrf.mxu0
        %v7050 = vadd.f32 0.0, %v7049
        %v7051 = vpop.f32.mrf.mxu0
        %7052 = vmatprep.mubr.f32.mxu0 %v6955
        %7053 = vmatmul.mubr.f32.gmra.mxu0 %v6954
        %v7054 = vpop.f32.mrf.mxu0
        %v7055 = vadd.f32 0.0, %v7054
        %v7056 = vpop.f32.mrf.mxu0
        %7057 = vmatprep.mubr.f32.mxu0 %v6958
        %7058 = vmatmul.mubr.f32.gmra.mxu0 %v6957
        %v7059 = vpop.f32.mrf.mxu0
        %v7060 = vadd.f32 0.0, %v7059
        %v7061 = vpop.f32.mrf.mxu0
        %7062 = vmatprep.mubr.f32.mxu0 %v6961
        %7063 = vmatmul.mubr.f32.gmra.mxu0 %v6960
        %v7064 = vpop.f32.mrf.mxu0
        %v7065 = vadd.f32 0.0, %v7064
        %v7066 = vpop.f32.mrf.mxu0
        %7067 = vdwg.mxu0
        %7068 = vmatprep.subr.mxu0 0.0
        %7069 = vmatpush1.msra.mxu0 %v6938
        %7070 = vmatprep.subr.mxu0 0.0
        %7071 = vmatpush1.msra.mxu0 %v6937
        %7072 = vmatprep.subr.mxu0 0.0
        %7073 = vmatpush1.msra.mxu0 %v6936
        %7074 = vmatprep.subr.mxu0 0.0
        %7075 = vmatpush1.msra.mxu0 %v6935
        %7076 = vmatprep.subr.mxu0 0.0
        %7077 = vmatpush1.msra.mxu0 %v6934
        %7078 = vmatprep.subr.mxu0 0.0
        %7079 = vmatpush1.msra.mxu0 %v6933
        %7080 = vmatprep.subr.mxu0 0.0
        %7081 = vmatpush1.msra.mxu0 %v6932
        %7082 = vmatprep.subr.mxu0 0.0
        %7083 = vmatpush1.msra.mxu0 %v6931
        %7084 = vmatprep.subr.mxu0 0.0
        %7085 = vmatpush1.msra.mxu0 %v6930
        %7086 = vmatprep.subr.mxu0 0.0
        %7087 = vmatpush1.msra.mxu0 %v6929
        %7088 = vmatprep.subr.mxu0 0.0
        %7089 = vmatpush1.msra.mxu0 %v6928
        %7090 = vmatprep.subr.mxu0 0.0
        %7091 = vmatpush1.msra.mxu0 %v6927
        %7092 = vmatprep.subr.mxu0 0.0
        %7093 = vmatpush1.msra.mxu0 %v6926
        %7094 = vmatprep.subr.mxu0 0.0
        %7095 = vmatpush1.msra.mxu0 %v6925
        %7096 = vmatprep.subr.mxu0 0.0
        %7097 = vmatpush1.msra.mxu0 %v6924
        %7098 = vmatprep.subr.mxu0 0.0
        %7099 = vmatpush1.msra.mxu0 %v6923
        %7100 = vmatprep.subr.mxu0 0.0
        %7101 = vmatpush2.msra.mxu0 0.0
        %7102 = vmatprep.subr.mxu0 0.0
        %7103 = vmatpush2.msra.mxu0 0.0
        %7104 = vmatprep.subr.mxu0 0.0
        %7105 = vmatpush2.msra.mxu0 0.0
        %7106 = vmatprep.subr.mxu0 0.0
        %7107 = vmatpush2.msra.mxu0 0.0
        %7108 = vmatprep.subr.mxu0 0.0
        %7109 = vmatpush2.msra.mxu0 0.0
        %7110 = vmatprep.subr.mxu0 0.0
        %7111 = vmatpush2.msra.mxu0 0.0
        %7112 = vmatprep.subr.mxu0 0.0
        %7113 = vmatpush2.msra.mxu0 0.0
        %7114 = vmatprep.subr.mxu0 0.0
        %7115 = vmatpush2.msra.mxu0 0.0
        %7116 = vmatprep.subr.mxu0 0.0
        %7117 = vmatpush2.msra.mxu0 0.0
        %7118 = vmatprep.subr.mxu0 0.0
        %7119 = vmatpush2.msra.mxu0 0.0
        %7120 = vmatprep.subr.mxu0 0.0
        %7121 = vmatpush2.msra.mxu0 0.0
        %7122 = vmatprep.subr.mxu0 0.0
        %7123 = vmatpush2.msra.mxu0 0.0
        %7124 = vmatprep.subr.mxu0 0.0
        %7125 = vmatpush2.msra.mxu0 0.0
        %7126 = vmatprep.subr.mxu0 0.0
        %7127 = vmatpush2.msra.mxu0 0.0
        %7128 = vmatprep.subr.mxu0 0.0
        %7129 = vmatpush2.msra.mxu0 0.0
        %7130 = vmatprep.subr.mxu0 0.0
        %7131 = vmatpush2.msra.mxu0 0.0
        %7132 = vmatprep.mubr.f32.mxu0 0.0
        %7133 = vmatmul.mubr.f32.gmra.mxu0 %v6941
        %v7134 = vpop.f32.mrf.mxu0
        %v7135 = vadd.f32 %v7030, %v7134
        %v7136 = vpop.f32.mrf.mxu0
        %7137 = vmatprep.mubr.f32.mxu0 0.0
        %7138 = vmatmul.mubr.f32.gmra.mxu0 %v6944
        %v7139 = vpop.f32.mrf.mxu0
        %v7140 = vadd.f32 %v7035, %v7139
        %v7141 = vpop.f32.mrf.mxu0
        %7142 = vmatprep.mubr.f32.mxu0 0.0
        %7143 = vmatmul.mubr.f32.gmra.mxu0 %v6947
        %v7144 = vpop.f32.mrf.mxu0
        %v7145 = vadd.f32 %v7040, %v7144
        %v7146 = vpop.f32.mrf.mxu0
        %7147 = vmatprep.mubr.f32.mxu0 0.0
        %7148 = vmatmul.mubr.f32.gmra.mxu0 %v6950
        %v7149 = vpop.f32.mrf.mxu0
        %v7150 = vadd.f32 %v7045, %v7149
        %v7151 = vpop.f32.mrf.mxu0
        %7152 = vmatprep.mubr.f32.mxu0 0.0
        %7153 = vmatmul.mubr.f32.gmra.mxu0 %v6953
        %v7154 = vpop.f32.mrf.mxu0
        %v7155 = vadd.f32 %v7050, %v7154
        %v7156 = vpop.f32.mrf.mxu0
        %7157 = vmatprep.mubr.f32.mxu0 0.0
        %7158 = vmatmul.mubr.f32.gmra.mxu0 %v6956
        %v7159 = vpop.f32.mrf.mxu0
        %v7160 = vadd.f32 %v7055, %v7159
        %v7161 = vpop.f32.mrf.mxu0
        %7162 = vmatprep.mubr.f32.mxu0 0.0
        %7163 = vmatmul.mubr.f32.gmra.mxu0 %v6959
        %v7164 = vpop.f32.mrf.mxu0
        %v7165 = vadd.f32 %v7060, %v7164
        %v7166 = vpop.f32.mrf.mxu0
        %7167 = vmatprep.mubr.f32.mxu0 0.0
        %7168 = vmatmul.mubr.f32.gmra.mxu0 %v6962
        %v7169 = vpop.f32.mrf.mxu0
        %v7170 = vadd.f32 %v7065, %v7169
        %v7171 = vpop.f32.mrf.mxu0
        %7172 = vdwg.mxu0
        %s7173 = scalar_lea.vmem %s12, 192
        %v7174 = vld [vmem:[%s7173] sm:$0xff]
        %v7175 = vld [vmem:[%s7173 + $0x8] sm:$0xff]
        %v7176 = vld [vmem:[%s7173 + $0x10] sm:$0xff]
        %v7177 = vld [vmem:[%s7173 + $0x18] sm:$0xff]
        %v7178 = vld [vmem:[%s7173 + $0x20] sm:$0xff]
        %v7179 = vld [vmem:[%s7173 + $0x28] sm:$0xff]
        %v7180 = vld [vmem:[%s7173 + $0x30] sm:$0xff]
        %v7181 = vld [vmem:[%s7173 + $0x38] sm:$0xff]
        %v7182 = vld [vmem:[%s7173 + $0x40] sm:$0xff]
        %v7183 = vld [vmem:[%s7173 + $0x48] sm:$0xff]
        %v7184 = vld [vmem:[%s7173 + $0x50] sm:$0xff]
        %v7185 = vld [vmem:[%s7173 + $0x58] sm:$0xff]
        %v7186 = vld [vmem:[%s7173 + $0x60] sm:$0xff]
        %v7187 = vld [vmem:[%s7173 + $0x68] sm:$0xff]
        %v7188 = vld [vmem:[%s7173 + $0x70] sm:$0xff]
        %v7189 = vld [vmem:[%s7173 + $0x78] sm:$0xff]
        %v7190 = vld [vmem:[%s7173 + $0x80] sm:$0xff]
        %v7191 = vld [vmem:[%s7173 + $0x88] sm:$0xff]
        %v7192 = vld [vmem:[%s7173 + $0x90] sm:$0xff]
        %v7193 = vld [vmem:[%s7173 + $0x98] sm:$0xff]
        %v7194 = vld [vmem:[%s7173 + $0xa0] sm:$0xff]
        %v7195 = vld [vmem:[%s7173 + $0xa8] sm:$0xff]
        %v7196 = vld [vmem:[%s7173 + $0xb0] sm:$0xff]
        %v7197 = vld [vmem:[%s7173 + $0xb8] sm:$0xff]
        %7198 = vmatprep.subr.mxu0 0.0
        %7199 = vmatpush1.msra.mxu0 %v6906
        %7200 = vmatprep.subr.mxu0 0.0
        %7201 = vmatpush1.msra.mxu0 %v6905
        %7202 = vmatprep.subr.mxu0 0.0
        %7203 = vmatpush1.msra.mxu0 %v6904
        %7204 = vmatprep.subr.mxu0 0.0
        %7205 = vmatpush1.msra.mxu0 %v6903
        %7206 = vmatprep.subr.mxu0 0.0
        %7207 = vmatpush1.msra.mxu0 %v6902
        %7208 = vmatprep.subr.mxu0 0.0
        %7209 = vmatpush1.msra.mxu0 %v6901
        %7210 = vmatprep.subr.mxu0 0.0
        %7211 = vmatpush1.msra.mxu0 %v6900
        %7212 = vmatprep.subr.mxu0 0.0
        %7213 = vmatpush1.msra.mxu0 %v6899
        %7214 = vmatprep.subr.mxu0 0.0
        %7215 = vmatpush1.msra.mxu0 %v6898
        %7216 = vmatprep.subr.mxu0 0.0
        %7217 = vmatpush1.msra.mxu0 %v6897
        %7218 = vmatprep.subr.mxu0 0.0
        %7219 = vmatpush1.msra.mxu0 %v6896
        %7220 = vmatprep.subr.mxu0 0.0
        %7221 = vmatpush1.msra.mxu0 %v6895
        %7222 = vmatprep.subr.mxu0 0.0
        %7223 = vmatpush1.msra.mxu0 %v6894
        %7224 = vmatprep.subr.mxu0 0.0
        %7225 = vmatpush1.msra.mxu0 %v6893
        %7226 = vmatprep.subr.mxu0 0.0
        %7227 = vmatpush1.msra.mxu0 %v6892
        %7228 = vmatprep.subr.mxu0 0.0
        %7229 = vmatpush1.msra.mxu0 %v6891
        %7230 = vmatprep.subr.mxu0 0.0
        %7231 = vmatpush2.msra.mxu0 %v6922
        %7232 = vmatprep.subr.mxu0 0.0
        %7233 = vmatpush2.msra.mxu0 %v6921
        %7234 = vmatprep.subr.mxu0 0.0
        %7235 = vmatpush2.msra.mxu0 %v6920
        %7236 = vmatprep.subr.mxu0 0.0
        %7237 = vmatpush2.msra.mxu0 %v6919
        %7238 = vmatprep.subr.mxu0 0.0
        %7239 = vmatpush2.msra.mxu0 %v6918
        %7240 = vmatprep.subr.mxu0 0.0
        %7241 = vmatpush2.msra.mxu0 %v6917
        %7242 = vmatprep.subr.mxu0 0.0
        %7243 = vmatpush2.msra.mxu0 %v6916
        %7244 = vmatprep.subr.mxu0 0.0
        %7245 = vmatpush2.msra.mxu0 %v6915
        %7246 = vmatprep.subr.mxu0 0.0
        %7247 = vmatpush2.msra.mxu0 %v6914
        %7248 = vmatprep.subr.mxu0 0.0
        %7249 = vmatpush2.msra.mxu0 %v6913
        %7250 = vmatprep.subr.mxu0 0.0
        %7251 = vmatpush2.msra.mxu0 %v6912
        %7252 = vmatprep.subr.mxu0 0.0
        %7253 = vmatpush2.msra.mxu0 %v6911
        %7254 = vmatprep.subr.mxu0 0.0
        %7255 = vmatpush2.msra.mxu0 %v6910
        %7256 = vmatprep.subr.mxu0 0.0
        %7257 = vmatpush2.msra.mxu0 %v6909
        %7258 = vmatprep.subr.mxu0 0.0
        %7259 = vmatpush2.msra.mxu0 %v6908
        %7260 = vmatprep.subr.mxu0 0.0
        %7261 = vmatpush2.msra.mxu0 %v6907
        %7262 = vmatprep.mubr.f32.mxu0 %v7175
        %7263 = vmatmul.mubr.f32.gmra.mxu0 %v7174
        %v7264 = vpop.f32.mrf.mxu0
        %v7265 = vadd.f32 0.0, %v7264
        %v7266 = vpop.f32.mrf.mxu0
        %7267 = vmatprep.mubr.f32.mxu0 %v7178
        %7268 = vmatmul.mubr.f32.gmra.mxu0 %v7177
        %v7269 = vpop.f32.mrf.mxu0
        %v7270 = vadd.f32 0.0, %v7269
        %v7271 = vpop.f32.mrf.mxu0
        %7272 = vmatprep.mubr.f32.mxu0 %v7181
        %7273 = vmatmul.mubr.f32.gmra.mxu0 %v7180
        %v7274 = vpop.f32.mrf.mxu0
        %v7275 = vadd.f32 0.0, %v7274
        %v7276 = vpop.f32.mrf.mxu0
        %7277 = vmatprep.mubr.f32.mxu0 %v7184
        %7278 = vmatmul.mubr.f32.gmra.mxu0 %v7183
        %v7279 = vpop.f32.mrf.mxu0
        %v7280 = vadd.f32 0.0, %v7279
        %v7281 = vpop.f32.mrf.mxu0
        %7282 = vmatprep.mubr.f32.mxu0 %v7187
        %7283 = vmatmul.mubr.f32.gmra.mxu0 %v7186
        %v7284 = vpop.f32.mrf.mxu0
        %v7285 = vadd.f32 0.0, %v7284
        %v7286 = vpop.f32.mrf.mxu0
        %7287 = vmatprep.mubr.f32.mxu0 %v7190
        %7288 = vmatmul.mubr.f32.gmra.mxu0 %v7189
        %v7289 = vpop.f32.mrf.mxu0
        %v7290 = vadd.f32 0.0, %v7289
        %v7291 = vpop.f32.mrf.mxu0
        %7292 = vmatprep.mubr.f32.mxu0 %v7193
        %7293 = vmatmul.mubr.f32.gmra.mxu0 %v7192
        %v7294 = vpop.f32.mrf.mxu0
        %v7295 = vadd.f32 0.0, %v7294
        %v7296 = vpop.f32.mrf.mxu0
        %7297 = vmatprep.mubr.f32.mxu0 %v7196
        %7298 = vmatmul.mubr.f32.gmra.mxu0 %v7195
        %v7299 = vpop.f32.mrf.mxu0
        %v7300 = vadd.f32 0.0, %v7299
        %v7301 = vpop.f32.mrf.mxu0
        %7302 = vdwg.mxu0
        %7303 = vmatprep.subr.mxu0 0.0
        %7304 = vmatpush1.msra.mxu0 %v6938
        %7305 = vmatprep.subr.mxu0 0.0
        %7306 = vmatpush1.msra.mxu0 %v6937
        %7307 = vmatprep.subr.mxu0 0.0
        %7308 = vmatpush1.msra.mxu0 %v6936
        %7309 = vmatprep.subr.mxu0 0.0
        %7310 = vmatpush1.msra.mxu0 %v6935
        %7311 = vmatprep.subr.mxu0 0.0
        %7312 = vmatpush1.msra.mxu0 %v6934
        %7313 = vmatprep.subr.mxu0 0.0
        %7314 = vmatpush1.msra.mxu0 %v6933
        %7315 = vmatprep.subr.mxu0 0.0
        %7316 = vmatpush1.msra.mxu0 %v6932
        %7317 = vmatprep.subr.mxu0 0.0
        %7318 = vmatpush1.msra.mxu0 %v6931
        %7319 = vmatprep.subr.mxu0 0.0
        %7320 = vmatpush1.msra.mxu0 %v6930
        %7321 = vmatprep.subr.mxu0 0.0
        %7322 = vmatpush1.msra.mxu0 %v6929
        %7323 = vmatprep.subr.mxu0 0.0
        %7324 = vmatpush1.msra.mxu0 %v6928
        %7325 = vmatprep.subr.mxu0 0.0
        %7326 = vmatpush1.msra.mxu0 %v6927
        %7327 = vmatprep.subr.mxu0 0.0
        %7328 = vmatpush1.msra.mxu0 %v6926
        %7329 = vmatprep.subr.mxu0 0.0
        %7330 = vmatpush1.msra.mxu0 %v6925
        %7331 = vmatprep.subr.mxu0 0.0
        %7332 = vmatpush1.msra.mxu0 %v6924
        %7333 = vmatprep.subr.mxu0 0.0
        %7334 = vmatpush1.msra.mxu0 %v6923
        %7335 = vmatprep.subr.mxu0 0.0
        %7336 = vmatpush2.msra.mxu0 0.0
        %7337 = vmatprep.subr.mxu0 0.0
        %7338 = vmatpush2.msra.mxu0 0.0
        %7339 = vmatprep.subr.mxu0 0.0
        %7340 = vmatpush2.msra.mxu0 0.0
        %7341 = vmatprep.subr.mxu0 0.0
        %7342 = vmatpush2.msra.mxu0 0.0
        %7343 = vmatprep.subr.mxu0 0.0
        %7344 = vmatpush2.msra.mxu0 0.0
        %7345 = vmatprep.subr.mxu0 0.0
        %7346 = vmatpush2.msra.mxu0 0.0
        %7347 = vmatprep.subr.mxu0 0.0
        %7348 = vmatpush2.msra.mxu0 0.0
        %7349 = vmatprep.subr.mxu0 0.0
        %7350 = vmatpush2.msra.mxu0 0.0
        %7351 = vmatprep.subr.mxu0 0.0
        %7352 = vmatpush2.msra.mxu0 0.0
        %7353 = vmatprep.subr.mxu0 0.0
        %7354 = vmatpush2.msra.mxu0 0.0
        %7355 = vmatprep.subr.mxu0 0.0
        %7356 = vmatpush2.msra.mxu0 0.0
        %7357 = vmatprep.subr.mxu0 0.0
        %7358 = vmatpush2.msra.mxu0 0.0
        %7359 = vmatprep.subr.mxu0 0.0
        %7360 = vmatpush2.msra.mxu0 0.0
        %7361 = vmatprep.subr.mxu0 0.0
        %7362 = vmatpush2.msra.mxu0 0.0
        %7363 = vmatprep.subr.mxu0 0.0
        %7364 = vmatpush2.msra.mxu0 0.0
        %7365 = vmatprep.subr.mxu0 0.0
        %7366 = vmatpush2.msra.mxu0 0.0
        %7367 = vmatprep.mubr.f32.mxu0 0.0
        %7368 = vmatmul.mubr.f32.gmra.mxu0 %v7176
        %v7369 = vpop.f32.mrf.mxu0
        %v7370 = vadd.f32 %v7265, %v7369
        %v7371 = vpop.f32.mrf.mxu0
        %7372 = vmatprep.mubr.f32.mxu0 0.0
        %7373 = vmatmul.mubr.f32.gmra.mxu0 %v7179
        %v7374 = vpop.f32.mrf.mxu0
        %v7375 = vadd.f32 %v7270, %v7374
        %v7376 = vpop.f32.mrf.mxu0
        %7377 = vmatprep.mubr.f32.mxu0 0.0
        %7378 = vmatmul.mubr.f32.gmra.mxu0 %v7182
        %v7379 = vpop.f32.mrf.mxu0
        %v7380 = vadd.f32 %v7275, %v7379
        %v7381 = vpop.f32.mrf.mxu0
        %7382 = vmatprep.mubr.f32.mxu0 0.0
        %7383 = vmatmul.mubr.f32.gmra.mxu0 %v7185
        %v7384 = vpop.f32.mrf.mxu0
        %v7385 = vadd.f32 %v7280, %v7384
        %v7386 = vpop.f32.mrf.mxu0
        %7387 = vmatprep.mubr.f32.mxu0 0.0
        %7388 = vmatmul.mubr.f32.gmra.mxu0 %v7188
        %v7389 = vpop.f32.mrf.mxu0
        %v7390 = vadd.f32 %v7285, %v7389
        %v7391 = vpop.f32.mrf.mxu0
        %7392 = vmatprep.mubr.f32.mxu0 0.0
        %7393 = vmatmul.mubr.f32.gmra.mxu0 %v7191
        %v7394 = vpop.f32.mrf.mxu0
        %v7395 = vadd.f32 %v7290, %v7394
        %v7396 = vpop.f32.mrf.mxu0
        %7397 = vmatprep.mubr.f32.mxu0 0.0
        %7398 = vmatmul.mubr.f32.gmra.mxu0 %v7194
        %v7399 = vpop.f32.mrf.mxu0
        %v7400 = vadd.f32 %v7295, %v7399
        %v7401 = vpop.f32.mrf.mxu0
        %7402 = vmatprep.mubr.f32.mxu0 0.0
        %7403 = vmatmul.mubr.f32.gmra.mxu0 %v7197
        %v7404 = vpop.f32.mrf.mxu0
        %v7405 = vadd.f32 %v7300, %v7404
        %v7406 = vpop.f32.mrf.mxu0
        %7407 = vdwg.mxu0
        %s7408 = scalar_lea.vmem %s12, 384
        %v7409 = vld [vmem:[%s7408] sm:$0xff]
        %v7410 = vld [vmem:[%s7408 + $0x8] sm:$0xff]
        %v7411 = vld [vmem:[%s7408 + $0x10] sm:$0xff]
        %v7412 = vld [vmem:[%s7408 + $0x18] sm:$0xff]
        %v7413 = vld [vmem:[%s7408 + $0x20] sm:$0xff]
        %v7414 = vld [vmem:[%s7408 + $0x28] sm:$0xff]
        %v7415 = vld [vmem:[%s7408 + $0x30] sm:$0xff]
        %v7416 = vld [vmem:[%s7408 + $0x38] sm:$0xff]
        %v7417 = vld [vmem:[%s7408 + $0x40] sm:$0xff]
        %v7418 = vld [vmem:[%s7408 + $0x48] sm:$0xff]
        %v7419 = vld [vmem:[%s7408 + $0x50] sm:$0xff]
        %v7420 = vld [vmem:[%s7408 + $0x58] sm:$0xff]
        %v7421 = vld [vmem:[%s7408 + $0x60] sm:$0xff]
        %v7422 = vld [vmem:[%s7408 + $0x68] sm:$0xff]
        %v7423 = vld [vmem:[%s7408 + $0x70] sm:$0xff]
        %v7424 = vld [vmem:[%s7408 + $0x78] sm:$0xff]
        %v7425 = vld [vmem:[%s7408 + $0x80] sm:$0xff]
        %v7426 = vld [vmem:[%s7408 + $0x88] sm:$0xff]
        %v7427 = vld [vmem:[%s7408 + $0x90] sm:$0xff]
        %v7428 = vld [vmem:[%s7408 + $0x98] sm:$0xff]
        %v7429 = vld [vmem:[%s7408 + $0xa0] sm:$0xff]
        %v7430 = vld [vmem:[%s7408 + $0xa8] sm:$0xff]
        %v7431 = vld [vmem:[%s7408 + $0xb0] sm:$0xff]
        %v7432 = vld [vmem:[%s7408 + $0xb8] sm:$0xff]
        %7433 = vmatprep.subr.mxu0 0.0
        %7434 = vmatpush1.msra.mxu0 %v6906
        %7435 = vmatprep.subr.mxu0 0.0
        %7436 = vmatpush1.msra.mxu0 %v6905
        %7437 = vmatprep.subr.mxu0 0.0
        %7438 = vmatpush1.msra.mxu0 %v6904
        %7439 = vmatprep.subr.mxu0 0.0
        %7440 = vmatpush1.msra.mxu0 %v6903
        %7441 = vmatprep.subr.mxu0 0.0
        %7442 = vmatpush1.msra.mxu0 %v6902
        %7443 = vmatprep.subr.mxu0 0.0
        %7444 = vmatpush1.msra.mxu0 %v6901
        %7445 = vmatprep.subr.mxu0 0.0
        %7446 = vmatpush1.msra.mxu0 %v6900
        %7447 = vmatprep.subr.mxu0 0.0
        %7448 = vmatpush1.msra.mxu0 %v6899
        %7449 = vmatprep.subr.mxu0 0.0
        %7450 = vmatpush1.msra.mxu0 %v6898
        %7451 = vmatprep.subr.mxu0 0.0
        %7452 = vmatpush1.msra.mxu0 %v6897
        %7453 = vmatprep.subr.mxu0 0.0
        %7454 = vmatpush1.msra.mxu0 %v6896
        %7455 = vmatprep.subr.mxu0 0.0
        %7456 = vmatpush1.msra.mxu0 %v6895
        %7457 = vmatprep.subr.mxu0 0.0
        %7458 = vmatpush1.msra.mxu0 %v6894
        %7459 = vmatprep.subr.mxu0 0.0
        %7460 = vmatpush1.msra.mxu0 %v6893
        %7461 = vmatprep.subr.mxu0 0.0
        %7462 = vmatpush1.msra.mxu0 %v6892
        %7463 = vmatprep.subr.mxu0 0.0
        %7464 = vmatpush1.msra.mxu0 %v6891
        %7465 = vmatprep.subr.mxu0 0.0
        %7466 = vmatpush2.msra.mxu0 %v6922
        %7467 = vmatprep.subr.mxu0 0.0
        %7468 = vmatpush2.msra.mxu0 %v6921
        %7469 = vmatprep.subr.mxu0 0.0
        %7470 = vmatpush2.msra.mxu0 %v6920
        %7471 = vmatprep.subr.mxu0 0.0
        %7472 = vmatpush2.msra.mxu0 %v6919
        %7473 = vmatprep.subr.mxu0 0.0
        %7474 = vmatpush2.msra.mxu0 %v6918
        %7475 = vmatprep.subr.mxu0 0.0
        %7476 = vmatpush2.msra.mxu0 %v6917
        %7477 = vmatprep.subr.mxu0 0.0
        %7478 = vmatpush2.msra.mxu0 %v6916
        %7479 = vmatprep.subr.mxu0 0.0
        %7480 = vmatpush2.msra.mxu0 %v6915
        %7481 = vmatprep.subr.mxu0 0.0
        %7482 = vmatpush2.msra.mxu0 %v6914
        %7483 = vmatprep.subr.mxu0 0.0
        %7484 = vmatpush2.msra.mxu0 %v6913
        %7485 = vmatprep.subr.mxu0 0.0
        %7486 = vmatpush2.msra.mxu0 %v6912
        %7487 = vmatprep.subr.mxu0 0.0
        %7488 = vmatpush2.msra.mxu0 %v6911
        %7489 = vmatprep.subr.mxu0 0.0
        %7490 = vmatpush2.msra.mxu0 %v6910
        %7491 = vmatprep.subr.mxu0 0.0
        %7492 = vmatpush2.msra.mxu0 %v6909
        %7493 = vmatprep.subr.mxu0 0.0
        %7494 = vmatpush2.msra.mxu0 %v6908
        %7495 = vmatprep.subr.mxu0 0.0
        %7496 = vmatpush2.msra.mxu0 %v6907
        %7497 = vmatprep.mubr.f32.mxu0 %v7410
        %7498 = vmatmul.mubr.f32.gmra.mxu0 %v7409
        %v7499 = vpop.f32.mrf.mxu0
        %v7500 = vadd.f32 0.0, %v7499
        %v7501 = vpop.f32.mrf.mxu0
        %7502 = vmatprep.mubr.f32.mxu0 %v7413
        %7503 = vmatmul.mubr.f32.gmra.mxu0 %v7412
        %v7504 = vpop.f32.mrf.mxu0
        %v7505 = vadd.f32 0.0, %v7504
        %v7506 = vpop.f32.mrf.mxu0
        %7507 = vmatprep.mubr.f32.mxu0 %v7416
        %7508 = vmatmul.mubr.f32.gmra.mxu0 %v7415
        %v7509 = vpop.f32.mrf.mxu0
        %v7510 = vadd.f32 0.0, %v7509
        %v7511 = vpop.f32.mrf.mxu0
        %7512 = vmatprep.mubr.f32.mxu0 %v7419
        %7513 = vmatmul.mubr.f32.gmra.mxu0 %v7418
        %v7514 = vpop.f32.mrf.mxu0
        %v7515 = vadd.f32 0.0, %v7514
        %v7516 = vpop.f32.mrf.mxu0
        %7517 = vmatprep.mubr.f32.mxu0 %v7422
        %7518 = vmatmul.mubr.f32.gmra.mxu0 %v7421
        %v7519 = vpop.f32.mrf.mxu0
        %v7520 = vadd.f32 0.0, %v7519
        %v7521 = vpop.f32.mrf.mxu0
        %7522 = vmatprep.mubr.f32.mxu0 %v7425
        %7523 = vmatmul.mubr.f32.gmra.mxu0 %v7424
        %v7524 = vpop.f32.mrf.mxu0
        %v7525 = vadd.f32 0.0, %v7524
        %v7526 = vpop.f32.mrf.mxu0
        %7527 = vmatprep.mubr.f32.mxu0 %v7428
        %7528 = vmatmul.mubr.f32.gmra.mxu0 %v7427
        %v7529 = vpop.f32.mrf.mxu0
        %v7530 = vadd.f32 0.0, %v7529
        %v7531 = vpop.f32.mrf.mxu0
        %7532 = vmatprep.mubr.f32.mxu0 %v7431
        %7533 = vmatmul.mubr.f32.gmra.mxu0 %v7430
        %v7534 = vpop.f32.mrf.mxu0
        %v7535 = vadd.f32 0.0, %v7534
        %v7536 = vpop.f32.mrf.mxu0
        %7537 = vdwg.mxu0
        %7538 = vmatprep.subr.mxu0 0.0
        %7539 = vmatpush1.msra.mxu0 %v6938
        %7540 = vmatprep.subr.mxu0 0.0
        %7541 = vmatpush1.msra.mxu0 %v6937
        %7542 = vmatprep.subr.mxu0 0.0
        %7543 = vmatpush1.msra.mxu0 %v6936
        %7544 = vmatprep.subr.mxu0 0.0
        %7545 = vmatpush1.msra.mxu0 %v6935
        %7546 = vmatprep.subr.mxu0 0.0
        %7547 = vmatpush1.msra.mxu0 %v6934
        %7548 = vmatprep.subr.mxu0 0.0
        %7549 = vmatpush1.msra.mxu0 %v6933
        %7550 = vmatprep.subr.mxu0 0.0
        %7551 = vmatpush1.msra.mxu0 %v6932
        %7552 = vmatprep.subr.mxu0 0.0
        %7553 = vmatpush1.msra.mxu0 %v6931
        %7554 = vmatprep.subr.mxu0 0.0
        %7555 = vmatpush1.msra.mxu0 %v6930
        %7556 = vmatprep.subr.mxu0 0.0
        %7557 = vmatpush1.msra.mxu0 %v6929
        %7558 = vmatprep.subr.mxu0 0.0
        %7559 = vmatpush1.msra.mxu0 %v6928
        %7560 = vmatprep.subr.mxu0 0.0
        %7561 = vmatpush1.msra.mxu0 %v6927
        %7562 = vmatprep.subr.mxu0 0.0
        %7563 = vmatpush1.msra.mxu0 %v6926
        %7564 = vmatprep.subr.mxu0 0.0
        %7565 = vmatpush1.msra.mxu0 %v6925
        %7566 = vmatprep.subr.mxu0 0.0
        %7567 = vmatpush1.msra.mxu0 %v6924
        %7568 = vmatprep.subr.mxu0 0.0
        %7569 = vmatpush1.msra.mxu0 %v6923
        %7570 = vmatprep.subr.mxu0 0.0
        %7571 = vmatpush2.msra.mxu0 0.0
        %7572 = vmatprep.subr.mxu0 0.0
        %7573 = vmatpush2.msra.mxu0 0.0
        %7574 = vmatprep.subr.mxu0 0.0
        %7575 = vmatpush2.msra.mxu0 0.0
        %7576 = vmatprep.subr.mxu0 0.0
        %7577 = vmatpush2.msra.mxu0 0.0
        %7578 = vmatprep.subr.mxu0 0.0
        %7579 = vmatpush2.msra.mxu0 0.0
        %7580 = vmatprep.subr.mxu0 0.0
        %7581 = vmatpush2.msra.mxu0 0.0
        %7582 = vmatprep.subr.mxu0 0.0
        %7583 = vmatpush2.msra.mxu0 0.0
        %7584 = vmatprep.subr.mxu0 0.0
        %7585 = vmatpush2.msra.mxu0 0.0
        %7586 = vmatprep.subr.mxu0 0.0
        %7587 = vmatpush2.msra.mxu0 0.0
        %7588 = vmatprep.subr.mxu0 0.0
        %7589 = vmatpush2.msra.mxu0 0.0
        %7590 = vmatprep.subr.mxu0 0.0
        %7591 = vmatpush2.msra.mxu0 0.0
        %7592 = vmatprep.subr.mxu0 0.0
        %7593 = vmatpush2.msra.mxu0 0.0
        %7594 = vmatprep.subr.mxu0 0.0
        %7595 = vmatpush2.msra.mxu0 0.0
        %7596 = vmatprep.subr.mxu0 0.0
        %7597 = vmatpush2.msra.mxu0 0.0
        %7598 = vmatprep.subr.mxu0 0.0
        %7599 = vmatpush2.msra.mxu0 0.0
        %7600 = vmatprep.subr.mxu0 0.0
        %7601 = vmatpush2.msra.mxu0 0.0
        %7602 = vmatprep.mubr.f32.mxu0 0.0
        %7603 = vmatmul.mubr.f32.gmra.mxu0 %v7411
        %v7604 = vpop.f32.mrf.mxu0
        %v7605 = vadd.f32 %v7500, %v7604
        %v7606 = vpop.f32.mrf.mxu0
        %7607 = vmatprep.mubr.f32.mxu0 0.0
        %7608 = vmatmul.mubr.f32.gmra.mxu0 %v7414
        %v7609 = vpop.f32.mrf.mxu0
        %v7610 = vadd.f32 %v7505, %v7609
        %v7611 = vpop.f32.mrf.mxu0
        %7612 = vmatprep.mubr.f32.mxu0 0.0
        %7613 = vmatmul.mubr.f32.gmra.mxu0 %v7417
        %v7614 = vpop.f32.mrf.mxu0
        %v7615 = vadd.f32 %v7510, %v7614
        %v7616 = vpop.f32.mrf.mxu0
        %7617 = vmatprep.mubr.f32.mxu0 0.0
        %7618 = vmatmul.mubr.f32.gmra.mxu0 %v7420
        %v7619 = vpop.f32.mrf.mxu0
        %v7620 = vadd.f32 %v7515, %v7619
        %v7621 = vpop.f32.mrf.mxu0
        %7622 = vmatprep.mubr.f32.mxu0 0.0
        %7623 = vmatmul.mubr.f32.gmra.mxu0 %v7423
        %v7624 = vpop.f32.mrf.mxu0
        %v7625 = vadd.f32 %v7520, %v7624
        %v7626 = vpop.f32.mrf.mxu0
        %7627 = vmatprep.mubr.f32.mxu0 0.0
        %7628 = vmatmul.mubr.f32.gmra.mxu0 %v7426
        %v7629 = vpop.f32.mrf.mxu0
        %v7630 = vadd.f32 %v7525, %v7629
        %v7631 = vpop.f32.mrf.mxu0
        %7632 = vmatprep.mubr.f32.mxu0 0.0
        %7633 = vmatmul.mubr.f32.gmra.mxu0 %v7429
        %v7634 = vpop.f32.mrf.mxu0
        %v7635 = vadd.f32 %v7530, %v7634
        %v7636 = vpop.f32.mrf.mxu0
        %7637 = vmatprep.mubr.f32.mxu0 0.0
        %7638 = vmatmul.mubr.f32.gmra.mxu0 %v7432
        %v7639 = vpop.f32.mrf.mxu0
        %v7640 = vadd.f32 %v7535, %v7639
        %v7641 = vpop.f32.mrf.mxu0
        %7642 = vdwg.mxu0
        %s7643 = scalar_lea.vmem %s12, 576
        %v7644 = vld [vmem:[%s7643] sm:$0xff]
        %v7645 = vld [vmem:[%s7643 + $0x8] sm:$0xff]
        %v7646 = vld [vmem:[%s7643 + $0x10] sm:$0xff]
        %v7647 = vld [vmem:[%s7643 + $0x18] sm:$0xff]
        %v7648 = vld [vmem:[%s7643 + $0x20] sm:$0xff]
        %v7649 = vld [vmem:[%s7643 + $0x28] sm:$0xff]
        %v7650 = vld [vmem:[%s7643 + $0x30] sm:$0xff]
        %v7651 = vld [vmem:[%s7643 + $0x38] sm:$0xff]
        %v7652 = vld [vmem:[%s7643 + $0x40] sm:$0xff]
        %v7653 = vld [vmem:[%s7643 + $0x48] sm:$0xff]
        %v7654 = vld [vmem:[%s7643 + $0x50] sm:$0xff]
        %v7655 = vld [vmem:[%s7643 + $0x58] sm:$0xff]
        %v7656 = vld [vmem:[%s7643 + $0x60] sm:$0xff]
        %v7657 = vld [vmem:[%s7643 + $0x68] sm:$0xff]
        %v7658 = vld [vmem:[%s7643 + $0x70] sm:$0xff]
        %v7659 = vld [vmem:[%s7643 + $0x78] sm:$0xff]
        %v7660 = vld [vmem:[%s7643 + $0x80] sm:$0xff]
        %v7661 = vld [vmem:[%s7643 + $0x88] sm:$0xff]
        %v7662 = vld [vmem:[%s7643 + $0x90] sm:$0xff]
        %v7663 = vld [vmem:[%s7643 + $0x98] sm:$0xff]
        %v7664 = vld [vmem:[%s7643 + $0xa0] sm:$0xff]
        %v7665 = vld [vmem:[%s7643 + $0xa8] sm:$0xff]
        %v7666 = vld [vmem:[%s7643 + $0xb0] sm:$0xff]
        %v7667 = vld [vmem:[%s7643 + $0xb8] sm:$0xff]
        %7668 = vmatprep.subr.mxu0 0.0
        %7669 = vmatpush1.msra.mxu0 %v6906
        %7670 = vmatprep.subr.mxu0 0.0
        %7671 = vmatpush1.msra.mxu0 %v6905
        %7672 = vmatprep.subr.mxu0 0.0
        %7673 = vmatpush1.msra.mxu0 %v6904
        %7674 = vmatprep.subr.mxu0 0.0
        %7675 = vmatpush1.msra.mxu0 %v6903
        %7676 = vmatprep.subr.mxu0 0.0
        %7677 = vmatpush1.msra.mxu0 %v6902
        %7678 = vmatprep.subr.mxu0 0.0
        %7679 = vmatpush1.msra.mxu0 %v6901
        %7680 = vmatprep.subr.mxu0 0.0
        %7681 = vmatpush1.msra.mxu0 %v6900
        %7682 = vmatprep.subr.mxu0 0.0
        %7683 = vmatpush1.msra.mxu0 %v6899
        %7684 = vmatprep.subr.mxu0 0.0
        %7685 = vmatpush1.msra.mxu0 %v6898
        %7686 = vmatprep.subr.mxu0 0.0
        %7687 = vmatpush1.msra.mxu0 %v6897
        %7688 = vmatprep.subr.mxu0 0.0
        %7689 = vmatpush1.msra.mxu0 %v6896
        %7690 = vmatprep.subr.mxu0 0.0
        %7691 = vmatpush1.msra.mxu0 %v6895
        %7692 = vmatprep.subr.mxu0 0.0
        %7693 = vmatpush1.msra.mxu0 %v6894
        %7694 = vmatprep.subr.mxu0 0.0
        %7695 = vmatpush1.msra.mxu0 %v6893
        %7696 = vmatprep.subr.mxu0 0.0
        %7697 = vmatpush1.msra.mxu0 %v6892
        %7698 = vmatprep.subr.mxu0 0.0
        %7699 = vmatpush1.msra.mxu0 %v6891
        %7700 = vmatprep.subr.mxu0 0.0
        %7701 = vmatpush2.msra.mxu0 %v6922
        %7702 = vmatprep.subr.mxu0 0.0
        %7703 = vmatpush2.msra.mxu0 %v6921
        %7704 = vmatprep.subr.mxu0 0.0
        %7705 = vmatpush2.msra.mxu0 %v6920
        %7706 = vmatprep.subr.mxu0 0.0
        %7707 = vmatpush2.msra.mxu0 %v6919
        %7708 = vmatprep.subr.mxu0 0.0
        %7709 = vmatpush2.msra.mxu0 %v6918
        %7710 = vmatprep.subr.mxu0 0.0
        %7711 = vmatpush2.msra.mxu0 %v6917
        %7712 = vmatprep.subr.mxu0 0.0
        %7713 = vmatpush2.msra.mxu0 %v6916
        %7714 = vmatprep.subr.mxu0 0.0
        %7715 = vmatpush2.msra.mxu0 %v6915
        %7716 = vmatprep.subr.mxu0 0.0
        %7717 = vmatpush2.msra.mxu0 %v6914
        %7718 = vmatprep.subr.mxu0 0.0
        %7719 = vmatpush2.msra.mxu0 %v6913
        %7720 = vmatprep.subr.mxu0 0.0
        %7721 = vmatpush2.msra.mxu0 %v6912
        %7722 = vmatprep.subr.mxu0 0.0
        %7723 = vmatpush2.msra.mxu0 %v6911
        %7724 = vmatprep.subr.mxu0 0.0
        %7725 = vmatpush2.msra.mxu0 %v6910
        %7726 = vmatprep.subr.mxu0 0.0
        %7727 = vmatpush2.msra.mxu0 %v6909
        %7728 = vmatprep.subr.mxu0 0.0
        %7729 = vmatpush2.msra.mxu0 %v6908
        %7730 = vmatprep.subr.mxu0 0.0
        %7731 = vmatpush2.msra.mxu0 %v6907
        %7732 = vmatprep.mubr.f32.mxu0 %v7645
        %7733 = vmatmul.mubr.f32.gmra.mxu0 %v7644
        %v7734 = vpop.f32.mrf.mxu0
        %v7735 = vadd.f32 0.0, %v7734
        %v7736 = vpop.f32.mrf.mxu0
        %7737 = vmatprep.mubr.f32.mxu0 %v7648
        %7738 = vmatmul.mubr.f32.gmra.mxu0 %v7647
        %v7739 = vpop.f32.mrf.mxu0
        %v7740 = vadd.f32 0.0, %v7739
        %v7741 = vpop.f32.mrf.mxu0
        %7742 = vmatprep.mubr.f32.mxu0 %v7651
        %7743 = vmatmul.mubr.f32.gmra.mxu0 %v7650
        %v7744 = vpop.f32.mrf.mxu0
        %v7745 = vadd.f32 0.0, %v7744
        %v7746 = vpop.f32.mrf.mxu0
        %7747 = vmatprep.mubr.f32.mxu0 %v7654
        %7748 = vmatmul.mubr.f32.gmra.mxu0 %v7653
        %v7749 = vpop.f32.mrf.mxu0
        %v7750 = vadd.f32 0.0, %v7749
        %v7751 = vpop.f32.mrf.mxu0
        %7752 = vmatprep.mubr.f32.mxu0 %v7657
        %7753 = vmatmul.mubr.f32.gmra.mxu0 %v7656
        %v7754 = vpop.f32.mrf.mxu0
        %v7755 = vadd.f32 0.0, %v7754
        %v7756 = vpop.f32.mrf.mxu0
        %7757 = vmatprep.mubr.f32.mxu0 %v7660
        %7758 = vmatmul.mubr.f32.gmra.mxu0 %v7659
        %v7759 = vpop.f32.mrf.mxu0
        %v7760 = vadd.f32 0.0, %v7759
        %v7761 = vpop.f32.mrf.mxu0
        %7762 = vmatprep.mubr.f32.mxu0 %v7663
        %7763 = vmatmul.mubr.f32.gmra.mxu0 %v7662
        %v7764 = vpop.f32.mrf.mxu0
        %v7765 = vadd.f32 0.0, %v7764
        %v7766 = vpop.f32.mrf.mxu0
        %7767 = vmatprep.mubr.f32.mxu0 %v7666
        %7768 = vmatmul.mubr.f32.gmra.mxu0 %v7665
        %v7769 = vpop.f32.mrf.mxu0
        %v7770 = vadd.f32 0.0, %v7769
        %v7771 = vpop.f32.mrf.mxu0
        %7772 = vdwg.mxu0
        %7773 = vmatprep.subr.mxu0 0.0
        %7774 = vmatpush1.msra.mxu0 %v6938
        %7775 = vmatprep.subr.mxu0 0.0
        %7776 = vmatpush1.msra.mxu0 %v6937
        %7777 = vmatprep.subr.mxu0 0.0
        %7778 = vmatpush1.msra.mxu0 %v6936
        %7779 = vmatprep.subr.mxu0 0.0
        %7780 = vmatpush1.msra.mxu0 %v6935
        %7781 = vmatprep.subr.mxu0 0.0
        %7782 = vmatpush1.msra.mxu0 %v6934
        %7783 = vmatprep.subr.mxu0 0.0
        %7784 = vmatpush1.msra.mxu0 %v6933
        %7785 = vmatprep.subr.mxu0 0.0
        %7786 = vmatpush1.msra.mxu0 %v6932
        %7787 = vmatprep.subr.mxu0 0.0
        %7788 = vmatpush1.msra.mxu0 %v6931
        %7789 = vmatprep.subr.mxu0 0.0
        %7790 = vmatpush1.msra.mxu0 %v6930
        %7791 = vmatprep.subr.mxu0 0.0
        %7792 = vmatpush1.msra.mxu0 %v6929
        %7793 = vmatprep.subr.mxu0 0.0
        %7794 = vmatpush1.msra.mxu0 %v6928
        %7795 = vmatprep.subr.mxu0 0.0
        %7796 = vmatpush1.msra.mxu0 %v6927
        %7797 = vmatprep.subr.mxu0 0.0
        %7798 = vmatpush1.msra.mxu0 %v6926
        %7799 = vmatprep.subr.mxu0 0.0
        %7800 = vmatpush1.msra.mxu0 %v6925
        %7801 = vmatprep.subr.mxu0 0.0
        %7802 = vmatpush1.msra.mxu0 %v6924
        %7803 = vmatprep.subr.mxu0 0.0
        %7804 = vmatpush1.msra.mxu0 %v6923
        %7805 = vmatprep.subr.mxu0 0.0
        %7806 = vmatpush2.msra.mxu0 0.0
        %7807 = vmatprep.subr.mxu0 0.0
        %7808 = vmatpush2.msra.mxu0 0.0
        %7809 = vmatprep.subr.mxu0 0.0
        %7810 = vmatpush2.msra.mxu0 0.0
        %7811 = vmatprep.subr.mxu0 0.0
        %7812 = vmatpush2.msra.mxu0 0.0
        %7813 = vmatprep.subr.mxu0 0.0
        %7814 = vmatpush2.msra.mxu0 0.0
        %7815 = vmatprep.subr.mxu0 0.0
        %7816 = vmatpush2.msra.mxu0 0.0
        %7817 = vmatprep.subr.mxu0 0.0
        %7818 = vmatpush2.msra.mxu0 0.0
        %7819 = vmatprep.subr.mxu0 0.0
        %7820 = vmatpush2.msra.mxu0 0.0
        %7821 = vmatprep.subr.mxu0 0.0
        %7822 = vmatpush2.msra.mxu0 0.0
        %7823 = vmatprep.subr.mxu0 0.0
        %7824 = vmatpush2.msra.mxu0 0.0
        %7825 = vmatprep.subr.mxu0 0.0
        %7826 = vmatpush2.msra.mxu0 0.0
        %7827 = vmatprep.subr.mxu0 0.0
        %7828 = vmatpush2.msra.mxu0 0.0
        %7829 = vmatprep.subr.mxu0 0.0
        %7830 = vmatpush2.msra.mxu0 0.0
        %7831 = vmatprep.subr.mxu0 0.0
        %7832 = vmatpush2.msra.mxu0 0.0
        %7833 = vmatprep.subr.mxu0 0.0
        %7834 = vmatpush2.msra.mxu0 0.0
        %7835 = vmatprep.subr.mxu0 0.0
        %7836 = vmatpush2.msra.mxu0 0.0
        %7837 = vmatprep.mubr.f32.mxu0 0.0
        %7838 = vmatmul.mubr.f32.gmra.mxu0 %v7646
        %v7839 = vpop.f32.mrf.mxu0
        %v7840 = vadd.f32 %v7735, %v7839
        %v7841 = vpop.f32.mrf.mxu0
        %7842 = vmatprep.mubr.f32.mxu0 0.0
        %7843 = vmatmul.mubr.f32.gmra.mxu0 %v7649
        %v7844 = vpop.f32.mrf.mxu0
        %v7845 = vadd.f32 %v7740, %v7844
        %v7846 = vpop.f32.mrf.mxu0
        %7847 = vmatprep.mubr.f32.mxu0 0.0
        %7848 = vmatmul.mubr.f32.gmra.mxu0 %v7652
        %v7849 = vpop.f32.mrf.mxu0
        %v7850 = vadd.f32 %v7745, %v7849
        %v7851 = vpop.f32.mrf.mxu0
        %7852 = vmatprep.mubr.f32.mxu0 0.0
        %7853 = vmatmul.mubr.f32.gmra.mxu0 %v7655
        %v7854 = vpop.f32.mrf.mxu0
        %v7855 = vadd.f32 %v7750, %v7854
        %v7856 = vpop.f32.mrf.mxu0
        %7857 = vmatprep.mubr.f32.mxu0 0.0
        %7858 = vmatmul.mubr.f32.gmra.mxu0 %v7658
        %v7859 = vpop.f32.mrf.mxu0
        %v7860 = vadd.f32 %v7755, %v7859
        %v7861 = vpop.f32.mrf.mxu0
        %7862 = vmatprep.mubr.f32.mxu0 0.0
        %7863 = vmatmul.mubr.f32.gmra.mxu0 %v7661
        %v7864 = vpop.f32.mrf.mxu0
        %v7865 = vadd.f32 %v7760, %v7864
        %v7866 = vpop.f32.mrf.mxu0
        %7867 = vmatprep.mubr.f32.mxu0 0.0
        %7868 = vmatmul.mubr.f32.gmra.mxu0 %v7664
        %v7869 = vpop.f32.mrf.mxu0
        %v7870 = vadd.f32 %v7765, %v7869
        %v7871 = vpop.f32.mrf.mxu0
        %7872 = vmatprep.mubr.f32.mxu0 0.0
        %7873 = vmatmul.mubr.f32.gmra.mxu0 %v7667
        %v7874 = vpop.f32.mrf.mxu0
        %v7875 = vadd.f32 %v7770, %v7874
        %v7876 = vpop.f32.mrf.mxu0
        %7877 = vdwg.mxu0
        %7886 = vrot.lane.b32.xlu0 %v7370, 32
        %v7887 = vpop.permute.xlu0 %7886
        %7888 = vrot.lane.b32.xlu0 %v7375, 32
        %v7889 = vpop.permute.xlu0 %7888
        %7890 = vrot.lane.b32.xlu0 %v7380, 32
        %v7891 = vpop.permute.xlu0 %7890
        %7892 = vrot.lane.b32.xlu0 %v7385, 32
        %v7893 = vpop.permute.xlu0 %7892
        %7894 = vrot.lane.b32.xlu0 %v7390, 32
        %v7895 = vpop.permute.xlu0 %7894
        %7896 = vrot.lane.b32.xlu0 %v7395, 32
        %v7897 = vpop.permute.xlu0 %7896
        %7898 = vrot.lane.b32.xlu0 %v7400, 32
        %v7899 = vpop.permute.xlu0 %7898
        %7900 = vrot.lane.b32.xlu0 %v7405, 32
        %v7901 = vpop.permute.xlu0 %7900
        %7918 = vrot.lane.b32.xlu0 %v7605, 64
        %v7919 = vpop.permute.xlu0 %7918
        %7920 = vrot.lane.b32.xlu0 %v7610, 64
        %v7921 = vpop.permute.xlu0 %7920
        %7922 = vrot.lane.b32.xlu0 %v7615, 64
        %v7923 = vpop.permute.xlu0 %7922
        %7924 = vrot.lane.b32.xlu0 %v7620, 64
        %v7925 = vpop.permute.xlu0 %7924
        %7926 = vrot.lane.b32.xlu0 %v7625, 64
        %v7927 = vpop.permute.xlu0 %7926
        %7928 = vrot.lane.b32.xlu0 %v7630, 64
        %v7929 = vpop.permute.xlu0 %7928
        %7930 = vrot.lane.b32.xlu0 %v7635, 64
        %v7931 = vpop.permute.xlu0 %7930
        %7932 = vrot.lane.b32.xlu0 %v7640, 64
        %v7933 = vpop.permute.xlu0 %7932
        %7950 = vrot.lane.b32.xlu0 %v7840, 96
        %v7951 = vpop.permute.xlu0 %7950
        %7952 = vrot.lane.b32.xlu0 %v7845, 96
        %v7953 = vpop.permute.xlu0 %7952
        %7954 = vrot.lane.b32.xlu0 %v7850, 96
        %v7955 = vpop.permute.xlu0 %7954
        %7956 = vrot.lane.b32.xlu0 %v7855, 96
        %v7957 = vpop.permute.xlu0 %7956
        %7958 = vrot.lane.b32.xlu0 %v7860, 96
        %v7959 = vpop.permute.xlu0 %7958
        %7960 = vrot.lane.b32.xlu0 %v7865, 96
        %v7961 = vpop.permute.xlu0 %7960
        %7962 = vrot.lane.b32.xlu0 %v7870, 96
        %v7963 = vpop.permute.xlu0 %7962
        %7964 = vrot.lane.b32.xlu0 %v7875, 96
        %v7965 = vpop.permute.xlu0 %7964
        %v7974 = vsel %vm2282, %v7135, %v7887
        %v7975 = vsel %vm2282, %v7140, %v7889
        %v7976 = vsel %vm2282, %v7145, %v7891
        %v7977 = vsel %vm2282, %v7150, %v7893
        %v7978 = vsel %vm2282, %v7155, %v7895
        %v7979 = vsel %vm2282, %v7160, %v7897
        %v7980 = vsel %vm2282, %v7165, %v7899
        %v7981 = vsel %vm2282, %v7170, %v7901
        %v7982 = vsel %vm4950, %v7974, %v7919
        %v7983 = vsel %vm4950, %v7975, %v7921
        %v7984 = vsel %vm4950, %v7976, %v7923
        %v7985 = vsel %vm4950, %v7977, %v7925
        %v7986 = vsel %vm4950, %v7978, %v7927
        %v7987 = vsel %vm4950, %v7979, %v7929
        %v7988 = vsel %vm4950, %v7980, %v7931
        %v7989 = vsel %vm4950, %v7981, %v7933
        %v7990 = vsel %vm4999, %v7982, %v7951
        %v7991 = vsel %vm4999, %v7983, %v7953
        %v7992 = vsel %vm4999, %v7984, %v7955
        %v7993 = vsel %vm4999, %v7985, %v7957
        %v7994 = vsel %vm4999, %v7986, %v7959
        %v7995 = vsel %vm4999, %v7987, %v7961
        %v7996 = vsel %vm4999, %v7988, %v7963
        %v7997 = vsel %vm4999, %v7989, %v7965
        %v7998 = vld [vmem:[%s13] sm:$0xff]
        %v7999 = vld [vmem:[%s13 + $0x8] sm:$0xff]
        %v8000 = vld [vmem:[%s13 + $0x10] sm:$0xff]
        %v8001 = vld [vmem:[%s13 + $0x18] sm:$0xff]
        %v8002 = vld [vmem:[%s13 + $0x20] sm:$0xff]
        %v8003 = vld [vmem:[%s13 + $0x28] sm:$0xff]
        %v8004 = vld [vmem:[%s13 + $0x30] sm:$0xff]
        %v8005 = vld [vmem:[%s13 + $0x38] sm:$0xff]
        %v8006 = vld [vmem:[%s13 + $0x40] sm:$0xff]
        %v8007 = vld [vmem:[%s13 + $0x48] sm:$0xff]
        %v8008 = vld [vmem:[%s13 + $0x50] sm:$0xff]
        %v8009 = vld [vmem:[%s13 + $0x58] sm:$0xff]
        %v8010 = vld [vmem:[%s13 + $0x60] sm:$0xff]
        %v8011 = vld [vmem:[%s13 + $0x68] sm:$0xff]
        %v8012 = vld [vmem:[%s13 + $0x70] sm:$0xff]
        %v8013 = vld [vmem:[%s13 + $0x78] sm:$0xff]
        %8014 = vmatprep.subr.mxu0 0.0
        %8015 = vmatpush1.msra.mxu0 %v8013
        %8016 = vmatprep.subr.mxu0 0.0
        %8017 = vmatpush1.msra.mxu0 %v8012
        %8018 = vmatprep.subr.mxu0 0.0
        %8019 = vmatpush1.msra.mxu0 %v8011
        %8020 = vmatprep.subr.mxu0 0.0
        %8021 = vmatpush1.msra.mxu0 %v8010
        %8022 = vmatprep.subr.mxu0 0.0
        %8023 = vmatpush1.msra.mxu0 %v8009
        %8024 = vmatprep.subr.mxu0 0.0
        %8025 = vmatpush1.msra.mxu0 %v8008
        %8026 = vmatprep.subr.mxu0 0.0
        %8027 = vmatpush1.msra.mxu0 %v8007
        %8028 = vmatprep.subr.mxu0 0.0
        %8029 = vmatpush1.msra.mxu0 %v8006
        %8030 = vmatprep.subr.mxu0 0.0
        %8031 = vmatpush1.msra.mxu0 %v8005
        %8032 = vmatprep.subr.mxu0 0.0
        %8033 = vmatpush1.msra.mxu0 %v8004
        %8034 = vmatprep.subr.mxu0 0.0
        %8035 = vmatpush1.msra.mxu0 %v8003
        %8036 = vmatprep.subr.mxu0 0.0
        %8037 = vmatpush1.msra.mxu0 %v8002
        %8038 = vmatprep.subr.mxu0 0.0
        %8039 = vmatpush1.msra.mxu0 %v8001
        %8040 = vmatprep.subr.mxu0 0.0
        %8041 = vmatpush1.msra.mxu0 %v8000
        %8042 = vmatprep.subr.mxu0 0.0
        %8043 = vmatpush1.msra.mxu0 %v7999
        %8044 = vmatprep.subr.mxu0 0.0
        %8045 = vmatpush1.msra.mxu0 %v7998
        %8046 = vmatprep.subr.mxu0 0.0
        %8047 = vmatpush2.msra.mxu0 0.0
        %8048 = vmatprep.subr.mxu0 0.0
        %8049 = vmatpush2.msra.mxu0 0.0
        %8050 = vmatprep.subr.mxu0 0.0
        %8051 = vmatpush2.msra.mxu0 0.0
        %8052 = vmatprep.subr.mxu0 0.0
        %8053 = vmatpush2.msra.mxu0 0.0
        %8054 = vmatprep.subr.mxu0 0.0
        %8055 = vmatpush2.msra.mxu0 0.0
        %8056 = vmatprep.subr.mxu0 0.0
        %8057 = vmatpush2.msra.mxu0 0.0
        %8058 = vmatprep.subr.mxu0 0.0
        %8059 = vmatpush2.msra.mxu0 0.0
        %8060 = vmatprep.subr.mxu0 0.0
        %8061 = vmatpush2.msra.mxu0 0.0
        %8062 = vmatprep.subr.mxu0 0.0
        %8063 = vmatpush2.msra.mxu0 0.0
        %8064 = vmatprep.subr.mxu0 0.0
        %8065 = vmatpush2.msra.mxu0 0.0
        %8066 = vmatprep.subr.mxu0 0.0
        %8067 = vmatpush2.msra.mxu0 0.0
        %8068 = vmatprep.subr.mxu0 0.0
        %8069 = vmatpush2.msra.mxu0 0.0
        %8070 = vmatprep.subr.mxu0 0.0
        %8071 = vmatpush2.msra.mxu0 0.0
        %8072 = vmatprep.subr.mxu0 0.0
        %8073 = vmatpush2.msra.mxu0 0.0
        %8074 = vmatprep.subr.mxu0 0.0
        %8075 = vmatpush2.msra.mxu0 0.0
        %8076 = vmatprep.subr.mxu0 0.0
        %8077 = vmatpush2.msra.mxu0 0.0
        %8078 = vmatprep.mubr.f32.mxu0 0.0
        %8079 = vmatmul.mubr.f32.gmra.mxu0 %v7990
        %v8080 = vpop.f32.mrf.mxu0
        %v8081 = vadd.f32 0.0, %v8080
        %v8082 = vpop.f32.mrf.mxu0
        %8083 = vmatprep.mubr.f32.mxu0 0.0
        %8084 = vmatmul.mubr.f32.gmra.mxu0 %v7991
        %v8085 = vpop.f32.mrf.mxu0
        %v8086 = vadd.f32 0.0, %v8085
        %v8087 = vpop.f32.mrf.mxu0
        %8088 = vmatprep.mubr.f32.mxu0 0.0
        %8089 = vmatmul.mubr.f32.gmra.mxu0 %v7992
        %v8090 = vpop.f32.mrf.mxu0
        %v8091 = vadd.f32 0.0, %v8090
        %v8092 = vpop.f32.mrf.mxu0
        %8093 = vmatprep.mubr.f32.mxu0 0.0
        %8094 = vmatmul.mubr.f32.gmra.mxu0 %v7993
        %v8095 = vpop.f32.mrf.mxu0
        %v8096 = vadd.f32 0.0, %v8095
        %v8097 = vpop.f32.mrf.mxu0
        %8098 = vmatprep.mubr.f32.mxu0 0.0
        %8099 = vmatmul.mubr.f32.gmra.mxu0 %v7994
        %v8100 = vpop.f32.mrf.mxu0
        %v8101 = vadd.f32 0.0, %v8100
        %v8102 = vpop.f32.mrf.mxu0
        %8103 = vmatprep.mubr.f32.mxu0 0.0
        %8104 = vmatmul.mubr.f32.gmra.mxu0 %v7995
        %v8105 = vpop.f32.mrf.mxu0
        %v8106 = vadd.f32 0.0, %v8105
        %v8107 = vpop.f32.mrf.mxu0
        %8108 = vmatprep.mubr.f32.mxu0 0.0
        %8109 = vmatmul.mubr.f32.gmra.mxu0 %v7996
        %v8110 = vpop.f32.mrf.mxu0
        %v8111 = vadd.f32 0.0, %v8110
        %v8112 = vpop.f32.mrf.mxu0
        %8113 = vmatprep.mubr.f32.mxu0 0.0
        %8114 = vmatmul.mubr.f32.gmra.mxu0 %v7997
        %v8115 = vpop.f32.mrf.mxu0
        %v8116 = vadd.f32 0.0, %v8115
        %v8117 = vpop.f32.mrf.mxu0
        %8118 = vdwg.mxu0
        %8119 = vxpose.xlu0.b32.start [1/16] %v8081, 128
        %8120 = vxpose.xlu0.b32.cont [2/16] %v8086, 128
        %8121 = vxpose.xlu0.b32.cont [3/16] %v8091, 128
        %8122 = vxpose.xlu0.b32.cont [4/16] %v8096, 128
        %8123 = vxpose.xlu0.b32.cont [5/16] %v8101, 128
        %8124 = vxpose.xlu0.b32.cont [6/16] %v8106, 128
        %8125 = vxpose.xlu0.b32.cont [7/16] %v8111, 128
        %8126 = vxpose.xlu0.b32.cont [8/16] %v8116, 128
        %8127 = vxpose.xlu0.b32.cont [9/16] 0.0, 128
        %8128 = vxpose.xlu0.b32.cont [10/16] 0.0, 128
        %8129 = vxpose.xlu0.b32.cont [11/16] 0.0, 128
        %8130 = vxpose.xlu0.b32.cont [12/16] 0.0, 128
        %8131 = vxpose.xlu0.b32.cont [13/16] 0.0, 128
        %8132 = vxpose.xlu0.b32.cont [14/16] 0.0, 128
        %8133 = vxpose.xlu0.b32.cont [15/16] 0.0, 128
        %8134 = vxpose.xlu0.b32.end [16/16] 0.0, 128
        %v8135 = vpop.trf.xlu0
        %v8136 = vpop.trf.xlu0
        %v8137 = vpop.trf.xlu0
        %v8138 = vpop.trf.xlu0
        %v8139 = vpop.trf.xlu0
        %v8140 = vpop.trf.xlu0
        %v8141 = vpop.trf.xlu0
        %v8142 = vpop.trf.xlu0
        %v8143 = vpop.trf.xlu0
        %v8144 = vpop.trf.xlu0
        %v8145 = vpop.trf.xlu0
        %v8146 = vpop.trf.xlu0
        %v8147 = vpop.trf.xlu0
        %v8148 = vpop.trf.xlu0
        %v8149 = vpop.trf.xlu0
        %v8150 = vpop.trf.xlu0
        %8151 = vst.msk [vmem:[%s460] sm:$0xff] %vm4950, %v8135
        %8152 = vst.msk [vmem:[%s460 + $0x8] sm:$0xff] %vm4950, %v8136
        %8153 = vst.msk [vmem:[%s460 + $0x10] sm:$0xff] %vm4950, %v8137
        %8154 = vst.msk [vmem:[%s460 + $0x18] sm:$0xff] %vm4950, %v8138
        %s8155 = sand.u32 %s335, 1
        %s8156 = scalar_lea.sflag [#allocation4], %s8155
        %s8157 = sand.u32 %s335, 1
        %s8158 = smul.addr %s8157, 32
        %s8159 = scalar_lea.vmem [#allocation3], %s8158
        // Predicated region
        $region77: #{tpu_custom_call.1} parent=75 // pred_check
          %p8160 = pneg %p345
        $region78: #{tpu_custom_call.1} parent=75 // pred_check_branch
          %8162 = sbr.rel (%p8160) target = $region80
        $region79: #{tpu_custom_call.1} parent=75 // pred_region
          %s8164 = ssub.s32 512, 512
          %8165 = vsyncadd %s8156, %s8164
          %s8166 = smul.addr %s28, 4
          %s8167 = smul.addr %s8166, 128
          %s8168 = scalar_lea.hbm %s14, %s8167
          %s8169 = sshll.u32 %s8159, 4
          %s8170 = int_to_ptr.vmem [resolvable:$true] %s8169
          %8175 = dma.vmem_to_hbm [thread:$0]  %s8170, 512, %s8168, %s8156, 128, 128, 8
        $region80: #{tpu_custom_call.1} parent=75 // pred_fallthru
          _
      $region76: #{tpu_custom_call.1} parent=5 // pred_fallthru
        _
      %p8176 = scmp.le.s32.totalorder 2, %s23
      // Predicated region
      $region81: #{tpu_custom_call.1} parent=5 // pred_check
        %p8177 = pneg %p8176
      $region82: #{tpu_custom_call.1} parent=5 // pred_check_branch
        %8179 = sbr.rel (%p8177) target = $region84
      $region83: #{tpu_custom_call.1} parent=5 // pred_region
        %s8180 = ssub.s32 %s23, 2
        // Predicated region
        $region85: #{tpu_custom_call.1} parent=83 // pred_check
          %p8181 = pneg %p351
        $region86: #{tpu_custom_call.1} parent=83 // pred_check_branch
          %8183 = sbr.rel (%p8181) target = $region88
        $region87: #{tpu_custom_call.1} parent=83 // pred_region
          %s8184 = sand.u32 %s336, 1
          %s8185 = scalar_lea.sflag [#allocation4], %s8184
          %s8186 = sand.u32 %s336, 1
          %s8187 = smul.addr %s8186, 32
          %s8188 = scalar_lea.vmem [#allocation3], %s8187
          %8189 = dma.done %s8185, 512
        $region88: #{tpu_custom_call.1} parent=83 // pred_fallthru
          _
      $region84: #{tpu_custom_call.1} parent=5 // pred_fallthru
        _
    $region6: #{tpu_custom_call.1} parent=1 // loop_footer
      %s27 = sadd.s32 1, %s23
    $region7: #{tpu_custom_call.1} parent=1 // loop_footer_branch
      %22 = sbr.rel target = $region3
    $region8: #{tpu_custom_call.1} parent=1 // loop_exit
      _
    %8190 = vsyncpa [#allocation4], 1
    %s8191 = scalar_lea.sflag [#allocation4], 1
    %8192 = vsyncpa %s8191, 1

</llo_original>
